<compile_context>
chip_gen: v7x
topology: tpu7x:2x2x1
jax: 0.10.0
libtpu: 0.0.40
codegen_flags: <defaults>
</compile_context>

<pallas_src>
import functools

import jax
import jax.numpy as jnp
import numpy as np
from jax.experimental import pallas as pl
from jax.experimental.pallas import tpu as pltpu

_BN_EPS = 1e-5
_C_PAD = 128                                # lane-dense channel slab
_PREC = jax.lax.Precision.HIGHEST           # exact-f32 MXU path (kernel + ref)


# ----------------------------- the fused kernel -------------------------------
#
# Layout: activations live as one folded (R, 128) slab, R = B * T_pad, where
# T_pad = extra_zeros + receptive_field + T and each batch segment is
# right-aligned in "absolute time".  Row index within a segment < v  means
# "not a real output of this layer" -> masked out of BN stats, never read by
# any valid downstream row (causal taps only look backwards), never stored.

def _tcn_kernel(x_ref, tix_ref, vec_ref, mat_ref, o_ref, h_scr, *,
                k, dilations, layer_size, bsz, t_pad, t_out, extra, margin):
    rows = bsz * t_pad
    V = vec_ref[...]                       # (n_rows, 128) packed vector params
    t_idx = tix_ref[...]                   # (rows, 128) int32: time idx in segment

    # Zero the scratch margin once; taps that would reach "before" a segment
    # read these zeros (or the previous segment's tail) and land only in
    # masked rows.
    h_scr[pl.ds(0, margin), :] = jnp.zeros((margin, _C_PAD), jnp.float32)

    def bn(y, g_row, b_row, v_start):
        """Training-mode BatchNorm1d over (batch, valid time); two-pass stats."""
        n = float(bsz * (t_pad - v_start))
        mask = t_idx >= v_start
        ym = jnp.where(mask, y, 0.0)
        mean = jnp.sum(ym, axis=0, keepdims=True) * (1.0 / n)          # (1,128)
        cen = jnp.where(mask, y - mean, 0.0)
        var = jnp.sum(cen * cen, axis=0, keepdims=True) * (1.0 / n)    # (1,128)
        scale = jax.lax.rsqrt(var + _BN_EPS) * V[g_row:g_row + 1]
        shift = V[b_row:b_row + 1] - mean * scale
        return y * scale + shift                                       # 1 FMA/elem

    def depthwise(h, w_base, d):
        """Causal dilated depthwise conv at fixed length: out[i] = sum_j w_j h[i-(k-1-j)d]."""
        h_scr[pl.ds(margin, rows), :] = h          # aligned store (margin % 8 == 0)
        acc = None
        for j in range(k):
            s = (k - 1 - j) * d
            tap = h_scr[pl.ds(margin - s, rows), :]            # shifted window read
            term = tap * V[w_base + j:w_base + j + 1]
            acc = term if acc is None else acc + term
        return acc + V[w_base + k:w_base + k + 1]              # + depthwise bias

    def pointwise(y, m_idx, b_row):
        """1x1 conv == one folded-batch MXU matmul."""
        return jnp.dot(y, mat_ref[m_idx], preferred_element_type=jnp.float32,
                       precision=_PREC) + V[b_row:b_row + 1]

    # ---- preprocessor: DSDilatedConv1d (depthwise -> BN -> pointwise) + ReLU --
    v = extra + (k - 1)
    y = depthwise(x_ref[...], 0, 1)
    y = bn(y, k + 1, k + 2, v)
    h = jnp.maximum(pointwise(y, 0, k + 3), 0.0)

    # ---- residual blocks (static, unrolled) -----------------------------------
    skip = None
    for li, d in enumerate(dilations):
        base = (k + 4) + li * (k + 9)
        v = v + d * (k - 1)
        y = depthwise(h, base, d)                               # conv1.conv
        y = bn(y, base + k + 1, base + k + 2, v)                # conv1.bn
        y = pointwise(y, 1 + 2 * li, base + k + 3)              # conv1.pointwise
        y = jnp.maximum(bn(y, base + k + 4, base + k + 5, v), 0.0)   # bn1 + relu1
        u = pointwise(y, 2 + 2 * li, base + k + 6)              # conv2 (1x1)
        u = bn(u, base + k + 7, base + k + 8, v)                # bn2
        h = jnp.maximum(u + h, 0.0)                             # relu2(+residual)
        if (li + 1) % layer_size == 0:                          # end of a stack
            skip = h if skip is None else skip + h              # in-place skip sum

    # ---- normalize_length + sum is implicit (absolute alignment); one aligned
    # ---- crop per batch segment, lane-dense (128) stores.
    crop = t_pad - t_out
    for bi in range(bsz):
        start = bi * t_pad + crop
        o_ref[bi] = skip[start:start + t_out, :]


# ------------------------- host-side packing & wrapper ------------------------

def _pack_params(params):
    """Pack every parameter into 2 slabs: a (rows,128) vector slab and a
    (n_mats,128,128) matrix slab (zero-padded lanes/rows -> numerics untouched)."""
    p = params['pre']

    def vec(a):
        return jnp.pad(a, ((0, 0), (0, _C_PAD - a.shape[-1])))

    def mat(w):
        return jnp.pad(w, ((0, _C_PAD - w.shape[0]), (0, _C_PAD - w.shape[1])))

    rows = [vec(p['dw_w']), vec(p['dw_b']), vec(p['bn_g']), vec(p['bn_b']),
            vec(p['pw_b'])]
    mats = [mat(p['pw_w'])]
    for stack in params['stacks']:
        for blk in stack:
            rows += [vec(blk['dw_w']), vec(blk['dw_b']), vec(blk['bna_g']),
                     vec(blk['bna_b']), vec(blk['pw_b']), vec(blk['bn1_g']),
                     vec(blk['bn1_b']), vec(blk['b2']), vec(blk['bn2_g']),
                     vec(blk['bn2_b'])]
            mats += [mat(blk['pw_w']), mat(blk['w2'])]
    vecs = jnp.concatenate(rows, axis=0)
    pad = (-vecs.shape[0]) % 8                      # sublane-friendly slab
    if pad:
        vecs = jnp.pad(vecs, ((0, pad), (0, 0)))
    return vecs, jnp.stack(mats, axis=0)


def multi_scale_causal_tcn_forward(params, x, length=None):
    """x: (B, T, C_in) f32 -> (B, T, res_channels).  `length` is unused
    (matching the PyTorch forward, which ignores it)."""
    del length
    k = params['kernel_size']
    rf = params['receptive_fields']
    dilations = tuple(blk['dilation'] for stack in params['stacks'] for blk in stack)
    layer_size = len(params['stacks'][0])
    bsz, t, c_in = x.shape
    res_c = params['pre']['pw_w'].shape[1]

    # F.pad(x, (0, 0, rf, 0, 0, 0)) left-pads time by rf; a few EXTRA zero rows
    # make T_pad and the final crop 8-aligned (the extra rows are masked out of
    # every BN, so the math is unchanged).  Channels pad to a 128-lane slab.
    extra = (-rf) % 8
    t_pad = extra + rf + t
    rows = bsz * t_pad
    max_shift = (k - 1) * max(dilations)
    margin = max(8, ((max_shift + 7) // 8) * 8)

    xp = jnp.pad(x, ((0, 0), (rf + extra, 0), (0, _C_PAD - c_in)))
    x_flat = xp.reshape(rows, _C_PAD)
    t_idx = jnp.broadcast_to(
        jnp.arange(t_pad, dtype=jnp.int32)[None, :, None],
        (bsz, t_pad, _C_PAD)).reshape(rows, _C_PAD)
    vecs, mats = _pack_params(params)

    kern = functools.partial(_tcn_kernel, k=k, dilations=dilations,
                             layer_size=layer_size, bsz=bsz, t_pad=t_pad,
                             t_out=t, extra=extra, margin=margin)
    vmem = pl.BlockSpec(memory_space=pltpu.MemorySpace.VMEM)
    out = pl.pallas_call(
        kern,
        out_shape=jax.ShapeDtypeStruct((bsz, t, _C_PAD), jnp.float32),
        in_specs=[vmem, vmem, vmem, vmem],
        out_specs=vmem,
        scratch_shapes=[pltpu.VMEM((margin + rows, _C_PAD), jnp.float32)],
        compiler_params=pltpu.CompilerParams(
            # Tiny at demo shapes; explicit and re-derived for v7x's 64 MiB
            # physical VMEM (single h slab + one skip accumulator + scratch).
            vmem_limit_bytes=32 * 1024 * 1024),
    )(x_flat, t_idx, vecs, mats)
    # TODO(synk): downstream consumers could take the lane-dense (.., 128) slab
    # directly and avoid this extra HBM pass.
    return out[:, :, :res_c]


# ---------------------------------- params ------------------------------------

def init_params(key, layer_size, stack_size, in_channels, res_channels,
                kernel_size):
    keys = iter(jax.random.split(key, 64))

    def nrm(shape, scale=0.1):
        return (scale * jax.random.normal(next(keys), shape)).astype(jnp.float32)

    def ones(shape):
        return jnp.ones(shape, jnp.float32)

    def zeros(shape):
        return jnp.zeros(shape, jnp.float32)

    params = {'kernel_size': kernel_size}
    params['pre'] = {
        'dw_w': nrm((kernel_size, in_channels)),      # depthwise weight (k, C)
        'dw_b': nrm((1, in_channels)),
        'bn_g': ones((1, in_channels)), 'bn_b': zeros((1, in_channels)),
        'pw_w': nrm((in_channels, res_channels)),     # pointwise (Cin, Cout)
        'pw_b': nrm((1, res_channels)),
    }
    rf = kernel_size - 1
    stacks = []
    for _ in range(stack_size):
        blocks = []
        for l in range(layer_size):
            d = 2 ** l
            rf += d * (kernel_size - 1)
            blocks.append({
                'dilation': d,
                'dw_w': nrm((kernel_size, res_channels)),
                'dw_b': nrm((1, res_channels)),
                'bna_g': ones((1, res_channels)), 'bna_b': zeros((1, res_channels)),
                'pw_w': nrm((res_channels, res_channels)),
                'pw_b': nrm((1, res_channels)),
                'bn1_g': ones((1, res_channels)), 'bn1_b': zeros((1, res_channels)),
                'w2': nrm((res_channels, res_channels)),
                'b2': nrm((1, res_channels)),
                'bn2_g': ones((1, res_channels)), 'bn2_b': zeros((1, res_channels)),
            })
        stacks.append(blocks)
    params['stacks'] = stacks
    params['receptive_fields'] = rf
    return params


# ------------------------- pure-JAX reference (check) --------------------------

def _bn_ref(y, g, b):
    mean = jnp.mean(y, axis=(0, 1), keepdims=True)
    var = jnp.mean((y - mean) ** 2, axis=(0, 1), keepdims=True)
    scale = jax.lax.rsqrt(var + _BN_EPS) * g
    return y * scale + (b - mean * scale)


def _dw_ref(x, w, b, k, d):
    t_out = x.shape[1] - d * (k - 1)
    acc = sum(x[:, j * d:j * d + t_out, :] * w[j][None, None, :] for j in range(k))
    return acc + b


def reference_forward(params, x):
    k = params['kernel_size']
    h = jnp.pad(x, ((0, 0), (params['receptive_fields'], 0), (0, 0)))
    p = params['pre']
    y = _bn_ref(_dw_ref(h, p['dw_w'], p['dw_b'], k, 1), p['bn_g'], p['bn_b'])
    h = jax.nn.relu(jnp.einsum('btc,co->bto', y, p['pw_w'],
                               precision=_PREC) + p['pw_b'])
    outs = []
    for stack in params['stacks']:
        for blk in stack:
            d = blk['dilation']
            y = _bn_ref(_dw_ref(h, blk['dw_w'], blk['dw_b'], k, d),
                        blk['bna_g'], blk['bna_b'])
            z = jnp.einsum('btc,co->bto', y, blk['pw_w'],
                           precision=_PREC) + blk['pw_b']
            z = jax.nn.relu(_bn_ref(z, blk['bn1_g'], blk['bn1_b']))
            u = jnp.einsum('btc,co->bto', z, blk['w2'],
                           precision=_PREC) + blk['b2']
            u = _bn_ref(u, blk['bn2_g'], blk['bn2_b'])
            h = jax.nn.relu(u + h[:, d * (k - 1):, :])
        outs.append(h)
    t_final = outs[-1].shape[1]
    out = outs[-1]
    for s in outs[:-1]:
        out = out + s[:, s.shape[1] - t_final:, :]
    return out


# ------------------------------------ main -------------------------------------

if __name__ == "__main__":
    # Module hyperparameters (small, consistent with the torch __init__).
    layer_size, stack_size = 2, 2
    in_channels, res_channels, out_channels = 4, 32, 32  # out_channels unused by forward
    kernel_size, dropout = 3, 0.0                        # dropout unused by forward
    B, T = 2, 16

    key = jax.random.PRNGKey(0)
    pkey, xkey = jax.random.split(key)
    params = init_params(pkey, layer_size, stack_size, in_channels,
                         res_channels, kernel_size)

    x = jax.random.normal(xkey, (B, T, in_channels), dtype=jnp.float32)
    length = jnp.full((B,), T, dtype=jnp.int32)   # unused by forward (as in torch)

    out = multi_scale_causal_tcn_forward(params, x, length)
    out = jax.block_until_ready(out)
    assert out.shape == (B, T, res_channels)

    # Kernel and reference now share the identical two-pass BN formula; the
    # remaining slack covers MXU-vs-XLA matmul / reduction accumulation order
    # compounded through 13 BatchNorm layers.
    ref = reference_forward(params, x)
    np.testing.assert_allclose(np.asarray(out), np.asarray(ref),
                               rtol=2e-3, atol=5e-4)
    print("KERNEL_OK")
</pallas_src>

<mosaic_0001>
module attributes {stable_mosaic.version = 11 : i64} {
  func.func @_tcn_kernel(%arg0: memref<64x128xf32, #tpu.memory_space<vmem>>, %arg1: memref<64x128xi32, #tpu.memory_space<vmem>>, %arg2: memref<56x128xf32, #tpu.memory_space<vmem>>, %arg3: memref<9x128x128xf32, #tpu.memory_space<vmem>>, %arg4: memref<2x16x128xf32, #tpu.memory_space<vmem>>, %arg5: memref<72x128xf32, #tpu.memory_space<vmem>>) attributes {dimension_semantics = [], scalar_prefetch = 0 : i64, scratch_operands = 1 : i64, tpu.core_type = #tpu.core_type<tc>} {
    %c0 = arith.constant 0 : index
    %c0_0 = arith.constant 0 : index
    %0 = vector.load %arg2[%c0, %c0_0] : memref<56x128xf32, #tpu.memory_space<vmem>>, vector<56x128xf32>
    %c0_1 = arith.constant 0 : index
    %c0_2 = arith.constant 0 : index
    %1 = vector.load %arg1[%c0_1, %c0_2] : memref<64x128xi32, #tpu.memory_space<vmem>>, vector<64x128xi32>
    %cst = arith.constant 0.000000e+00 : f32
    %2 = vector.broadcast %cst : f32 to vector<8x128xf32>
    %c0_3 = arith.constant 0 : index
    %c0_4 = arith.constant 0 : index
    %3 = vector.load %arg5[%c0_3, %c0_4] : memref<72x128xf32, #tpu.memory_space<vmem>>, vector<8x128xf32>
    tpu.vector_store %arg5[%c0_3, %c0_4], %2 {strides = array<i32>} : memref<72x128xf32, #tpu.memory_space<vmem>>, vector<8x128xf32>,
    %c0_5 = arith.constant 0 : index
    %c0_6 = arith.constant 0 : index
    %4 = vector.load %arg0[%c0_5, %c0_6] : memref<64x128xf32, #tpu.memory_space<vmem>>, vector<64x128xf32>
    %c8 = arith.constant 8 : index
    %c0_7 = arith.constant 0 : index
    %5 = vector.load %arg5[%c8, %c0_7] : memref<72x128xf32, #tpu.memory_space<vmem>>, vector<64x128xf32>
    tpu.vector_store %arg5[%c8, %c0_7], %4 {strides = array<i32>} : memref<72x128xf32, #tpu.memory_space<vmem>>, vector<64x128xf32>,
    %c6 = arith.constant 6 : index
    %c0_8 = arith.constant 0 : index
    %6 = vector.load %arg5[%c6, %c0_8] : memref<72x128xf32, #tpu.memory_space<vmem>>, vector<64x128xf32>
    %7 = vector.extract_strided_slice %0 {offsets = [0, 0], sizes = [1, 128], strides = [1, 1]} : vector<56x128xf32> to vector<1x128xf32>
    %8 = vector.broadcast %7 : vector<1x128xf32> to vector<64x128xf32>
    %9 = arith.mulf %6, %8 : vector<64x128xf32>
    %c7 = arith.constant 7 : index
    %c0_9 = arith.constant 0 : index
    %10 = vector.load %arg5[%c7, %c0_9] : memref<72x128xf32, #tpu.memory_space<vmem>>, vector<64x128xf32>
    %11 = vector.extract_strided_slice %0 {offsets = [1, 0], sizes = [1, 128], strides = [1, 1]} : vector<56x128xf32> to vector<1x128xf32>
    %12 = vector.broadcast %11 : vector<1x128xf32> to vector<64x128xf32>
    %13 = arith.mulf %10, %12 : vector<64x128xf32>
    %14 = arith.addf %9, %13 : vector<64x128xf32>
    %c8_10 = arith.constant 8 : index
    %c0_11 = arith.constant 0 : index
    %15 = vector.load %arg5[%c8_10, %c0_11] : memref<72x128xf32, #tpu.memory_space<vmem>>, vector<64x128xf32>
    %16 = vector.extract_strided_slice %0 {offsets = [2, 0], sizes = [1, 128], strides = [1, 1]} : vector<56x128xf32> to vector<1x128xf32>
    %17 = vector.broadcast %16 : vector<1x128xf32> to vector<64x128xf32>
    %18 = arith.mulf %15, %17 : vector<64x128xf32>
    %19 = arith.addf %14, %18 : vector<64x128xf32>
    %20 = vector.extract_strided_slice %0 {offsets = [3, 0], sizes = [1, 128], strides = [1, 1]} : vector<56x128xf32> to vector<1x128xf32>
    %21 = vector.broadcast %20 : vector<1x128xf32> to vector<64x128xf32>
    %22 = arith.addf %19, %21 : vector<64x128xf32>
    %c4_i32 = arith.constant 4 : i32
    %23 = vector.broadcast %c4_i32 : i32 to vector<64x128xi32>
    %24 = arith.cmpi sge, %1, %23 : vector<64x128xi32>
    %cst_12 = arith.constant 0.000000e+00 : f32
    %25 = vector.broadcast %cst_12 : f32 to vector<64x128xf32>
    %26 = arith.select %24, %22, %25 : vector<64x128xi1>, vector<64x128xf32>
    %cst_13 = arith.constant dense<0.000000e+00> : vector<128xf32>
    %27 = vector.multi_reduction <add>, %26, %cst_13 [0] : vector<64x128xf32> to vector<128xf32>
    %28 = vector.shape_cast %27 : vector<128xf32> to vector<1x128xf32>
    %cst_14 = arith.constant 0.0178571437 : f32
    %29 = vector.broadcast %cst_14 : f32 to vector<1x128xf32>
    %30 = arith.mulf %28, %29 : vector<1x128xf32>
    %31 = vector.broadcast %30 : vector<1x128xf32> to vector<64x128xf32>
    %32 = arith.subf %22, %31 : vector<64x128xf32>
    %cst_15 = arith.constant 0.000000e+00 : f32
    %33 = vector.broadcast %cst_15 : f32 to vector<64x128xf32>
    %34 = arith.select %24, %32, %33 : vector<64x128xi1>, vector<64x128xf32>
    %35 = arith.mulf %34, %34 : vector<64x128xf32>
    %cst_16 = arith.constant dense<0.000000e+00> : vector<128xf32>
    %36 = vector.multi_reduction <add>, %35, %cst_16 [0] : vector<64x128xf32> to vector<128xf32>
    %37 = vector.shape_cast %36 : vector<128xf32> to vector<1x128xf32>
    %cst_17 = arith.constant 0.0178571437 : f32
    %38 = vector.broadcast %cst_17 : f32 to vector<1x128xf32>
    %39 = arith.mulf %37, %38 : vector<1x128xf32>
    %cst_18 = arith.constant 9.99999974E-6 : f32
    %40 = vector.broadcast %cst_18 : f32 to vector<1x128xf32>
    %41 = arith.addf %39, %40 : vector<1x128xf32>
    %42 = math.rsqrt %41 : vector<1x128xf32>
    %43 = vector.extract_strided_slice %0 {offsets = [4, 0], sizes = [1, 128], strides = [1, 1]} : vector<56x128xf32> to vector<1x128xf32>
    %44 = arith.mulf %42, %43 : vector<1x128xf32>
    %45 = vector.extract_strided_slice %0 {offsets = [5, 0], sizes = [1, 128], strides = [1, 1]} : vector<56x128xf32> to vector<1x128xf32>
    %46 = arith.mulf %30, %44 : vector<1x128xf32>
    %47 = arith.subf %45, %46 : vector<1x128xf32>
    %48 = vector.broadcast %44 : vector<1x128xf32> to vector<64x128xf32>
    %49 = arith.mulf %22, %48 : vector<64x128xf32>
    %50 = vector.broadcast %47 : vector<1x128xf32> to vector<64x128xf32>
    %51 = arith.addf %49, %50 : vector<64x128xf32>
    %c0_19 = arith.constant 0 : index
    %c0_20 = arith.constant 0 : index
    %c0_21 = arith.constant 0 : index
    %52 = vector.load %arg3[%c0_19, %c0_20, %c0_21] : memref<9x128x128xf32, #tpu.memory_space<vmem>>, vector<1x128x128xf32>
    %53 = vector.shape_cast %52 : vector<1x128x128xf32> to vector<128x128xf32>
    %cst_22 = arith.constant dense<0.000000e+00> : vector<64x128xf32>
    %54 = tpu.matmul %51, %53, %cst_22 {dimension_numbers = #tpu.dot_dimension_numbers<[1], [0], [0], [1], [0, 0, 1, 1], [], []>, precision = #tpu.contract_precision<fp32>} : vector<64x128xf32>, vector<128x128xf32>, vector<64x128xf32> -> vector<64x128xf32>
    %55 = vector.extract_strided_slice %0 {offsets = [6, 0], sizes = [1, 128], strides = [1, 1]} : vector<56x128xf32> to vector<1x128xf32>
    %56 = vector.broadcast %55 : vector<1x128xf32> to vector<64x128xf32>
    %57 = arith.addf %54, %56 : vector<64x128xf32>
    %cst_23 = arith.constant 0.000000e+00 : f32
    %58 = vector.broadcast %cst_23 : f32 to vector<64x128xf32>
    %59 = arith.maximumf %57, %58 : vector<64x128xf32>
    %c8_24 = arith.constant 8 : index
    %c0_25 = arith.constant 0 : index
    %60 = vector.load %arg5[%c8_24, %c0_25] : memref<72x128xf32, #tpu.memory_space<vmem>>, vector<64x128xf32>
    tpu.vector_store %arg5[%c8_24, %c0_25], %59 {strides = array<i32>} : memref<72x128xf32, #tpu.memory_space<vmem>>, vector<64x128xf32>,
    %c6_26 = arith.constant 6 : index
    %c0_27 = arith.constant 0 : index
    %61 = vector.load %arg5[%c6_26, %c0_27] : memref<72x128xf32, #tpu.memory_space<vmem>>, vector<64x128xf32>
    %62 = vector.extract_strided_slice %0 {offsets = [7, 0], sizes = [1, 128], strides = [1, 1]} : vector<56x128xf32> to vector<1x128xf32>
    %63 = vector.broadcast %62 : vector<1x128xf32> to vector<64x128xf32>
    %64 = arith.mulf %61, %63 : vector<64x128xf32>
    %c7_28 = arith.constant 7 : index
    %c0_29 = arith.constant 0 : index
    %65 = vector.load %arg5[%c7_28, %c0_29] : memref<72x128xf32, #tpu.memory_space<vmem>>, vector<64x128xf32>
    %66 = vector.extract_strided_slice %0 {offsets = [8, 0], sizes = [1, 128], strides = [1, 1]} : vector<56x128xf32> to vector<1x128xf32>
    %67 = vector.broadcast %66 : vector<1x128xf32> to vector<64x128xf32>
    %68 = arith.mulf %65, %67 : vector<64x128xf32>
    %69 = arith.addf %64, %68 : vector<64x128xf32>
    %c8_30 = arith.constant 8 : index
    %c0_31 = arith.constant 0 : index
    %70 = vector.load %arg5[%c8_30, %c0_31] : memref<72x128xf32, #tpu.memory_space<vmem>>, vector<64x128xf32>
    %71 = vector.extract_strided_slice %0 {offsets = [9, 0], sizes = [1, 128], strides = [1, 1]} : vector<56x128xf32> to vector<1x128xf32>
    %72 = vector.broadcast %71 : vector<1x128xf32> to vector<64x128xf32>
    %73 = arith.mulf %70, %72 : vector<64x128xf32>
    %74 = arith.addf %69, %73 : vector<64x128xf32>
    %75 = vector.extract_strided_slice %0 {offsets = [10, 0], sizes = [1, 128], strides = [1, 1]} : vector<56x128xf32> to vector<1x128xf32>
    %76 = vector.broadcast %75 : vector<1x128xf32> to vector<64x128xf32>
    %77 = arith.addf %74, %76 : vector<64x128xf32>
    %c6_i32 = arith.constant 6 : i32
    %78 = vector.broadcast %c6_i32 : i32 to vector<64x128xi32>
    %79 = arith.cmpi sge, %1, %78 : vector<64x128xi32>
    %cst_32 = arith.constant 0.000000e+00 : f32
    %80 = vector.broadcast %cst_32 : f32 to vector<64x128xf32>
    %81 = arith.select %79, %77, %80 : vector<64x128xi1>, vector<64x128xf32>
    %cst_33 = arith.constant dense<0.000000e+00> : vector<128xf32>
    %82 = vector.multi_reduction <add>, %81, %cst_33 [0] : vector<64x128xf32> to vector<128xf32>
    %83 = vector.shape_cast %82 : vector<128xf32> to vector<1x128xf32>
    %cst_34 = arith.constant 0.0192307699 : f32
    %84 = vector.broadcast %cst_34 : f32 to vector<1x128xf32>
    %85 = arith.mulf %83, %84 : vector<1x128xf32>
    %86 = vector.broadcast %85 : vector<1x128xf32> to vector<64x128xf32>
    %87 = arith.subf %77, %86 : vector<64x128xf32>
    %cst_35 = arith.constant 0.000000e+00 : f32
    %88 = vector.broadcast %cst_35 : f32 to vector<64x128xf32>
    %89 = arith.select %79, %87, %88 : vector<64x128xi1>, vector<64x128xf32>
    %90 = arith.mulf %89, %89 : vector<64x128xf32>
    %cst_36 = arith.constant dense<0.000000e+00> : vector<128xf32>
    %91 = vector.multi_reduction <add>, %90, %cst_36 [0] : vector<64x128xf32> to vector<128xf32>
    %92 = vector.shape_cast %91 : vector<128xf32> to vector<1x128xf32>
    %cst_37 = arith.constant 0.0192307699 : f32
    %93 = vector.broadcast %cst_37 : f32 to vector<1x128xf32>
    %94 = arith.mulf %92, %93 : vector<1x128xf32>
    %cst_38 = arith.constant 9.99999974E-6 : f32
    %95 = vector.broadcast %cst_38 : f32 to vector<1x128xf32>
    %96 = arith.addf %94, %95 : vector<1x128xf32>
    %97 = math.rsqrt %96 : vector<1x128xf32>
    %98 = vector.extract_strided_slice %0 {offsets = [11, 0], sizes = [1, 128], strides = [1, 1]} : vector<56x128xf32> to vector<1x128xf32>
    %99 = arith.mulf %97, %98 : vector<1x128xf32>
    %100 = vector.extract_strided_slice %0 {offsets = [12, 0], sizes = [1, 128], strides = [1, 1]} : vector<56x128xf32> to vector<1x128xf32>
    %101 = arith.mulf %85, %99 : vector<1x128xf32>
    %102 = arith.subf %100, %101 : vector<1x128xf32>
    %103 = vector.broadcast %99 : vector<1x128xf32> to vector<64x128xf32>
    %104 = arith.mulf %77, %103 : vector<64x128xf32>
    %105 = vector.broadcast %102 : vector<1x128xf32> to vector<64x128xf32>
    %106 = arith.addf %104, %105 : vector<64x128xf32>
    %c1 = arith.constant 1 : index
    %c0_39 = arith.constant 0 : index
    %c0_40 = arith.constant 0 : index
    %107 = vector.load %arg3[%c1, %c0_39, %c0_40] : memref<9x128x128xf32, #tpu.memory_space<vmem>>, vector<1x128x128xf32>
    %108 = vector.shape_cast %107 : vector<1x128x128xf32> to vector<128x128xf32>
    %cst_41 = arith.constant dense<0.000000e+00> : vector<64x128xf32>
    %109 = tpu.matmul %106, %108, %cst_41 {dimension_numbers = #tpu.dot_dimension_numbers<[1], [0], [0], [1], [0, 0, 1, 1], [], []>, precision = #tpu.contract_precision<fp32>} : vector<64x128xf32>, vector<128x128xf32>, vector<64x128xf32> -> vector<64x128xf32>
    %110 = vector.extract_strided_slice %0 {offsets = [13, 0], sizes = [1, 128], strides = [1, 1]} : vector<56x128xf32> to vector<1x128xf32>
    %111 = vector.broadcast %110 : vector<1x128xf32> to vector<64x128xf32>
    %112 = arith.addf %109, %111 : vector<64x128xf32>
    %c6_i32_42 = arith.constant 6 : i32
    %113 = vector.broadcast %c6_i32_42 : i32 to vector<64x128xi32>
    %114 = arith.cmpi sge, %1, %113 : vector<64x128xi32>
    %cst_43 = arith.constant 0.000000e+00 : f32
    %115 = vector.broadcast %cst_43 : f32 to vector<64x128xf32>
    %116 = arith.select %114, %112, %115 : vector<64x128xi1>, vector<64x128xf32>
    %cst_44 = arith.constant dense<0.000000e+00> : vector<128xf32>
    %117 = vector.multi_reduction <add>, %116, %cst_44 [0] : vector<64x128xf32> to vector<128xf32>
    %118 = vector.shape_cast %117 : vector<128xf32> to vector<1x128xf32>
    %cst_45 = arith.constant 0.0192307699 : f32
    %119 = vector.broadcast %cst_45 : f32 to vector<1x128xf32>
    %120 = arith.mulf %118, %119 : vector<1x128xf32>
    %121 = vector.broadcast %120 : vector<1x128xf32> to vector<64x128xf32>
    %122 = arith.subf %112, %121 : vector<64x128xf32>
    %cst_46 = arith.constant 0.000000e+00 : f32
    %123 = vector.broadcast %cst_46 : f32 to vector<64x128xf32>
    %124 = arith.select %114, %122, %123 : vector<64x128xi1>, vector<64x128xf32>
    %125 = arith.mulf %124, %124 : vector<64x128xf32>
    %cst_47 = arith.constant dense<0.000000e+00> : vector<128xf32>
    %126 = vector.multi_reduction <add>, %125, %cst_47 [0] : vector<64x128xf32> to vector<128xf32>
    %127 = vector.shape_cast %126 : vector<128xf32> to vector<1x128xf32>
    %cst_48 = arith.constant 0.0192307699 : f32
    %128 = vector.broadcast %cst_48 : f32 to vector<1x128xf32>
    %129 = arith.mulf %127, %128 : vector<1x128xf32>
    %cst_49 = arith.constant 9.99999974E-6 : f32
    %130 = vector.broadcast %cst_49 : f32 to vector<1x128xf32>
    %131 = arith.addf %129, %130 : vector<1x128xf32>
    %132 = math.rsqrt %131 : vector<1x128xf32>
    %133 = vector.extract_strided_slice %0 {offsets = [14, 0], sizes = [1, 128], strides = [1, 1]} : vector<56x128xf32> to vector<1x128xf32>
    %134 = arith.mulf %132, %133 : vector<1x128xf32>
    %135 = vector.extract_strided_slice %0 {offsets = [15, 0], sizes = [1, 128], strides = [1, 1]} : vector<56x128xf32> to vector<1x128xf32>
    %136 = arith.mulf %120, %134 : vector<1x128xf32>
    %137 = arith.subf %135, %136 : vector<1x128xf32>
    %138 = vector.broadcast %134 : vector<1x128xf32> to vector<64x128xf32>
    %139 = arith.mulf %112, %138 : vector<64x128xf32>
    %140 = vector.broadcast %137 : vector<1x128xf32> to vector<64x128xf32>
    %141 = arith.addf %139, %140 : vector<64x128xf32>
    %cst_50 = arith.constant 0.000000e+00 : f32
    %142 = vector.broadcast %cst_50 : f32 to vector<64x128xf32>
    %143 = arith.maximumf %141, %142 : vector<64x128xf32>
    %c2 = arith.constant 2 : index
    %c0_51 = arith.constant 0 : index
    %c0_52 = arith.constant 0 : index
    %144 = vector.load %arg3[%c2, %c0_51, %c0_52] : memref<9x128x128xf32, #tpu.memory_space<vmem>>, vector<1x128x128xf32>
    %145 = vector.shape_cast %144 : vector<1x128x128xf32> to vector<128x128xf32>
    %cst_53 = arith.constant dense<0.000000e+00> : vector<64x128xf32>
    %146 = tpu.matmul %143, %145, %cst_53 {dimension_numbers = #tpu.dot_dimension_numbers<[1], [0], [0], [1], [0, 0, 1, 1], [], []>, precision = #tpu.contract_precision<fp32>} : vector<64x128xf32>, vector<128x128xf32>, vector<64x128xf32> -> vector<64x128xf32>
    %147 = vector.extract_strided_slice %0 {offsets = [16, 0], sizes = [1, 128], strides = [1, 1]} : vector<56x128xf32> to vector<1x128xf32>
    %148 = vector.broadcast %147 : vector<1x128xf32> to vector<64x128xf32>
    %149 = arith.addf %146, %148 : vector<64x128xf32>
    %c6_i32_54 = arith.constant 6 : i32
    %150 = vector.broadcast %c6_i32_54 : i32 to vector<64x128xi32>
    %151 = arith.cmpi sge, %1, %150 : vector<64x128xi32>
    %cst_55 = arith.constant 0.000000e+00 : f32
    %152 = vector.broadcast %cst_55 : f32 to vector<64x128xf32>
    %153 = arith.select %151, %149, %152 : vector<64x128xi1>, vector<64x128xf32>
    %cst_56 = arith.constant dense<0.000000e+00> : vector<128xf32>
    %154 = vector.multi_reduction <add>, %153, %cst_56 [0] : vector<64x128xf32> to vector<128xf32>
    %155 = vector.shape_cast %154 : vector<128xf32> to vector<1x128xf32>
    %cst_57 = arith.constant 0.0192307699 : f32
    %156 = vector.broadcast %cst_57 : f32 to vector<1x128xf32>
    %157 = arith.mulf %155, %156 : vector<1x128xf32>
    %158 = vector.broadcast %157 : vector<1x128xf32> to vector<64x128xf32>
    %159 = arith.subf %149, %158 : vector<64x128xf32>
    %cst_58 = arith.constant 0.000000e+00 : f32
    %160 = vector.broadcast %cst_58 : f32 to vector<64x128xf32>
    %161 = arith.select %151, %159, %160 : vector<64x128xi1>, vector<64x128xf32>
    %162 = arith.mulf %161, %161 : vector<64x128xf32>
    %cst_59 = arith.constant dense<0.000000e+00> : vector<128xf32>
    %163 = vector.multi_reduction <add>, %162, %cst_59 [0] : vector<64x128xf32> to vector<128xf32>
    %164 = vector.shape_cast %163 : vector<128xf32> to vector<1x128xf32>
    %cst_60 = arith.constant 0.0192307699 : f32
    %165 = vector.broadcast %cst_60 : f32 to vector<1x128xf32>
    %166 = arith.mulf %164, %165 : vector<1x128xf32>
    %cst_61 = arith.constant 9.99999974E-6 : f32
    %167 = vector.broadcast %cst_61 : f32 to vector<1x128xf32>
    %168 = arith.addf %166, %167 : vector<1x128xf32>
    %169 = math.rsqrt %168 : vector<1x128xf32>
    %170 = vector.extract_strided_slice %0 {offsets = [17, 0], sizes = [1, 128], strides = [1, 1]} : vector<56x128xf32> to vector<1x128xf32>
    %171 = arith.mulf %169, %170 : vector<1x128xf32>
    %172 = vector.extract_strided_slice %0 {offsets = [18, 0], sizes = [1, 128], strides = [1, 1]} : vector<56x128xf32> to vector<1x128xf32>
    %173 = arith.mulf %157, %171 : vector<1x128xf32>
    %174 = arith.subf %172, %173 : vector<1x128xf32>
    %175 = vector.broadcast %171 : vector<1x128xf32> to vector<64x128xf32>
    %176 = arith.mulf %149, %175 : vector<64x128xf32>
    %177 = vector.broadcast %174 : vector<1x128xf32> to vector<64x128xf32>
    %178 = arith.addf %176, %177 : vector<64x128xf32>
    %179 = arith.addf %178, %59 : vector<64x128xf32>
    %cst_62 = arith.constant 0.000000e+00 : f32
    %180 = vector.broadcast %cst_62 : f32 to vector<64x128xf32>
    %181 = arith.maximumf %179, %180 : vector<64x128xf32>
    %c8_63 = arith.constant 8 : index
    %c0_64 = arith.constant 0 : index
    %182 = vector.load %arg5[%c8_63, %c0_64] : memref<72x128xf32, #tpu.memory_space<vmem>>, vector<64x128xf32>
    tpu.vector_store %arg5[%c8_63, %c0_64], %181 {strides = array<i32>} : memref<72x128xf32, #tpu.memory_space<vmem>>, vector<64x128xf32>,
    %c4 = arith.constant 4 : index
    %c0_65 = arith.constant 0 : index
    %183 = vector.load %arg5[%c4, %c0_65] : memref<72x128xf32, #tpu.memory_space<vmem>>, vector<64x128xf32>
    %184 = vector.extract_strided_slice %0 {offsets = [19, 0], sizes = [1, 128], strides = [1, 1]} : vector<56x128xf32> to vector<1x128xf32>
    %185 = vector.broadcast %184 : vector<1x128xf32> to vector<64x128xf32>
    %186 = arith.mulf %183, %185 : vector<64x128xf32>
    %c6_66 = arith.constant 6 : index
    %c0_67 = arith.constant 0 : index
    %187 = vector.load %arg5[%c6_66, %c0_67] : memref<72x128xf32, #tpu.memory_space<vmem>>, vector<64x128xf32>
    %188 = vector.extract_strided_slice %0 {offsets = [20, 0], sizes = [1, 128], strides = [1, 1]} : vector<56x128xf32> to vector<1x128xf32>
    %189 = vector.broadcast %188 : vector<1x128xf32> to vector<64x128xf32>
    %190 = arith.mulf %187, %189 : vector<64x128xf32>
    %191 = arith.addf %186, %190 : vector<64x128xf32>
    %c8_68 = arith.constant 8 : index
    %c0_69 = arith.constant 0 : index
    %192 = vector.load %arg5[%c8_68, %c0_69] : memref<72x128xf32, #tpu.memory_space<vmem>>, vector<64x128xf32>
    %193 = vector.extract_strided_slice %0 {offsets = [21, 0], sizes = [1, 128], strides = [1, 1]} : vector<56x128xf32> to vector<1x128xf32>
    %194 = vector.broadcast %193 : vector<1x128xf32> to vector<64x128xf32>
    %195 = arith.mulf %192, %194 : vector<64x128xf32>
    %196 = arith.addf %191, %195 : vector<64x128xf32>
    %197 = vector.extract_strided_slice %0 {offsets = [22, 0], sizes = [1, 128], strides = [1, 1]} : vector<56x128xf32> to vector<1x128xf32>
    %198 = vector.broadcast %197 : vector<1x128xf32> to vector<64x128xf32>
    %199 = arith.addf %196, %198 : vector<64x128xf32>
    %c10_i32 = arith.constant 10 : i32
    %200 = vector.broadcast %c10_i32 : i32 to vector<64x128xi32>
    %201 = arith.cmpi sge, %1, %200 : vector<64x128xi32>
    %cst_70 = arith.constant 0.000000e+00 : f32
    %202 = vector.broadcast %cst_70 : f32 to vector<64x128xf32>
    %203 = arith.select %201, %199, %202 : vector<64x128xi1>, vector<64x128xf32>
    %cst_71 = arith.constant dense<0.000000e+00> : vector<128xf32>
    %204 = vector.multi_reduction <add>, %203, %cst_71 [0] : vector<64x128xf32> to vector<128xf32>
    %205 = vector.shape_cast %204 : vector<128xf32> to vector<1x128xf32>
    %cst_72 = arith.constant 0.0227272734 : f32
    %206 = vector.broadcast %cst_72 : f32 to vector<1x128xf32>
    %207 = arith.mulf %205, %206 : vector<1x128xf32>
    %208 = vector.broadcast %207 : vector<1x128xf32> to vector<64x128xf32>
    %209 = arith.subf %199, %208 : vector<64x128xf32>
    %cst_73 = arith.constant 0.000000e+00 : f32
    %210 = vector.broadcast %cst_73 : f32 to vector<64x128xf32>
    %211 = arith.select %201, %209, %210 : vector<64x128xi1>, vector<64x128xf32>
    %212 = arith.mulf %211, %211 : vector<64x128xf32>
    %cst_74 = arith.constant dense<0.000000e+00> : vector<128xf32>
    %213 = vector.multi_reduction <add>, %212, %cst_74 [0] : vector<64x128xf32> to vector<128xf32>
    %214 = vector.shape_cast %213 : vector<128xf32> to vector<1x128xf32>
    %cst_75 = arith.constant 0.0227272734 : f32
    %215 = vector.broadcast %cst_75 : f32 to vector<1x128xf32>
    %216 = arith.mulf %214, %215 : vector<1x128xf32>
    %cst_76 = arith.constant 9.99999974E-6 : f32
    %217 = vector.broadcast %cst_76 : f32 to vector<1x128xf32>
    %218 = arith.addf %216, %217 : vector<1x128xf32>
    %219 = math.rsqrt %218 : vector<1x128xf32>
    %220 = vector.extract_strided_slice %0 {offsets = [23, 0], sizes = [1, 128], strides = [1, 1]} : vector<56x128xf32> to vector<1x128xf32>
    %221 = arith.mulf %219, %220 : vector<1x128xf32>
    %222 = vector.extract_strided_slice %0 {offsets = [24, 0], sizes = [1, 128], strides = [1, 1]} : vector<56x128xf32> to vector<1x128xf32>
    %223 = arith.mulf %207, %221 : vector<1x128xf32>
    %224 = arith.subf %222, %223 : vector<1x128xf32>
    %225 = vector.broadcast %221 : vector<1x128xf32> to vector<64x128xf32>
    %226 = arith.mulf %199, %225 : vector<64x128xf32>
    %227 = vector.broadcast %224 : vector<1x128xf32> to vector<64x128xf32>
    %228 = arith.addf %226, %227 : vector<64x128xf32>
    %c3 = arith.constant 3 : index
    %c0_77 = arith.constant 0 : index
    %c0_78 = arith.constant 0 : index
    %229 = vector.load %arg3[%c3, %c0_77, %c0_78] : memref<9x128x128xf32, #tpu.memory_space<vmem>>, vector<1x128x128xf32>
    %230 = vector.shape_cast %229 : vector<1x128x128xf32> to vector<128x128xf32>
    %cst_79 = arith.constant dense<0.000000e+00> : vector<64x128xf32>
    %231 = tpu.matmul %228, %230, %cst_79 {dimension_numbers = #tpu.dot_dimension_numbers<[1], [0], [0], [1], [0, 0, 1, 1], [], []>, precision = #tpu.contract_precision<fp32>} : vector<64x128xf32>, vector<128x128xf32>, vector<64x128xf32> -> vector<64x128xf32>
    %232 = vector.extract_strided_slice %0 {offsets = [25, 0], sizes = [1, 128], strides = [1, 1]} : vector<56x128xf32> to vector<1x128xf32>
    %233 = vector.broadcast %232 : vector<1x128xf32> to vector<64x128xf32>
    %234 = arith.addf %231, %233 : vector<64x128xf32>
    %c10_i32_80 = arith.constant 10 : i32
    %235 = vector.broadcast %c10_i32_80 : i32 to vector<64x128xi32>
    %236 = arith.cmpi sge, %1, %235 : vector<64x128xi32>
    %cst_81 = arith.constant 0.000000e+00 : f32
    %237 = vector.broadcast %cst_81 : f32 to vector<64x128xf32>
    %238 = arith.select %236, %234, %237 : vector<64x128xi1>, vector<64x128xf32>
    %cst_82 = arith.constant dense<0.000000e+00> : vector<128xf32>
    %239 = vector.multi_reduction <add>, %238, %cst_82 [0] : vector<64x128xf32> to vector<128xf32>
    %240 = vector.shape_cast %239 : vector<128xf32> to vector<1x128xf32>
    %cst_83 = arith.constant 0.0227272734 : f32
    %241 = vector.broadcast %cst_83 : f32 to vector<1x128xf32>
    %242 = arith.mulf %240, %241 : vector<1x128xf32>
    %243 = vector.broadcast %242 : vector<1x128xf32> to vector<64x128xf32>
    %244 = arith.subf %234, %243 : vector<64x128xf32>
    %cst_84 = arith.constant 0.000000e+00 : f32
    %245 = vector.broadcast %cst_84 : f32 to vector<64x128xf32>
    %246 = arith.select %236, %244, %245 : vector<64x128xi1>, vector<64x128xf32>
    %247 = arith.mulf %246, %246 : vector<64x128xf32>
    %cst_85 = arith.constant dense<0.000000e+00> : vector<128xf32>
    %248 = vector.multi_reduction <add>, %247, %cst_85 [0] : vector<64x128xf32> to vector<128xf32>
    %249 = vector.shape_cast %248 : vector<128xf32> to vector<1x128xf32>
    %cst_86 = arith.constant 0.0227272734 : f32
    %250 = vector.broadcast %cst_86 : f32 to vector<1x128xf32>
    %251 = arith.mulf %249, %250 : vector<1x128xf32>
    %cst_87 = arith.constant 9.99999974E-6 : f32
    %252 = vector.broadcast %cst_87 : f32 to vector<1x128xf32>
    %253 = arith.addf %251, %252 : vector<1x128xf32>
    %254 = math.rsqrt %253 : vector<1x128xf32>
    %255 = vector.extract_strided_slice %0 {offsets = [26, 0], sizes = [1, 128], strides = [1, 1]} : vector<56x128xf32> to vector<1x128xf32>
    %256 = arith.mulf %254, %255 : vector<1x128xf32>
    %257 = vector.extract_strided_slice %0 {offsets = [27, 0], sizes = [1, 128], strides = [1, 1]} : vector<56x128xf32> to vector<1x128xf32>
    %258 = arith.mulf %242, %256 : vector<1x128xf32>
    %259 = arith.subf %257, %258 : vector<1x128xf32>
    %260 = vector.broadcast %256 : vector<1x128xf32> to vector<64x128xf32>
    %261 = arith.mulf %234, %260 : vector<64x128xf32>
    %262 = vector.broadcast %259 : vector<1x128xf32> to vector<64x128xf32>
    %263 = arith.addf %261, %262 : vector<64x128xf32>
    %cst_88 = arith.constant 0.000000e+00 : f32
    %264 = vector.broadcast %cst_88 : f32 to vector<64x128xf32>
    %265 = arith.maximumf %263, %264 : vector<64x128xf32>
    %c4_89 = arith.constant 4 : index
    %c0_90 = arith.constant 0 : index
    %c0_91 = arith.constant 0 : index
    %266 = vector.load %arg3[%c4_89, %c0_90, %c0_91] : memref<9x128x128xf32, #tpu.memory_space<vmem>>, vector<1x128x128xf32>
    %267 = vector.shape_cast %266 : vector<1x128x128xf32> to vector<128x128xf32>
    %cst_92 = arith.constant dense<0.000000e+00> : vector<64x128xf32>
    %268 = tpu.matmul %265, %267, %cst_92 {dimension_numbers = #tpu.dot_dimension_numbers<[1], [0], [0], [1], [0, 0, 1, 1], [], []>, precision = #tpu.contract_precision<fp32>} : vector<64x128xf32>, vector<128x128xf32>, vector<64x128xf32> -> vector<64x128xf32>
    %269 = vector.extract_strided_slice %0 {offsets = [28, 0], sizes = [1, 128], strides = [1, 1]} : vector<56x128xf32> to vector<1x128xf32>
    %270 = vector.broadcast %269 : vector<1x128xf32> to vector<64x128xf32>
    %271 = arith.addf %268, %270 : vector<64x128xf32>
    %c10_i32_93 = arith.constant 10 : i32
    %272 = vector.broadcast %c10_i32_93 : i32 to vector<64x128xi32>
    %273 = arith.cmpi sge, %1, %272 : vector<64x128xi32>
    %cst_94 = arith.constant 0.000000e+00 : f32
    %274 = vector.broadcast %cst_94 : f32 to vector<64x128xf32>
    %275 = arith.select %273, %271, %274 : vector<64x128xi1>, vector<64x128xf32>
    %cst_95 = arith.constant dense<0.000000e+00> : vector<128xf32>
    %276 = vector.multi_reduction <add>, %275, %cst_95 [0] : vector<64x128xf32> to vector<128xf32>
    %277 = vector.shape_cast %276 : vector<128xf32> to vector<1x128xf32>
    %cst_96 = arith.constant 0.0227272734 : f32
    %278 = vector.broadcast %cst_96 : f32 to vector<1x128xf32>
    %279 = arith.mulf %277, %278 : vector<1x128xf32>
    %280 = vector.broadcast %279 : vector<1x128xf32> to vector<64x128xf32>
    %281 = arith.subf %271, %280 : vector<64x128xf32>
    %cst_97 = arith.constant 0.000000e+00 : f32
    %282 = vector.broadcast %cst_97 : f32 to vector<64x128xf32>
    %283 = arith.select %273, %281, %282 : vector<64x128xi1>, vector<64x128xf32>
    %284 = arith.mulf %283, %283 : vector<64x128xf32>
    %cst_98 = arith.constant dense<0.000000e+00> : vector<128xf32>
    %285 = vector.multi_reduction <add>, %284, %cst_98 [0] : vector<64x128xf32> to vector<128xf32>
    %286 = vector.shape_cast %285 : vector<128xf32> to vector<1x128xf32>
    %cst_99 = arith.constant 0.0227272734 : f32
    %287 = vector.broadcast %cst_99 : f32 to vector<1x128xf32>
    %288 = arith.mulf %286, %287 : vector<1x128xf32>
    %cst_100 = arith.constant 9.99999974E-6 : f32
    %289 = vector.broadcast %cst_100 : f32 to vector<1x128xf32>
    %290 = arith.addf %288, %289 : vector<1x128xf32>
    %291 = math.rsqrt %290 : vector<1x128xf32>
    %292 = vector.extract_strided_slice %0 {offsets = [29, 0], sizes = [1, 128], strides = [1, 1]} : vector<56x128xf32> to vector<1x128xf32>
    %293 = arith.mulf %291, %292 : vector<1x128xf32>
    %294 = vector.extract_strided_slice %0 {offsets = [30, 0], sizes = [1, 128], strides = [1, 1]} : vector<56x128xf32> to vector<1x128xf32>
    %295 = arith.mulf %279, %293 : vector<1x128xf32>
    %296 = arith.subf %294, %295 : vector<1x128xf32>
    %297 = vector.broadcast %293 : vector<1x128xf32> to vector<64x128xf32>
    %298 = arith.mulf %271, %297 : vector<64x128xf32>
    %299 = vector.broadcast %296 : vector<1x128xf32> to vector<64x128xf32>
    %300 = arith.addf %298, %299 : vector<64x128xf32>
    %301 = arith.addf %300, %181 : vector<64x128xf32>
    %cst_101 = arith.constant 0.000000e+00 : f32
    %302 = vector.broadcast %cst_101 : f32 to vector<64x128xf32>
    %303 = arith.maximumf %301, %302 : vector<64x128xf32>
    %c8_102 = arith.constant 8 : index
    %c0_103 = arith.constant 0 : index
    %304 = vector.load %arg5[%c8_102, %c0_103] : memref<72x128xf32, #tpu.memory_space<vmem>>, vector<64x128xf32>
    tpu.vector_store %arg5[%c8_102, %c0_103], %303 {strides = array<i32>} : memref<72x128xf32, #tpu.memory_space<vmem>>, vector<64x128xf32>,
    %c6_104 = arith.constant 6 : index
    %c0_105 = arith.constant 0 : index
    %305 = vector.load %arg5[%c6_104, %c0_105] : memref<72x128xf32, #tpu.memory_space<vmem>>, vector<64x128xf32>
    %306 = vector.extract_strided_slice %0 {offsets = [31, 0], sizes = [1, 128], strides = [1, 1]} : vector<56x128xf32> to vector<1x128xf32>
    %307 = vector.broadcast %306 : vector<1x128xf32> to vector<64x128xf32>
    %308 = arith.mulf %305, %307 : vector<64x128xf32>
    %c7_106 = arith.constant 7 : index
    %c0_107 = arith.constant 0 : index
    %309 = vector.load %arg5[%c7_106, %c0_107] : memref<72x128xf32, #tpu.memory_space<vmem>>, vector<64x128xf32>
    %310 = vector.extract_strided_slice %0 {offsets = [32, 0], sizes = [1, 128], strides = [1, 1]} : vector<56x128xf32> to vector<1x128xf32>
    %311 = vector.broadcast %310 : vector<1x128xf32> to vector<64x128xf32>
    %312 = arith.mulf %309, %311 : vector<64x128xf32>
    %313 = arith.addf %308, %312 : vector<64x128xf32>
    %c8_108 = arith.constant 8 : index
    %c0_109 = arith.constant 0 : index
    %314 = vector.load %arg5[%c8_108, %c0_109] : memref<72x128xf32, #tpu.memory_space<vmem>>, vector<64x128xf32>
    %315 = vector.extract_strided_slice %0 {offsets = [33, 0], sizes = [1, 128], strides = [1, 1]} : vector<56x128xf32> to vector<1x128xf32>
    %316 = vector.broadcast %315 : vector<1x128xf32> to vector<64x128xf32>
    %317 = arith.mulf %314, %316 : vector<64x128xf32>
    %318 = arith.addf %313, %317 : vector<64x128xf32>
    %319 = vector.extract_strided_slice %0 {offsets = [34, 0], sizes = [1, 128], strides = [1, 1]} : vector<56x128xf32> to vector<1x128xf32>
    %320 = vector.broadcast %319 : vector<1x128xf32> to vector<64x128xf32>
    %321 = arith.addf %318, %320 : vector<64x128xf32>
    %c12_i32 = arith.constant 12 : i32
    %322 = vector.broadcast %c12_i32 : i32 to vector<64x128xi32>
    %323 = arith.cmpi sge, %1, %322 : vector<64x128xi32>
    %cst_110 = arith.constant 0.000000e+00 : f32
    %324 = vector.broadcast %cst_110 : f32 to vector<64x128xf32>
    %325 = arith.select %323, %321, %324 : vector<64x128xi1>, vector<64x128xf32>
    %cst_111 = arith.constant dense<0.000000e+00> : vector<128xf32>
    %326 = vector.multi_reduction <add>, %325, %cst_111 [0] : vector<64x128xf32> to vector<128xf32>
    %327 = vector.shape_cast %326 : vector<128xf32> to vector<1x128xf32>
    %cst_112 = arith.constant 2.500000e-02 : f32
    %328 = vector.broadcast %cst_112 : f32 to vector<1x128xf32>
    %329 = arith.mulf %327, %328 : vector<1x128xf32>
    %330 = vector.broadcast %329 : vector<1x128xf32> to vector<64x128xf32>
    %331 = arith.subf %321, %330 : vector<64x128xf32>
    %cst_113 = arith.constant 0.000000e+00 : f32
    %332 = vector.broadcast %cst_113 : f32 to vector<64x128xf32>
    %333 = arith.select %323, %331, %332 : vector<64x128xi1>, vector<64x128xf32>
    %334 = arith.mulf %333, %333 : vector<64x128xf32>
    %cst_114 = arith.constant dense<0.000000e+00> : vector<128xf32>
    %335 = vector.multi_reduction <add>, %334, %cst_114 [0] : vector<64x128xf32> to vector<128xf32>
    %336 = vector.shape_cast %335 : vector<128xf32> to vector<1x128xf32>
    %cst_115 = arith.constant 2.500000e-02 : f32
    %337 = vector.broadcast %cst_115 : f32 to vector<1x128xf32>
    %338 = arith.mulf %336, %337 : vector<1x128xf32>
    %cst_116 = arith.constant 9.99999974E-6 : f32
    %339 = vector.broadcast %cst_116 : f32 to vector<1x128xf32>
    %340 = arith.addf %338, %339 : vector<1x128xf32>
    %341 = math.rsqrt %340 : vector<1x128xf32>
    %342 = vector.extract_strided_slice %0 {offsets = [35, 0], sizes = [1, 128], strides = [1, 1]} : vector<56x128xf32> to vector<1x128xf32>
    %343 = arith.mulf %341, %342 : vector<1x128xf32>
    %344 = vector.extract_strided_slice %0 {offsets = [36, 0], sizes = [1, 128], strides = [1, 1]} : vector<56x128xf32> to vector<1x128xf32>
    %345 = arith.mulf %329, %343 : vector<1x128xf32>
    %346 = arith.subf %344, %345 : vector<1x128xf32>
    %347 = vector.broadcast %343 : vector<1x128xf32> to vector<64x128xf32>
    %348 = arith.mulf %321, %347 : vector<64x128xf32>
    %349 = vector.broadcast %346 : vector<1x128xf32> to vector<64x128xf32>
    %350 = arith.addf %348, %349 : vector<64x128xf32>
    %c5 = arith.constant 5 : index
    %c0_117 = arith.constant 0 : index
    %c0_118 = arith.constant 0 : index
    %351 = vector.load %arg3[%c5, %c0_117, %c0_118] : memref<9x128x128xf32, #tpu.memory_space<vmem>>, vector<1x128x128xf32>
    %352 = vector.shape_cast %351 : vector<1x128x128xf32> to vector<128x128xf32>
    %cst_119 = arith.constant dense<0.000000e+00> : vector<64x128xf32>
    %353 = tpu.matmul %350, %352, %cst_119 {dimension_numbers = #tpu.dot_dimension_numbers<[1], [0], [0], [1], [0, 0, 1, 1], [], []>, precision = #tpu.contract_precision<fp32>} : vector<64x128xf32>, vector<128x128xf32>, vector<64x128xf32> -> vector<64x128xf32>
    %354 = vector.extract_strided_slice %0 {offsets = [37, 0], sizes = [1, 128], strides = [1, 1]} : vector<56x128xf32> to vector<1x128xf32>
    %355 = vector.broadcast %354 : vector<1x128xf32> to vector<64x128xf32>
    %356 = arith.addf %353, %355 : vector<64x128xf32>
    %c12_i32_120 = arith.constant 12 : i32
    %357 = vector.broadcast %c12_i32_120 : i32 to vector<64x128xi32>
    %358 = arith.cmpi sge, %1, %357 : vector<64x128xi32>
    %cst_121 = arith.constant 0.000000e+00 : f32
    %359 = vector.broadcast %cst_121 : f32 to vector<64x128xf32>
    %360 = arith.select %358, %356, %359 : vector<64x128xi1>, vector<64x128xf32>
    %cst_122 = arith.constant dense<0.000000e+00> : vector<128xf32>
    %361 = vector.multi_reduction <add>, %360, %cst_122 [0] : vector<64x128xf32> to vector<128xf32>
    %362 = vector.shape_cast %361 : vector<128xf32> to vector<1x128xf32>
    %cst_123 = arith.constant 2.500000e-02 : f32
    %363 = vector.broadcast %cst_123 : f32 to vector<1x128xf32>
    %364 = arith.mulf %362, %363 : vector<1x128xf32>
    %365 = vector.broadcast %364 : vector<1x128xf32> to vector<64x128xf32>
    %366 = arith.subf %356, %365 : vector<64x128xf32>
    %cst_124 = arith.constant 0.000000e+00 : f32
    %367 = vector.broadcast %cst_124 : f32 to vector<64x128xf32>
    %368 = arith.select %358, %366, %367 : vector<64x128xi1>, vector<64x128xf32>
    %369 = arith.mulf %368, %368 : vector<64x128xf32>
    %cst_125 = arith.constant dense<0.000000e+00> : vector<128xf32>
    %370 = vector.multi_reduction <add>, %369, %cst_125 [0] : vector<64x128xf32> to vector<128xf32>
    %371 = vector.shape_cast %370 : vector<128xf32> to vector<1x128xf32>
    %cst_126 = arith.constant 2.500000e-02 : f32
    %372 = vector.broadcast %cst_126 : f32 to vector<1x128xf32>
    %373 = arith.mulf %371, %372 : vector<1x128xf32>
    %cst_127 = arith.constant 9.99999974E-6 : f32
    %374 = vector.broadcast %cst_127 : f32 to vector<1x128xf32>
    %375 = arith.addf %373, %374 : vector<1x128xf32>
    %376 = math.rsqrt %375 : vector<1x128xf32>
    %377 = vector.extract_strided_slice %0 {offsets = [38, 0], sizes = [1, 128], strides = [1, 1]} : vector<56x128xf32> to vector<1x128xf32>
    %378 = arith.mulf %376, %377 : vector<1x128xf32>
    %379 = vector.extract_strided_slice %0 {offsets = [39, 0], sizes = [1, 128], strides = [1, 1]} : vector<56x128xf32> to vector<1x128xf32>
    %380 = arith.mulf %364, %378 : vector<1x128xf32>
    %381 = arith.subf %379, %380 : vector<1x128xf32>
    %382 = vector.broadcast %378 : vector<1x128xf32> to vector<64x128xf32>
    %383 = arith.mulf %356, %382 : vector<64x128xf32>
    %384 = vector.broadcast %381 : vector<1x128xf32> to vector<64x128xf32>
    %385 = arith.addf %383, %384 : vector<64x128xf32>
    %cst_128 = arith.constant 0.000000e+00 : f32
    %386 = vector.broadcast %cst_128 : f32 to vector<64x128xf32>
    %387 = arith.maximumf %385, %386 : vector<64x128xf32>
    %c6_129 = arith.constant 6 : index
    %c0_130 = arith.constant 0 : index
    %c0_131 = arith.constant 0 : index
    %388 = vector.load %arg3[%c6_129, %c0_130, %c0_131] : memref<9x128x128xf32, #tpu.memory_space<vmem>>, vector<1x128x128xf32>
    %389 = vector.shape_cast %388 : vector<1x128x128xf32> to vector<128x128xf32>
    %cst_132 = arith.constant dense<0.000000e+00> : vector<64x128xf32>
    %390 = tpu.matmul %387, %389, %cst_132 {dimension_numbers = #tpu.dot_dimension_numbers<[1], [0], [0], [1], [0, 0, 1, 1], [], []>, precision = #tpu.contract_precision<fp32>} : vector<64x128xf32>, vector<128x128xf32>, vector<64x128xf32> -> vector<64x128xf32>
    %391 = vector.extract_strided_slice %0 {offsets = [40, 0], sizes = [1, 128], strides = [1, 1]} : vector<56x128xf32> to vector<1x128xf32>
    %392 = vector.broadcast %391 : vector<1x128xf32> to vector<64x128xf32>
    %393 = arith.addf %390, %392 : vector<64x128xf32>
    %c12_i32_133 = arith.constant 12 : i32
    %394 = vector.broadcast %c12_i32_133 : i32 to vector<64x128xi32>
    %395 = arith.cmpi sge, %1, %394 : vector<64x128xi32>
    %cst_134 = arith.constant 0.000000e+00 : f32
    %396 = vector.broadcast %cst_134 : f32 to vector<64x128xf32>
    %397 = arith.select %395, %393, %396 : vector<64x128xi1>, vector<64x128xf32>
    %cst_135 = arith.constant dense<0.000000e+00> : vector<128xf32>
    %398 = vector.multi_reduction <add>, %397, %cst_135 [0] : vector<64x128xf32> to vector<128xf32>
    %399 = vector.shape_cast %398 : vector<128xf32> to vector<1x128xf32>
    %cst_136 = arith.constant 2.500000e-02 : f32
    %400 = vector.broadcast %cst_136 : f32 to vector<1x128xf32>
    %401 = arith.mulf %399, %400 : vector<1x128xf32>
    %402 = vector.broadcast %401 : vector<1x128xf32> to vector<64x128xf32>
    %403 = arith.subf %393, %402 : vector<64x128xf32>
    %cst_137 = arith.constant 0.000000e+00 : f32
    %404 = vector.broadcast %cst_137 : f32 to vector<64x128xf32>
    %405 = arith.select %395, %403, %404 : vector<64x128xi1>, vector<64x128xf32>
    %406 = arith.mulf %405, %405 : vector<64x128xf32>
    %cst_138 = arith.constant dense<0.000000e+00> : vector<128xf32>
    %407 = vector.multi_reduction <add>, %406, %cst_138 [0] : vector<64x128xf32> to vector<128xf32>
    %408 = vector.shape_cast %407 : vector<128xf32> to vector<1x128xf32>
    %cst_139 = arith.constant 2.500000e-02 : f32
    %409 = vector.broadcast %cst_139 : f32 to vector<1x128xf32>
    %410 = arith.mulf %408, %409 : vector<1x128xf32>
    %cst_140 = arith.constant 9.99999974E-6 : f32
    %411 = vector.broadcast %cst_140 : f32 to vector<1x128xf32>
    %412 = arith.addf %410, %411 : vector<1x128xf32>
    %413 = math.rsqrt %412 : vector<1x128xf32>
    %414 = vector.extract_strided_slice %0 {offsets = [41, 0], sizes = [1, 128], strides = [1, 1]} : vector<56x128xf32> to vector<1x128xf32>
    %415 = arith.mulf %413, %414 : vector<1x128xf32>
    %416 = vector.extract_strided_slice %0 {offsets = [42, 0], sizes = [1, 128], strides = [1, 1]} : vector<56x128xf32> to vector<1x128xf32>
    %417 = arith.mulf %401, %415 : vector<1x128xf32>
    %418 = arith.subf %416, %417 : vector<1x128xf32>
    %419 = vector.broadcast %415 : vector<1x128xf32> to vector<64x128xf32>
    %420 = arith.mulf %393, %419 : vector<64x128xf32>
    %421 = vector.broadcast %418 : vector<1x128xf32> to vector<64x128xf32>
    %422 = arith.addf %420, %421 : vector<64x128xf32>
    %423 = arith.addf %422, %303 : vector<64x128xf32>
    %cst_141 = arith.constant 0.000000e+00 : f32
    %424 = vector.broadcast %cst_141 : f32 to vector<64x128xf32>
    %425 = arith.maximumf %423, %424 : vector<64x128xf32>
    %c8_142 = arith.constant 8 : index
    %c0_143 = arith.constant 0 : index
    %426 = vector.load %arg5[%c8_142, %c0_143] : memref<72x128xf32, #tpu.memory_space<vmem>>, vector<64x128xf32>
    tpu.vector_store %arg5[%c8_142, %c0_143], %425 {strides = array<i32>} : memref<72x128xf32, #tpu.memory_space<vmem>>, vector<64x128xf32>,
    %c4_144 = arith.constant 4 : index
    %c0_145 = arith.constant 0 : index
    %427 = vector.load %arg5[%c4_144, %c0_145] : memref<72x128xf32, #tpu.memory_space<vmem>>, vector<64x128xf32>
    %428 = vector.extract_strided_slice %0 {offsets = [43, 0], sizes = [1, 128], strides = [1, 1]} : vector<56x128xf32> to vector<1x128xf32>
    %429 = vector.broadcast %428 : vector<1x128xf32> to vector<64x128xf32>
    %430 = arith.mulf %427, %429 : vector<64x128xf32>
    %c6_146 = arith.constant 6 : index
    %c0_147 = arith.constant 0 : index
    %431 = vector.load %arg5[%c6_146, %c0_147] : memref<72x128xf32, #tpu.memory_space<vmem>>, vector<64x128xf32>
    %432 = vector.extract_strided_slice %0 {offsets = [44, 0], sizes = [1, 128], strides = [1, 1]} : vector<56x128xf32> to vector<1x128xf32>
    %433 = vector.broadcast %432 : vector<1x128xf32> to vector<64x128xf32>
    %434 = arith.mulf %431, %433 : vector<64x128xf32>
    %435 = arith.addf %430, %434 : vector<64x128xf32>
    %c8_148 = arith.constant 8 : index
    %c0_149 = arith.constant 0 : index
    %436 = vector.load %arg5[%c8_148, %c0_149] : memref<72x128xf32, #tpu.memory_space<vmem>>, vector<64x128xf32>
    %437 = vector.extract_strided_slice %0 {offsets = [45, 0], sizes = [1, 128], strides = [1, 1]} : vector<56x128xf32> to vector<1x128xf32>
    %438 = vector.broadcast %437 : vector<1x128xf32> to vector<64x128xf32>
    %439 = arith.mulf %436, %438 : vector<64x128xf32>
    %440 = arith.addf %435, %439 : vector<64x128xf32>
    %441 = vector.extract_strided_slice %0 {offsets = [46, 0], sizes = [1, 128], strides = [1, 1]} : vector<56x128xf32> to vector<1x128xf32>
    %442 = vector.broadcast %441 : vector<1x128xf32> to vector<64x128xf32>
    %443 = arith.addf %440, %442 : vector<64x128xf32>
    %c16_i32 = arith.constant 16 : i32
    %444 = vector.broadcast %c16_i32 : i32 to vector<64x128xi32>
    %445 = arith.cmpi sge, %1, %444 : vector<64x128xi32>
    %cst_150 = arith.constant 0.000000e+00 : f32
    %446 = vector.broadcast %cst_150 : f32 to vector<64x128xf32>
    %447 = arith.select %445, %443, %446 : vector<64x128xi1>, vector<64x128xf32>
    %cst_151 = arith.constant dense<0.000000e+00> : vector<128xf32>
    %448 = vector.multi_reduction <add>, %447, %cst_151 [0] : vector<64x128xf32> to vector<128xf32>
    %449 = vector.shape_cast %448 : vector<128xf32> to vector<1x128xf32>
    %cst_152 = arith.constant 3.125000e-02 : f32
    %450 = vector.broadcast %cst_152 : f32 to vector<1x128xf32>
    %451 = arith.mulf %449, %450 : vector<1x128xf32>
    %452 = vector.broadcast %451 : vector<1x128xf32> to vector<64x128xf32>
    %453 = arith.subf %443, %452 : vector<64x128xf32>
    %cst_153 = arith.constant 0.000000e+00 : f32
    %454 = vector.broadcast %cst_153 : f32 to vector<64x128xf32>
    %455 = arith.select %445, %453, %454 : vector<64x128xi1>, vector<64x128xf32>
    %456 = arith.mulf %455, %455 : vector<64x128xf32>
    %cst_154 = arith.constant dense<0.000000e+00> : vector<128xf32>
    %457 = vector.multi_reduction <add>, %456, %cst_154 [0] : vector<64x128xf32> to vector<128xf32>
    %458 = vector.shape_cast %457 : vector<128xf32> to vector<1x128xf32>
    %cst_155 = arith.constant 3.125000e-02 : f32
    %459 = vector.broadcast %cst_155 : f32 to vector<1x128xf32>
    %460 = arith.mulf %458, %459 : vector<1x128xf32>
    %cst_156 = arith.constant 9.99999974E-6 : f32
    %461 = vector.broadcast %cst_156 : f32 to vector<1x128xf32>
    %462 = arith.addf %460, %461 : vector<1x128xf32>
    %463 = math.rsqrt %462 : vector<1x128xf32>
    %464 = vector.extract_strided_slice %0 {offsets = [47, 0], sizes = [1, 128], strides = [1, 1]} : vector<56x128xf32> to vector<1x128xf32>
    %465 = arith.mulf %463, %464 : vector<1x128xf32>
    %466 = vector.extract_strided_slice %0 {offsets = [48, 0], sizes = [1, 128], strides = [1, 1]} : vector<56x128xf32> to vector<1x128xf32>
    %467 = arith.mulf %451, %465 : vector<1x128xf32>
    %468 = arith.subf %466, %467 : vector<1x128xf32>
    %469 = vector.broadcast %465 : vector<1x128xf32> to vector<64x128xf32>
    %470 = arith.mulf %443, %469 : vector<64x128xf32>
    %471 = vector.broadcast %468 : vector<1x128xf32> to vector<64x128xf32>
    %472 = arith.addf %470, %471 : vector<64x128xf32>
    %c7_157 = arith.constant 7 : index
    %c0_158 = arith.constant 0 : index
    %c0_159 = arith.constant 0 : index
    %473 = vector.load %arg3[%c7_157, %c0_158, %c0_159] : memref<9x128x128xf32, #tpu.memory_space<vmem>>, vector<1x128x128xf32>
    %474 = vector.shape_cast %473 : vector<1x128x128xf32> to vector<128x128xf32>
    %cst_160 = arith.constant dense<0.000000e+00> : vector<64x128xf32>
    %475 = tpu.matmul %472, %474, %cst_160 {dimension_numbers = #tpu.dot_dimension_numbers<[1], [0], [0], [1], [0, 0, 1, 1], [], []>, precision = #tpu.contract_precision<fp32>} : vector<64x128xf32>, vector<128x128xf32>, vector<64x128xf32> -> vector<64x128xf32>
    %476 = vector.extract_strided_slice %0 {offsets = [49, 0], sizes = [1, 128], strides = [1, 1]} : vector<56x128xf32> to vector<1x128xf32>
    %477 = vector.broadcast %476 : vector<1x128xf32> to vector<64x128xf32>
    %478 = arith.addf %475, %477 : vector<64x128xf32>
    %c16_i32_161 = arith.constant 16 : i32
    %479 = vector.broadcast %c16_i32_161 : i32 to vector<64x128xi32>
    %480 = arith.cmpi sge, %1, %479 : vector<64x128xi32>
    %cst_162 = arith.constant 0.000000e+00 : f32
    %481 = vector.broadcast %cst_162 : f32 to vector<64x128xf32>
    %482 = arith.select %480, %478, %481 : vector<64x128xi1>, vector<64x128xf32>
    %cst_163 = arith.constant dense<0.000000e+00> : vector<128xf32>
    %483 = vector.multi_reduction <add>, %482, %cst_163 [0] : vector<64x128xf32> to vector<128xf32>
    %484 = vector.shape_cast %483 : vector<128xf32> to vector<1x128xf32>
    %cst_164 = arith.constant 3.125000e-02 : f32
    %485 = vector.broadcast %cst_164 : f32 to vector<1x128xf32>
    %486 = arith.mulf %484, %485 : vector<1x128xf32>
    %487 = vector.broadcast %486 : vector<1x128xf32> to vector<64x128xf32>
    %488 = arith.subf %478, %487 : vector<64x128xf32>
    %cst_165 = arith.constant 0.000000e+00 : f32
    %489 = vector.broadcast %cst_165 : f32 to vector<64x128xf32>
    %490 = arith.select %480, %488, %489 : vector<64x128xi1>, vector<64x128xf32>
    %491 = arith.mulf %490, %490 : vector<64x128xf32>
    %cst_166 = arith.constant dense<0.000000e+00> : vector<128xf32>
    %492 = vector.multi_reduction <add>, %491, %cst_166 [0] : vector<64x128xf32> to vector<128xf32>
    %493 = vector.shape_cast %492 : vector<128xf32> to vector<1x128xf32>
    %cst_167 = arith.constant 3.125000e-02 : f32
    %494 = vector.broadcast %cst_167 : f32 to vector<1x128xf32>
    %495 = arith.mulf %493, %494 : vector<1x128xf32>
    %cst_168 = arith.constant 9.99999974E-6 : f32
    %496 = vector.broadcast %cst_168 : f32 to vector<1x128xf32>
    %497 = arith.addf %495, %496 : vector<1x128xf32>
    %498 = math.rsqrt %497 : vector<1x128xf32>
    %499 = vector.extract_strided_slice %0 {offsets = [50, 0], sizes = [1, 128], strides = [1, 1]} : vector<56x128xf32> to vector<1x128xf32>
    %500 = arith.mulf %498, %499 : vector<1x128xf32>
    %501 = vector.extract_strided_slice %0 {offsets = [51, 0], sizes = [1, 128], strides = [1, 1]} : vector<56x128xf32> to vector<1x128xf32>
    %502 = arith.mulf %486, %500 : vector<1x128xf32>
    %503 = arith.subf %501, %502 : vector<1x128xf32>
    %504 = vector.broadcast %500 : vector<1x128xf32> to vector<64x128xf32>
    %505 = arith.mulf %478, %504 : vector<64x128xf32>
    %506 = vector.broadcast %503 : vector<1x128xf32> to vector<64x128xf32>
    %507 = arith.addf %505, %506 : vector<64x128xf32>
    %cst_169 = arith.constant 0.000000e+00 : f32
    %508 = vector.broadcast %cst_169 : f32 to vector<64x128xf32>
    %509 = arith.maximumf %507, %508 : vector<64x128xf32>
    %c8_170 = arith.constant 8 : index
    %c0_171 = arith.constant 0 : index
    %c0_172 = arith.constant 0 : index
    %510 = vector.load %arg3[%c8_170, %c0_171, %c0_172] : memref<9x128x128xf32, #tpu.memory_space<vmem>>, vector<1x128x128xf32>
    %511 = vector.shape_cast %510 : vector<1x128x128xf32> to vector<128x128xf32>
    %cst_173 = arith.constant dense<0.000000e+00> : vector<64x128xf32>
    %512 = tpu.matmul %509, %511, %cst_173 {dimension_numbers = #tpu.dot_dimension_numbers<[1], [0], [0], [1], [0, 0, 1, 1], [], []>, precision = #tpu.contract_precision<fp32>} : vector<64x128xf32>, vector<128x128xf32>, vector<64x128xf32> -> vector<64x128xf32>
    %513 = vector.extract_strided_slice %0 {offsets = [52, 0], sizes = [1, 128], strides = [1, 1]} : vector<56x128xf32> to vector<1x128xf32>
    %514 = vector.broadcast %513 : vector<1x128xf32> to vector<64x128xf32>
    %515 = arith.addf %512, %514 : vector<64x128xf32>
    %c16_i32_174 = arith.constant 16 : i32
    %516 = vector.broadcast %c16_i32_174 : i32 to vector<64x128xi32>
    %517 = arith.cmpi sge, %1, %516 : vector<64x128xi32>
    %cst_175 = arith.constant 0.000000e+00 : f32
    %518 = vector.broadcast %cst_175 : f32 to vector<64x128xf32>
    %519 = arith.select %517, %515, %518 : vector<64x128xi1>, vector<64x128xf32>
    %cst_176 = arith.constant dense<0.000000e+00> : vector<128xf32>
    %520 = vector.multi_reduction <add>, %519, %cst_176 [0] : vector<64x128xf32> to vector<128xf32>
    %521 = vector.shape_cast %520 : vector<128xf32> to vector<1x128xf32>
    %cst_177 = arith.constant 3.125000e-02 : f32
    %522 = vector.broadcast %cst_177 : f32 to vector<1x128xf32>
    %523 = arith.mulf %521, %522 : vector<1x128xf32>
    %524 = vector.broadcast %523 : vector<1x128xf32> to vector<64x128xf32>
    %525 = arith.subf %515, %524 : vector<64x128xf32>
    %cst_178 = arith.constant 0.000000e+00 : f32
    %526 = vector.broadcast %cst_178 : f32 to vector<64x128xf32>
    %527 = arith.select %517, %525, %526 : vector<64x128xi1>, vector<64x128xf32>
    %528 = arith.mulf %527, %527 : vector<64x128xf32>
    %cst_179 = arith.constant dense<0.000000e+00> : vector<128xf32>
    %529 = vector.multi_reduction <add>, %528, %cst_179 [0] : vector<64x128xf32> to vector<128xf32>
    %530 = vector.shape_cast %529 : vector<128xf32> to vector<1x128xf32>
    %cst_180 = arith.constant 3.125000e-02 : f32
    %531 = vector.broadcast %cst_180 : f32 to vector<1x128xf32>
    %532 = arith.mulf %530, %531 : vector<1x128xf32>
    %cst_181 = arith.constant 9.99999974E-6 : f32
    %533 = vector.broadcast %cst_181 : f32 to vector<1x128xf32>
    %534 = arith.addf %532, %533 : vector<1x128xf32>
    %535 = math.rsqrt %534 : vector<1x128xf32>
    %536 = vector.extract_strided_slice %0 {offsets = [53, 0], sizes = [1, 128], strides = [1, 1]} : vector<56x128xf32> to vector<1x128xf32>
    %537 = arith.mulf %535, %536 : vector<1x128xf32>
    %538 = vector.extract_strided_slice %0 {offsets = [54, 0], sizes = [1, 128], strides = [1, 1]} : vector<56x128xf32> to vector<1x128xf32>
    %539 = arith.mulf %523, %537 : vector<1x128xf32>
    %540 = arith.subf %538, %539 : vector<1x128xf32>
    %541 = vector.broadcast %537 : vector<1x128xf32> to vector<64x128xf32>
    %542 = arith.mulf %515, %541 : vector<64x128xf32>
    %543 = vector.broadcast %540 : vector<1x128xf32> to vector<64x128xf32>
    %544 = arith.addf %542, %543 : vector<64x128xf32>
    %545 = arith.addf %544, %425 : vector<64x128xf32>
    %cst_182 = arith.constant 0.000000e+00 : f32
    %546 = vector.broadcast %cst_182 : f32 to vector<64x128xf32>
    %547 = arith.maximumf %545, %546 : vector<64x128xf32>
    %548 = arith.addf %303, %547 : vector<64x128xf32>
    %549 = vector.extract_strided_slice %548 {offsets = [16, 0], sizes = [16, 128], strides = [1, 1]} : vector<64x128xf32> to vector<16x128xf32>
    %c0_183 = arith.constant 0 : index
    %c0_184 = arith.constant 0 : index
    %c0_185 = arith.constant 0 : index
    %550 = vector.load %arg4[%c0_183, %c0_184, %c0_185] : memref<2x16x128xf32, #tpu.memory_space<vmem>>, vector<1x16x128xf32>
    %551 = vector.shape_cast %550 : vector<1x16x128xf32> to vector<16x128xf32>
    %552 = vector.shape_cast %549 : vector<16x128xf32> to vector<1x16x128xf32>
    tpu.vector_store %arg4[%c0_183, %c0_184, %c0_185], %552 {strides = array<i32>} : memref<2x16x128xf32, #tpu.memory_space<vmem>>, vector<1x16x128xf32>,
    %553 = vector.extract_strided_slice %548 {offsets = [48, 0], sizes = [16, 128], strides = [1, 1]} : vector<64x128xf32> to vector<16x128xf32>
    %c1_186 = arith.constant 1 : index
    %c0_187 = arith.constant 0 : index
    %c0_188 = arith.constant 0 : index
    %554 = vector.load %arg4[%c1_186, %c0_187, %c0_188] : memref<2x16x128xf32, #tpu.memory_space<vmem>>, vector<1x16x128xf32>
    %555 = vector.shape_cast %554 : vector<1x16x128xf32> to vector<16x128xf32>
    %556 = vector.shape_cast %553 : vector<16x128xf32> to vector<1x16x128xf32>
    tpu.vector_store %arg4[%c1_186, %c0_187, %c0_188], %556 {strides = array<i32>} : memref<2x16x128xf32, #tpu.memory_space<vmem>>, vector<1x16x128xf32>,
    return
  }
}

</mosaic_0001>

<llo_original>
// kernel: tpu_custom_call.1
$region0: #{tpu_custom_call.1}
  #allocation0 [shape = 'u32[]', space=smem, size = 0x4, offset = 0x4, fixed_abs, tag = 'smem constant byte address 0x4 - core index']
  #allocation1 [shape = 'u32[144,128]{1,0:T(1,128)}', space=vmem, size = 0x12000, scoped, tag = 'internal scratch']
  #allocation2 [shape = 'f32[72,128]{1,0:T(8,128)}', space=vmem, size = 0x9000, scoped, tag = 'scratch operand']
  %s0 = inlined_call_operand.hbm [shape: f32[64,128], index: 0, kind: input, shape index: {}]
  %s1 = inlined_call_operand.hbm [shape: s32[64,128], index: 1, kind: input, shape index: {}]
  %s2 = inlined_call_operand.hbm [shape: f32[56,128], index: 2, kind: input, shape index: {}]
  %s3 = inlined_call_operand.hbm [shape: f32[9,128,128], index: 3, kind: input, shape index: {}]
  %s4 = inlined_call_operand.hbm [shape: f32[2,16,128], index: 4, kind: output, shape index: {}]
  %s5 = sld [smem:[#allocation0]]
  $region42: #{tpu_custom_call.1} parent=0
    _
  %s7 = ssub.s32 1, %s5
  %s8 = scalar_select 0, %s7, %s5
  $region1: #{tpu_custom_call.1} parent=0
    #allocation3 [shape = 'u8[32768]{0}', space=vmem, size = 0x8000, scoped, tag = 'input window, operand 0, single buffered']
    #allocation4 [shape = 's32[1]{0}', space=sflag, size = 0x4, scoped, tag = 'scoped memory for tpu_custom_call.1']
    #allocation5 [shape = 's32[1]{0}', space=sflag, size = 0x4, scoped, tag = 'scoped memory for tpu_custom_call.1']
    #allocation6 [shape = 'u8[32768]{0}', space=vmem, size = 0x8000, scoped, tag = 'input window, operand 1, single buffered']
    #allocation7 [shape = 's32[1]{0}', space=sflag, size = 0x4, scoped, tag = 'scoped memory for tpu_custom_call.1']
    #allocation8 [shape = 'u8[28672]{0}', space=vmem, size = 0x7000, scoped, tag = 'input window, operand 2, single buffered']
    #allocation9 [shape = 'u8[589824]{0}', space=vmem, size = 0x90000, scoped, tag = 'input window, operand 3, single buffered']
    #allocation10 [shape = 's32[1]{0}', space=sflag, size = 0x4, scoped, tag = 'scoped memory for tpu_custom_call.1']
    #allocation11 [shape = 'u8[16384]{0}', space=vmem, size = 0x4000, scoped, tag = 'output window, operand 0, single buffered']
    %9 = vsyncpa [#allocation4], 0
    %10 = vsyncpa [#allocation7], 0
    %11 = vsyncpa [#allocation10], 0
    %12 = vsyncpa [#allocation5], 0
    // Predicated region
    $region2: #{tpu_custom_call.1} parent=1 // pred_check
      _
    $region3: #{tpu_custom_call.1} parent=1 // pred_check_branch
      %14 = sbr.rel (0) target = $region5
    $region4: #{tpu_custom_call.1} parent=1 // pred_region
      %s16 = ssub.s32 1024, 1024
      %17 = vsyncadd [#allocation4], %s16
      %s18 = sshll.u32 [#allocation3], 4
      %s19 = int_to_ptr.vmem [resolvable:$true] %s18
      %24 = dma.hbm_to_vmem [thread:$0]  %s0, 1024, %s19, [#allocation4], 128, 128, 8
    $region5: #{tpu_custom_call.1} parent=1 // pred_fallthru
      _
    // Predicated region
    $region6: #{tpu_custom_call.1} parent=1 // pred_check
      _
    $region7: #{tpu_custom_call.1} parent=1 // pred_check_branch
      %26 = sbr.rel (0) target = $region9
    $region8: #{tpu_custom_call.1} parent=1 // pred_region
      %s28 = ssub.s32 1024, 1024
      %29 = vsyncadd [#allocation7], %s28
      %s30 = sshll.u32 [#allocation6], 4
      %s31 = int_to_ptr.vmem [resolvable:$true] %s30
      %36 = dma.hbm_to_vmem [thread:$0]  %s1, 1024, %s31, [#allocation7], 128, 128, 8
    $region9: #{tpu_custom_call.1} parent=1 // pred_fallthru
      _
    // Predicated region
    $region10: #{tpu_custom_call.1} parent=1 // pred_check
      _
    $region11: #{tpu_custom_call.1} parent=1 // pred_check_branch
      %38 = sbr.rel (0) target = $region13
    $region12: #{tpu_custom_call.1} parent=1 // pred_region
      %s40 = ssub.s32 896, 896
      %41 = vsyncadd [#allocation7], %s40
      %s42 = sshll.u32 [#allocation8], 4
      %s43 = int_to_ptr.vmem [resolvable:$true] %s42
      %48 = dma.hbm_to_vmem [thread:$0]  %s2, 896, %s43, [#allocation7], 128, 128, 8
    $region13: #{tpu_custom_call.1} parent=1 // pred_fallthru
      _
    // Predicated region
    $region14: #{tpu_custom_call.1} parent=1 // pred_check
      _
    $region15: #{tpu_custom_call.1} parent=1 // pred_check_branch
      %50 = sbr.rel (0) target = $region17
    $region16: #{tpu_custom_call.1} parent=1 // pred_region
      %s52 = ssub.s32 18432, 18432
      %53 = vsyncadd [#allocation10], %s52
      %s54 = sshll.u32 [#allocation9], 4
      %s55 = int_to_ptr.vmem [resolvable:$true] %s54
      %60 = dma.hbm_to_vmem [thread:$0]  %s3, 18432, %s55, [#allocation10], 128, 128, 8
    $region17: #{tpu_custom_call.1} parent=1 // pred_fallthru
      _
    // Predicated region
    $region18: #{tpu_custom_call.1} parent=1 // pred_check
      _
    $region19: #{tpu_custom_call.1} parent=1 // pred_check_branch
      %62 = sbr.rel (0) target = $region21
    $region20: #{tpu_custom_call.1} parent=1 // pred_region
      %63 = dma.done [#allocation4], 1024
    $region21: #{tpu_custom_call.1} parent=1 // pred_fallthru
      _
    // Predicated region
    $region22: #{tpu_custom_call.1} parent=1 // pred_check
      _
    $region23: #{tpu_custom_call.1} parent=1 // pred_check_branch
      %65 = sbr.rel (0) target = $region25
    $region24: #{tpu_custom_call.1} parent=1 // pred_region
      %66 = dma.done [#allocation7], 1024
    $region25: #{tpu_custom_call.1} parent=1 // pred_fallthru
      _
    // Predicated region
    $region26: #{tpu_custom_call.1} parent=1 // pred_check
      _
    $region27: #{tpu_custom_call.1} parent=1 // pred_check_branch
      %68 = sbr.rel (0) target = $region29
    $region28: #{tpu_custom_call.1} parent=1 // pred_region
      %69 = dma.done [#allocation7], 896
    $region29: #{tpu_custom_call.1} parent=1 // pred_fallthru
      _
    // Predicated region
    $region30: #{tpu_custom_call.1} parent=1 // pred_check
      _
    $region31: #{tpu_custom_call.1} parent=1 // pred_check_branch
      %71 = sbr.rel (0) target = $region33
    $region32: #{tpu_custom_call.1} parent=1 // pred_region
      %72 = dma.done [#allocation10], 18432
    $region33: #{tpu_custom_call.1} parent=1 // pred_fallthru
      _
    %v73 = vld [vmem:[#allocation8] sm:$0xff]
    %v74 = vld [vmem:[#allocation8 + $0x8] sm:$0xff]
    %v75 = vld [vmem:[#allocation8 + $0x10] sm:$0xff]
    %v76 = vld [vmem:[#allocation8 + $0x18] sm:$0xff]
    %v77 = vld [vmem:[#allocation8 + $0x20] sm:$0xff]
    %v78 = vld [vmem:[#allocation8 + $0x28] sm:$0xff]
    %v79 = vld [vmem:[#allocation8 + $0x30] sm:$0xff]
    %v80 = vld [vmem:[#allocation6] sm:$0xff]
    %v81 = vld [vmem:[#allocation6 + $0x8] sm:$0xff]
    %v82 = vld [vmem:[#allocation6 + $0x10] sm:$0xff]
    %v83 = vld [vmem:[#allocation6 + $0x18] sm:$0xff]
    %v84 = vld [vmem:[#allocation6 + $0x20] sm:$0xff]
    %v85 = vld [vmem:[#allocation6 + $0x28] sm:$0xff]
    %v86 = vld [vmem:[#allocation6 + $0x30] sm:$0xff]
    %v87 = vld [vmem:[#allocation6 + $0x38] sm:$0xff]
    %88 = vst [vmem:[#allocation2] sm:$0xff] 0.0
    %v89 = vld [vmem:[#allocation3] sm:$0xff]
    %v90 = vld [vmem:[#allocation3 + $0x8] sm:$0xff]
    %v91 = vld [vmem:[#allocation3 + $0x10] sm:$0xff]
    %v92 = vld [vmem:[#allocation3 + $0x18] sm:$0xff]
    %v93 = vld [vmem:[#allocation3 + $0x20] sm:$0xff]
    %v94 = vld [vmem:[#allocation3 + $0x28] sm:$0xff]
    %v95 = vld [vmem:[#allocation3 + $0x30] sm:$0xff]
    %v96 = vld [vmem:[#allocation3 + $0x38] sm:$0xff]
    %97 = vst [vmem:[#allocation2 + $0x8] sm:$0xff] %v89
    %98 = vst [vmem:[#allocation2 + $0x10] sm:$0xff] %v90
    %99 = vst [vmem:[#allocation2 + $0x18] sm:$0xff] %v91
    %100 = vst [vmem:[#allocation2 + $0x20] sm:$0xff] %v92
    %101 = vst [vmem:[#allocation2 + $0x28] sm:$0xff] %v93
    %102 = vst [vmem:[#allocation2 + $0x30] sm:$0xff] %v94
    %103 = vst [vmem:[#allocation2 + $0x38] sm:$0xff] %v95
    %104 = vst [vmem:[#allocation2 + $0x40] sm:$0xff] %v96
    %v105 = vld [vmem:[#allocation2 + $0x6] sm:$0xff]
    %v106 = vld [vmem:[#allocation2 + $0xe] sm:$0xff]
    %v107 = vld [vmem:[#allocation2 + $0x16] sm:$0xff]
    %v108 = vld [vmem:[#allocation2 + $0x1e] sm:$0xff]
    %v109 = vld [vmem:[#allocation2 + $0x26] sm:$0xff]
    %v110 = vld [vmem:[#allocation2 + $0x2e] sm:$0xff]
    %v111 = vld [vmem:[#allocation2 + $0x36] sm:$0xff]
    %v112 = vld [vmem:[#allocation2 + $0x3e] sm:$0xff]
    %v113 = vlaneseq
    %v114 = vshrl.u32 %v113, 7
    %v115 = vsub.s32 0, %v114
    %v116 = vrot.slane %v73, %v115
    %v117 = vmul.f32 %v105, %v116
    %v118 = vmul.f32 %v106, %v116
    %v119 = vmul.f32 %v107, %v116
    %v120 = vmul.f32 %v108, %v116
    %v121 = vmul.f32 %v109, %v116
    %v122 = vmul.f32 %v110, %v116
    %v123 = vmul.f32 %v111, %v116
    %v124 = vmul.f32 %v112, %v116
    %v125 = vld [vmem:[#allocation2 + $0x7] sm:$0xff]
    %v126 = vld [vmem:[#allocation2 + $0xf] sm:$0xff]
    %v127 = vld [vmem:[#allocation2 + $0x17] sm:$0xff]
    %v128 = vld [vmem:[#allocation2 + $0x1f] sm:$0xff]
    %v129 = vld [vmem:[#allocation2 + $0x27] sm:$0xff]
    %v130 = vld [vmem:[#allocation2 + $0x2f] sm:$0xff]
    %v131 = vld [vmem:[#allocation2 + $0x37] sm:$0xff]
    %v132 = vld [vmem:[#allocation2 + $0x3f] sm:$0xff]
    %v133 = vlaneseq
    %v134 = vshrl.u32 %v133, 7
    %v135 = vsub.s32 1, %v134
    %v136 = vrot.slane %v73, %v135
    %v137 = vmul.f32 %v125, %v136
    %v138 = vmul.f32 %v126, %v136
    %v139 = vmul.f32 %v127, %v136
    %v140 = vmul.f32 %v128, %v136
    %v141 = vmul.f32 %v129, %v136
    %v142 = vmul.f32 %v130, %v136
    %v143 = vmul.f32 %v131, %v136
    %v144 = vmul.f32 %v132, %v136
    %v145 = vadd.f32 %v117, %v137
    %v146 = vadd.f32 %v118, %v138
    %v147 = vadd.f32 %v119, %v139
    %v148 = vadd.f32 %v120, %v140
    %v149 = vadd.f32 %v121, %v141
    %v150 = vadd.f32 %v122, %v142
    %v151 = vadd.f32 %v123, %v143
    %v152 = vadd.f32 %v124, %v144
    %v153 = vld [vmem:[#allocation2 + $0x8] sm:$0xff]
    %v154 = vld [vmem:[#allocation2 + $0x10] sm:$0xff]
    %v155 = vld [vmem:[#allocation2 + $0x18] sm:$0xff]
    %v156 = vld [vmem:[#allocation2 + $0x20] sm:$0xff]
    %v157 = vld [vmem:[#allocation2 + $0x28] sm:$0xff]
    %v158 = vld [vmem:[#allocation2 + $0x30] sm:$0xff]
    %v159 = vld [vmem:[#allocation2 + $0x38] sm:$0xff]
    %v160 = vld [vmem:[#allocation2 + $0x40] sm:$0xff]
    %v161 = vlaneseq
    %v162 = vshrl.u32 %v161, 7
    %v163 = vsub.s32 2, %v162
    %v164 = vrot.slane %v73, %v163
    %v165 = vmul.f32 %v153, %v164
    %v166 = vmul.f32 %v154, %v164
    %v167 = vmul.f32 %v155, %v164
    %v168 = vmul.f32 %v156, %v164
    %v169 = vmul.f32 %v157, %v164
    %v170 = vmul.f32 %v158, %v164
    %v171 = vmul.f32 %v159, %v164
    %v172 = vmul.f32 %v160, %v164
    %v173 = vadd.f32 %v145, %v165
    %v174 = vadd.f32 %v146, %v166
    %v175 = vadd.f32 %v147, %v167
    %v176 = vadd.f32 %v148, %v168
    %v177 = vadd.f32 %v149, %v169
    %v178 = vadd.f32 %v150, %v170
    %v179 = vadd.f32 %v151, %v171
    %v180 = vadd.f32 %v152, %v172
    %v181 = vlaneseq
    %v182 = vshrl.u32 %v181, 7
    %v183 = vsub.s32 3, %v182
    %v184 = vrot.slane %v73, %v183
    %v185 = vadd.f32 %v173, %v184
    %v186 = vadd.f32 %v174, %v184
    %v187 = vadd.f32 %v175, %v184
    %v188 = vadd.f32 %v176, %v184
    %v189 = vadd.f32 %v177, %v184
    %v190 = vadd.f32 %v178, %v184
    %v191 = vadd.f32 %v179, %v184
    %v192 = vadd.f32 %v180, %v184
    %vm193 = vcmp.ge.s32.totalorder %v80, 4
    %vm194 = vcmp.ge.s32.totalorder %v81, 4
    %vm195 = vcmp.ge.s32.totalorder %v82, 4
    %vm196 = vcmp.ge.s32.totalorder %v83, 4
    %vm197 = vcmp.ge.s32.totalorder %v84, 4
    %vm198 = vcmp.ge.s32.totalorder %v85, 4
    %vm199 = vcmp.ge.s32.totalorder %v86, 4
    %vm200 = vcmp.ge.s32.totalorder %v87, 4
    %v201 = vsel %vm193, %v185, 0.0
    %v202 = vsel %vm194, %v186, 0.0
    %v203 = vsel %vm195, %v187, 0.0
    %v204 = vsel %vm196, %v188, 0.0
    %v205 = vsel %vm197, %v189, 0.0
    %v206 = vsel %vm198, %v190, 0.0
    %v207 = vsel %vm199, %v191, 0.0
    %v208 = vsel %vm200, %v192, 0.0
    %v209 = vadd.f32 %v201, %v202
    %v210 = vadd.f32 %v209, %v203
    %v211 = vadd.f32 %v210, %v204
    %v212 = vadd.f32 %v211, %v205
    %v213 = vadd.f32 %v212, %v206
    %v214 = vadd.f32 %v213, %v207
    %v215 = vadd.f32 %v214, %v208
    %v216 = vrot.slane %v215, 4
    %v217 = vadd.f32 %v215, %v216
    %v218 = vrot.slane %v217, 2
    %v219 = vadd.f32 %v217, %v218
    %v220 = vrot.slane %v219, 1
    %v221 = vadd.f32 %v219, %v220
    %v222 = vmul.f32 %v221, 0.017857144
    %v223 = vsub.f32 %v185, %v222
    %v224 = vsub.f32 %v186, %v222
    %v225 = vsub.f32 %v187, %v222
    %v226 = vsub.f32 %v188, %v222
    %v227 = vsub.f32 %v189, %v222
    %v228 = vsub.f32 %v190, %v222
    %v229 = vsub.f32 %v191, %v222
    %v230 = vsub.f32 %v192, %v222
    %v231 = vsel %vm193, %v223, 0.0
    %v232 = vsel %vm194, %v224, 0.0
    %v233 = vsel %vm195, %v225, 0.0
    %v234 = vsel %vm196, %v226, 0.0
    %v235 = vsel %vm197, %v227, 0.0
    %v236 = vsel %vm198, %v228, 0.0
    %v237 = vsel %vm199, %v229, 0.0
    %v238 = vsel %vm200, %v230, 0.0
    %v239 = vmul.f32 %v231, %v231
    %v240 = vmul.f32 %v232, %v232
    %v241 = vmul.f32 %v233, %v233
    %v242 = vmul.f32 %v234, %v234
    %v243 = vmul.f32 %v235, %v235
    %v244 = vmul.f32 %v236, %v236
    %v245 = vmul.f32 %v237, %v237
    %v246 = vmul.f32 %v238, %v238
    %v247 = vadd.f32 %v239, %v240
    %v248 = vadd.f32 %v247, %v241
    %v249 = vadd.f32 %v248, %v242
    %v250 = vadd.f32 %v249, %v243
    %v251 = vadd.f32 %v250, %v244
    %v252 = vadd.f32 %v251, %v245
    %v253 = vadd.f32 %v252, %v246
    %v254 = vrot.slane %v253, 4
    %v255 = vadd.f32 %v253, %v254
    %v256 = vrot.slane %v255, 2
    %v257 = vadd.f32 %v255, %v256
    %v258 = vrot.slane %v257, 1
    %v259 = vadd.f32 %v257, %v258
    %v260 = vmul.f32 %v259, 0.017857144
    %v261 = vadd.f32 %v260, 1e-05
    %v262 = vrsqrt.pop %v261
    %v263 = vmul.f32 %v262, %v73
    %v264 = vmul.f32 %v222, %v263
    %v266 = vrot.slane %v264, 7
    %v268 = vsub.f32 %v73, %v266
    %v269 = vlaneseq
    %v270 = vshrl.u32 %v269, 7
    %v271 = vsub.s32 4, %v270
    %v272 = vrot.slane %v263, %v271
    %v273 = vmul.f32 %v185, %v272
    %v274 = vmul.f32 %v186, %v272
    %v275 = vmul.f32 %v187, %v272
    %v276 = vmul.f32 %v188, %v272
    %v277 = vmul.f32 %v189, %v272
    %v278 = vmul.f32 %v190, %v272
    %v279 = vmul.f32 %v191, %v272
    %v280 = vmul.f32 %v192, %v272
    %v281 = vlaneseq
    %v282 = vshrl.u32 %v281, 7
    %v283 = vsub.s32 5, %v282
    %v284 = vrot.slane %v268, %v283
    %v285 = vadd.f32 %v273, %v284
    %v286 = vadd.f32 %v274, %v284
    %v287 = vadd.f32 %v275, %v284
    %v288 = vadd.f32 %v276, %v284
    %v289 = vadd.f32 %v277, %v284
    %v290 = vadd.f32 %v278, %v284
    %v291 = vadd.f32 %v279, %v284
    %v292 = vadd.f32 %v280, %v284
    %v293 = vld [vmem:[#allocation9] sm:$0xff]
    %v294 = vld [vmem:[#allocation9 + $0x8] sm:$0xff]
    %v295 = vld [vmem:[#allocation9 + $0x10] sm:$0xff]
    %v296 = vld [vmem:[#allocation9 + $0x18] sm:$0xff]
    %v297 = vld [vmem:[#allocation9 + $0x20] sm:$0xff]
    %v298 = vld [vmem:[#allocation9 + $0x28] sm:$0xff]
    %v299 = vld [vmem:[#allocation9 + $0x30] sm:$0xff]
    %v300 = vld [vmem:[#allocation9 + $0x38] sm:$0xff]
    %v301 = vld [vmem:[#allocation9 + $0x40] sm:$0xff]
    %v302 = vld [vmem:[#allocation9 + $0x48] sm:$0xff]
    %v303 = vld [vmem:[#allocation9 + $0x50] sm:$0xff]
    %v304 = vld [vmem:[#allocation9 + $0x58] sm:$0xff]
    %v305 = vld [vmem:[#allocation9 + $0x60] sm:$0xff]
    %v306 = vld [vmem:[#allocation9 + $0x68] sm:$0xff]
    %v307 = vld [vmem:[#allocation9 + $0x70] sm:$0xff]
    %v308 = vld [vmem:[#allocation9 + $0x78] sm:$0xff]
    %v309 = vlaneseq
    %v310 = vshrl.u32 %v309, 7
    %v311 = vsub.s32 6, %v310
    %v312 = vrot.slane %v73, %v311
    %313 = vmatprep.subr.mxu0 0.0
    %v314 = vand.u32 %v293, 4294901760
    %315 = vmatpush1.msra.mxu0 %v314
    %316 = vmatprep.subr.mxu0 0.0
    %v317 = vand.u32 %v294, 4294901760
    %318 = vmatpush1.msra.mxu0 %v317
    %319 = vmatprep.subr.mxu0 0.0
    %v320 = vand.u32 %v295, 4294901760
    %321 = vmatpush1.msra.mxu0 %v320
    %322 = vmatprep.subr.mxu0 0.0
    %v323 = vand.u32 %v296, 4294901760
    %324 = vmatpush1.msra.mxu0 %v323
    %325 = vmatprep.subr.mxu0 0.0
    %v326 = vand.u32 %v297, 4294901760
    %327 = vmatpush1.msra.mxu0 %v326
    %328 = vmatprep.subr.mxu0 0.0
    %v329 = vand.u32 %v298, 4294901760
    %330 = vmatpush1.msra.mxu0 %v329
    %331 = vmatprep.subr.mxu0 0.0
    %v332 = vand.u32 %v299, 4294901760
    %333 = vmatpush1.msra.mxu0 %v332
    %334 = vmatprep.subr.mxu0 0.0
    %v335 = vand.u32 %v300, 4294901760
    %336 = vmatpush1.msra.mxu0 %v335
    %337 = vmatprep.subr.mxu0 0.0
    %v338 = vand.u32 %v301, 4294901760
    %339 = vmatpush1.msra.mxu0 %v338
    %340 = vmatprep.subr.mxu0 0.0
    %v341 = vand.u32 %v302, 4294901760
    %342 = vmatpush1.msra.mxu0 %v341
    %343 = vmatprep.subr.mxu0 0.0
    %v344 = vand.u32 %v303, 4294901760
    %345 = vmatpush1.msra.mxu0 %v344
    %346 = vmatprep.subr.mxu0 0.0
    %v347 = vand.u32 %v304, 4294901760
    %348 = vmatpush1.msra.mxu0 %v347
    %349 = vmatprep.subr.mxu0 0.0
    %v350 = vand.u32 %v305, 4294901760
    %351 = vmatpush1.msra.mxu0 %v350
    %352 = vmatprep.subr.mxu0 0.0
    %v353 = vand.u32 %v306, 4294901760
    %354 = vmatpush1.msra.mxu0 %v353
    %355 = vmatprep.subr.mxu0 0.0
    %v356 = vand.u32 %v307, 4294901760
    %357 = vmatpush1.msra.mxu0 %v356
    %358 = vmatprep.subr.mxu0 0.0
    %v359 = vand.u32 %v308, 4294901760
    %360 = vmatpush1.msra.mxu0 %v359
    %361 = vmatprep.subr.mxu0 0.0
    %362 = vmatpush1.msra.mxu0 0.0
    %363 = vmatprep.subr.mxu0 0.0
    %364 = vmatpush1.msra.mxu0 0.0
    %365 = vmatprep.subr.mxu0 0.0
    %366 = vmatpush1.msra.mxu0 0.0
    %367 = vmatprep.subr.mxu0 0.0
    %368 = vmatpush1.msra.mxu0 0.0
    %369 = vmatprep.subr.mxu0 0.0
    %370 = vmatpush1.msra.mxu0 0.0
    %371 = vmatprep.subr.mxu0 0.0
    %372 = vmatpush1.msra.mxu0 0.0
    %373 = vmatprep.subr.mxu0 0.0
    %374 = vmatpush1.msra.mxu0 0.0
    %375 = vmatprep.subr.mxu0 0.0
    %376 = vmatpush1.msra.mxu0 0.0
    %377 = vmatprep.subr.mxu0 0.0
    %378 = vmatpush1.msra.mxu0 0.0
    %379 = vmatprep.subr.mxu0 0.0
    %380 = vmatpush1.msra.mxu0 0.0
    %381 = vmatprep.subr.mxu0 0.0
    %382 = vmatpush1.msra.mxu0 0.0
    %383 = vmatprep.subr.mxu0 0.0
    %384 = vmatpush1.msra.mxu0 0.0
    %385 = vmatprep.subr.mxu0 0.0
    %386 = vmatpush1.msra.mxu0 0.0
    %387 = vmatprep.subr.mxu0 0.0
    %388 = vmatpush1.msra.mxu0 0.0
    %389 = vmatprep.subr.mxu0 0.0
    %390 = vmatpush1.msra.mxu0 0.0
    %391 = vmatprep.subr.mxu0 0.0
    %392 = vmatpush1.msra.mxu0 0.0
    %393 = vmatprep.mubr.f32.mxu0 0.0
    %v394 = vand.u32 %v285, 4294901760
    %v395 = vsub.f32 %v285, %v394
    %v396 = vand.u32 %v395, 4294901760
    %v397 = vsub.f32 %v395, %v396
    %v398 = vand.u32 %v397, 4294901760
    %399 = vmatmul.mubr.f32.gmra.mrb[0].mxu0 %v398
    %v400 = vpop.f32.mrb[0].mxu0
    %v401 = vadd.f32 %v312, %v400
    %v402 = vpop.f32.mrb[0].mxu0
    %403 = vmatprep.mubr.f32.mxu0 0.0
    %v404 = vand.u32 %v286, 4294901760
    %v405 = vsub.f32 %v286, %v404
    %v406 = vand.u32 %v405, 4294901760
    %v407 = vsub.f32 %v405, %v406
    %v408 = vand.u32 %v407, 4294901760
    %409 = vmatmul.mubr.f32.gmra.mrb[0].mxu0 %v408
    %v410 = vpop.f32.mrb[0].mxu0
    %v411 = vadd.f32 %v312, %v410
    %v412 = vpop.f32.mrb[0].mxu0
    %413 = vmatprep.mubr.f32.mxu0 0.0
    %v414 = vand.u32 %v287, 4294901760
    %v415 = vsub.f32 %v287, %v414
    %v416 = vand.u32 %v415, 4294901760
    %v417 = vsub.f32 %v415, %v416
    %v418 = vand.u32 %v417, 4294901760
    %419 = vmatmul.mubr.f32.gmra.mrb[0].mxu0 %v418
    %v420 = vpop.f32.mrb[0].mxu0
    %v421 = vadd.f32 %v312, %v420
    %v422 = vpop.f32.mrb[0].mxu0
    %423 = vmatprep.mubr.f32.mxu0 0.0
    %v424 = vand.u32 %v288, 4294901760
    %v425 = vsub.f32 %v288, %v424
    %v426 = vand.u32 %v425, 4294901760
    %v427 = vsub.f32 %v425, %v426
    %v428 = vand.u32 %v427, 4294901760
    %429 = vmatmul.mubr.f32.gmra.mrb[0].mxu0 %v428
    %v430 = vpop.f32.mrb[0].mxu0
    %v431 = vadd.f32 %v312, %v430
    %v432 = vpop.f32.mrb[0].mxu0
    %433 = vmatprep.mubr.f32.mxu0 0.0
    %v434 = vand.u32 %v289, 4294901760
    %v435 = vsub.f32 %v289, %v434
    %v436 = vand.u32 %v435, 4294901760
    %v437 = vsub.f32 %v435, %v436
    %v438 = vand.u32 %v437, 4294901760
    %439 = vmatmul.mubr.f32.gmra.mrb[0].mxu0 %v438
    %v440 = vpop.f32.mrb[0].mxu0
    %v441 = vadd.f32 %v312, %v440
    %v442 = vpop.f32.mrb[0].mxu0
    %443 = vmatprep.mubr.f32.mxu0 0.0
    %v444 = vand.u32 %v290, 4294901760
    %v445 = vsub.f32 %v290, %v444
    %v446 = vand.u32 %v445, 4294901760
    %v447 = vsub.f32 %v445, %v446
    %v448 = vand.u32 %v447, 4294901760
    %449 = vmatmul.mubr.f32.gmra.mrb[0].mxu0 %v448
    %v450 = vpop.f32.mrb[0].mxu0
    %v451 = vadd.f32 %v312, %v450
    %v452 = vpop.f32.mrb[0].mxu0
    %453 = vmatprep.mubr.f32.mxu0 0.0
    %v454 = vand.u32 %v291, 4294901760
    %v455 = vsub.f32 %v291, %v454
    %v456 = vand.u32 %v455, 4294901760
    %v457 = vsub.f32 %v455, %v456
    %v458 = vand.u32 %v457, 4294901760
    %459 = vmatmul.mubr.f32.gmra.mrb[0].mxu0 %v458
    %v460 = vpop.f32.mrb[0].mxu0
    %v461 = vadd.f32 %v312, %v460
    %v462 = vpop.f32.mrb[0].mxu0
    %463 = vmatprep.mubr.f32.mxu0 0.0
    %v464 = vand.u32 %v292, 4294901760
    %v465 = vsub.f32 %v292, %v464
    %v466 = vand.u32 %v465, 4294901760
    %v467 = vsub.f32 %v465, %v466
    %v468 = vand.u32 %v467, 4294901760
    %469 = vmatmul.mubr.f32.gmra.mrb[0].mxu0 %v468
    %v470 = vpop.f32.mrb[0].mxu0
    %v471 = vadd.f32 %v312, %v470
    %v472 = vpop.f32.mrb[0].mxu0
    %473 = vdwg.mxu0
    %474 = vmatprep.subr.mxu0 0.0
    %v475 = vand.u32 %v293, 4294901760
    %v476 = vsub.f32 %v293, %v475
    %v477 = vand.u32 %v476, 4294901760
    %v478 = vsub.f32 %v476, %v477
    %v479 = vand.u32 %v478, 4294901760
    %480 = vmatpush1.msra.mxu0 %v479
    %481 = vmatprep.subr.mxu0 0.0
    %v482 = vand.u32 %v294, 4294901760
    %v483 = vsub.f32 %v294, %v482
    %v484 = vand.u32 %v483, 4294901760
    %v485 = vsub.f32 %v483, %v484
    %v486 = vand.u32 %v485, 4294901760
    %487 = vmatpush1.msra.mxu0 %v486
    %488 = vmatprep.subr.mxu0 0.0
    %v489 = vand.u32 %v295, 4294901760
    %v490 = vsub.f32 %v295, %v489
    %v491 = vand.u32 %v490, 4294901760
    %v492 = vsub.f32 %v490, %v491
    %v493 = vand.u32 %v492, 4294901760
    %494 = vmatpush1.msra.mxu0 %v493
    %495 = vmatprep.subr.mxu0 0.0
    %v496 = vand.u32 %v296, 4294901760
    %v497 = vsub.f32 %v296, %v496
    %v498 = vand.u32 %v497, 4294901760
    %v499 = vsub.f32 %v497, %v498
    %v500 = vand.u32 %v499, 4294901760
    %501 = vmatpush1.msra.mxu0 %v500
    %502 = vmatprep.subr.mxu0 0.0
    %v503 = vand.u32 %v297, 4294901760
    %v504 = vsub.f32 %v297, %v503
    %v505 = vand.u32 %v504, 4294901760
    %v506 = vsub.f32 %v504, %v505
    %v507 = vand.u32 %v506, 4294901760
    %508 = vmatpush1.msra.mxu0 %v507
    %509 = vmatprep.subr.mxu0 0.0
    %v510 = vand.u32 %v298, 4294901760
    %v511 = vsub.f32 %v298, %v510
    %v512 = vand.u32 %v511, 4294901760
    %v513 = vsub.f32 %v511, %v512
    %v514 = vand.u32 %v513, 4294901760
    %515 = vmatpush1.msra.mxu0 %v514
    %516 = vmatprep.subr.mxu0 0.0
    %v517 = vand.u32 %v299, 4294901760
    %v518 = vsub.f32 %v299, %v517
    %v519 = vand.u32 %v518, 4294901760
    %v520 = vsub.f32 %v518, %v519
    %v521 = vand.u32 %v520, 4294901760
    %522 = vmatpush1.msra.mxu0 %v521
    %523 = vmatprep.subr.mxu0 0.0
    %v524 = vand.u32 %v300, 4294901760
    %v525 = vsub.f32 %v300, %v524
    %v526 = vand.u32 %v525, 4294901760
    %v527 = vsub.f32 %v525, %v526
    %v528 = vand.u32 %v527, 4294901760
    %529 = vmatpush1.msra.mxu0 %v528
    %530 = vmatprep.subr.mxu0 0.0
    %v531 = vand.u32 %v301, 4294901760
    %v532 = vsub.f32 %v301, %v531
    %v533 = vand.u32 %v532, 4294901760
    %v534 = vsub.f32 %v532, %v533
    %v535 = vand.u32 %v534, 4294901760
    %536 = vmatpush1.msra.mxu0 %v535
    %537 = vmatprep.subr.mxu0 0.0
    %v538 = vand.u32 %v302, 4294901760
    %v539 = vsub.f32 %v302, %v538
    %v540 = vand.u32 %v539, 4294901760
    %v541 = vsub.f32 %v539, %v540
    %v542 = vand.u32 %v541, 4294901760
    %543 = vmatpush1.msra.mxu0 %v542
    %544 = vmatprep.subr.mxu0 0.0
    %v545 = vand.u32 %v303, 4294901760
    %v546 = vsub.f32 %v303, %v545
    %v547 = vand.u32 %v546, 4294901760
    %v548 = vsub.f32 %v546, %v547
    %v549 = vand.u32 %v548, 4294901760
    %550 = vmatpush1.msra.mxu0 %v549
    %551 = vmatprep.subr.mxu0 0.0
    %v552 = vand.u32 %v304, 4294901760
    %v553 = vsub.f32 %v304, %v552
    %v554 = vand.u32 %v553, 4294901760
    %v555 = vsub.f32 %v553, %v554
    %v556 = vand.u32 %v555, 4294901760
    %557 = vmatpush1.msra.mxu0 %v556
    %558 = vmatprep.subr.mxu0 0.0
    %v559 = vand.u32 %v305, 4294901760
    %v560 = vsub.f32 %v305, %v559
    %v561 = vand.u32 %v560, 4294901760
    %v562 = vsub.f32 %v560, %v561
    %v563 = vand.u32 %v562, 4294901760
    %564 = vmatpush1.msra.mxu0 %v563
    %565 = vmatprep.subr.mxu0 0.0
    %v566 = vand.u32 %v306, 4294901760
    %v567 = vsub.f32 %v306, %v566
    %v568 = vand.u32 %v567, 4294901760
    %v569 = vsub.f32 %v567, %v568
    %v570 = vand.u32 %v569, 4294901760
    %571 = vmatpush1.msra.mxu0 %v570
    %572 = vmatprep.subr.mxu0 0.0
    %v573 = vand.u32 %v307, 4294901760
    %v574 = vsub.f32 %v307, %v573
    %v575 = vand.u32 %v574, 4294901760
    %v576 = vsub.f32 %v574, %v575
    %v577 = vand.u32 %v576, 4294901760
    %578 = vmatpush1.msra.mxu0 %v577
    %579 = vmatprep.subr.mxu0 0.0
    %v580 = vand.u32 %v308, 4294901760
    %v581 = vsub.f32 %v308, %v580
    %v582 = vand.u32 %v581, 4294901760
    %v583 = vsub.f32 %v581, %v582
    %v584 = vand.u32 %v583, 4294901760
    %585 = vmatpush1.msra.mxu0 %v584
    %586 = vmatprep.subr.mxu0 0.0
    %587 = vmatpush1.msra.mxu0 0.0
    %588 = vmatprep.subr.mxu0 0.0
    %589 = vmatpush1.msra.mxu0 0.0
    %590 = vmatprep.subr.mxu0 0.0
    %591 = vmatpush1.msra.mxu0 0.0
    %592 = vmatprep.subr.mxu0 0.0
    %593 = vmatpush1.msra.mxu0 0.0
    %594 = vmatprep.subr.mxu0 0.0
    %595 = vmatpush1.msra.mxu0 0.0
    %596 = vmatprep.subr.mxu0 0.0
    %597 = vmatpush1.msra.mxu0 0.0
    %598 = vmatprep.subr.mxu0 0.0
    %599 = vmatpush1.msra.mxu0 0.0
    %600 = vmatprep.subr.mxu0 0.0
    %601 = vmatpush1.msra.mxu0 0.0
    %602 = vmatprep.subr.mxu0 0.0
    %603 = vmatpush1.msra.mxu0 0.0
    %604 = vmatprep.subr.mxu0 0.0
    %605 = vmatpush1.msra.mxu0 0.0
    %606 = vmatprep.subr.mxu0 0.0
    %607 = vmatpush1.msra.mxu0 0.0
    %608 = vmatprep.subr.mxu0 0.0
    %609 = vmatpush1.msra.mxu0 0.0
    %610 = vmatprep.subr.mxu0 0.0
    %611 = vmatpush1.msra.mxu0 0.0
    %612 = vmatprep.subr.mxu0 0.0
    %613 = vmatpush1.msra.mxu0 0.0
    %614 = vmatprep.subr.mxu0 0.0
    %615 = vmatpush1.msra.mxu0 0.0
    %616 = vmatprep.subr.mxu0 0.0
    %617 = vmatpush1.msra.mxu0 0.0
    %618 = vmatprep.mubr.f32.mxu0 0.0
    %v619 = vand.u32 %v285, 4294901760
    %620 = vmatmul.mubr.f32.gmra.mrb[0].mxu0 %v619
    %v621 = vpop.f32.mrb[0].mxu0
    %v622 = vadd.f32 %v401, %v621
    %v623 = vpop.f32.mrb[0].mxu0
    %624 = vmatprep.mubr.f32.mxu0 0.0
    %v625 = vand.u32 %v286, 4294901760
    %626 = vmatmul.mubr.f32.gmra.mrb[0].mxu0 %v625
    %v627 = vpop.f32.mrb[0].mxu0
    %v628 = vadd.f32 %v411, %v627
    %v629 = vpop.f32.mrb[0].mxu0
    %630 = vmatprep.mubr.f32.mxu0 0.0
    %v631 = vand.u32 %v287, 4294901760
    %632 = vmatmul.mubr.f32.gmra.mrb[0].mxu0 %v631
    %v633 = vpop.f32.mrb[0].mxu0
    %v634 = vadd.f32 %v421, %v633
    %v635 = vpop.f32.mrb[0].mxu0
    %636 = vmatprep.mubr.f32.mxu0 0.0
    %v637 = vand.u32 %v288, 4294901760
    %638 = vmatmul.mubr.f32.gmra.mrb[0].mxu0 %v637
    %v639 = vpop.f32.mrb[0].mxu0
    %v640 = vadd.f32 %v431, %v639
    %v641 = vpop.f32.mrb[0].mxu0
    %642 = vmatprep.mubr.f32.mxu0 0.0
    %v643 = vand.u32 %v289, 4294901760
    %644 = vmatmul.mubr.f32.gmra.mrb[0].mxu0 %v643
    %v645 = vpop.f32.mrb[0].mxu0
    %v646 = vadd.f32 %v441, %v645
    %v647 = vpop.f32.mrb[0].mxu0
    %648 = vmatprep.mubr.f32.mxu0 0.0
    %v649 = vand.u32 %v290, 4294901760
    %650 = vmatmul.mubr.f32.gmra.mrb[0].mxu0 %v649
    %v651 = vpop.f32.mrb[0].mxu0
    %v652 = vadd.f32 %v451, %v651
    %v653 = vpop.f32.mrb[0].mxu0
    %654 = vmatprep.mubr.f32.mxu0 0.0
    %v655 = vand.u32 %v291, 4294901760
    %656 = vmatmul.mubr.f32.gmra.mrb[0].mxu0 %v655
    %v657 = vpop.f32.mrb[0].mxu0
    %v658 = vadd.f32 %v461, %v657
    %v659 = vpop.f32.mrb[0].mxu0
    %660 = vmatprep.mubr.f32.mxu0 0.0
    %v661 = vand.u32 %v292, 4294901760
    %662 = vmatmul.mubr.f32.gmra.mrb[0].mxu0 %v661
    %v663 = vpop.f32.mrb[0].mxu0
    %v664 = vadd.f32 %v471, %v663
    %v665 = vpop.f32.mrb[0].mxu0
    %666 = vdwg.mxu0
    %667 = vmatprep.subr.mxu0 0.0
    %v668 = vand.u32 %v293, 4294901760
    %v669 = vsub.f32 %v293, %v668
    %670 = vmatpush1.msra.mxu0 %v669
    %671 = vmatprep.subr.mxu0 0.0
    %v672 = vand.u32 %v294, 4294901760
    %v673 = vsub.f32 %v294, %v672
    %674 = vmatpush1.msra.mxu0 %v673
    %675 = vmatprep.subr.mxu0 0.0
    %v676 = vand.u32 %v295, 4294901760
    %v677 = vsub.f32 %v295, %v676
    %678 = vmatpush1.msra.mxu0 %v677
    %679 = vmatprep.subr.mxu0 0.0
    %v680 = vand.u32 %v296, 4294901760
    %v681 = vsub.f32 %v296, %v680
    %682 = vmatpush1.msra.mxu0 %v681
    %683 = vmatprep.subr.mxu0 0.0
    %v684 = vand.u32 %v297, 4294901760
    %v685 = vsub.f32 %v297, %v684
    %686 = vmatpush1.msra.mxu0 %v685
    %687 = vmatprep.subr.mxu0 0.0
    %v688 = vand.u32 %v298, 4294901760
    %v689 = vsub.f32 %v298, %v688
    %690 = vmatpush1.msra.mxu0 %v689
    %691 = vmatprep.subr.mxu0 0.0
    %v692 = vand.u32 %v299, 4294901760
    %v693 = vsub.f32 %v299, %v692
    %694 = vmatpush1.msra.mxu0 %v693
    %695 = vmatprep.subr.mxu0 0.0
    %v696 = vand.u32 %v300, 4294901760
    %v697 = vsub.f32 %v300, %v696
    %698 = vmatpush1.msra.mxu0 %v697
    %699 = vmatprep.subr.mxu0 0.0
    %v700 = vand.u32 %v301, 4294901760
    %v701 = vsub.f32 %v301, %v700
    %702 = vmatpush1.msra.mxu0 %v701
    %703 = vmatprep.subr.mxu0 0.0
    %v704 = vand.u32 %v302, 4294901760
    %v705 = vsub.f32 %v302, %v704
    %706 = vmatpush1.msra.mxu0 %v705
    %707 = vmatprep.subr.mxu0 0.0
    %v708 = vand.u32 %v303, 4294901760
    %v709 = vsub.f32 %v303, %v708
    %710 = vmatpush1.msra.mxu0 %v709
    %711 = vmatprep.subr.mxu0 0.0
    %v712 = vand.u32 %v304, 4294901760
    %v713 = vsub.f32 %v304, %v712
    %714 = vmatpush1.msra.mxu0 %v713
    %715 = vmatprep.subr.mxu0 0.0
    %v716 = vand.u32 %v305, 4294901760
    %v717 = vsub.f32 %v305, %v716
    %718 = vmatpush1.msra.mxu0 %v717
    %719 = vmatprep.subr.mxu0 0.0
    %v720 = vand.u32 %v306, 4294901760
    %v721 = vsub.f32 %v306, %v720
    %722 = vmatpush1.msra.mxu0 %v721
    %723 = vmatprep.subr.mxu0 0.0
    %v724 = vand.u32 %v307, 4294901760
    %v725 = vsub.f32 %v307, %v724
    %726 = vmatpush1.msra.mxu0 %v725
    %727 = vmatprep.subr.mxu0 0.0
    %v728 = vand.u32 %v308, 4294901760
    %v729 = vsub.f32 %v308, %v728
    %730 = vmatpush1.msra.mxu0 %v729
    %731 = vmatprep.subr.mxu0 0.0
    %732 = vmatpush1.msra.mxu0 0.0
    %733 = vmatprep.subr.mxu0 0.0
    %734 = vmatpush1.msra.mxu0 0.0
    %735 = vmatprep.subr.mxu0 0.0
    %736 = vmatpush1.msra.mxu0 0.0
    %737 = vmatprep.subr.mxu0 0.0
    %738 = vmatpush1.msra.mxu0 0.0
    %739 = vmatprep.subr.mxu0 0.0
    %740 = vmatpush1.msra.mxu0 0.0
    %741 = vmatprep.subr.mxu0 0.0
    %742 = vmatpush1.msra.mxu0 0.0
    %743 = vmatprep.subr.mxu0 0.0
    %744 = vmatpush1.msra.mxu0 0.0
    %745 = vmatprep.subr.mxu0 0.0
    %746 = vmatpush1.msra.mxu0 0.0
    %747 = vmatprep.subr.mxu0 0.0
    %748 = vmatpush1.msra.mxu0 0.0
    %749 = vmatprep.subr.mxu0 0.0
    %750 = vmatpush1.msra.mxu0 0.0
    %751 = vmatprep.subr.mxu0 0.0
    %752 = vmatpush1.msra.mxu0 0.0
    %753 = vmatprep.subr.mxu0 0.0
    %754 = vmatpush1.msra.mxu0 0.0
    %755 = vmatprep.subr.mxu0 0.0
    %756 = vmatpush1.msra.mxu0 0.0
    %757 = vmatprep.subr.mxu0 0.0
    %758 = vmatpush1.msra.mxu0 0.0
    %759 = vmatprep.subr.mxu0 0.0
    %760 = vmatpush1.msra.mxu0 0.0
    %761 = vmatprep.subr.mxu0 0.0
    %762 = vmatpush1.msra.mxu0 0.0
    %763 = vmatprep.mubr.f32.mxu0 0.0
    %v764 = vand.u32 %v285, 4294901760
    %v765 = vsub.f32 %v285, %v764
    %766 = vmatmul.mubr.f32.gmra.mrb[0].mxu0 %v765
    %v767 = vpop.f32.mrb[0].mxu0
    %v768 = vadd.f32 %v622, %v767
    %v769 = vpop.f32.mrb[0].mxu0
    %770 = vmatprep.mubr.f32.mxu0 0.0
    %v771 = vand.u32 %v286, 4294901760
    %v772 = vsub.f32 %v286, %v771
    %773 = vmatmul.mubr.f32.gmra.mrb[0].mxu0 %v772
    %v774 = vpop.f32.mrb[0].mxu0
    %v775 = vadd.f32 %v628, %v774
    %v776 = vpop.f32.mrb[0].mxu0
    %777 = vmatprep.mubr.f32.mxu0 0.0
    %v778 = vand.u32 %v287, 4294901760
    %v779 = vsub.f32 %v287, %v778
    %780 = vmatmul.mubr.f32.gmra.mrb[0].mxu0 %v779
    %v781 = vpop.f32.mrb[0].mxu0
    %v782 = vadd.f32 %v634, %v781
    %v783 = vpop.f32.mrb[0].mxu0
    %784 = vmatprep.mubr.f32.mxu0 0.0
    %v785 = vand.u32 %v288, 4294901760
    %v786 = vsub.f32 %v288, %v785
    %787 = vmatmul.mubr.f32.gmra.mrb[0].mxu0 %v786
    %v788 = vpop.f32.mrb[0].mxu0
    %v789 = vadd.f32 %v640, %v788
    %v790 = vpop.f32.mrb[0].mxu0
    %791 = vmatprep.mubr.f32.mxu0 0.0
    %v792 = vand.u32 %v289, 4294901760
    %v793 = vsub.f32 %v289, %v792
    %794 = vmatmul.mubr.f32.gmra.mrb[0].mxu0 %v793
    %v795 = vpop.f32.mrb[0].mxu0
    %v796 = vadd.f32 %v646, %v795
    %v797 = vpop.f32.mrb[0].mxu0
    %798 = vmatprep.mubr.f32.mxu0 0.0
    %v799 = vand.u32 %v290, 4294901760
    %v800 = vsub.f32 %v290, %v799
    %801 = vmatmul.mubr.f32.gmra.mrb[0].mxu0 %v800
    %v802 = vpop.f32.mrb[0].mxu0
    %v803 = vadd.f32 %v652, %v802
    %v804 = vpop.f32.mrb[0].mxu0
    %805 = vmatprep.mubr.f32.mxu0 0.0
    %v806 = vand.u32 %v291, 4294901760
    %v807 = vsub.f32 %v291, %v806
    %808 = vmatmul.mubr.f32.gmra.mrb[0].mxu0 %v807
    %v809 = vpop.f32.mrb[0].mxu0
    %v810 = vadd.f32 %v658, %v809
    %v811 = vpop.f32.mrb[0].mxu0
    %812 = vmatprep.mubr.f32.mxu0 0.0
    %v813 = vand.u32 %v292, 4294901760
    %v814 = vsub.f32 %v292, %v813
    %815 = vmatmul.mubr.f32.gmra.mrb[0].mxu0 %v814
    %v816 = vpop.f32.mrb[0].mxu0
    %v817 = vadd.f32 %v664, %v816
    %v818 = vpop.f32.mrb[0].mxu0
    %819 = vdwg.mxu0
    %820 = vmatprep.subr.mxu0 0.0
    %v821 = vand.u32 %v293, 4294901760
    %822 = vmatpush1.msra.mxu0 %v821
    %823 = vmatprep.subr.mxu0 0.0
    %v824 = vand.u32 %v294, 4294901760
    %825 = vmatpush1.msra.mxu0 %v824
    %826 = vmatprep.subr.mxu0 0.0
    %v827 = vand.u32 %v295, 4294901760
    %828 = vmatpush1.msra.mxu0 %v827
    %829 = vmatprep.subr.mxu0 0.0
    %v830 = vand.u32 %v296, 4294901760
    %831 = vmatpush1.msra.mxu0 %v830
    %832 = vmatprep.subr.mxu0 0.0
    %v833 = vand.u32 %v297, 4294901760
    %834 = vmatpush1.msra.mxu0 %v833
    %835 = vmatprep.subr.mxu0 0.0
    %v836 = vand.u32 %v298, 4294901760
    %837 = vmatpush1.msra.mxu0 %v836
    %838 = vmatprep.subr.mxu0 0.0
    %v839 = vand.u32 %v299, 4294901760
    %840 = vmatpush1.msra.mxu0 %v839
    %841 = vmatprep.subr.mxu0 0.0
    %v842 = vand.u32 %v300, 4294901760
    %843 = vmatpush1.msra.mxu0 %v842
    %844 = vmatprep.subr.mxu0 0.0
    %v845 = vand.u32 %v301, 4294901760
    %846 = vmatpush1.msra.mxu0 %v845
    %847 = vmatprep.subr.mxu0 0.0
    %v848 = vand.u32 %v302, 4294901760
    %849 = vmatpush1.msra.mxu0 %v848
    %850 = vmatprep.subr.mxu0 0.0
    %v851 = vand.u32 %v303, 4294901760
    %852 = vmatpush1.msra.mxu0 %v851
    %853 = vmatprep.subr.mxu0 0.0
    %v854 = vand.u32 %v304, 4294901760
    %855 = vmatpush1.msra.mxu0 %v854
    %856 = vmatprep.subr.mxu0 0.0
    %v857 = vand.u32 %v305, 4294901760
    %858 = vmatpush1.msra.mxu0 %v857
    %859 = vmatprep.subr.mxu0 0.0
    %v860 = vand.u32 %v306, 4294901760
    %861 = vmatpush1.msra.mxu0 %v860
    %862 = vmatprep.subr.mxu0 0.0
    %v863 = vand.u32 %v307, 4294901760
    %864 = vmatpush1.msra.mxu0 %v863
    %865 = vmatprep.subr.mxu0 0.0
    %v866 = vand.u32 %v308, 4294901760
    %867 = vmatpush1.msra.mxu0 %v866
    %868 = vmatprep.subr.mxu0 0.0
    %869 = vmatpush1.msra.mxu0 0.0
    %870 = vmatprep.subr.mxu0 0.0
    %871 = vmatpush1.msra.mxu0 0.0
    %872 = vmatprep.subr.mxu0 0.0
    %873 = vmatpush1.msra.mxu0 0.0
    %874 = vmatprep.subr.mxu0 0.0
    %875 = vmatpush1.msra.mxu0 0.0
    %876 = vmatprep.subr.mxu0 0.0
    %877 = vmatpush1.msra.mxu0 0.0
    %878 = vmatprep.subr.mxu0 0.0
    %879 = vmatpush1.msra.mxu0 0.0
    %880 = vmatprep.subr.mxu0 0.0
    %881 = vmatpush1.msra.mxu0 0.0
    %882 = vmatprep.subr.mxu0 0.0
    %883 = vmatpush1.msra.mxu0 0.0
    %884 = vmatprep.subr.mxu0 0.0
    %885 = vmatpush1.msra.mxu0 0.0
    %886 = vmatprep.subr.mxu0 0.0
    %887 = vmatpush1.msra.mxu0 0.0
    %888 = vmatprep.subr.mxu0 0.0
    %889 = vmatpush1.msra.mxu0 0.0
    %890 = vmatprep.subr.mxu0 0.0
    %891 = vmatpush1.msra.mxu0 0.0
    %892 = vmatprep.subr.mxu0 0.0
    %893 = vmatpush1.msra.mxu0 0.0
    %894 = vmatprep.subr.mxu0 0.0
    %895 = vmatpush1.msra.mxu0 0.0
    %896 = vmatprep.subr.mxu0 0.0
    %897 = vmatpush1.msra.mxu0 0.0
    %898 = vmatprep.subr.mxu0 0.0
    %899 = vmatpush1.msra.mxu0 0.0
    %900 = vmatprep.mubr.f32.mxu0 0.0
    %v901 = vand.u32 %v285, 4294901760
    %v902 = vsub.f32 %v285, %v901
    %v903 = vand.u32 %v902, 4294901760
    %904 = vmatmul.mubr.f32.gmra.mrb[0].mxu0 %v903
    %v905 = vpop.f32.mrb[0].mxu0
    %v906 = vadd.f32 %v768, %v905
    %v907 = vpop.f32.mrb[0].mxu0
    %908 = vmatprep.mubr.f32.mxu0 0.0
    %v909 = vand.u32 %v286, 4294901760
    %v910 = vsub.f32 %v286, %v909
    %v911 = vand.u32 %v910, 4294901760
    %912 = vmatmul.mubr.f32.gmra.mrb[0].mxu0 %v911
    %v913 = vpop.f32.mrb[0].mxu0
    %v914 = vadd.f32 %v775, %v913
    %v915 = vpop.f32.mrb[0].mxu0
    %916 = vmatprep.mubr.f32.mxu0 0.0
    %v917 = vand.u32 %v287, 4294901760
    %v918 = vsub.f32 %v287, %v917
    %v919 = vand.u32 %v918, 4294901760
    %920 = vmatmul.mubr.f32.gmra.mrb[0].mxu0 %v919
    %v921 = vpop.f32.mrb[0].mxu0
    %v922 = vadd.f32 %v782, %v921
    %v923 = vpop.f32.mrb[0].mxu0
    %924 = vmatprep.mubr.f32.mxu0 0.0
    %v925 = vand.u32 %v288, 4294901760
    %v926 = vsub.f32 %v288, %v925
    %v927 = vand.u32 %v926, 4294901760
    %928 = vmatmul.mubr.f32.gmra.mrb[0].mxu0 %v927
    %v929 = vpop.f32.mrb[0].mxu0
    %v930 = vadd.f32 %v789, %v929
    %v931 = vpop.f32.mrb[0].mxu0
    %932 = vmatprep.mubr.f32.mxu0 0.0
    %v933 = vand.u32 %v289, 4294901760
    %v934 = vsub.f32 %v289, %v933
    %v935 = vand.u32 %v934, 4294901760
    %936 = vmatmul.mubr.f32.gmra.mrb[0].mxu0 %v935
    %v937 = vpop.f32.mrb[0].mxu0
    %v938 = vadd.f32 %v796, %v937
    %v939 = vpop.f32.mrb[0].mxu0
    %940 = vmatprep.mubr.f32.mxu0 0.0
    %v941 = vand.u32 %v290, 4294901760
    %v942 = vsub.f32 %v290, %v941
    %v943 = vand.u32 %v942, 4294901760
    %944 = vmatmul.mubr.f32.gmra.mrb[0].mxu0 %v943
    %v945 = vpop.f32.mrb[0].mxu0
    %v946 = vadd.f32 %v803, %v945
    %v947 = vpop.f32.mrb[0].mxu0
    %948 = vmatprep.mubr.f32.mxu0 0.0
    %v949 = vand.u32 %v291, 4294901760
    %v950 = vsub.f32 %v291, %v949
    %v951 = vand.u32 %v950, 4294901760
    %952 = vmatmul.mubr.f32.gmra.mrb[0].mxu0 %v951
    %v953 = vpop.f32.mrb[0].mxu0
    %v954 = vadd.f32 %v810, %v953
    %v955 = vpop.f32.mrb[0].mxu0
    %956 = vmatprep.mubr.f32.mxu0 0.0
    %v957 = vand.u32 %v292, 4294901760
    %v958 = vsub.f32 %v292, %v957
    %v959 = vand.u32 %v958, 4294901760
    %960 = vmatmul.mubr.f32.gmra.mrb[0].mxu0 %v959
    %v961 = vpop.f32.mrb[0].mxu0
    %v962 = vadd.f32 %v817, %v961
    %v963 = vpop.f32.mrb[0].mxu0
    %964 = vdwg.mxu0
    %965 = vmatprep.subr.mxu0 0.0
    %v966 = vand.u32 %v293, 4294901760
    %v967 = vsub.f32 %v293, %v966
    %v968 = vand.u32 %v967, 4294901760
    %969 = vmatpush1.msra.mxu0 %v968
    %970 = vmatprep.subr.mxu0 0.0
    %v971 = vand.u32 %v294, 4294901760
    %v972 = vsub.f32 %v294, %v971
    %v973 = vand.u32 %v972, 4294901760
    %974 = vmatpush1.msra.mxu0 %v973
    %975 = vmatprep.subr.mxu0 0.0
    %v976 = vand.u32 %v295, 4294901760
    %v977 = vsub.f32 %v295, %v976
    %v978 = vand.u32 %v977, 4294901760
    %979 = vmatpush1.msra.mxu0 %v978
    %980 = vmatprep.subr.mxu0 0.0
    %v981 = vand.u32 %v296, 4294901760
    %v982 = vsub.f32 %v296, %v981
    %v983 = vand.u32 %v982, 4294901760
    %984 = vmatpush1.msra.mxu0 %v983
    %985 = vmatprep.subr.mxu0 0.0
    %v986 = vand.u32 %v297, 4294901760
    %v987 = vsub.f32 %v297, %v986
    %v988 = vand.u32 %v987, 4294901760
    %989 = vmatpush1.msra.mxu0 %v988
    %990 = vmatprep.subr.mxu0 0.0
    %v991 = vand.u32 %v298, 4294901760
    %v992 = vsub.f32 %v298, %v991
    %v993 = vand.u32 %v992, 4294901760
    %994 = vmatpush1.msra.mxu0 %v993
    %995 = vmatprep.subr.mxu0 0.0
    %v996 = vand.u32 %v299, 4294901760
    %v997 = vsub.f32 %v299, %v996
    %v998 = vand.u32 %v997, 4294901760
    %999 = vmatpush1.msra.mxu0 %v998
    %1000 = vmatprep.subr.mxu0 0.0
    %v1001 = vand.u32 %v300, 4294901760
    %v1002 = vsub.f32 %v300, %v1001
    %v1003 = vand.u32 %v1002, 4294901760
    %1004 = vmatpush1.msra.mxu0 %v1003
    %1005 = vmatprep.subr.mxu0 0.0
    %v1006 = vand.u32 %v301, 4294901760
    %v1007 = vsub.f32 %v301, %v1006
    %v1008 = vand.u32 %v1007, 4294901760
    %1009 = vmatpush1.msra.mxu0 %v1008
    %1010 = vmatprep.subr.mxu0 0.0
    %v1011 = vand.u32 %v302, 4294901760
    %v1012 = vsub.f32 %v302, %v1011
    %v1013 = vand.u32 %v1012, 4294901760
    %1014 = vmatpush1.msra.mxu0 %v1013
    %1015 = vmatprep.subr.mxu0 0.0
    %v1016 = vand.u32 %v303, 4294901760
    %v1017 = vsub.f32 %v303, %v1016
    %v1018 = vand.u32 %v1017, 4294901760
    %1019 = vmatpush1.msra.mxu0 %v1018
    %1020 = vmatprep.subr.mxu0 0.0
    %v1021 = vand.u32 %v304, 4294901760
    %v1022 = vsub.f32 %v304, %v1021
    %v1023 = vand.u32 %v1022, 4294901760
    %1024 = vmatpush1.msra.mxu0 %v1023
    %1025 = vmatprep.subr.mxu0 0.0
    %v1026 = vand.u32 %v305, 4294901760
    %v1027 = vsub.f32 %v305, %v1026
    %v1028 = vand.u32 %v1027, 4294901760
    %1029 = vmatpush1.msra.mxu0 %v1028
    %1030 = vmatprep.subr.mxu0 0.0
    %v1031 = vand.u32 %v306, 4294901760
    %v1032 = vsub.f32 %v306, %v1031
    %v1033 = vand.u32 %v1032, 4294901760
    %1034 = vmatpush1.msra.mxu0 %v1033
    %1035 = vmatprep.subr.mxu0 0.0
    %v1036 = vand.u32 %v307, 4294901760
    %v1037 = vsub.f32 %v307, %v1036
    %v1038 = vand.u32 %v1037, 4294901760
    %1039 = vmatpush1.msra.mxu0 %v1038
    %1040 = vmatprep.subr.mxu0 0.0
    %v1041 = vand.u32 %v308, 4294901760
    %v1042 = vsub.f32 %v308, %v1041
    %v1043 = vand.u32 %v1042, 4294901760
    %1044 = vmatpush1.msra.mxu0 %v1043
    %1045 = vmatprep.subr.mxu0 0.0
    %1046 = vmatpush1.msra.mxu0 0.0
    %1047 = vmatprep.subr.mxu0 0.0
    %1048 = vmatpush1.msra.mxu0 0.0
    %1049 = vmatprep.subr.mxu0 0.0
    %1050 = vmatpush1.msra.mxu0 0.0
    %1051 = vmatprep.subr.mxu0 0.0
    %1052 = vmatpush1.msra.mxu0 0.0
    %1053 = vmatprep.subr.mxu0 0.0
    %1054 = vmatpush1.msra.mxu0 0.0
    %1055 = vmatprep.subr.mxu0 0.0
    %1056 = vmatpush1.msra.mxu0 0.0
    %1057 = vmatprep.subr.mxu0 0.0
    %1058 = vmatpush1.msra.mxu0 0.0
    %1059 = vmatprep.subr.mxu0 0.0
    %1060 = vmatpush1.msra.mxu0 0.0
    %1061 = vmatprep.subr.mxu0 0.0
    %1062 = vmatpush1.msra.mxu0 0.0
    %1063 = vmatprep.subr.mxu0 0.0
    %1064 = vmatpush1.msra.mxu0 0.0
    %1065 = vmatprep.subr.mxu0 0.0
    %1066 = vmatpush1.msra.mxu0 0.0
    %1067 = vmatprep.subr.mxu0 0.0
    %1068 = vmatpush1.msra.mxu0 0.0
    %1069 = vmatprep.subr.mxu0 0.0
    %1070 = vmatpush1.msra.mxu0 0.0
    %1071 = vmatprep.subr.mxu0 0.0
    %1072 = vmatpush1.msra.mxu0 0.0
    %1073 = vmatprep.subr.mxu0 0.0
    %1074 = vmatpush1.msra.mxu0 0.0
    %1075 = vmatprep.subr.mxu0 0.0
    %1076 = vmatpush1.msra.mxu0 0.0
    %1077 = vmatprep.mubr.f32.mxu0 0.0
    %v1078 = vand.u32 %v285, 4294901760
    %1079 = vmatmul.mubr.f32.gmra.mrb[0].mxu0 %v1078
    %v1080 = vpop.f32.mrb[0].mxu0
    %v1081 = vadd.f32 %v906, %v1080
    %v1082 = vpop.f32.mrb[0].mxu0
    %1083 = vmatprep.mubr.f32.mxu0 0.0
    %v1084 = vand.u32 %v286, 4294901760
    %1085 = vmatmul.mubr.f32.gmra.mrb[0].mxu0 %v1084
    %v1086 = vpop.f32.mrb[0].mxu0
    %v1087 = vadd.f32 %v914, %v1086
    %v1088 = vpop.f32.mrb[0].mxu0
    %1089 = vmatprep.mubr.f32.mxu0 0.0
    %v1090 = vand.u32 %v287, 4294901760
    %1091 = vmatmul.mubr.f32.gmra.mrb[0].mxu0 %v1090
    %v1092 = vpop.f32.mrb[0].mxu0
    %v1093 = vadd.f32 %v922, %v1092
    %v1094 = vpop.f32.mrb[0].mxu0
    %1095 = vmatprep.mubr.f32.mxu0 0.0
    %v1096 = vand.u32 %v288, 4294901760
    %1097 = vmatmul.mubr.f32.gmra.mrb[0].mxu0 %v1096
    %v1098 = vpop.f32.mrb[0].mxu0
    %v1099 = vadd.f32 %v930, %v1098
    %v1100 = vpop.f32.mrb[0].mxu0
    %1101 = vmatprep.mubr.f32.mxu0 0.0
    %v1102 = vand.u32 %v289, 4294901760
    %1103 = vmatmul.mubr.f32.gmra.mrb[0].mxu0 %v1102
    %v1104 = vpop.f32.mrb[0].mxu0
    %v1105 = vadd.f32 %v938, %v1104
    %v1106 = vpop.f32.mrb[0].mxu0
    %1107 = vmatprep.mubr.f32.mxu0 0.0
    %v1108 = vand.u32 %v290, 4294901760
    %1109 = vmatmul.mubr.f32.gmra.mrb[0].mxu0 %v1108
    %v1110 = vpop.f32.mrb[0].mxu0
    %v1111 = vadd.f32 %v946, %v1110
    %v1112 = vpop.f32.mrb[0].mxu0
    %1113 = vmatprep.mubr.f32.mxu0 0.0
    %v1114 = vand.u32 %v291, 4294901760
    %1115 = vmatmul.mubr.f32.gmra.mrb[0].mxu0 %v1114
    %v1116 = vpop.f32.mrb[0].mxu0
    %v1117 = vadd.f32 %v954, %v1116
    %v1118 = vpop.f32.mrb[0].mxu0
    %1119 = vmatprep.mubr.f32.mxu0 0.0
    %v1120 = vand.u32 %v292, 4294901760
    %1121 = vmatmul.mubr.f32.gmra.mrb[0].mxu0 %v1120
    %v1122 = vpop.f32.mrb[0].mxu0
    %v1123 = vadd.f32 %v962, %v1122
    %v1124 = vpop.f32.mrb[0].mxu0
    %1125 = vdwg.mxu0
    %1126 = vmatprep.subr.mxu0 0.0
    %v1127 = vand.u32 %v293, 4294901760
    %1128 = vmatpush1.msra.mxu0 %v1127
    %1129 = vmatprep.subr.mxu0 0.0
    %v1130 = vand.u32 %v294, 4294901760
    %1131 = vmatpush1.msra.mxu0 %v1130
    %1132 = vmatprep.subr.mxu0 0.0
    %v1133 = vand.u32 %v295, 4294901760
    %1134 = vmatpush1.msra.mxu0 %v1133
    %1135 = vmatprep.subr.mxu0 0.0
    %v1136 = vand.u32 %v296, 4294901760
    %1137 = vmatpush1.msra.mxu0 %v1136
    %1138 = vmatprep.subr.mxu0 0.0
    %v1139 = vand.u32 %v297, 4294901760
    %1140 = vmatpush1.msra.mxu0 %v1139
    %1141 = vmatprep.subr.mxu0 0.0
    %v1142 = vand.u32 %v298, 4294901760
    %1143 = vmatpush1.msra.mxu0 %v1142
    %1144 = vmatprep.subr.mxu0 0.0
    %v1145 = vand.u32 %v299, 4294901760
    %1146 = vmatpush1.msra.mxu0 %v1145
    %1147 = vmatprep.subr.mxu0 0.0
    %v1148 = vand.u32 %v300, 4294901760
    %1149 = vmatpush1.msra.mxu0 %v1148
    %1150 = vmatprep.subr.mxu0 0.0
    %v1151 = vand.u32 %v301, 4294901760
    %1152 = vmatpush1.msra.mxu0 %v1151
    %1153 = vmatprep.subr.mxu0 0.0
    %v1154 = vand.u32 %v302, 4294901760
    %1155 = vmatpush1.msra.mxu0 %v1154
    %1156 = vmatprep.subr.mxu0 0.0
    %v1157 = vand.u32 %v303, 4294901760
    %1158 = vmatpush1.msra.mxu0 %v1157
    %1159 = vmatprep.subr.mxu0 0.0
    %v1160 = vand.u32 %v304, 4294901760
    %1161 = vmatpush1.msra.mxu0 %v1160
    %1162 = vmatprep.subr.mxu0 0.0
    %v1163 = vand.u32 %v305, 4294901760
    %1164 = vmatpush1.msra.mxu0 %v1163
    %1165 = vmatprep.subr.mxu0 0.0
    %v1166 = vand.u32 %v306, 4294901760
    %1167 = vmatpush1.msra.mxu0 %v1166
    %1168 = vmatprep.subr.mxu0 0.0
    %v1169 = vand.u32 %v307, 4294901760
    %1170 = vmatpush1.msra.mxu0 %v1169
    %1171 = vmatprep.subr.mxu0 0.0
    %v1172 = vand.u32 %v308, 4294901760
    %1173 = vmatpush1.msra.mxu0 %v1172
    %1174 = vmatprep.subr.mxu0 0.0
    %1175 = vmatpush1.msra.mxu0 0.0
    %1176 = vmatprep.subr.mxu0 0.0
    %1177 = vmatpush1.msra.mxu0 0.0
    %1178 = vmatprep.subr.mxu0 0.0
    %1179 = vmatpush1.msra.mxu0 0.0
    %1180 = vmatprep.subr.mxu0 0.0
    %1181 = vmatpush1.msra.mxu0 0.0
    %1182 = vmatprep.subr.mxu0 0.0
    %1183 = vmatpush1.msra.mxu0 0.0
    %1184 = vmatprep.subr.mxu0 0.0
    %1185 = vmatpush1.msra.mxu0 0.0
    %1186 = vmatprep.subr.mxu0 0.0
    %1187 = vmatpush1.msra.mxu0 0.0
    %1188 = vmatprep.subr.mxu0 0.0
    %1189 = vmatpush1.msra.mxu0 0.0
    %1190 = vmatprep.subr.mxu0 0.0
    %1191 = vmatpush1.msra.mxu0 0.0
    %1192 = vmatprep.subr.mxu0 0.0
    %1193 = vmatpush1.msra.mxu0 0.0
    %1194 = vmatprep.subr.mxu0 0.0
    %1195 = vmatpush1.msra.mxu0 0.0
    %1196 = vmatprep.subr.mxu0 0.0
    %1197 = vmatpush1.msra.mxu0 0.0
    %1198 = vmatprep.subr.mxu0 0.0
    %1199 = vmatpush1.msra.mxu0 0.0
    %1200 = vmatprep.subr.mxu0 0.0
    %1201 = vmatpush1.msra.mxu0 0.0
    %1202 = vmatprep.subr.mxu0 0.0
    %1203 = vmatpush1.msra.mxu0 0.0
    %1204 = vmatprep.subr.mxu0 0.0
    %1205 = vmatpush1.msra.mxu0 0.0
    %1206 = vmatprep.mubr.f32.mxu0 0.0
    %v1207 = vand.u32 %v285, 4294901760
    %1208 = vmatmul.mubr.f32.gmra.mrb[0].mxu0 %v1207
    %v1209 = vpop.f32.mrb[0].mxu0
    %v1210 = vadd.f32 %v1081, %v1209
    %v1211 = vpop.f32.mrb[0].mxu0
    %1212 = vmatprep.mubr.f32.mxu0 0.0
    %v1213 = vand.u32 %v286, 4294901760
    %1214 = vmatmul.mubr.f32.gmra.mrb[0].mxu0 %v1213
    %v1215 = vpop.f32.mrb[0].mxu0
    %v1216 = vadd.f32 %v1087, %v1215
    %v1217 = vpop.f32.mrb[0].mxu0
    %1218 = vmatprep.mubr.f32.mxu0 0.0
    %v1219 = vand.u32 %v287, 4294901760
    %1220 = vmatmul.mubr.f32.gmra.mrb[0].mxu0 %v1219
    %v1221 = vpop.f32.mrb[0].mxu0
    %v1222 = vadd.f32 %v1093, %v1221
    %v1223 = vpop.f32.mrb[0].mxu0
    %1224 = vmatprep.mubr.f32.mxu0 0.0
    %v1225 = vand.u32 %v288, 4294901760
    %1226 = vmatmul.mubr.f32.gmra.mrb[0].mxu0 %v1225
    %v1227 = vpop.f32.mrb[0].mxu0
    %v1228 = vadd.f32 %v1099, %v1227
    %v1229 = vpop.f32.mrb[0].mxu0
    %1230 = vmatprep.mubr.f32.mxu0 0.0
    %v1231 = vand.u32 %v289, 4294901760
    %1232 = vmatmul.mubr.f32.gmra.mrb[0].mxu0 %v1231
    %v1233 = vpop.f32.mrb[0].mxu0
    %v1234 = vadd.f32 %v1105, %v1233
    %v1235 = vpop.f32.mrb[0].mxu0
    %1236 = vmatprep.mubr.f32.mxu0 0.0
    %v1237 = vand.u32 %v290, 4294901760
    %1238 = vmatmul.mubr.f32.gmra.mrb[0].mxu0 %v1237
    %v1239 = vpop.f32.mrb[0].mxu0
    %v1240 = vadd.f32 %v1111, %v1239
    %v1241 = vpop.f32.mrb[0].mxu0
    %1242 = vmatprep.mubr.f32.mxu0 0.0
    %v1243 = vand.u32 %v291, 4294901760
    %1244 = vmatmul.mubr.f32.gmra.mrb[0].mxu0 %v1243
    %v1245 = vpop.f32.mrb[0].mxu0
    %v1246 = vadd.f32 %v1117, %v1245
    %v1247 = vpop.f32.mrb[0].mxu0
    %1248 = vmatprep.mubr.f32.mxu0 0.0
    %v1249 = vand.u32 %v292, 4294901760
    %1250 = vmatmul.mubr.f32.gmra.mrb[0].mxu0 %v1249
    %v1251 = vpop.f32.mrb[0].mxu0
    %v1252 = vadd.f32 %v1123, %v1251
    %v1253 = vpop.f32.mrb[0].mxu0
    %1254 = vdwg.mxu0
    %v1255 = vmax.f32 %v1210, 0.0
    %v1256 = vmax.f32 %v1216, 0.0
    %v1257 = vmax.f32 %v1222, 0.0
    %v1258 = vmax.f32 %v1228, 0.0
    %v1259 = vmax.f32 %v1234, 0.0
    %v1260 = vmax.f32 %v1240, 0.0
    %v1261 = vmax.f32 %v1246, 0.0
    %v1262 = vmax.f32 %v1252, 0.0
    %1263 = vst [vmem:[#allocation2 + $0x8] sm:$0xff] %v1255
    %1264 = vst [vmem:[#allocation2 + $0x10] sm:$0xff] %v1256
    %1265 = vst [vmem:[#allocation2 + $0x18] sm:$0xff] %v1257
    %1266 = vst [vmem:[#allocation2 + $0x20] sm:$0xff] %v1258
    %1267 = vst [vmem:[#allocation2 + $0x28] sm:$0xff] %v1259
    %1268 = vst [vmem:[#allocation2 + $0x30] sm:$0xff] %v1260
    %1269 = vst [vmem:[#allocation2 + $0x38] sm:$0xff] %v1261
    %1270 = vst [vmem:[#allocation2 + $0x40] sm:$0xff] %v1262
    %v1271 = vld [vmem:[#allocation2 + $0x6] sm:$0xff]
    %v1272 = vld [vmem:[#allocation2 + $0xe] sm:$0xff]
    %v1273 = vld [vmem:[#allocation2 + $0x16] sm:$0xff]
    %v1274 = vld [vmem:[#allocation2 + $0x1e] sm:$0xff]
    %v1275 = vld [vmem:[#allocation2 + $0x26] sm:$0xff]
    %v1276 = vld [vmem:[#allocation2 + $0x2e] sm:$0xff]
    %v1277 = vld [vmem:[#allocation2 + $0x36] sm:$0xff]
    %v1278 = vld [vmem:[#allocation2 + $0x3e] sm:$0xff]
    %v1279 = vlaneseq
    %v1280 = vshrl.u32 %v1279, 7
    %v1281 = vsub.s32 7, %v1280
    %v1282 = vrot.slane %v73, %v1281
    %v1283 = vmul.f32 %v1271, %v1282
    %v1284 = vmul.f32 %v1272, %v1282
    %v1285 = vmul.f32 %v1273, %v1282
    %v1286 = vmul.f32 %v1274, %v1282
    %v1287 = vmul.f32 %v1275, %v1282
    %v1288 = vmul.f32 %v1276, %v1282
    %v1289 = vmul.f32 %v1277, %v1282
    %v1290 = vmul.f32 %v1278, %v1282
    %v1291 = vld [vmem:[#allocation2 + $0x7] sm:$0xff]
    %v1292 = vld [vmem:[#allocation2 + $0xf] sm:$0xff]
    %v1293 = vld [vmem:[#allocation2 + $0x17] sm:$0xff]
    %v1294 = vld [vmem:[#allocation2 + $0x1f] sm:$0xff]
    %v1295 = vld [vmem:[#allocation2 + $0x27] sm:$0xff]
    %v1296 = vld [vmem:[#allocation2 + $0x2f] sm:$0xff]
    %v1297 = vld [vmem:[#allocation2 + $0x37] sm:$0xff]
    %v1298 = vld [vmem:[#allocation2 + $0x3f] sm:$0xff]
    %v1299 = vlaneseq
    %v1300 = vshrl.u32 %v1299, 7
    %v1301 = vsub.s32 0, %v1300
    %v1302 = vrot.slane %v74, %v1301
    %v1303 = vmul.f32 %v1291, %v1302
    %v1304 = vmul.f32 %v1292, %v1302
    %v1305 = vmul.f32 %v1293, %v1302
    %v1306 = vmul.f32 %v1294, %v1302
    %v1307 = vmul.f32 %v1295, %v1302
    %v1308 = vmul.f32 %v1296, %v1302
    %v1309 = vmul.f32 %v1297, %v1302
    %v1310 = vmul.f32 %v1298, %v1302
    %v1311 = vadd.f32 %v1283, %v1303
    %v1312 = vadd.f32 %v1284, %v1304
    %v1313 = vadd.f32 %v1285, %v1305
    %v1314 = vadd.f32 %v1286, %v1306
    %v1315 = vadd.f32 %v1287, %v1307
    %v1316 = vadd.f32 %v1288, %v1308
    %v1317 = vadd.f32 %v1289, %v1309
    %v1318 = vadd.f32 %v1290, %v1310
    %v1319 = vld [vmem:[#allocation2 + $0x8] sm:$0xff]
    %v1320 = vld [vmem:[#allocation2 + $0x10] sm:$0xff]
    %v1321 = vld [vmem:[#allocation2 + $0x18] sm:$0xff]
    %v1322 = vld [vmem:[#allocation2 + $0x20] sm:$0xff]
    %v1323 = vld [vmem:[#allocation2 + $0x28] sm:$0xff]
    %v1324 = vld [vmem:[#allocation2 + $0x30] sm:$0xff]
    %v1325 = vld [vmem:[#allocation2 + $0x38] sm:$0xff]
    %v1326 = vld [vmem:[#allocation2 + $0x40] sm:$0xff]
    %v1327 = vlaneseq
    %v1328 = vshrl.u32 %v1327, 7
    %v1329 = vsub.s32 1, %v1328
    %v1330 = vrot.slane %v74, %v1329
    %v1331 = vmul.f32 %v1319, %v1330
    %v1332 = vmul.f32 %v1320, %v1330
    %v1333 = vmul.f32 %v1321, %v1330
    %v1334 = vmul.f32 %v1322, %v1330
    %v1335 = vmul.f32 %v1323, %v1330
    %v1336 = vmul.f32 %v1324, %v1330
    %v1337 = vmul.f32 %v1325, %v1330
    %v1338 = vmul.f32 %v1326, %v1330
    %v1339 = vadd.f32 %v1311, %v1331
    %v1340 = vadd.f32 %v1312, %v1332
    %v1341 = vadd.f32 %v1313, %v1333
    %v1342 = vadd.f32 %v1314, %v1334
    %v1343 = vadd.f32 %v1315, %v1335
    %v1344 = vadd.f32 %v1316, %v1336
    %v1345 = vadd.f32 %v1317, %v1337
    %v1346 = vadd.f32 %v1318, %v1338
    %v1347 = vlaneseq
    %v1348 = vshrl.u32 %v1347, 7
    %v1349 = vsub.s32 2, %v1348
    %v1350 = vrot.slane %v74, %v1349
    %v1351 = vadd.f32 %v1339, %v1350
    %v1352 = vadd.f32 %v1340, %v1350
    %v1353 = vadd.f32 %v1341, %v1350
    %v1354 = vadd.f32 %v1342, %v1350
    %v1355 = vadd.f32 %v1343, %v1350
    %v1356 = vadd.f32 %v1344, %v1350
    %v1357 = vadd.f32 %v1345, %v1350
    %v1358 = vadd.f32 %v1346, %v1350
    %vm1359 = vcmp.ge.s32.totalorder %v80, 6
    %vm1360 = vcmp.ge.s32.totalorder %v81, 6
    %vm1361 = vcmp.ge.s32.totalorder %v82, 6
    %vm1362 = vcmp.ge.s32.totalorder %v83, 6
    %vm1363 = vcmp.ge.s32.totalorder %v84, 6
    %vm1364 = vcmp.ge.s32.totalorder %v85, 6
    %vm1365 = vcmp.ge.s32.totalorder %v86, 6
    %vm1366 = vcmp.ge.s32.totalorder %v87, 6
    %v1367 = vsel %vm1359, %v1351, 0.0
    %v1368 = vsel %vm1360, %v1352, 0.0
    %v1369 = vsel %vm1361, %v1353, 0.0
    %v1370 = vsel %vm1362, %v1354, 0.0
    %v1371 = vsel %vm1363, %v1355, 0.0
    %v1372 = vsel %vm1364, %v1356, 0.0
    %v1373 = vsel %vm1365, %v1357, 0.0
    %v1374 = vsel %vm1366, %v1358, 0.0
    %v1375 = vadd.f32 %v1367, %v1368
    %v1376 = vadd.f32 %v1375, %v1369
    %v1377 = vadd.f32 %v1376, %v1370
    %v1378 = vadd.f32 %v1377, %v1371
    %v1379 = vadd.f32 %v1378, %v1372
    %v1380 = vadd.f32 %v1379, %v1373
    %v1381 = vadd.f32 %v1380, %v1374
    %v1382 = vrot.slane %v1381, 4
    %v1383 = vadd.f32 %v1381, %v1382
    %v1384 = vrot.slane %v1383, 2
    %v1385 = vadd.f32 %v1383, %v1384
    %v1386 = vrot.slane %v1385, 1
    %v1387 = vadd.f32 %v1385, %v1386
    %v1388 = vmul.f32 %v1387, 0.01923077
    %v1389 = vsub.f32 %v1351, %v1388
    %v1390 = vsub.f32 %v1352, %v1388
    %v1391 = vsub.f32 %v1353, %v1388
    %v1392 = vsub.f32 %v1354, %v1388
    %v1393 = vsub.f32 %v1355, %v1388
    %v1394 = vsub.f32 %v1356, %v1388
    %v1395 = vsub.f32 %v1357, %v1388
    %v1396 = vsub.f32 %v1358, %v1388
    %v1397 = vsel %vm1359, %v1389, 0.0
    %v1398 = vsel %vm1360, %v1390, 0.0
    %v1399 = vsel %vm1361, %v1391, 0.0
    %v1400 = vsel %vm1362, %v1392, 0.0
    %v1401 = vsel %vm1363, %v1393, 0.0
    %v1402 = vsel %vm1364, %v1394, 0.0
    %v1403 = vsel %vm1365, %v1395, 0.0
    %v1404 = vsel %vm1366, %v1396, 0.0
    %v1405 = vmul.f32 %v1397, %v1397
    %v1406 = vmul.f32 %v1398, %v1398
    %v1407 = vmul.f32 %v1399, %v1399
    %v1408 = vmul.f32 %v1400, %v1400
    %v1409 = vmul.f32 %v1401, %v1401
    %v1410 = vmul.f32 %v1402, %v1402
    %v1411 = vmul.f32 %v1403, %v1403
    %v1412 = vmul.f32 %v1404, %v1404
    %v1413 = vadd.f32 %v1405, %v1406
    %v1414 = vadd.f32 %v1413, %v1407
    %v1415 = vadd.f32 %v1414, %v1408
    %v1416 = vadd.f32 %v1415, %v1409
    %v1417 = vadd.f32 %v1416, %v1410
    %v1418 = vadd.f32 %v1417, %v1411
    %v1419 = vadd.f32 %v1418, %v1412
    %v1420 = vrot.slane %v1419, 4
    %v1421 = vadd.f32 %v1419, %v1420
    %v1422 = vrot.slane %v1421, 2
    %v1423 = vadd.f32 %v1421, %v1422
    %v1424 = vrot.slane %v1423, 1
    %v1425 = vadd.f32 %v1423, %v1424
    %v1426 = vmul.f32 %v1425, 0.01923077
    %v1427 = vadd.f32 %v1426, 1e-05
    %v1428 = vrsqrt.pop %v1427
    %v1429 = vmul.f32 %v1428, %v74
    %v1430 = vmul.f32 %v1388, %v1429
    %v1432 = vrot.slane %v1430, 7
    %v1434 = vsub.f32 %v74, %v1432
    %v1435 = vlaneseq
    %v1436 = vshrl.u32 %v1435, 7
    %v1437 = vsub.s32 3, %v1436
    %v1438 = vrot.slane %v1429, %v1437
    %v1439 = vmul.f32 %v1351, %v1438
    %v1440 = vmul.f32 %v1352, %v1438
    %v1441 = vmul.f32 %v1353, %v1438
    %v1442 = vmul.f32 %v1354, %v1438
    %v1443 = vmul.f32 %v1355, %v1438
    %v1444 = vmul.f32 %v1356, %v1438
    %v1445 = vmul.f32 %v1357, %v1438
    %v1446 = vmul.f32 %v1358, %v1438
    %v1447 = vlaneseq
    %v1448 = vshrl.u32 %v1447, 7
    %v1449 = vsub.s32 4, %v1448
    %v1450 = vrot.slane %v1434, %v1449
    %v1451 = vadd.f32 %v1439, %v1450
    %v1452 = vadd.f32 %v1440, %v1450
    %v1453 = vadd.f32 %v1441, %v1450
    %v1454 = vadd.f32 %v1442, %v1450
    %v1455 = vadd.f32 %v1443, %v1450
    %v1456 = vadd.f32 %v1444, %v1450
    %v1457 = vadd.f32 %v1445, %v1450
    %v1458 = vadd.f32 %v1446, %v1450
    %s1459 = scalar_lea.vmem [#allocation9], 128
    %v1460 = vld [vmem:[%s1459] sm:$0xff]
    %v1461 = vld [vmem:[%s1459 + $0x8] sm:$0xff]
    %v1462 = vld [vmem:[%s1459 + $0x10] sm:$0xff]
    %v1463 = vld [vmem:[%s1459 + $0x18] sm:$0xff]
    %v1464 = vld [vmem:[%s1459 + $0x20] sm:$0xff]
    %v1465 = vld [vmem:[%s1459 + $0x28] sm:$0xff]
    %v1466 = vld [vmem:[%s1459 + $0x30] sm:$0xff]
    %v1467 = vld [vmem:[%s1459 + $0x38] sm:$0xff]
    %v1468 = vld [vmem:[%s1459 + $0x40] sm:$0xff]
    %v1469 = vld [vmem:[%s1459 + $0x48] sm:$0xff]
    %v1470 = vld [vmem:[%s1459 + $0x50] sm:$0xff]
    %v1471 = vld [vmem:[%s1459 + $0x58] sm:$0xff]
    %v1472 = vld [vmem:[%s1459 + $0x60] sm:$0xff]
    %v1473 = vld [vmem:[%s1459 + $0x68] sm:$0xff]
    %v1474 = vld [vmem:[%s1459 + $0x70] sm:$0xff]
    %v1475 = vld [vmem:[%s1459 + $0x78] sm:$0xff]
    %v1476 = vlaneseq
    %v1477 = vshrl.u32 %v1476, 7
    %v1478 = vsub.s32 5, %v1477
    %v1479 = vrot.slane %v74, %v1478
    %1480 = vmatprep.subr.mxu0 0.0
    %v1481 = vand.u32 %v1460, 4294901760
    %1482 = vmatpush1.msra.mxu0 %v1481
    %1483 = vmatprep.subr.mxu0 0.0
    %v1484 = vand.u32 %v1461, 4294901760
    %1485 = vmatpush1.msra.mxu0 %v1484
    %1486 = vmatprep.subr.mxu0 0.0
    %v1487 = vand.u32 %v1462, 4294901760
    %1488 = vmatpush1.msra.mxu0 %v1487
    %1489 = vmatprep.subr.mxu0 0.0
    %v1490 = vand.u32 %v1463, 4294901760
    %1491 = vmatpush1.msra.mxu0 %v1490
    %1492 = vmatprep.subr.mxu0 0.0
    %v1493 = vand.u32 %v1464, 4294901760
    %1494 = vmatpush1.msra.mxu0 %v1493
    %1495 = vmatprep.subr.mxu0 0.0
    %v1496 = vand.u32 %v1465, 4294901760
    %1497 = vmatpush1.msra.mxu0 %v1496
    %1498 = vmatprep.subr.mxu0 0.0
    %v1499 = vand.u32 %v1466, 4294901760
    %1500 = vmatpush1.msra.mxu0 %v1499
    %1501 = vmatprep.subr.mxu0 0.0
    %v1502 = vand.u32 %v1467, 4294901760
    %1503 = vmatpush1.msra.mxu0 %v1502
    %1504 = vmatprep.subr.mxu0 0.0
    %v1505 = vand.u32 %v1468, 4294901760
    %1506 = vmatpush1.msra.mxu0 %v1505
    %1507 = vmatprep.subr.mxu0 0.0
    %v1508 = vand.u32 %v1469, 4294901760
    %1509 = vmatpush1.msra.mxu0 %v1508
    %1510 = vmatprep.subr.mxu0 0.0
    %v1511 = vand.u32 %v1470, 4294901760
    %1512 = vmatpush1.msra.mxu0 %v1511
    %1513 = vmatprep.subr.mxu0 0.0
    %v1514 = vand.u32 %v1471, 4294901760
    %1515 = vmatpush1.msra.mxu0 %v1514
    %1516 = vmatprep.subr.mxu0 0.0
    %v1517 = vand.u32 %v1472, 4294901760
    %1518 = vmatpush1.msra.mxu0 %v1517
    %1519 = vmatprep.subr.mxu0 0.0
    %v1520 = vand.u32 %v1473, 4294901760
    %1521 = vmatpush1.msra.mxu0 %v1520
    %1522 = vmatprep.subr.mxu0 0.0
    %v1523 = vand.u32 %v1474, 4294901760
    %1524 = vmatpush1.msra.mxu0 %v1523
    %1525 = vmatprep.subr.mxu0 0.0
    %v1526 = vand.u32 %v1475, 4294901760
    %1527 = vmatpush1.msra.mxu0 %v1526
    %1528 = vmatprep.subr.mxu0 0.0
    %1529 = vmatpush1.msra.mxu0 0.0
    %1530 = vmatprep.subr.mxu0 0.0
    %1531 = vmatpush1.msra.mxu0 0.0
    %1532 = vmatprep.subr.mxu0 0.0
    %1533 = vmatpush1.msra.mxu0 0.0
    %1534 = vmatprep.subr.mxu0 0.0
    %1535 = vmatpush1.msra.mxu0 0.0
    %1536 = vmatprep.subr.mxu0 0.0
    %1537 = vmatpush1.msra.mxu0 0.0
    %1538 = vmatprep.subr.mxu0 0.0
    %1539 = vmatpush1.msra.mxu0 0.0
    %1540 = vmatprep.subr.mxu0 0.0
    %1541 = vmatpush1.msra.mxu0 0.0
    %1542 = vmatprep.subr.mxu0 0.0
    %1543 = vmatpush1.msra.mxu0 0.0
    %1544 = vmatprep.subr.mxu0 0.0
    %1545 = vmatpush1.msra.mxu0 0.0
    %1546 = vmatprep.subr.mxu0 0.0
    %1547 = vmatpush1.msra.mxu0 0.0
    %1548 = vmatprep.subr.mxu0 0.0
    %1549 = vmatpush1.msra.mxu0 0.0
    %1550 = vmatprep.subr.mxu0 0.0
    %1551 = vmatpush1.msra.mxu0 0.0
    %1552 = vmatprep.subr.mxu0 0.0
    %1553 = vmatpush1.msra.mxu0 0.0
    %1554 = vmatprep.subr.mxu0 0.0
    %1555 = vmatpush1.msra.mxu0 0.0
    %1556 = vmatprep.subr.mxu0 0.0
    %1557 = vmatpush1.msra.mxu0 0.0
    %1558 = vmatprep.subr.mxu0 0.0
    %1559 = vmatpush1.msra.mxu0 0.0
    %1560 = vmatprep.mubr.f32.mxu0 0.0
    %v1561 = vand.u32 %v1451, 4294901760
    %v1562 = vsub.f32 %v1451, %v1561
    %v1563 = vand.u32 %v1562, 4294901760
    %v1564 = vsub.f32 %v1562, %v1563
    %v1565 = vand.u32 %v1564, 4294901760
    %1566 = vmatmul.mubr.f32.gmra.mrb[0].mxu0 %v1565
    %v1567 = vpop.f32.mrb[0].mxu0
    %v1568 = vadd.f32 %v1479, %v1567
    %v1569 = vpop.f32.mrb[0].mxu0
    %1570 = vmatprep.mubr.f32.mxu0 0.0
    %v1571 = vand.u32 %v1452, 4294901760
    %v1572 = vsub.f32 %v1452, %v1571
    %v1573 = vand.u32 %v1572, 4294901760
    %v1574 = vsub.f32 %v1572, %v1573
    %v1575 = vand.u32 %v1574, 4294901760
    %1576 = vmatmul.mubr.f32.gmra.mrb[0].mxu0 %v1575
    %v1577 = vpop.f32.mrb[0].mxu0
    %v1578 = vadd.f32 %v1479, %v1577
    %v1579 = vpop.f32.mrb[0].mxu0
    %1580 = vmatprep.mubr.f32.mxu0 0.0
    %v1581 = vand.u32 %v1453, 4294901760
    %v1582 = vsub.f32 %v1453, %v1581
    %v1583 = vand.u32 %v1582, 4294901760
    %v1584 = vsub.f32 %v1582, %v1583
    %v1585 = vand.u32 %v1584, 4294901760
    %1586 = vmatmul.mubr.f32.gmra.mrb[0].mxu0 %v1585
    %v1587 = vpop.f32.mrb[0].mxu0
    %v1588 = vadd.f32 %v1479, %v1587
    %v1589 = vpop.f32.mrb[0].mxu0
    %1590 = vmatprep.mubr.f32.mxu0 0.0
    %v1591 = vand.u32 %v1454, 4294901760
    %v1592 = vsub.f32 %v1454, %v1591
    %v1593 = vand.u32 %v1592, 4294901760
    %v1594 = vsub.f32 %v1592, %v1593
    %v1595 = vand.u32 %v1594, 4294901760
    %1596 = vmatmul.mubr.f32.gmra.mrb[0].mxu0 %v1595
    %v1597 = vpop.f32.mrb[0].mxu0
    %v1598 = vadd.f32 %v1479, %v1597
    %v1599 = vpop.f32.mrb[0].mxu0
    %1600 = vmatprep.mubr.f32.mxu0 0.0
    %v1601 = vand.u32 %v1455, 4294901760
    %v1602 = vsub.f32 %v1455, %v1601
    %v1603 = vand.u32 %v1602, 4294901760
    %v1604 = vsub.f32 %v1602, %v1603
    %v1605 = vand.u32 %v1604, 4294901760
    %1606 = vmatmul.mubr.f32.gmra.mrb[0].mxu0 %v1605
    %v1607 = vpop.f32.mrb[0].mxu0
    %v1608 = vadd.f32 %v1479, %v1607
    %v1609 = vpop.f32.mrb[0].mxu0
    %1610 = vmatprep.mubr.f32.mxu0 0.0
    %v1611 = vand.u32 %v1456, 4294901760
    %v1612 = vsub.f32 %v1456, %v1611
    %v1613 = vand.u32 %v1612, 4294901760
    %v1614 = vsub.f32 %v1612, %v1613
    %v1615 = vand.u32 %v1614, 4294901760
    %1616 = vmatmul.mubr.f32.gmra.mrb[0].mxu0 %v1615
    %v1617 = vpop.f32.mrb[0].mxu0
    %v1618 = vadd.f32 %v1479, %v1617
    %v1619 = vpop.f32.mrb[0].mxu0
    %1620 = vmatprep.mubr.f32.mxu0 0.0
    %v1621 = vand.u32 %v1457, 4294901760
    %v1622 = vsub.f32 %v1457, %v1621
    %v1623 = vand.u32 %v1622, 4294901760
    %v1624 = vsub.f32 %v1622, %v1623
    %v1625 = vand.u32 %v1624, 4294901760
    %1626 = vmatmul.mubr.f32.gmra.mrb[0].mxu0 %v1625
    %v1627 = vpop.f32.mrb[0].mxu0
    %v1628 = vadd.f32 %v1479, %v1627
    %v1629 = vpop.f32.mrb[0].mxu0
    %1630 = vmatprep.mubr.f32.mxu0 0.0
    %v1631 = vand.u32 %v1458, 4294901760
    %v1632 = vsub.f32 %v1458, %v1631
    %v1633 = vand.u32 %v1632, 4294901760
    %v1634 = vsub.f32 %v1632, %v1633
    %v1635 = vand.u32 %v1634, 4294901760
    %1636 = vmatmul.mubr.f32.gmra.mrb[0].mxu0 %v1635
    %v1637 = vpop.f32.mrb[0].mxu0
    %v1638 = vadd.f32 %v1479, %v1637
    %v1639 = vpop.f32.mrb[0].mxu0
    %1640 = vdwg.mxu0
    %1641 = vmatprep.subr.mxu0 0.0
    %v1642 = vand.u32 %v1460, 4294901760
    %v1643 = vsub.f32 %v1460, %v1642
    %v1644 = vand.u32 %v1643, 4294901760
    %v1645 = vsub.f32 %v1643, %v1644
    %v1646 = vand.u32 %v1645, 4294901760
    %1647 = vmatpush1.msra.mxu0 %v1646
    %1648 = vmatprep.subr.mxu0 0.0
    %v1649 = vand.u32 %v1461, 4294901760
    %v1650 = vsub.f32 %v1461, %v1649
    %v1651 = vand.u32 %v1650, 4294901760
    %v1652 = vsub.f32 %v1650, %v1651
    %v1653 = vand.u32 %v1652, 4294901760
    %1654 = vmatpush1.msra.mxu0 %v1653
    %1655 = vmatprep.subr.mxu0 0.0
    %v1656 = vand.u32 %v1462, 4294901760
    %v1657 = vsub.f32 %v1462, %v1656
    %v1658 = vand.u32 %v1657, 4294901760
    %v1659 = vsub.f32 %v1657, %v1658
    %v1660 = vand.u32 %v1659, 4294901760
    %1661 = vmatpush1.msra.mxu0 %v1660
    %1662 = vmatprep.subr.mxu0 0.0
    %v1663 = vand.u32 %v1463, 4294901760
    %v1664 = vsub.f32 %v1463, %v1663
    %v1665 = vand.u32 %v1664, 4294901760
    %v1666 = vsub.f32 %v1664, %v1665
    %v1667 = vand.u32 %v1666, 4294901760
    %1668 = vmatpush1.msra.mxu0 %v1667
    %1669 = vmatprep.subr.mxu0 0.0
    %v1670 = vand.u32 %v1464, 4294901760
    %v1671 = vsub.f32 %v1464, %v1670
    %v1672 = vand.u32 %v1671, 4294901760
    %v1673 = vsub.f32 %v1671, %v1672
    %v1674 = vand.u32 %v1673, 4294901760
    %1675 = vmatpush1.msra.mxu0 %v1674
    %1676 = vmatprep.subr.mxu0 0.0
    %v1677 = vand.u32 %v1465, 4294901760
    %v1678 = vsub.f32 %v1465, %v1677
    %v1679 = vand.u32 %v1678, 4294901760
    %v1680 = vsub.f32 %v1678, %v1679
    %v1681 = vand.u32 %v1680, 4294901760
    %1682 = vmatpush1.msra.mxu0 %v1681
    %1683 = vmatprep.subr.mxu0 0.0
    %v1684 = vand.u32 %v1466, 4294901760
    %v1685 = vsub.f32 %v1466, %v1684
    %v1686 = vand.u32 %v1685, 4294901760
    %v1687 = vsub.f32 %v1685, %v1686
    %v1688 = vand.u32 %v1687, 4294901760
    %1689 = vmatpush1.msra.mxu0 %v1688
    %1690 = vmatprep.subr.mxu0 0.0
    %v1691 = vand.u32 %v1467, 4294901760
    %v1692 = vsub.f32 %v1467, %v1691
    %v1693 = vand.u32 %v1692, 4294901760
    %v1694 = vsub.f32 %v1692, %v1693
    %v1695 = vand.u32 %v1694, 4294901760
    %1696 = vmatpush1.msra.mxu0 %v1695
    %1697 = vmatprep.subr.mxu0 0.0
    %v1698 = vand.u32 %v1468, 4294901760
    %v1699 = vsub.f32 %v1468, %v1698
    %v1700 = vand.u32 %v1699, 4294901760
    %v1701 = vsub.f32 %v1699, %v1700
    %v1702 = vand.u32 %v1701, 4294901760
    %1703 = vmatpush1.msra.mxu0 %v1702
    %1704 = vmatprep.subr.mxu0 0.0
    %v1705 = vand.u32 %v1469, 4294901760
    %v1706 = vsub.f32 %v1469, %v1705
    %v1707 = vand.u32 %v1706, 4294901760
    %v1708 = vsub.f32 %v1706, %v1707
    %v1709 = vand.u32 %v1708, 4294901760
    %1710 = vmatpush1.msra.mxu0 %v1709
    %1711 = vmatprep.subr.mxu0 0.0
    %v1712 = vand.u32 %v1470, 4294901760
    %v1713 = vsub.f32 %v1470, %v1712
    %v1714 = vand.u32 %v1713, 4294901760
    %v1715 = vsub.f32 %v1713, %v1714
    %v1716 = vand.u32 %v1715, 4294901760
    %1717 = vmatpush1.msra.mxu0 %v1716
    %1718 = vmatprep.subr.mxu0 0.0
    %v1719 = vand.u32 %v1471, 4294901760
    %v1720 = vsub.f32 %v1471, %v1719
    %v1721 = vand.u32 %v1720, 4294901760
    %v1722 = vsub.f32 %v1720, %v1721
    %v1723 = vand.u32 %v1722, 4294901760
    %1724 = vmatpush1.msra.mxu0 %v1723
    %1725 = vmatprep.subr.mxu0 0.0
    %v1726 = vand.u32 %v1472, 4294901760
    %v1727 = vsub.f32 %v1472, %v1726
    %v1728 = vand.u32 %v1727, 4294901760
    %v1729 = vsub.f32 %v1727, %v1728
    %v1730 = vand.u32 %v1729, 4294901760
    %1731 = vmatpush1.msra.mxu0 %v1730
    %1732 = vmatprep.subr.mxu0 0.0
    %v1733 = vand.u32 %v1473, 4294901760
    %v1734 = vsub.f32 %v1473, %v1733
    %v1735 = vand.u32 %v1734, 4294901760
    %v1736 = vsub.f32 %v1734, %v1735
    %v1737 = vand.u32 %v1736, 4294901760
    %1738 = vmatpush1.msra.mxu0 %v1737
    %1739 = vmatprep.subr.mxu0 0.0
    %v1740 = vand.u32 %v1474, 4294901760
    %v1741 = vsub.f32 %v1474, %v1740
    %v1742 = vand.u32 %v1741, 4294901760
    %v1743 = vsub.f32 %v1741, %v1742
    %v1744 = vand.u32 %v1743, 4294901760
    %1745 = vmatpush1.msra.mxu0 %v1744
    %1746 = vmatprep.subr.mxu0 0.0
    %v1747 = vand.u32 %v1475, 4294901760
    %v1748 = vsub.f32 %v1475, %v1747
    %v1749 = vand.u32 %v1748, 4294901760
    %v1750 = vsub.f32 %v1748, %v1749
    %v1751 = vand.u32 %v1750, 4294901760
    %1752 = vmatpush1.msra.mxu0 %v1751
    %1753 = vmatprep.subr.mxu0 0.0
    %1754 = vmatpush1.msra.mxu0 0.0
    %1755 = vmatprep.subr.mxu0 0.0
    %1756 = vmatpush1.msra.mxu0 0.0
    %1757 = vmatprep.subr.mxu0 0.0
    %1758 = vmatpush1.msra.mxu0 0.0
    %1759 = vmatprep.subr.mxu0 0.0
    %1760 = vmatpush1.msra.mxu0 0.0
    %1761 = vmatprep.subr.mxu0 0.0
    %1762 = vmatpush1.msra.mxu0 0.0
    %1763 = vmatprep.subr.mxu0 0.0
    %1764 = vmatpush1.msra.mxu0 0.0
    %1765 = vmatprep.subr.mxu0 0.0
    %1766 = vmatpush1.msra.mxu0 0.0
    %1767 = vmatprep.subr.mxu0 0.0
    %1768 = vmatpush1.msra.mxu0 0.0
    %1769 = vmatprep.subr.mxu0 0.0
    %1770 = vmatpush1.msra.mxu0 0.0
    %1771 = vmatprep.subr.mxu0 0.0
    %1772 = vmatpush1.msra.mxu0 0.0
    %1773 = vmatprep.subr.mxu0 0.0
    %1774 = vmatpush1.msra.mxu0 0.0
    %1775 = vmatprep.subr.mxu0 0.0
    %1776 = vmatpush1.msra.mxu0 0.0
    %1777 = vmatprep.subr.mxu0 0.0
    %1778 = vmatpush1.msra.mxu0 0.0
    %1779 = vmatprep.subr.mxu0 0.0
    %1780 = vmatpush1.msra.mxu0 0.0
    %1781 = vmatprep.subr.mxu0 0.0
    %1782 = vmatpush1.msra.mxu0 0.0
    %1783 = vmatprep.subr.mxu0 0.0
    %1784 = vmatpush1.msra.mxu0 0.0
    %1785 = vmatprep.mubr.f32.mxu0 0.0
    %v1786 = vand.u32 %v1451, 4294901760
    %1787 = vmatmul.mubr.f32.gmra.mrb[0].mxu0 %v1786
    %v1788 = vpop.f32.mrb[0].mxu0
    %v1789 = vadd.f32 %v1568, %v1788
    %v1790 = vpop.f32.mrb[0].mxu0
    %1791 = vmatprep.mubr.f32.mxu0 0.0
    %v1792 = vand.u32 %v1452, 4294901760
    %1793 = vmatmul.mubr.f32.gmra.mrb[0].mxu0 %v1792
    %v1794 = vpop.f32.mrb[0].mxu0
    %v1795 = vadd.f32 %v1578, %v1794
    %v1796 = vpop.f32.mrb[0].mxu0
    %1797 = vmatprep.mubr.f32.mxu0 0.0
    %v1798 = vand.u32 %v1453, 4294901760
    %1799 = vmatmul.mubr.f32.gmra.mrb[0].mxu0 %v1798
    %v1800 = vpop.f32.mrb[0].mxu0
    %v1801 = vadd.f32 %v1588, %v1800
    %v1802 = vpop.f32.mrb[0].mxu0
    %1803 = vmatprep.mubr.f32.mxu0 0.0
    %v1804 = vand.u32 %v1454, 4294901760
    %1805 = vmatmul.mubr.f32.gmra.mrb[0].mxu0 %v1804
    %v1806 = vpop.f32.mrb[0].mxu0
    %v1807 = vadd.f32 %v1598, %v1806
    %v1808 = vpop.f32.mrb[0].mxu0
    %1809 = vmatprep.mubr.f32.mxu0 0.0
    %v1810 = vand.u32 %v1455, 4294901760
    %1811 = vmatmul.mubr.f32.gmra.mrb[0].mxu0 %v1810
    %v1812 = vpop.f32.mrb[0].mxu0
    %v1813 = vadd.f32 %v1608, %v1812
    %v1814 = vpop.f32.mrb[0].mxu0
    %1815 = vmatprep.mubr.f32.mxu0 0.0
    %v1816 = vand.u32 %v1456, 4294901760
    %1817 = vmatmul.mubr.f32.gmra.mrb[0].mxu0 %v1816
    %v1818 = vpop.f32.mrb[0].mxu0
    %v1819 = vadd.f32 %v1618, %v1818
    %v1820 = vpop.f32.mrb[0].mxu0
    %1821 = vmatprep.mubr.f32.mxu0 0.0
    %v1822 = vand.u32 %v1457, 4294901760
    %1823 = vmatmul.mubr.f32.gmra.mrb[0].mxu0 %v1822
    %v1824 = vpop.f32.mrb[0].mxu0
    %v1825 = vadd.f32 %v1628, %v1824
    %v1826 = vpop.f32.mrb[0].mxu0
    %1827 = vmatprep.mubr.f32.mxu0 0.0
    %v1828 = vand.u32 %v1458, 4294901760
    %1829 = vmatmul.mubr.f32.gmra.mrb[0].mxu0 %v1828
    %v1830 = vpop.f32.mrb[0].mxu0
    %v1831 = vadd.f32 %v1638, %v1830
    %v1832 = vpop.f32.mrb[0].mxu0
    %1833 = vdwg.mxu0
    %1834 = vmatprep.subr.mxu0 0.0
    %v1835 = vand.u32 %v1460, 4294901760
    %v1836 = vsub.f32 %v1460, %v1835
    %1837 = vmatpush1.msra.mxu0 %v1836
    %1838 = vmatprep.subr.mxu0 0.0
    %v1839 = vand.u32 %v1461, 4294901760
    %v1840 = vsub.f32 %v1461, %v1839
    %1841 = vmatpush1.msra.mxu0 %v1840
    %1842 = vmatprep.subr.mxu0 0.0
    %v1843 = vand.u32 %v1462, 4294901760
    %v1844 = vsub.f32 %v1462, %v1843
    %1845 = vmatpush1.msra.mxu0 %v1844
    %1846 = vmatprep.subr.mxu0 0.0
    %v1847 = vand.u32 %v1463, 4294901760
    %v1848 = vsub.f32 %v1463, %v1847
    %1849 = vmatpush1.msra.mxu0 %v1848
    %1850 = vmatprep.subr.mxu0 0.0
    %v1851 = vand.u32 %v1464, 4294901760
    %v1852 = vsub.f32 %v1464, %v1851
    %1853 = vmatpush1.msra.mxu0 %v1852
    %1854 = vmatprep.subr.mxu0 0.0
    %v1855 = vand.u32 %v1465, 4294901760
    %v1856 = vsub.f32 %v1465, %v1855
    %1857 = vmatpush1.msra.mxu0 %v1856
    %1858 = vmatprep.subr.mxu0 0.0
    %v1859 = vand.u32 %v1466, 4294901760
    %v1860 = vsub.f32 %v1466, %v1859
    %1861 = vmatpush1.msra.mxu0 %v1860
    %1862 = vmatprep.subr.mxu0 0.0
    %v1863 = vand.u32 %v1467, 4294901760
    %v1864 = vsub.f32 %v1467, %v1863
    %1865 = vmatpush1.msra.mxu0 %v1864
    %1866 = vmatprep.subr.mxu0 0.0
    %v1867 = vand.u32 %v1468, 4294901760
    %v1868 = vsub.f32 %v1468, %v1867
    %1869 = vmatpush1.msra.mxu0 %v1868
    %1870 = vmatprep.subr.mxu0 0.0
    %v1871 = vand.u32 %v1469, 4294901760
    %v1872 = vsub.f32 %v1469, %v1871
    %1873 = vmatpush1.msra.mxu0 %v1872
    %1874 = vmatprep.subr.mxu0 0.0
    %v1875 = vand.u32 %v1470, 4294901760
    %v1876 = vsub.f32 %v1470, %v1875
    %1877 = vmatpush1.msra.mxu0 %v1876
    %1878 = vmatprep.subr.mxu0 0.0
    %v1879 = vand.u32 %v1471, 4294901760
    %v1880 = vsub.f32 %v1471, %v1879
    %1881 = vmatpush1.msra.mxu0 %v1880
    %1882 = vmatprep.subr.mxu0 0.0
    %v1883 = vand.u32 %v1472, 4294901760
    %v1884 = vsub.f32 %v1472, %v1883
    %1885 = vmatpush1.msra.mxu0 %v1884
    %1886 = vmatprep.subr.mxu0 0.0
    %v1887 = vand.u32 %v1473, 4294901760
    %v1888 = vsub.f32 %v1473, %v1887
    %1889 = vmatpush1.msra.mxu0 %v1888
    %1890 = vmatprep.subr.mxu0 0.0
    %v1891 = vand.u32 %v1474, 4294901760
    %v1892 = vsub.f32 %v1474, %v1891
    %1893 = vmatpush1.msra.mxu0 %v1892
    %1894 = vmatprep.subr.mxu0 0.0
    %v1895 = vand.u32 %v1475, 4294901760
    %v1896 = vsub.f32 %v1475, %v1895
    %1897 = vmatpush1.msra.mxu0 %v1896
    %1898 = vmatprep.subr.mxu0 0.0
    %1899 = vmatpush1.msra.mxu0 0.0
    %1900 = vmatprep.subr.mxu0 0.0
    %1901 = vmatpush1.msra.mxu0 0.0
    %1902 = vmatprep.subr.mxu0 0.0
    %1903 = vmatpush1.msra.mxu0 0.0
    %1904 = vmatprep.subr.mxu0 0.0
    %1905 = vmatpush1.msra.mxu0 0.0
    %1906 = vmatprep.subr.mxu0 0.0
    %1907 = vmatpush1.msra.mxu0 0.0
    %1908 = vmatprep.subr.mxu0 0.0
    %1909 = vmatpush1.msra.mxu0 0.0
    %1910 = vmatprep.subr.mxu0 0.0
    %1911 = vmatpush1.msra.mxu0 0.0
    %1912 = vmatprep.subr.mxu0 0.0
    %1913 = vmatpush1.msra.mxu0 0.0
    %1914 = vmatprep.subr.mxu0 0.0
    %1915 = vmatpush1.msra.mxu0 0.0
    %1916 = vmatprep.subr.mxu0 0.0
    %1917 = vmatpush1.msra.mxu0 0.0
    %1918 = vmatprep.subr.mxu0 0.0
    %1919 = vmatpush1.msra.mxu0 0.0
    %1920 = vmatprep.subr.mxu0 0.0
    %1921 = vmatpush1.msra.mxu0 0.0
    %1922 = vmatprep.subr.mxu0 0.0
    %1923 = vmatpush1.msra.mxu0 0.0
    %1924 = vmatprep.subr.mxu0 0.0
    %1925 = vmatpush1.msra.mxu0 0.0
    %1926 = vmatprep.subr.mxu0 0.0
    %1927 = vmatpush1.msra.mxu0 0.0
    %1928 = vmatprep.subr.mxu0 0.0
    %1929 = vmatpush1.msra.mxu0 0.0
    %1930 = vmatprep.mubr.f32.mxu0 0.0
    %v1931 = vand.u32 %v1451, 4294901760
    %v1932 = vsub.f32 %v1451, %v1931
    %1933 = vmatmul.mubr.f32.gmra.mrb[0].mxu0 %v1932
    %v1934 = vpop.f32.mrb[0].mxu0
    %v1935 = vadd.f32 %v1789, %v1934
    %v1936 = vpop.f32.mrb[0].mxu0
    %1937 = vmatprep.mubr.f32.mxu0 0.0
    %v1938 = vand.u32 %v1452, 4294901760
    %v1939 = vsub.f32 %v1452, %v1938
    %1940 = vmatmul.mubr.f32.gmra.mrb[0].mxu0 %v1939
    %v1941 = vpop.f32.mrb[0].mxu0
    %v1942 = vadd.f32 %v1795, %v1941
    %v1943 = vpop.f32.mrb[0].mxu0
    %1944 = vmatprep.mubr.f32.mxu0 0.0
    %v1945 = vand.u32 %v1453, 4294901760
    %v1946 = vsub.f32 %v1453, %v1945
    %1947 = vmatmul.mubr.f32.gmra.mrb[0].mxu0 %v1946
    %v1948 = vpop.f32.mrb[0].mxu0
    %v1949 = vadd.f32 %v1801, %v1948
    %v1950 = vpop.f32.mrb[0].mxu0
    %1951 = vmatprep.mubr.f32.mxu0 0.0
    %v1952 = vand.u32 %v1454, 4294901760
    %v1953 = vsub.f32 %v1454, %v1952
    %1954 = vmatmul.mubr.f32.gmra.mrb[0].mxu0 %v1953
    %v1955 = vpop.f32.mrb[0].mxu0
    %v1956 = vadd.f32 %v1807, %v1955
    %v1957 = vpop.f32.mrb[0].mxu0
    %1958 = vmatprep.mubr.f32.mxu0 0.0
    %v1959 = vand.u32 %v1455, 4294901760
    %v1960 = vsub.f32 %v1455, %v1959
    %1961 = vmatmul.mubr.f32.gmra.mrb[0].mxu0 %v1960
    %v1962 = vpop.f32.mrb[0].mxu0
    %v1963 = vadd.f32 %v1813, %v1962
    %v1964 = vpop.f32.mrb[0].mxu0
    %1965 = vmatprep.mubr.f32.mxu0 0.0
    %v1966 = vand.u32 %v1456, 4294901760
    %v1967 = vsub.f32 %v1456, %v1966
    %1968 = vmatmul.mubr.f32.gmra.mrb[0].mxu0 %v1967
    %v1969 = vpop.f32.mrb[0].mxu0
    %v1970 = vadd.f32 %v1819, %v1969
    %v1971 = vpop.f32.mrb[0].mxu0
    %1972 = vmatprep.mubr.f32.mxu0 0.0
    %v1973 = vand.u32 %v1457, 4294901760
    %v1974 = vsub.f32 %v1457, %v1973
    %1975 = vmatmul.mubr.f32.gmra.mrb[0].mxu0 %v1974
    %v1976 = vpop.f32.mrb[0].mxu0
    %v1977 = vadd.f32 %v1825, %v1976
    %v1978 = vpop.f32.mrb[0].mxu0
    %1979 = vmatprep.mubr.f32.mxu0 0.0
    %v1980 = vand.u32 %v1458, 4294901760
    %v1981 = vsub.f32 %v1458, %v1980
    %1982 = vmatmul.mubr.f32.gmra.mrb[0].mxu0 %v1981
    %v1983 = vpop.f32.mrb[0].mxu0
    %v1984 = vadd.f32 %v1831, %v1983
    %v1985 = vpop.f32.mrb[0].mxu0
    %1986 = vdwg.mxu0
    %1987 = vmatprep.subr.mxu0 0.0
    %v1988 = vand.u32 %v1460, 4294901760
    %1989 = vmatpush1.msra.mxu0 %v1988
    %1990 = vmatprep.subr.mxu0 0.0
    %v1991 = vand.u32 %v1461, 4294901760
    %1992 = vmatpush1.msra.mxu0 %v1991
    %1993 = vmatprep.subr.mxu0 0.0
    %v1994 = vand.u32 %v1462, 4294901760
    %1995 = vmatpush1.msra.mxu0 %v1994
    %1996 = vmatprep.subr.mxu0 0.0
    %v1997 = vand.u32 %v1463, 4294901760
    %1998 = vmatpush1.msra.mxu0 %v1997
    %1999 = vmatprep.subr.mxu0 0.0
    %v2000 = vand.u32 %v1464, 4294901760
    %2001 = vmatpush1.msra.mxu0 %v2000
    %2002 = vmatprep.subr.mxu0 0.0
    %v2003 = vand.u32 %v1465, 4294901760
    %2004 = vmatpush1.msra.mxu0 %v2003
    %2005 = vmatprep.subr.mxu0 0.0
    %v2006 = vand.u32 %v1466, 4294901760
    %2007 = vmatpush1.msra.mxu0 %v2006
    %2008 = vmatprep.subr.mxu0 0.0
    %v2009 = vand.u32 %v1467, 4294901760
    %2010 = vmatpush1.msra.mxu0 %v2009
    %2011 = vmatprep.subr.mxu0 0.0
    %v2012 = vand.u32 %v1468, 4294901760
    %2013 = vmatpush1.msra.mxu0 %v2012
    %2014 = vmatprep.subr.mxu0 0.0
    %v2015 = vand.u32 %v1469, 4294901760
    %2016 = vmatpush1.msra.mxu0 %v2015
    %2017 = vmatprep.subr.mxu0 0.0
    %v2018 = vand.u32 %v1470, 4294901760
    %2019 = vmatpush1.msra.mxu0 %v2018
    %2020 = vmatprep.subr.mxu0 0.0
    %v2021 = vand.u32 %v1471, 4294901760
    %2022 = vmatpush1.msra.mxu0 %v2021
    %2023 = vmatprep.subr.mxu0 0.0
    %v2024 = vand.u32 %v1472, 4294901760
    %2025 = vmatpush1.msra.mxu0 %v2024
    %2026 = vmatprep.subr.mxu0 0.0
    %v2027 = vand.u32 %v1473, 4294901760
    %2028 = vmatpush1.msra.mxu0 %v2027
    %2029 = vmatprep.subr.mxu0 0.0
    %v2030 = vand.u32 %v1474, 4294901760
    %2031 = vmatpush1.msra.mxu0 %v2030
    %2032 = vmatprep.subr.mxu0 0.0
    %v2033 = vand.u32 %v1475, 4294901760
    %2034 = vmatpush1.msra.mxu0 %v2033
    %2035 = vmatprep.subr.mxu0 0.0
    %2036 = vmatpush1.msra.mxu0 0.0
    %2037 = vmatprep.subr.mxu0 0.0
    %2038 = vmatpush1.msra.mxu0 0.0
    %2039 = vmatprep.subr.mxu0 0.0
    %2040 = vmatpush1.msra.mxu0 0.0
    %2041 = vmatprep.subr.mxu0 0.0
    %2042 = vmatpush1.msra.mxu0 0.0
    %2043 = vmatprep.subr.mxu0 0.0
    %2044 = vmatpush1.msra.mxu0 0.0
    %2045 = vmatprep.subr.mxu0 0.0
    %2046 = vmatpush1.msra.mxu0 0.0
    %2047 = vmatprep.subr.mxu0 0.0
    %2048 = vmatpush1.msra.mxu0 0.0
    %2049 = vmatprep.subr.mxu0 0.0
    %2050 = vmatpush1.msra.mxu0 0.0
    %2051 = vmatprep.subr.mxu0 0.0
    %2052 = vmatpush1.msra.mxu0 0.0
    %2053 = vmatprep.subr.mxu0 0.0
    %2054 = vmatpush1.msra.mxu0 0.0
    %2055 = vmatprep.subr.mxu0 0.0
    %2056 = vmatpush1.msra.mxu0 0.0
    %2057 = vmatprep.subr.mxu0 0.0
    %2058 = vmatpush1.msra.mxu0 0.0
    %2059 = vmatprep.subr.mxu0 0.0
    %2060 = vmatpush1.msra.mxu0 0.0
    %2061 = vmatprep.subr.mxu0 0.0
    %2062 = vmatpush1.msra.mxu0 0.0
    %2063 = vmatprep.subr.mxu0 0.0
    %2064 = vmatpush1.msra.mxu0 0.0
    %2065 = vmatprep.subr.mxu0 0.0
    %2066 = vmatpush1.msra.mxu0 0.0
    %2067 = vmatprep.mubr.f32.mxu0 0.0
    %v2068 = vand.u32 %v1451, 4294901760
    %v2069 = vsub.f32 %v1451, %v2068
    %v2070 = vand.u32 %v2069, 4294901760
    %2071 = vmatmul.mubr.f32.gmra.mrb[0].mxu0 %v2070
    %v2072 = vpop.f32.mrb[0].mxu0
    %v2073 = vadd.f32 %v1935, %v2072
    %v2074 = vpop.f32.mrb[0].mxu0
    %2075 = vmatprep.mubr.f32.mxu0 0.0
    %v2076 = vand.u32 %v1452, 4294901760
    %v2077 = vsub.f32 %v1452, %v2076
    %v2078 = vand.u32 %v2077, 4294901760
    %2079 = vmatmul.mubr.f32.gmra.mrb[0].mxu0 %v2078
    %v2080 = vpop.f32.mrb[0].mxu0
    %v2081 = vadd.f32 %v1942, %v2080
    %v2082 = vpop.f32.mrb[0].mxu0
    %2083 = vmatprep.mubr.f32.mxu0 0.0
    %v2084 = vand.u32 %v1453, 4294901760
    %v2085 = vsub.f32 %v1453, %v2084
    %v2086 = vand.u32 %v2085, 4294901760
    %2087 = vmatmul.mubr.f32.gmra.mrb[0].mxu0 %v2086
    %v2088 = vpop.f32.mrb[0].mxu0
    %v2089 = vadd.f32 %v1949, %v2088
    %v2090 = vpop.f32.mrb[0].mxu0
    %2091 = vmatprep.mubr.f32.mxu0 0.0
    %v2092 = vand.u32 %v1454, 4294901760
    %v2093 = vsub.f32 %v1454, %v2092
    %v2094 = vand.u32 %v2093, 4294901760
    %2095 = vmatmul.mubr.f32.gmra.mrb[0].mxu0 %v2094
    %v2096 = vpop.f32.mrb[0].mxu0
    %v2097 = vadd.f32 %v1956, %v2096
    %v2098 = vpop.f32.mrb[0].mxu0
    %2099 = vmatprep.mubr.f32.mxu0 0.0
    %v2100 = vand.u32 %v1455, 4294901760
    %v2101 = vsub.f32 %v1455, %v2100
    %v2102 = vand.u32 %v2101, 4294901760
    %2103 = vmatmul.mubr.f32.gmra.mrb[0].mxu0 %v2102
    %v2104 = vpop.f32.mrb[0].mxu0
    %v2105 = vadd.f32 %v1963, %v2104
    %v2106 = vpop.f32.mrb[0].mxu0
    %2107 = vmatprep.mubr.f32.mxu0 0.0
    %v2108 = vand.u32 %v1456, 4294901760
    %v2109 = vsub.f32 %v1456, %v2108
    %v2110 = vand.u32 %v2109, 4294901760
    %2111 = vmatmul.mubr.f32.gmra.mrb[0].mxu0 %v2110
    %v2112 = vpop.f32.mrb[0].mxu0
    %v2113 = vadd.f32 %v1970, %v2112
    %v2114 = vpop.f32.mrb[0].mxu0
    %2115 = vmatprep.mubr.f32.mxu0 0.0
    %v2116 = vand.u32 %v1457, 4294901760
    %v2117 = vsub.f32 %v1457, %v2116
    %v2118 = vand.u32 %v2117, 4294901760
    %2119 = vmatmul.mubr.f32.gmra.mrb[0].mxu0 %v2118
    %v2120 = vpop.f32.mrb[0].mxu0
    %v2121 = vadd.f32 %v1977, %v2120
    %v2122 = vpop.f32.mrb[0].mxu0
    %2123 = vmatprep.mubr.f32.mxu0 0.0
    %v2124 = vand.u32 %v1458, 4294901760
    %v2125 = vsub.f32 %v1458, %v2124
    %v2126 = vand.u32 %v2125, 4294901760
    %2127 = vmatmul.mubr.f32.gmra.mrb[0].mxu0 %v2126
    %v2128 = vpop.f32.mrb[0].mxu0
    %v2129 = vadd.f32 %v1984, %v2128
    %v2130 = vpop.f32.mrb[0].mxu0
    %2131 = vdwg.mxu0
    %2132 = vmatprep.subr.mxu0 0.0
    %v2133 = vand.u32 %v1460, 4294901760
    %v2134 = vsub.f32 %v1460, %v2133
    %v2135 = vand.u32 %v2134, 4294901760
    %2136 = vmatpush1.msra.mxu0 %v2135
    %2137 = vmatprep.subr.mxu0 0.0
    %v2138 = vand.u32 %v1461, 4294901760
    %v2139 = vsub.f32 %v1461, %v2138
    %v2140 = vand.u32 %v2139, 4294901760
    %2141 = vmatpush1.msra.mxu0 %v2140
    %2142 = vmatprep.subr.mxu0 0.0
    %v2143 = vand.u32 %v1462, 4294901760
    %v2144 = vsub.f32 %v1462, %v2143
    %v2145 = vand.u32 %v2144, 4294901760
    %2146 = vmatpush1.msra.mxu0 %v2145
    %2147 = vmatprep.subr.mxu0 0.0
    %v2148 = vand.u32 %v1463, 4294901760
    %v2149 = vsub.f32 %v1463, %v2148
    %v2150 = vand.u32 %v2149, 4294901760
    %2151 = vmatpush1.msra.mxu0 %v2150
    %2152 = vmatprep.subr.mxu0 0.0
    %v2153 = vand.u32 %v1464, 4294901760
    %v2154 = vsub.f32 %v1464, %v2153
    %v2155 = vand.u32 %v2154, 4294901760
    %2156 = vmatpush1.msra.mxu0 %v2155
    %2157 = vmatprep.subr.mxu0 0.0
    %v2158 = vand.u32 %v1465, 4294901760
    %v2159 = vsub.f32 %v1465, %v2158
    %v2160 = vand.u32 %v2159, 4294901760
    %2161 = vmatpush1.msra.mxu0 %v2160
    %2162 = vmatprep.subr.mxu0 0.0
    %v2163 = vand.u32 %v1466, 4294901760
    %v2164 = vsub.f32 %v1466, %v2163
    %v2165 = vand.u32 %v2164, 4294901760
    %2166 = vmatpush1.msra.mxu0 %v2165
    %2167 = vmatprep.subr.mxu0 0.0
    %v2168 = vand.u32 %v1467, 4294901760
    %v2169 = vsub.f32 %v1467, %v2168
    %v2170 = vand.u32 %v2169, 4294901760
    %2171 = vmatpush1.msra.mxu0 %v2170
    %2172 = vmatprep.subr.mxu0 0.0
    %v2173 = vand.u32 %v1468, 4294901760
    %v2174 = vsub.f32 %v1468, %v2173
    %v2175 = vand.u32 %v2174, 4294901760
    %2176 = vmatpush1.msra.mxu0 %v2175
    %2177 = vmatprep.subr.mxu0 0.0
    %v2178 = vand.u32 %v1469, 4294901760
    %v2179 = vsub.f32 %v1469, %v2178
    %v2180 = vand.u32 %v2179, 4294901760
    %2181 = vmatpush1.msra.mxu0 %v2180
    %2182 = vmatprep.subr.mxu0 0.0
    %v2183 = vand.u32 %v1470, 4294901760
    %v2184 = vsub.f32 %v1470, %v2183
    %v2185 = vand.u32 %v2184, 4294901760
    %2186 = vmatpush1.msra.mxu0 %v2185
    %2187 = vmatprep.subr.mxu0 0.0
    %v2188 = vand.u32 %v1471, 4294901760
    %v2189 = vsub.f32 %v1471, %v2188
    %v2190 = vand.u32 %v2189, 4294901760
    %2191 = vmatpush1.msra.mxu0 %v2190
    %2192 = vmatprep.subr.mxu0 0.0
    %v2193 = vand.u32 %v1472, 4294901760
    %v2194 = vsub.f32 %v1472, %v2193
    %v2195 = vand.u32 %v2194, 4294901760
    %2196 = vmatpush1.msra.mxu0 %v2195
    %2197 = vmatprep.subr.mxu0 0.0
    %v2198 = vand.u32 %v1473, 4294901760
    %v2199 = vsub.f32 %v1473, %v2198
    %v2200 = vand.u32 %v2199, 4294901760
    %2201 = vmatpush1.msra.mxu0 %v2200
    %2202 = vmatprep.subr.mxu0 0.0
    %v2203 = vand.u32 %v1474, 4294901760
    %v2204 = vsub.f32 %v1474, %v2203
    %v2205 = vand.u32 %v2204, 4294901760
    %2206 = vmatpush1.msra.mxu0 %v2205
    %2207 = vmatprep.subr.mxu0 0.0
    %v2208 = vand.u32 %v1475, 4294901760
    %v2209 = vsub.f32 %v1475, %v2208
    %v2210 = vand.u32 %v2209, 4294901760
    %2211 = vmatpush1.msra.mxu0 %v2210
    %2212 = vmatprep.subr.mxu0 0.0
    %2213 = vmatpush1.msra.mxu0 0.0
    %2214 = vmatprep.subr.mxu0 0.0
    %2215 = vmatpush1.msra.mxu0 0.0
    %2216 = vmatprep.subr.mxu0 0.0
    %2217 = vmatpush1.msra.mxu0 0.0
    %2218 = vmatprep.subr.mxu0 0.0
    %2219 = vmatpush1.msra.mxu0 0.0
    %2220 = vmatprep.subr.mxu0 0.0
    %2221 = vmatpush1.msra.mxu0 0.0
    %2222 = vmatprep.subr.mxu0 0.0
    %2223 = vmatpush1.msra.mxu0 0.0
    %2224 = vmatprep.subr.mxu0 0.0
    %2225 = vmatpush1.msra.mxu0 0.0
    %2226 = vmatprep.subr.mxu0 0.0
    %2227 = vmatpush1.msra.mxu0 0.0
    %2228 = vmatprep.subr.mxu0 0.0
    %2229 = vmatpush1.msra.mxu0 0.0
    %2230 = vmatprep.subr.mxu0 0.0
    %2231 = vmatpush1.msra.mxu0 0.0
    %2232 = vmatprep.subr.mxu0 0.0
    %2233 = vmatpush1.msra.mxu0 0.0
    %2234 = vmatprep.subr.mxu0 0.0
    %2235 = vmatpush1.msra.mxu0 0.0
    %2236 = vmatprep.subr.mxu0 0.0
    %2237 = vmatpush1.msra.mxu0 0.0
    %2238 = vmatprep.subr.mxu0 0.0
    %2239 = vmatpush1.msra.mxu0 0.0
    %2240 = vmatprep.subr.mxu0 0.0
    %2241 = vmatpush1.msra.mxu0 0.0
    %2242 = vmatprep.subr.mxu0 0.0
    %2243 = vmatpush1.msra.mxu0 0.0
    %2244 = vmatprep.mubr.f32.mxu0 0.0
    %v2245 = vand.u32 %v1451, 4294901760
    %2246 = vmatmul.mubr.f32.gmra.mrb[0].mxu0 %v2245
    %v2247 = vpop.f32.mrb[0].mxu0
    %v2248 = vadd.f32 %v2073, %v2247
    %v2249 = vpop.f32.mrb[0].mxu0
    %2250 = vmatprep.mubr.f32.mxu0 0.0
    %v2251 = vand.u32 %v1452, 4294901760
    %2252 = vmatmul.mubr.f32.gmra.mrb[0].mxu0 %v2251
    %v2253 = vpop.f32.mrb[0].mxu0
    %v2254 = vadd.f32 %v2081, %v2253
    %v2255 = vpop.f32.mrb[0].mxu0
    %2256 = vmatprep.mubr.f32.mxu0 0.0
    %v2257 = vand.u32 %v1453, 4294901760
    %2258 = vmatmul.mubr.f32.gmra.mrb[0].mxu0 %v2257
    %v2259 = vpop.f32.mrb[0].mxu0
    %v2260 = vadd.f32 %v2089, %v2259
    %v2261 = vpop.f32.mrb[0].mxu0
    %2262 = vmatprep.mubr.f32.mxu0 0.0
    %v2263 = vand.u32 %v1454, 4294901760
    %2264 = vmatmul.mubr.f32.gmra.mrb[0].mxu0 %v2263
    %v2265 = vpop.f32.mrb[0].mxu0
    %v2266 = vadd.f32 %v2097, %v2265
    %v2267 = vpop.f32.mrb[0].mxu0
    %2268 = vmatprep.mubr.f32.mxu0 0.0
    %v2269 = vand.u32 %v1455, 4294901760
    %2270 = vmatmul.mubr.f32.gmra.mrb[0].mxu0 %v2269
    %v2271 = vpop.f32.mrb[0].mxu0
    %v2272 = vadd.f32 %v2105, %v2271
    %v2273 = vpop.f32.mrb[0].mxu0
    %2274 = vmatprep.mubr.f32.mxu0 0.0
    %v2275 = vand.u32 %v1456, 4294901760
    %2276 = vmatmul.mubr.f32.gmra.mrb[0].mxu0 %v2275
    %v2277 = vpop.f32.mrb[0].mxu0
    %v2278 = vadd.f32 %v2113, %v2277
    %v2279 = vpop.f32.mrb[0].mxu0
    %2280 = vmatprep.mubr.f32.mxu0 0.0
    %v2281 = vand.u32 %v1457, 4294901760
    %2282 = vmatmul.mubr.f32.gmra.mrb[0].mxu0 %v2281
    %v2283 = vpop.f32.mrb[0].mxu0
    %v2284 = vadd.f32 %v2121, %v2283
    %v2285 = vpop.f32.mrb[0].mxu0
    %2286 = vmatprep.mubr.f32.mxu0 0.0
    %v2287 = vand.u32 %v1458, 4294901760
    %2288 = vmatmul.mubr.f32.gmra.mrb[0].mxu0 %v2287
    %v2289 = vpop.f32.mrb[0].mxu0
    %v2290 = vadd.f32 %v2129, %v2289
    %v2291 = vpop.f32.mrb[0].mxu0
    %2292 = vdwg.mxu0
    %2293 = vmatprep.subr.mxu0 0.0
    %v2294 = vand.u32 %v1460, 4294901760
    %2295 = vmatpush1.msra.mxu0 %v2294
    %2296 = vmatprep.subr.mxu0 0.0
    %v2297 = vand.u32 %v1461, 4294901760
    %2298 = vmatpush1.msra.mxu0 %v2297
    %2299 = vmatprep.subr.mxu0 0.0
    %v2300 = vand.u32 %v1462, 4294901760
    %2301 = vmatpush1.msra.mxu0 %v2300
    %2302 = vmatprep.subr.mxu0 0.0
    %v2303 = vand.u32 %v1463, 4294901760
    %2304 = vmatpush1.msra.mxu0 %v2303
    %2305 = vmatprep.subr.mxu0 0.0
    %v2306 = vand.u32 %v1464, 4294901760
    %2307 = vmatpush1.msra.mxu0 %v2306
    %2308 = vmatprep.subr.mxu0 0.0
    %v2309 = vand.u32 %v1465, 4294901760
    %2310 = vmatpush1.msra.mxu0 %v2309
    %2311 = vmatprep.subr.mxu0 0.0
    %v2312 = vand.u32 %v1466, 4294901760
    %2313 = vmatpush1.msra.mxu0 %v2312
    %2314 = vmatprep.subr.mxu0 0.0
    %v2315 = vand.u32 %v1467, 4294901760
    %2316 = vmatpush1.msra.mxu0 %v2315
    %2317 = vmatprep.subr.mxu0 0.0
    %v2318 = vand.u32 %v1468, 4294901760
    %2319 = vmatpush1.msra.mxu0 %v2318
    %2320 = vmatprep.subr.mxu0 0.0
    %v2321 = vand.u32 %v1469, 4294901760
    %2322 = vmatpush1.msra.mxu0 %v2321
    %2323 = vmatprep.subr.mxu0 0.0
    %v2324 = vand.u32 %v1470, 4294901760
    %2325 = vmatpush1.msra.mxu0 %v2324
    %2326 = vmatprep.subr.mxu0 0.0
    %v2327 = vand.u32 %v1471, 4294901760
    %2328 = vmatpush1.msra.mxu0 %v2327
    %2329 = vmatprep.subr.mxu0 0.0
    %v2330 = vand.u32 %v1472, 4294901760
    %2331 = vmatpush1.msra.mxu0 %v2330
    %2332 = vmatprep.subr.mxu0 0.0
    %v2333 = vand.u32 %v1473, 4294901760
    %2334 = vmatpush1.msra.mxu0 %v2333
    %2335 = vmatprep.subr.mxu0 0.0
    %v2336 = vand.u32 %v1474, 4294901760
    %2337 = vmatpush1.msra.mxu0 %v2336
    %2338 = vmatprep.subr.mxu0 0.0
    %v2339 = vand.u32 %v1475, 4294901760
    %2340 = vmatpush1.msra.mxu0 %v2339
    %2341 = vmatprep.subr.mxu0 0.0
    %2342 = vmatpush1.msra.mxu0 0.0
    %2343 = vmatprep.subr.mxu0 0.0
    %2344 = vmatpush1.msra.mxu0 0.0
    %2345 = vmatprep.subr.mxu0 0.0
    %2346 = vmatpush1.msra.mxu0 0.0
    %2347 = vmatprep.subr.mxu0 0.0
    %2348 = vmatpush1.msra.mxu0 0.0
    %2349 = vmatprep.subr.mxu0 0.0
    %2350 = vmatpush1.msra.mxu0 0.0
    %2351 = vmatprep.subr.mxu0 0.0
    %2352 = vmatpush1.msra.mxu0 0.0
    %2353 = vmatprep.subr.mxu0 0.0
    %2354 = vmatpush1.msra.mxu0 0.0
    %2355 = vmatprep.subr.mxu0 0.0
    %2356 = vmatpush1.msra.mxu0 0.0
    %2357 = vmatprep.subr.mxu0 0.0
    %2358 = vmatpush1.msra.mxu0 0.0
    %2359 = vmatprep.subr.mxu0 0.0
    %2360 = vmatpush1.msra.mxu0 0.0
    %2361 = vmatprep.subr.mxu0 0.0
    %2362 = vmatpush1.msra.mxu0 0.0
    %2363 = vmatprep.subr.mxu0 0.0
    %2364 = vmatpush1.msra.mxu0 0.0
    %2365 = vmatprep.subr.mxu0 0.0
    %2366 = vmatpush1.msra.mxu0 0.0
    %2367 = vmatprep.subr.mxu0 0.0
    %2368 = vmatpush1.msra.mxu0 0.0
    %2369 = vmatprep.subr.mxu0 0.0
    %2370 = vmatpush1.msra.mxu0 0.0
    %2371 = vmatprep.subr.mxu0 0.0
    %2372 = vmatpush1.msra.mxu0 0.0
    %2373 = vmatprep.mubr.f32.mxu0 0.0
    %v2374 = vand.u32 %v1451, 4294901760
    %2375 = vmatmul.mubr.f32.gmra.mrb[0].mxu0 %v2374
    %v2376 = vpop.f32.mrb[0].mxu0
    %v2377 = vadd.f32 %v2248, %v2376
    %v2378 = vpop.f32.mrb[0].mxu0
    %2379 = vmatprep.mubr.f32.mxu0 0.0
    %v2380 = vand.u32 %v1452, 4294901760
    %2381 = vmatmul.mubr.f32.gmra.mrb[0].mxu0 %v2380
    %v2382 = vpop.f32.mrb[0].mxu0
    %v2383 = vadd.f32 %v2254, %v2382
    %v2384 = vpop.f32.mrb[0].mxu0
    %2385 = vmatprep.mubr.f32.mxu0 0.0
    %v2386 = vand.u32 %v1453, 4294901760
    %2387 = vmatmul.mubr.f32.gmra.mrb[0].mxu0 %v2386
    %v2388 = vpop.f32.mrb[0].mxu0
    %v2389 = vadd.f32 %v2260, %v2388
    %v2390 = vpop.f32.mrb[0].mxu0
    %2391 = vmatprep.mubr.f32.mxu0 0.0
    %v2392 = vand.u32 %v1454, 4294901760
    %2393 = vmatmul.mubr.f32.gmra.mrb[0].mxu0 %v2392
    %v2394 = vpop.f32.mrb[0].mxu0
    %v2395 = vadd.f32 %v2266, %v2394
    %v2396 = vpop.f32.mrb[0].mxu0
    %2397 = vmatprep.mubr.f32.mxu0 0.0
    %v2398 = vand.u32 %v1455, 4294901760
    %2399 = vmatmul.mubr.f32.gmra.mrb[0].mxu0 %v2398
    %v2400 = vpop.f32.mrb[0].mxu0
    %v2401 = vadd.f32 %v2272, %v2400
    %v2402 = vpop.f32.mrb[0].mxu0
    %2403 = vmatprep.mubr.f32.mxu0 0.0
    %v2404 = vand.u32 %v1456, 4294901760
    %2405 = vmatmul.mubr.f32.gmra.mrb[0].mxu0 %v2404
    %v2406 = vpop.f32.mrb[0].mxu0
    %v2407 = vadd.f32 %v2278, %v2406
    %v2408 = vpop.f32.mrb[0].mxu0
    %2409 = vmatprep.mubr.f32.mxu0 0.0
    %v2410 = vand.u32 %v1457, 4294901760
    %2411 = vmatmul.mubr.f32.gmra.mrb[0].mxu0 %v2410
    %v2412 = vpop.f32.mrb[0].mxu0
    %v2413 = vadd.f32 %v2284, %v2412
    %v2414 = vpop.f32.mrb[0].mxu0
    %2415 = vmatprep.mubr.f32.mxu0 0.0
    %v2416 = vand.u32 %v1458, 4294901760
    %2417 = vmatmul.mubr.f32.gmra.mrb[0].mxu0 %v2416
    %v2418 = vpop.f32.mrb[0].mxu0
    %v2419 = vadd.f32 %v2290, %v2418
    %v2420 = vpop.f32.mrb[0].mxu0
    %2421 = vdwg.mxu0
    %v2422 = vsel %vm1359, %v2377, 0.0
    %v2423 = vsel %vm1360, %v2383, 0.0
    %v2424 = vsel %vm1361, %v2389, 0.0
    %v2425 = vsel %vm1362, %v2395, 0.0
    %v2426 = vsel %vm1363, %v2401, 0.0
    %v2427 = vsel %vm1364, %v2407, 0.0
    %v2428 = vsel %vm1365, %v2413, 0.0
    %v2429 = vsel %vm1366, %v2419, 0.0
    %v2430 = vadd.f32 %v2422, %v2423
    %v2431 = vadd.f32 %v2430, %v2424
    %v2432 = vadd.f32 %v2431, %v2425
    %v2433 = vadd.f32 %v2432, %v2426
    %v2434 = vadd.f32 %v2433, %v2427
    %v2435 = vadd.f32 %v2434, %v2428
    %v2436 = vadd.f32 %v2435, %v2429
    %v2437 = vrot.slane %v2436, 4
    %v2438 = vadd.f32 %v2436, %v2437
    %v2439 = vrot.slane %v2438, 2
    %v2440 = vadd.f32 %v2438, %v2439
    %v2441 = vrot.slane %v2440, 1
    %v2442 = vadd.f32 %v2440, %v2441
    %v2443 = vmul.f32 %v2442, 0.01923077
    %v2444 = vsub.f32 %v2377, %v2443
    %v2445 = vsub.f32 %v2383, %v2443
    %v2446 = vsub.f32 %v2389, %v2443
    %v2447 = vsub.f32 %v2395, %v2443
    %v2448 = vsub.f32 %v2401, %v2443
    %v2449 = vsub.f32 %v2407, %v2443
    %v2450 = vsub.f32 %v2413, %v2443
    %v2451 = vsub.f32 %v2419, %v2443
    %v2452 = vsel %vm1359, %v2444, 0.0
    %v2453 = vsel %vm1360, %v2445, 0.0
    %v2454 = vsel %vm1361, %v2446, 0.0
    %v2455 = vsel %vm1362, %v2447, 0.0
    %v2456 = vsel %vm1363, %v2448, 0.0
    %v2457 = vsel %vm1364, %v2449, 0.0
    %v2458 = vsel %vm1365, %v2450, 0.0
    %v2459 = vsel %vm1366, %v2451, 0.0
    %v2460 = vmul.f32 %v2452, %v2452
    %v2461 = vmul.f32 %v2453, %v2453
    %v2462 = vmul.f32 %v2454, %v2454
    %v2463 = vmul.f32 %v2455, %v2455
    %v2464 = vmul.f32 %v2456, %v2456
    %v2465 = vmul.f32 %v2457, %v2457
    %v2466 = vmul.f32 %v2458, %v2458
    %v2467 = vmul.f32 %v2459, %v2459
    %v2468 = vadd.f32 %v2460, %v2461
    %v2469 = vadd.f32 %v2468, %v2462
    %v2470 = vadd.f32 %v2469, %v2463
    %v2471 = vadd.f32 %v2470, %v2464
    %v2472 = vadd.f32 %v2471, %v2465
    %v2473 = vadd.f32 %v2472, %v2466
    %v2474 = vadd.f32 %v2473, %v2467
    %v2475 = vrot.slane %v2474, 4
    %v2476 = vadd.f32 %v2474, %v2475
    %v2477 = vrot.slane %v2476, 2
    %v2478 = vadd.f32 %v2476, %v2477
    %v2479 = vrot.slane %v2478, 1
    %v2480 = vadd.f32 %v2478, %v2479
    %v2481 = vmul.f32 %v2480, 0.01923077
    %v2482 = vadd.f32 %v2481, 1e-05
    %v2483 = vrsqrt.pop %v2482
    %v2484 = vmul.f32 %v2483, %v74
    %v2485 = vmul.f32 %v2443, %v2484
    %v2487 = vrot.slane %v2485, 7
    %v2489 = vsub.f32 %v74, %v2487
    %v2490 = vlaneseq
    %v2491 = vshrl.u32 %v2490, 7
    %v2492 = vsub.s32 6, %v2491
    %v2493 = vrot.slane %v2484, %v2492
    %v2494 = vmul.f32 %v2377, %v2493
    %v2495 = vmul.f32 %v2383, %v2493
    %v2496 = vmul.f32 %v2389, %v2493
    %v2497 = vmul.f32 %v2395, %v2493
    %v2498 = vmul.f32 %v2401, %v2493
    %v2499 = vmul.f32 %v2407, %v2493
    %v2500 = vmul.f32 %v2413, %v2493
    %v2501 = vmul.f32 %v2419, %v2493
    %v2502 = vlaneseq
    %v2503 = vshrl.u32 %v2502, 7
    %v2504 = vsub.s32 7, %v2503
    %v2505 = vrot.slane %v2489, %v2504
    %v2506 = vadd.f32 %v2494, %v2505
    %v2507 = vadd.f32 %v2495, %v2505
    %v2508 = vadd.f32 %v2496, %v2505
    %v2509 = vadd.f32 %v2497, %v2505
    %v2510 = vadd.f32 %v2498, %v2505
    %v2511 = vadd.f32 %v2499, %v2505
    %v2512 = vadd.f32 %v2500, %v2505
    %v2513 = vadd.f32 %v2501, %v2505
    %v2514 = vmax.f32 %v2506, 0.0
    %v2515 = vmax.f32 %v2507, 0.0
    %v2516 = vmax.f32 %v2508, 0.0
    %v2517 = vmax.f32 %v2509, 0.0
    %v2518 = vmax.f32 %v2510, 0.0
    %v2519 = vmax.f32 %v2511, 0.0
    %v2520 = vmax.f32 %v2512, 0.0
    %v2521 = vmax.f32 %v2513, 0.0
    %s2522 = scalar_lea.vmem [#allocation9], 256
    %v2523 = vld [vmem:[%s2522] sm:$0xff]
    %v2524 = vld [vmem:[%s2522 + $0x8] sm:$0xff]
    %v2525 = vld [vmem:[%s2522 + $0x10] sm:$0xff]
    %v2526 = vld [vmem:[%s2522 + $0x18] sm:$0xff]
    %v2527 = vld [vmem:[%s2522 + $0x20] sm:$0xff]
    %v2528 = vld [vmem:[%s2522 + $0x28] sm:$0xff]
    %v2529 = vld [vmem:[%s2522 + $0x30] sm:$0xff]
    %v2530 = vld [vmem:[%s2522 + $0x38] sm:$0xff]
    %v2531 = vld [vmem:[%s2522 + $0x40] sm:$0xff]
    %v2532 = vld [vmem:[%s2522 + $0x48] sm:$0xff]
    %v2533 = vld [vmem:[%s2522 + $0x50] sm:$0xff]
    %v2534 = vld [vmem:[%s2522 + $0x58] sm:$0xff]
    %v2535 = vld [vmem:[%s2522 + $0x60] sm:$0xff]
    %v2536 = vld [vmem:[%s2522 + $0x68] sm:$0xff]
    %v2537 = vld [vmem:[%s2522 + $0x70] sm:$0xff]
    %v2538 = vld [vmem:[%s2522 + $0x78] sm:$0xff]
    %v2539 = vlaneseq
    %v2540 = vshrl.u32 %v2539, 7
    %v2541 = vsub.s32 0, %v2540
    %v2542 = vrot.slane %v75, %v2541
    %2543 = vmatprep.subr.mxu0 0.0
    %v2544 = vand.u32 %v2523, 4294901760
    %2545 = vmatpush1.msra.mxu0 %v2544
    %2546 = vmatprep.subr.mxu0 0.0
    %v2547 = vand.u32 %v2524, 4294901760
    %2548 = vmatpush1.msra.mxu0 %v2547
    %2549 = vmatprep.subr.mxu0 0.0
    %v2550 = vand.u32 %v2525, 4294901760
    %2551 = vmatpush1.msra.mxu0 %v2550
    %2552 = vmatprep.subr.mxu0 0.0
    %v2553 = vand.u32 %v2526, 4294901760
    %2554 = vmatpush1.msra.mxu0 %v2553
    %2555 = vmatprep.subr.mxu0 0.0
    %v2556 = vand.u32 %v2527, 4294901760
    %2557 = vmatpush1.msra.mxu0 %v2556
    %2558 = vmatprep.subr.mxu0 0.0
    %v2559 = vand.u32 %v2528, 4294901760
    %2560 = vmatpush1.msra.mxu0 %v2559
    %2561 = vmatprep.subr.mxu0 0.0
    %v2562 = vand.u32 %v2529, 4294901760
    %2563 = vmatpush1.msra.mxu0 %v2562
    %2564 = vmatprep.subr.mxu0 0.0
    %v2565 = vand.u32 %v2530, 4294901760
    %2566 = vmatpush1.msra.mxu0 %v2565
    %2567 = vmatprep.subr.mxu0 0.0
    %v2568 = vand.u32 %v2531, 4294901760
    %2569 = vmatpush1.msra.mxu0 %v2568
    %2570 = vmatprep.subr.mxu0 0.0
    %v2571 = vand.u32 %v2532, 4294901760
    %2572 = vmatpush1.msra.mxu0 %v2571
    %2573 = vmatprep.subr.mxu0 0.0
    %v2574 = vand.u32 %v2533, 4294901760
    %2575 = vmatpush1.msra.mxu0 %v2574
    %2576 = vmatprep.subr.mxu0 0.0
    %v2577 = vand.u32 %v2534, 4294901760
    %2578 = vmatpush1.msra.mxu0 %v2577
    %2579 = vmatprep.subr.mxu0 0.0
    %v2580 = vand.u32 %v2535, 4294901760
    %2581 = vmatpush1.msra.mxu0 %v2580
    %2582 = vmatprep.subr.mxu0 0.0
    %v2583 = vand.u32 %v2536, 4294901760
    %2584 = vmatpush1.msra.mxu0 %v2583
    %2585 = vmatprep.subr.mxu0 0.0
    %v2586 = vand.u32 %v2537, 4294901760
    %2587 = vmatpush1.msra.mxu0 %v2586
    %2588 = vmatprep.subr.mxu0 0.0
    %v2589 = vand.u32 %v2538, 4294901760
    %2590 = vmatpush1.msra.mxu0 %v2589
    %2591 = vmatprep.subr.mxu0 0.0
    %2592 = vmatpush1.msra.mxu0 0.0
    %2593 = vmatprep.subr.mxu0 0.0
    %2594 = vmatpush1.msra.mxu0 0.0
    %2595 = vmatprep.subr.mxu0 0.0
    %2596 = vmatpush1.msra.mxu0 0.0
    %2597 = vmatprep.subr.mxu0 0.0
    %2598 = vmatpush1.msra.mxu0 0.0
    %2599 = vmatprep.subr.mxu0 0.0
    %2600 = vmatpush1.msra.mxu0 0.0
    %2601 = vmatprep.subr.mxu0 0.0
    %2602 = vmatpush1.msra.mxu0 0.0
    %2603 = vmatprep.subr.mxu0 0.0
    %2604 = vmatpush1.msra.mxu0 0.0
    %2605 = vmatprep.subr.mxu0 0.0
    %2606 = vmatpush1.msra.mxu0 0.0
    %2607 = vmatprep.subr.mxu0 0.0
    %2608 = vmatpush1.msra.mxu0 0.0
    %2609 = vmatprep.subr.mxu0 0.0
    %2610 = vmatpush1.msra.mxu0 0.0
    %2611 = vmatprep.subr.mxu0 0.0
    %2612 = vmatpush1.msra.mxu0 0.0
    %2613 = vmatprep.subr.mxu0 0.0
    %2614 = vmatpush1.msra.mxu0 0.0
    %2615 = vmatprep.subr.mxu0 0.0
    %2616 = vmatpush1.msra.mxu0 0.0
    %2617 = vmatprep.subr.mxu0 0.0
    %2618 = vmatpush1.msra.mxu0 0.0
    %2619 = vmatprep.subr.mxu0 0.0
    %2620 = vmatpush1.msra.mxu0 0.0
    %2621 = vmatprep.subr.mxu0 0.0
    %2622 = vmatpush1.msra.mxu0 0.0
    %2623 = vmatprep.mubr.f32.mxu0 0.0
    %v2624 = vand.u32 %v2514, 4294901760
    %v2625 = vsub.f32 %v2514, %v2624
    %v2626 = vand.u32 %v2625, 4294901760
    %v2627 = vsub.f32 %v2625, %v2626
    %v2628 = vand.u32 %v2627, 4294901760
    %2629 = vmatmul.mubr.f32.gmra.mrb[0].mxu0 %v2628
    %v2630 = vpop.f32.mrb[0].mxu0
    %v2631 = vadd.f32 %v2542, %v2630
    %v2632 = vpop.f32.mrb[0].mxu0
    %2633 = vmatprep.mubr.f32.mxu0 0.0
    %v2634 = vand.u32 %v2515, 4294901760
    %v2635 = vsub.f32 %v2515, %v2634
    %v2636 = vand.u32 %v2635, 4294901760
    %v2637 = vsub.f32 %v2635, %v2636
    %v2638 = vand.u32 %v2637, 4294901760
    %2639 = vmatmul.mubr.f32.gmra.mrb[0].mxu0 %v2638
    %v2640 = vpop.f32.mrb[0].mxu0
    %v2641 = vadd.f32 %v2542, %v2640
    %v2642 = vpop.f32.mrb[0].mxu0
    %2643 = vmatprep.mubr.f32.mxu0 0.0
    %v2644 = vand.u32 %v2516, 4294901760
    %v2645 = vsub.f32 %v2516, %v2644
    %v2646 = vand.u32 %v2645, 4294901760
    %v2647 = vsub.f32 %v2645, %v2646
    %v2648 = vand.u32 %v2647, 4294901760
    %2649 = vmatmul.mubr.f32.gmra.mrb[0].mxu0 %v2648
    %v2650 = vpop.f32.mrb[0].mxu0
    %v2651 = vadd.f32 %v2542, %v2650
    %v2652 = vpop.f32.mrb[0].mxu0
    %2653 = vmatprep.mubr.f32.mxu0 0.0
    %v2654 = vand.u32 %v2517, 4294901760
    %v2655 = vsub.f32 %v2517, %v2654
    %v2656 = vand.u32 %v2655, 4294901760
    %v2657 = vsub.f32 %v2655, %v2656
    %v2658 = vand.u32 %v2657, 4294901760
    %2659 = vmatmul.mubr.f32.gmra.mrb[0].mxu0 %v2658
    %v2660 = vpop.f32.mrb[0].mxu0
    %v2661 = vadd.f32 %v2542, %v2660
    %v2662 = vpop.f32.mrb[0].mxu0
    %2663 = vmatprep.mubr.f32.mxu0 0.0
    %v2664 = vand.u32 %v2518, 4294901760
    %v2665 = vsub.f32 %v2518, %v2664
    %v2666 = vand.u32 %v2665, 4294901760
    %v2667 = vsub.f32 %v2665, %v2666
    %v2668 = vand.u32 %v2667, 4294901760
    %2669 = vmatmul.mubr.f32.gmra.mrb[0].mxu0 %v2668
    %v2670 = vpop.f32.mrb[0].mxu0
    %v2671 = vadd.f32 %v2542, %v2670
    %v2672 = vpop.f32.mrb[0].mxu0
    %2673 = vmatprep.mubr.f32.mxu0 0.0
    %v2674 = vand.u32 %v2519, 4294901760
    %v2675 = vsub.f32 %v2519, %v2674
    %v2676 = vand.u32 %v2675, 4294901760
    %v2677 = vsub.f32 %v2675, %v2676
    %v2678 = vand.u32 %v2677, 4294901760
    %2679 = vmatmul.mubr.f32.gmra.mrb[0].mxu0 %v2678
    %v2680 = vpop.f32.mrb[0].mxu0
    %v2681 = vadd.f32 %v2542, %v2680
    %v2682 = vpop.f32.mrb[0].mxu0
    %2683 = vmatprep.mubr.f32.mxu0 0.0
    %v2684 = vand.u32 %v2520, 4294901760
    %v2685 = vsub.f32 %v2520, %v2684
    %v2686 = vand.u32 %v2685, 4294901760
    %v2687 = vsub.f32 %v2685, %v2686
    %v2688 = vand.u32 %v2687, 4294901760
    %2689 = vmatmul.mubr.f32.gmra.mrb[0].mxu0 %v2688
    %v2690 = vpop.f32.mrb[0].mxu0
    %v2691 = vadd.f32 %v2542, %v2690
    %v2692 = vpop.f32.mrb[0].mxu0
    %2693 = vmatprep.mubr.f32.mxu0 0.0
    %v2694 = vand.u32 %v2521, 4294901760
    %v2695 = vsub.f32 %v2521, %v2694
    %v2696 = vand.u32 %v2695, 4294901760
    %v2697 = vsub.f32 %v2695, %v2696
    %v2698 = vand.u32 %v2697, 4294901760
    %2699 = vmatmul.mubr.f32.gmra.mrb[0].mxu0 %v2698
    %v2700 = vpop.f32.mrb[0].mxu0
    %v2701 = vadd.f32 %v2542, %v2700
    %v2702 = vpop.f32.mrb[0].mxu0
    %2703 = vdwg.mxu0
    %2704 = vmatprep.subr.mxu0 0.0
    %v2705 = vand.u32 %v2523, 4294901760
    %v2706 = vsub.f32 %v2523, %v2705
    %v2707 = vand.u32 %v2706, 4294901760
    %v2708 = vsub.f32 %v2706, %v2707
    %v2709 = vand.u32 %v2708, 4294901760
    %2710 = vmatpush1.msra.mxu0 %v2709
    %2711 = vmatprep.subr.mxu0 0.0
    %v2712 = vand.u32 %v2524, 4294901760
    %v2713 = vsub.f32 %v2524, %v2712
    %v2714 = vand.u32 %v2713, 4294901760
    %v2715 = vsub.f32 %v2713, %v2714
    %v2716 = vand.u32 %v2715, 4294901760
    %2717 = vmatpush1.msra.mxu0 %v2716
    %2718 = vmatprep.subr.mxu0 0.0
    %v2719 = vand.u32 %v2525, 4294901760
    %v2720 = vsub.f32 %v2525, %v2719
    %v2721 = vand.u32 %v2720, 4294901760
    %v2722 = vsub.f32 %v2720, %v2721
    %v2723 = vand.u32 %v2722, 4294901760
    %2724 = vmatpush1.msra.mxu0 %v2723
    %2725 = vmatprep.subr.mxu0 0.0
    %v2726 = vand.u32 %v2526, 4294901760
    %v2727 = vsub.f32 %v2526, %v2726
    %v2728 = vand.u32 %v2727, 4294901760
    %v2729 = vsub.f32 %v2727, %v2728
    %v2730 = vand.u32 %v2729, 4294901760
    %2731 = vmatpush1.msra.mxu0 %v2730
    %2732 = vmatprep.subr.mxu0 0.0
    %v2733 = vand.u32 %v2527, 4294901760
    %v2734 = vsub.f32 %v2527, %v2733
    %v2735 = vand.u32 %v2734, 4294901760
    %v2736 = vsub.f32 %v2734, %v2735
    %v2737 = vand.u32 %v2736, 4294901760
    %2738 = vmatpush1.msra.mxu0 %v2737
    %2739 = vmatprep.subr.mxu0 0.0
    %v2740 = vand.u32 %v2528, 4294901760
    %v2741 = vsub.f32 %v2528, %v2740
    %v2742 = vand.u32 %v2741, 4294901760
    %v2743 = vsub.f32 %v2741, %v2742
    %v2744 = vand.u32 %v2743, 4294901760
    %2745 = vmatpush1.msra.mxu0 %v2744
    %2746 = vmatprep.subr.mxu0 0.0
    %v2747 = vand.u32 %v2529, 4294901760
    %v2748 = vsub.f32 %v2529, %v2747
    %v2749 = vand.u32 %v2748, 4294901760
    %v2750 = vsub.f32 %v2748, %v2749
    %v2751 = vand.u32 %v2750, 4294901760
    %2752 = vmatpush1.msra.mxu0 %v2751
    %2753 = vmatprep.subr.mxu0 0.0
    %v2754 = vand.u32 %v2530, 4294901760
    %v2755 = vsub.f32 %v2530, %v2754
    %v2756 = vand.u32 %v2755, 4294901760
    %v2757 = vsub.f32 %v2755, %v2756
    %v2758 = vand.u32 %v2757, 4294901760
    %2759 = vmatpush1.msra.mxu0 %v2758
    %2760 = vmatprep.subr.mxu0 0.0
    %v2761 = vand.u32 %v2531, 4294901760
    %v2762 = vsub.f32 %v2531, %v2761
    %v2763 = vand.u32 %v2762, 4294901760
    %v2764 = vsub.f32 %v2762, %v2763
    %v2765 = vand.u32 %v2764, 4294901760
    %2766 = vmatpush1.msra.mxu0 %v2765
    %2767 = vmatprep.subr.mxu0 0.0
    %v2768 = vand.u32 %v2532, 4294901760
    %v2769 = vsub.f32 %v2532, %v2768
    %v2770 = vand.u32 %v2769, 4294901760
    %v2771 = vsub.f32 %v2769, %v2770
    %v2772 = vand.u32 %v2771, 4294901760
    %2773 = vmatpush1.msra.mxu0 %v2772
    %2774 = vmatprep.subr.mxu0 0.0
    %v2775 = vand.u32 %v2533, 4294901760
    %v2776 = vsub.f32 %v2533, %v2775
    %v2777 = vand.u32 %v2776, 4294901760
    %v2778 = vsub.f32 %v2776, %v2777
    %v2779 = vand.u32 %v2778, 4294901760
    %2780 = vmatpush1.msra.mxu0 %v2779
    %2781 = vmatprep.subr.mxu0 0.0
    %v2782 = vand.u32 %v2534, 4294901760
    %v2783 = vsub.f32 %v2534, %v2782
    %v2784 = vand.u32 %v2783, 4294901760
    %v2785 = vsub.f32 %v2783, %v2784
    %v2786 = vand.u32 %v2785, 4294901760
    %2787 = vmatpush1.msra.mxu0 %v2786
    %2788 = vmatprep.subr.mxu0 0.0
    %v2789 = vand.u32 %v2535, 4294901760
    %v2790 = vsub.f32 %v2535, %v2789
    %v2791 = vand.u32 %v2790, 4294901760
    %v2792 = vsub.f32 %v2790, %v2791
    %v2793 = vand.u32 %v2792, 4294901760
    %2794 = vmatpush1.msra.mxu0 %v2793
    %2795 = vmatprep.subr.mxu0 0.0
    %v2796 = vand.u32 %v2536, 4294901760
    %v2797 = vsub.f32 %v2536, %v2796
    %v2798 = vand.u32 %v2797, 4294901760
    %v2799 = vsub.f32 %v2797, %v2798
    %v2800 = vand.u32 %v2799, 4294901760
    %2801 = vmatpush1.msra.mxu0 %v2800
    %2802 = vmatprep.subr.mxu0 0.0
    %v2803 = vand.u32 %v2537, 4294901760
    %v2804 = vsub.f32 %v2537, %v2803
    %v2805 = vand.u32 %v2804, 4294901760
    %v2806 = vsub.f32 %v2804, %v2805
    %v2807 = vand.u32 %v2806, 4294901760
    %2808 = vmatpush1.msra.mxu0 %v2807
    %2809 = vmatprep.subr.mxu0 0.0
    %v2810 = vand.u32 %v2538, 4294901760
    %v2811 = vsub.f32 %v2538, %v2810
    %v2812 = vand.u32 %v2811, 4294901760
    %v2813 = vsub.f32 %v2811, %v2812
    %v2814 = vand.u32 %v2813, 4294901760
    %2815 = vmatpush1.msra.mxu0 %v2814
    %2816 = vmatprep.subr.mxu0 0.0
    %2817 = vmatpush1.msra.mxu0 0.0
    %2818 = vmatprep.subr.mxu0 0.0
    %2819 = vmatpush1.msra.mxu0 0.0
    %2820 = vmatprep.subr.mxu0 0.0
    %2821 = vmatpush1.msra.mxu0 0.0
    %2822 = vmatprep.subr.mxu0 0.0
    %2823 = vmatpush1.msra.mxu0 0.0
    %2824 = vmatprep.subr.mxu0 0.0
    %2825 = vmatpush1.msra.mxu0 0.0
    %2826 = vmatprep.subr.mxu0 0.0
    %2827 = vmatpush1.msra.mxu0 0.0
    %2828 = vmatprep.subr.mxu0 0.0
    %2829 = vmatpush1.msra.mxu0 0.0
    %2830 = vmatprep.subr.mxu0 0.0
    %2831 = vmatpush1.msra.mxu0 0.0
    %2832 = vmatprep.subr.mxu0 0.0
    %2833 = vmatpush1.msra.mxu0 0.0
    %2834 = vmatprep.subr.mxu0 0.0
    %2835 = vmatpush1.msra.mxu0 0.0
    %2836 = vmatprep.subr.mxu0 0.0
    %2837 = vmatpush1.msra.mxu0 0.0
    %2838 = vmatprep.subr.mxu0 0.0
    %2839 = vmatpush1.msra.mxu0 0.0
    %2840 = vmatprep.subr.mxu0 0.0
    %2841 = vmatpush1.msra.mxu0 0.0
    %2842 = vmatprep.subr.mxu0 0.0
    %2843 = vmatpush1.msra.mxu0 0.0
    %2844 = vmatprep.subr.mxu0 0.0
    %2845 = vmatpush1.msra.mxu0 0.0
    %2846 = vmatprep.subr.mxu0 0.0
    %2847 = vmatpush1.msra.mxu0 0.0
    %2848 = vmatprep.mubr.f32.mxu0 0.0
    %v2849 = vand.u32 %v2514, 4294901760
    %2850 = vmatmul.mubr.f32.gmra.mrb[0].mxu0 %v2849
    %v2851 = vpop.f32.mrb[0].mxu0
    %v2852 = vadd.f32 %v2631, %v2851
    %v2853 = vpop.f32.mrb[0].mxu0
    %2854 = vmatprep.mubr.f32.mxu0 0.0
    %v2855 = vand.u32 %v2515, 4294901760
    %2856 = vmatmul.mubr.f32.gmra.mrb[0].mxu0 %v2855
    %v2857 = vpop.f32.mrb[0].mxu0
    %v2858 = vadd.f32 %v2641, %v2857
    %v2859 = vpop.f32.mrb[0].mxu0
    %2860 = vmatprep.mubr.f32.mxu0 0.0
    %v2861 = vand.u32 %v2516, 4294901760
    %2862 = vmatmul.mubr.f32.gmra.mrb[0].mxu0 %v2861
    %v2863 = vpop.f32.mrb[0].mxu0
    %v2864 = vadd.f32 %v2651, %v2863
    %v2865 = vpop.f32.mrb[0].mxu0
    %2866 = vmatprep.mubr.f32.mxu0 0.0
    %v2867 = vand.u32 %v2517, 4294901760
    %2868 = vmatmul.mubr.f32.gmra.mrb[0].mxu0 %v2867
    %v2869 = vpop.f32.mrb[0].mxu0
    %v2870 = vadd.f32 %v2661, %v2869
    %v2871 = vpop.f32.mrb[0].mxu0
    %2872 = vmatprep.mubr.f32.mxu0 0.0
    %v2873 = vand.u32 %v2518, 4294901760
    %2874 = vmatmul.mubr.f32.gmra.mrb[0].mxu0 %v2873
    %v2875 = vpop.f32.mrb[0].mxu0
    %v2876 = vadd.f32 %v2671, %v2875
    %v2877 = vpop.f32.mrb[0].mxu0
    %2878 = vmatprep.mubr.f32.mxu0 0.0
    %v2879 = vand.u32 %v2519, 4294901760
    %2880 = vmatmul.mubr.f32.gmra.mrb[0].mxu0 %v2879
    %v2881 = vpop.f32.mrb[0].mxu0
    %v2882 = vadd.f32 %v2681, %v2881
    %v2883 = vpop.f32.mrb[0].mxu0
    %2884 = vmatprep.mubr.f32.mxu0 0.0
    %v2885 = vand.u32 %v2520, 4294901760
    %2886 = vmatmul.mubr.f32.gmra.mrb[0].mxu0 %v2885
    %v2887 = vpop.f32.mrb[0].mxu0
    %v2888 = vadd.f32 %v2691, %v2887
    %v2889 = vpop.f32.mrb[0].mxu0
    %2890 = vmatprep.mubr.f32.mxu0 0.0
    %v2891 = vand.u32 %v2521, 4294901760
    %2892 = vmatmul.mubr.f32.gmra.mrb[0].mxu0 %v2891
    %v2893 = vpop.f32.mrb[0].mxu0
    %v2894 = vadd.f32 %v2701, %v2893
    %v2895 = vpop.f32.mrb[0].mxu0
    %2896 = vdwg.mxu0
    %2897 = vmatprep.subr.mxu0 0.0
    %v2898 = vand.u32 %v2523, 4294901760
    %v2899 = vsub.f32 %v2523, %v2898
    %2900 = vmatpush1.msra.mxu0 %v2899
    %2901 = vmatprep.subr.mxu0 0.0
    %v2902 = vand.u32 %v2524, 4294901760
    %v2903 = vsub.f32 %v2524, %v2902
    %2904 = vmatpush1.msra.mxu0 %v2903
    %2905 = vmatprep.subr.mxu0 0.0
    %v2906 = vand.u32 %v2525, 4294901760
    %v2907 = vsub.f32 %v2525, %v2906
    %2908 = vmatpush1.msra.mxu0 %v2907
    %2909 = vmatprep.subr.mxu0 0.0
    %v2910 = vand.u32 %v2526, 4294901760
    %v2911 = vsub.f32 %v2526, %v2910
    %2912 = vmatpush1.msra.mxu0 %v2911
    %2913 = vmatprep.subr.mxu0 0.0
    %v2914 = vand.u32 %v2527, 4294901760
    %v2915 = vsub.f32 %v2527, %v2914
    %2916 = vmatpush1.msra.mxu0 %v2915
    %2917 = vmatprep.subr.mxu0 0.0
    %v2918 = vand.u32 %v2528, 4294901760
    %v2919 = vsub.f32 %v2528, %v2918
    %2920 = vmatpush1.msra.mxu0 %v2919
    %2921 = vmatprep.subr.mxu0 0.0
    %v2922 = vand.u32 %v2529, 4294901760
    %v2923 = vsub.f32 %v2529, %v2922
    %2924 = vmatpush1.msra.mxu0 %v2923
    %2925 = vmatprep.subr.mxu0 0.0
    %v2926 = vand.u32 %v2530, 4294901760
    %v2927 = vsub.f32 %v2530, %v2926
    %2928 = vmatpush1.msra.mxu0 %v2927
    %2929 = vmatprep.subr.mxu0 0.0
    %v2930 = vand.u32 %v2531, 4294901760
    %v2931 = vsub.f32 %v2531, %v2930
    %2932 = vmatpush1.msra.mxu0 %v2931
    %2933 = vmatprep.subr.mxu0 0.0
    %v2934 = vand.u32 %v2532, 4294901760
    %v2935 = vsub.f32 %v2532, %v2934
    %2936 = vmatpush1.msra.mxu0 %v2935
    %2937 = vmatprep.subr.mxu0 0.0
    %v2938 = vand.u32 %v2533, 4294901760
    %v2939 = vsub.f32 %v2533, %v2938
    %2940 = vmatpush1.msra.mxu0 %v2939
    %2941 = vmatprep.subr.mxu0 0.0
    %v2942 = vand.u32 %v2534, 4294901760
    %v2943 = vsub.f32 %v2534, %v2942
    %2944 = vmatpush1.msra.mxu0 %v2943
    %2945 = vmatprep.subr.mxu0 0.0
    %v2946 = vand.u32 %v2535, 4294901760
    %v2947 = vsub.f32 %v2535, %v2946
    %2948 = vmatpush1.msra.mxu0 %v2947
    %2949 = vmatprep.subr.mxu0 0.0
    %v2950 = vand.u32 %v2536, 4294901760
    %v2951 = vsub.f32 %v2536, %v2950
    %2952 = vmatpush1.msra.mxu0 %v2951
    %2953 = vmatprep.subr.mxu0 0.0
    %v2954 = vand.u32 %v2537, 4294901760
    %v2955 = vsub.f32 %v2537, %v2954
    %2956 = vmatpush1.msra.mxu0 %v2955
    %2957 = vmatprep.subr.mxu0 0.0
    %v2958 = vand.u32 %v2538, 4294901760
    %v2959 = vsub.f32 %v2538, %v2958
    %2960 = vmatpush1.msra.mxu0 %v2959
    %2961 = vmatprep.subr.mxu0 0.0
    %2962 = vmatpush1.msra.mxu0 0.0
    %2963 = vmatprep.subr.mxu0 0.0
    %2964 = vmatpush1.msra.mxu0 0.0
    %2965 = vmatprep.subr.mxu0 0.0
    %2966 = vmatpush1.msra.mxu0 0.0
    %2967 = vmatprep.subr.mxu0 0.0
    %2968 = vmatpush1.msra.mxu0 0.0
    %2969 = vmatprep.subr.mxu0 0.0
    %2970 = vmatpush1.msra.mxu0 0.0
    %2971 = vmatprep.subr.mxu0 0.0
    %2972 = vmatpush1.msra.mxu0 0.0
    %2973 = vmatprep.subr.mxu0 0.0
    %2974 = vmatpush1.msra.mxu0 0.0
    %2975 = vmatprep.subr.mxu0 0.0
    %2976 = vmatpush1.msra.mxu0 0.0
    %2977 = vmatprep.subr.mxu0 0.0
    %2978 = vmatpush1.msra.mxu0 0.0
    %2979 = vmatprep.subr.mxu0 0.0
    %2980 = vmatpush1.msra.mxu0 0.0
    %2981 = vmatprep.subr.mxu0 0.0
    %2982 = vmatpush1.msra.mxu0 0.0
    %2983 = vmatprep.subr.mxu0 0.0
    %2984 = vmatpush1.msra.mxu0 0.0
    %2985 = vmatprep.subr.mxu0 0.0
    %2986 = vmatpush1.msra.mxu0 0.0
    %2987 = vmatprep.subr.mxu0 0.0
    %2988 = vmatpush1.msra.mxu0 0.0
    %2989 = vmatprep.subr.mxu0 0.0
    %2990 = vmatpush1.msra.mxu0 0.0
    %2991 = vmatprep.subr.mxu0 0.0
    %2992 = vmatpush1.msra.mxu0 0.0
    %2993 = vmatprep.mubr.f32.mxu0 0.0
    %v2994 = vand.u32 %v2514, 4294901760
    %v2995 = vsub.f32 %v2514, %v2994
    %2996 = vmatmul.mubr.f32.gmra.mrb[0].mxu0 %v2995
    %v2997 = vpop.f32.mrb[0].mxu0
    %v2998 = vadd.f32 %v2852, %v2997
    %v2999 = vpop.f32.mrb[0].mxu0
    %3000 = vmatprep.mubr.f32.mxu0 0.0
    %v3001 = vand.u32 %v2515, 4294901760
    %v3002 = vsub.f32 %v2515, %v3001
    %3003 = vmatmul.mubr.f32.gmra.mrb[0].mxu0 %v3002
    %v3004 = vpop.f32.mrb[0].mxu0
    %v3005 = vadd.f32 %v2858, %v3004
    %v3006 = vpop.f32.mrb[0].mxu0
    %3007 = vmatprep.mubr.f32.mxu0 0.0
    %v3008 = vand.u32 %v2516, 4294901760
    %v3009 = vsub.f32 %v2516, %v3008
    %3010 = vmatmul.mubr.f32.gmra.mrb[0].mxu0 %v3009
    %v3011 = vpop.f32.mrb[0].mxu0
    %v3012 = vadd.f32 %v2864, %v3011
    %v3013 = vpop.f32.mrb[0].mxu0
    %3014 = vmatprep.mubr.f32.mxu0 0.0
    %v3015 = vand.u32 %v2517, 4294901760
    %v3016 = vsub.f32 %v2517, %v3015
    %3017 = vmatmul.mubr.f32.gmra.mrb[0].mxu0 %v3016
    %v3018 = vpop.f32.mrb[0].mxu0
    %v3019 = vadd.f32 %v2870, %v3018
    %v3020 = vpop.f32.mrb[0].mxu0
    %3021 = vmatprep.mubr.f32.mxu0 0.0
    %v3022 = vand.u32 %v2518, 4294901760
    %v3023 = vsub.f32 %v2518, %v3022
    %3024 = vmatmul.mubr.f32.gmra.mrb[0].mxu0 %v3023
    %v3025 = vpop.f32.mrb[0].mxu0
    %v3026 = vadd.f32 %v2876, %v3025
    %v3027 = vpop.f32.mrb[0].mxu0
    %3028 = vmatprep.mubr.f32.mxu0 0.0
    %v3029 = vand.u32 %v2519, 4294901760
    %v3030 = vsub.f32 %v2519, %v3029
    %3031 = vmatmul.mubr.f32.gmra.mrb[0].mxu0 %v3030
    %v3032 = vpop.f32.mrb[0].mxu0
    %v3033 = vadd.f32 %v2882, %v3032
    %v3034 = vpop.f32.mrb[0].mxu0
    %3035 = vmatprep.mubr.f32.mxu0 0.0
    %v3036 = vand.u32 %v2520, 4294901760
    %v3037 = vsub.f32 %v2520, %v3036
    %3038 = vmatmul.mubr.f32.gmra.mrb[0].mxu0 %v3037
    %v3039 = vpop.f32.mrb[0].mxu0
    %v3040 = vadd.f32 %v2888, %v3039
    %v3041 = vpop.f32.mrb[0].mxu0
    %3042 = vmatprep.mubr.f32.mxu0 0.0
    %v3043 = vand.u32 %v2521, 4294901760
    %v3044 = vsub.f32 %v2521, %v3043
    %3045 = vmatmul.mubr.f32.gmra.mrb[0].mxu0 %v3044
    %v3046 = vpop.f32.mrb[0].mxu0
    %v3047 = vadd.f32 %v2894, %v3046
    %v3048 = vpop.f32.mrb[0].mxu0
    %3049 = vdwg.mxu0
    %3050 = vmatprep.subr.mxu0 0.0
    %v3051 = vand.u32 %v2523, 4294901760
    %3052 = vmatpush1.msra.mxu0 %v3051
    %3053 = vmatprep.subr.mxu0 0.0
    %v3054 = vand.u32 %v2524, 4294901760
    %3055 = vmatpush1.msra.mxu0 %v3054
    %3056 = vmatprep.subr.mxu0 0.0
    %v3057 = vand.u32 %v2525, 4294901760
    %3058 = vmatpush1.msra.mxu0 %v3057
    %3059 = vmatprep.subr.mxu0 0.0
    %v3060 = vand.u32 %v2526, 4294901760
    %3061 = vmatpush1.msra.mxu0 %v3060
    %3062 = vmatprep.subr.mxu0 0.0
    %v3063 = vand.u32 %v2527, 4294901760
    %3064 = vmatpush1.msra.mxu0 %v3063
    %3065 = vmatprep.subr.mxu0 0.0
    %v3066 = vand.u32 %v2528, 4294901760
    %3067 = vmatpush1.msra.mxu0 %v3066
    %3068 = vmatprep.subr.mxu0 0.0
    %v3069 = vand.u32 %v2529, 4294901760
    %3070 = vmatpush1.msra.mxu0 %v3069
    %3071 = vmatprep.subr.mxu0 0.0
    %v3072 = vand.u32 %v2530, 4294901760
    %3073 = vmatpush1.msra.mxu0 %v3072
    %3074 = vmatprep.subr.mxu0 0.0
    %v3075 = vand.u32 %v2531, 4294901760
    %3076 = vmatpush1.msra.mxu0 %v3075
    %3077 = vmatprep.subr.mxu0 0.0
    %v3078 = vand.u32 %v2532, 4294901760
    %3079 = vmatpush1.msra.mxu0 %v3078
    %3080 = vmatprep.subr.mxu0 0.0
    %v3081 = vand.u32 %v2533, 4294901760
    %3082 = vmatpush1.msra.mxu0 %v3081
    %3083 = vmatprep.subr.mxu0 0.0
    %v3084 = vand.u32 %v2534, 4294901760
    %3085 = vmatpush1.msra.mxu0 %v3084
    %3086 = vmatprep.subr.mxu0 0.0
    %v3087 = vand.u32 %v2535, 4294901760
    %3088 = vmatpush1.msra.mxu0 %v3087
    %3089 = vmatprep.subr.mxu0 0.0
    %v3090 = vand.u32 %v2536, 4294901760
    %3091 = vmatpush1.msra.mxu0 %v3090
    %3092 = vmatprep.subr.mxu0 0.0
    %v3093 = vand.u32 %v2537, 4294901760
    %3094 = vmatpush1.msra.mxu0 %v3093
    %3095 = vmatprep.subr.mxu0 0.0
    %v3096 = vand.u32 %v2538, 4294901760
    %3097 = vmatpush1.msra.mxu0 %v3096
    %3098 = vmatprep.subr.mxu0 0.0
    %3099 = vmatpush1.msra.mxu0 0.0
    %3100 = vmatprep.subr.mxu0 0.0
    %3101 = vmatpush1.msra.mxu0 0.0
    %3102 = vmatprep.subr.mxu0 0.0
    %3103 = vmatpush1.msra.mxu0 0.0
    %3104 = vmatprep.subr.mxu0 0.0
    %3105 = vmatpush1.msra.mxu0 0.0
    %3106 = vmatprep.subr.mxu0 0.0
    %3107 = vmatpush1.msra.mxu0 0.0
    %3108 = vmatprep.subr.mxu0 0.0
    %3109 = vmatpush1.msra.mxu0 0.0
    %3110 = vmatprep.subr.mxu0 0.0
    %3111 = vmatpush1.msra.mxu0 0.0
    %3112 = vmatprep.subr.mxu0 0.0
    %3113 = vmatpush1.msra.mxu0 0.0
    %3114 = vmatprep.subr.mxu0 0.0
    %3115 = vmatpush1.msra.mxu0 0.0
    %3116 = vmatprep.subr.mxu0 0.0
    %3117 = vmatpush1.msra.mxu0 0.0
    %3118 = vmatprep.subr.mxu0 0.0
    %3119 = vmatpush1.msra.mxu0 0.0
    %3120 = vmatprep.subr.mxu0 0.0
    %3121 = vmatpush1.msra.mxu0 0.0
    %3122 = vmatprep.subr.mxu0 0.0
    %3123 = vmatpush1.msra.mxu0 0.0
    %3124 = vmatprep.subr.mxu0 0.0
    %3125 = vmatpush1.msra.mxu0 0.0
    %3126 = vmatprep.subr.mxu0 0.0
    %3127 = vmatpush1.msra.mxu0 0.0
    %3128 = vmatprep.subr.mxu0 0.0
    %3129 = vmatpush1.msra.mxu0 0.0
    %3130 = vmatprep.mubr.f32.mxu0 0.0
    %v3131 = vand.u32 %v2514, 4294901760
    %v3132 = vsub.f32 %v2514, %v3131
    %v3133 = vand.u32 %v3132, 4294901760
    %3134 = vmatmul.mubr.f32.gmra.mrb[0].mxu0 %v3133
    %v3135 = vpop.f32.mrb[0].mxu0
    %v3136 = vadd.f32 %v2998, %v3135
    %v3137 = vpop.f32.mrb[0].mxu0
    %3138 = vmatprep.mubr.f32.mxu0 0.0
    %v3139 = vand.u32 %v2515, 4294901760
    %v3140 = vsub.f32 %v2515, %v3139
    %v3141 = vand.u32 %v3140, 4294901760
    %3142 = vmatmul.mubr.f32.gmra.mrb[0].mxu0 %v3141
    %v3143 = vpop.f32.mrb[0].mxu0
    %v3144 = vadd.f32 %v3005, %v3143
    %v3145 = vpop.f32.mrb[0].mxu0
    %3146 = vmatprep.mubr.f32.mxu0 0.0
    %v3147 = vand.u32 %v2516, 4294901760
    %v3148 = vsub.f32 %v2516, %v3147
    %v3149 = vand.u32 %v3148, 4294901760
    %3150 = vmatmul.mubr.f32.gmra.mrb[0].mxu0 %v3149
    %v3151 = vpop.f32.mrb[0].mxu0
    %v3152 = vadd.f32 %v3012, %v3151
    %v3153 = vpop.f32.mrb[0].mxu0
    %3154 = vmatprep.mubr.f32.mxu0 0.0
    %v3155 = vand.u32 %v2517, 4294901760
    %v3156 = vsub.f32 %v2517, %v3155
    %v3157 = vand.u32 %v3156, 4294901760
    %3158 = vmatmul.mubr.f32.gmra.mrb[0].mxu0 %v3157
    %v3159 = vpop.f32.mrb[0].mxu0
    %v3160 = vadd.f32 %v3019, %v3159
    %v3161 = vpop.f32.mrb[0].mxu0
    %3162 = vmatprep.mubr.f32.mxu0 0.0
    %v3163 = vand.u32 %v2518, 4294901760
    %v3164 = vsub.f32 %v2518, %v3163
    %v3165 = vand.u32 %v3164, 4294901760
    %3166 = vmatmul.mubr.f32.gmra.mrb[0].mxu0 %v3165
    %v3167 = vpop.f32.mrb[0].mxu0
    %v3168 = vadd.f32 %v3026, %v3167
    %v3169 = vpop.f32.mrb[0].mxu0
    %3170 = vmatprep.mubr.f32.mxu0 0.0
    %v3171 = vand.u32 %v2519, 4294901760
    %v3172 = vsub.f32 %v2519, %v3171
    %v3173 = vand.u32 %v3172, 4294901760
    %3174 = vmatmul.mubr.f32.gmra.mrb[0].mxu0 %v3173
    %v3175 = vpop.f32.mrb[0].mxu0
    %v3176 = vadd.f32 %v3033, %v3175
    %v3177 = vpop.f32.mrb[0].mxu0
    %3178 = vmatprep.mubr.f32.mxu0 0.0
    %v3179 = vand.u32 %v2520, 4294901760
    %v3180 = vsub.f32 %v2520, %v3179
    %v3181 = vand.u32 %v3180, 4294901760
    %3182 = vmatmul.mubr.f32.gmra.mrb[0].mxu0 %v3181
    %v3183 = vpop.f32.mrb[0].mxu0
    %v3184 = vadd.f32 %v3040, %v3183
    %v3185 = vpop.f32.mrb[0].mxu0
    %3186 = vmatprep.mubr.f32.mxu0 0.0
    %v3187 = vand.u32 %v2521, 4294901760
    %v3188 = vsub.f32 %v2521, %v3187
    %v3189 = vand.u32 %v3188, 4294901760
    %3190 = vmatmul.mubr.f32.gmra.mrb[0].mxu0 %v3189
    %v3191 = vpop.f32.mrb[0].mxu0
    %v3192 = vadd.f32 %v3047, %v3191
    %v3193 = vpop.f32.mrb[0].mxu0
    %3194 = vdwg.mxu0
    %3195 = vmatprep.subr.mxu0 0.0
    %v3196 = vand.u32 %v2523, 4294901760
    %v3197 = vsub.f32 %v2523, %v3196
    %v3198 = vand.u32 %v3197, 4294901760
    %3199 = vmatpush1.msra.mxu0 %v3198
    %3200 = vmatprep.subr.mxu0 0.0
    %v3201 = vand.u32 %v2524, 4294901760
    %v3202 = vsub.f32 %v2524, %v3201
    %v3203 = vand.u32 %v3202, 4294901760
    %3204 = vmatpush1.msra.mxu0 %v3203
    %3205 = vmatprep.subr.mxu0 0.0
    %v3206 = vand.u32 %v2525, 4294901760
    %v3207 = vsub.f32 %v2525, %v3206
    %v3208 = vand.u32 %v3207, 4294901760
    %3209 = vmatpush1.msra.mxu0 %v3208
    %3210 = vmatprep.subr.mxu0 0.0
    %v3211 = vand.u32 %v2526, 4294901760
    %v3212 = vsub.f32 %v2526, %v3211
    %v3213 = vand.u32 %v3212, 4294901760
    %3214 = vmatpush1.msra.mxu0 %v3213
    %3215 = vmatprep.subr.mxu0 0.0
    %v3216 = vand.u32 %v2527, 4294901760
    %v3217 = vsub.f32 %v2527, %v3216
    %v3218 = vand.u32 %v3217, 4294901760
    %3219 = vmatpush1.msra.mxu0 %v3218
    %3220 = vmatprep.subr.mxu0 0.0
    %v3221 = vand.u32 %v2528, 4294901760
    %v3222 = vsub.f32 %v2528, %v3221
    %v3223 = vand.u32 %v3222, 4294901760
    %3224 = vmatpush1.msra.mxu0 %v3223
    %3225 = vmatprep.subr.mxu0 0.0
    %v3226 = vand.u32 %v2529, 4294901760
    %v3227 = vsub.f32 %v2529, %v3226
    %v3228 = vand.u32 %v3227, 4294901760
    %3229 = vmatpush1.msra.mxu0 %v3228
    %3230 = vmatprep.subr.mxu0 0.0
    %v3231 = vand.u32 %v2530, 4294901760
    %v3232 = vsub.f32 %v2530, %v3231
    %v3233 = vand.u32 %v3232, 4294901760
    %3234 = vmatpush1.msra.mxu0 %v3233
    %3235 = vmatprep.subr.mxu0 0.0
    %v3236 = vand.u32 %v2531, 4294901760
    %v3237 = vsub.f32 %v2531, %v3236
    %v3238 = vand.u32 %v3237, 4294901760
    %3239 = vmatpush1.msra.mxu0 %v3238
    %3240 = vmatprep.subr.mxu0 0.0
    %v3241 = vand.u32 %v2532, 4294901760
    %v3242 = vsub.f32 %v2532, %v3241
    %v3243 = vand.u32 %v3242, 4294901760
    %3244 = vmatpush1.msra.mxu0 %v3243
    %3245 = vmatprep.subr.mxu0 0.0
    %v3246 = vand.u32 %v2533, 4294901760
    %v3247 = vsub.f32 %v2533, %v3246
    %v3248 = vand.u32 %v3247, 4294901760
    %3249 = vmatpush1.msra.mxu0 %v3248
    %3250 = vmatprep.subr.mxu0 0.0
    %v3251 = vand.u32 %v2534, 4294901760
    %v3252 = vsub.f32 %v2534, %v3251
    %v3253 = vand.u32 %v3252, 4294901760
    %3254 = vmatpush1.msra.mxu0 %v3253
    %3255 = vmatprep.subr.mxu0 0.0
    %v3256 = vand.u32 %v2535, 4294901760
    %v3257 = vsub.f32 %v2535, %v3256
    %v3258 = vand.u32 %v3257, 4294901760
    %3259 = vmatpush1.msra.mxu0 %v3258
    %3260 = vmatprep.subr.mxu0 0.0
    %v3261 = vand.u32 %v2536, 4294901760
    %v3262 = vsub.f32 %v2536, %v3261
    %v3263 = vand.u32 %v3262, 4294901760
    %3264 = vmatpush1.msra.mxu0 %v3263
    %3265 = vmatprep.subr.mxu0 0.0
    %v3266 = vand.u32 %v2537, 4294901760
    %v3267 = vsub.f32 %v2537, %v3266
    %v3268 = vand.u32 %v3267, 4294901760
    %3269 = vmatpush1.msra.mxu0 %v3268
    %3270 = vmatprep.subr.mxu0 0.0
    %v3271 = vand.u32 %v2538, 4294901760
    %v3272 = vsub.f32 %v2538, %v3271
    %v3273 = vand.u32 %v3272, 4294901760
    %3274 = vmatpush1.msra.mxu0 %v3273
    %3275 = vmatprep.subr.mxu0 0.0
    %3276 = vmatpush1.msra.mxu0 0.0
    %3277 = vmatprep.subr.mxu0 0.0
    %3278 = vmatpush1.msra.mxu0 0.0
    %3279 = vmatprep.subr.mxu0 0.0
    %3280 = vmatpush1.msra.mxu0 0.0
    %3281 = vmatprep.subr.mxu0 0.0
    %3282 = vmatpush1.msra.mxu0 0.0
    %3283 = vmatprep.subr.mxu0 0.0
    %3284 = vmatpush1.msra.mxu0 0.0
    %3285 = vmatprep.subr.mxu0 0.0
    %3286 = vmatpush1.msra.mxu0 0.0
    %3287 = vmatprep.subr.mxu0 0.0
    %3288 = vmatpush1.msra.mxu0 0.0
    %3289 = vmatprep.subr.mxu0 0.0
    %3290 = vmatpush1.msra.mxu0 0.0
    %3291 = vmatprep.subr.mxu0 0.0
    %3292 = vmatpush1.msra.mxu0 0.0
    %3293 = vmatprep.subr.mxu0 0.0
    %3294 = vmatpush1.msra.mxu0 0.0
    %3295 = vmatprep.subr.mxu0 0.0
    %3296 = vmatpush1.msra.mxu0 0.0
    %3297 = vmatprep.subr.mxu0 0.0
    %3298 = vmatpush1.msra.mxu0 0.0
    %3299 = vmatprep.subr.mxu0 0.0
    %3300 = vmatpush1.msra.mxu0 0.0
    %3301 = vmatprep.subr.mxu0 0.0
    %3302 = vmatpush1.msra.mxu0 0.0
    %3303 = vmatprep.subr.mxu0 0.0
    %3304 = vmatpush1.msra.mxu0 0.0
    %3305 = vmatprep.subr.mxu0 0.0
    %3306 = vmatpush1.msra.mxu0 0.0
    %3307 = vmatprep.mubr.f32.mxu0 0.0
    %v3308 = vand.u32 %v2514, 4294901760
    %3309 = vmatmul.mubr.f32.gmra.mrb[0].mxu0 %v3308
    %v3310 = vpop.f32.mrb[0].mxu0
    %v3311 = vadd.f32 %v3136, %v3310
    %v3312 = vpop.f32.mrb[0].mxu0
    %3313 = vmatprep.mubr.f32.mxu0 0.0
    %v3314 = vand.u32 %v2515, 4294901760
    %3315 = vmatmul.mubr.f32.gmra.mrb[0].mxu0 %v3314
    %v3316 = vpop.f32.mrb[0].mxu0
    %v3317 = vadd.f32 %v3144, %v3316
    %v3318 = vpop.f32.mrb[0].mxu0
    %3319 = vmatprep.mubr.f32.mxu0 0.0
    %v3320 = vand.u32 %v2516, 4294901760
    %3321 = vmatmul.mubr.f32.gmra.mrb[0].mxu0 %v3320
    %v3322 = vpop.f32.mrb[0].mxu0
    %v3323 = vadd.f32 %v3152, %v3322
    %v3324 = vpop.f32.mrb[0].mxu0
    %3325 = vmatprep.mubr.f32.mxu0 0.0
    %v3326 = vand.u32 %v2517, 4294901760
    %3327 = vmatmul.mubr.f32.gmra.mrb[0].mxu0 %v3326
    %v3328 = vpop.f32.mrb[0].mxu0
    %v3329 = vadd.f32 %v3160, %v3328
    %v3330 = vpop.f32.mrb[0].mxu0
    %3331 = vmatprep.mubr.f32.mxu0 0.0
    %v3332 = vand.u32 %v2518, 4294901760
    %3333 = vmatmul.mubr.f32.gmra.mrb[0].mxu0 %v3332
    %v3334 = vpop.f32.mrb[0].mxu0
    %v3335 = vadd.f32 %v3168, %v3334
    %v3336 = vpop.f32.mrb[0].mxu0
    %3337 = vmatprep.mubr.f32.mxu0 0.0
    %v3338 = vand.u32 %v2519, 4294901760
    %3339 = vmatmul.mubr.f32.gmra.mrb[0].mxu0 %v3338
    %v3340 = vpop.f32.mrb[0].mxu0
    %v3341 = vadd.f32 %v3176, %v3340
    %v3342 = vpop.f32.mrb[0].mxu0
    %3343 = vmatprep.mubr.f32.mxu0 0.0
    %v3344 = vand.u32 %v2520, 4294901760
    %3345 = vmatmul.mubr.f32.gmra.mrb[0].mxu0 %v3344
    %v3346 = vpop.f32.mrb[0].mxu0
    %v3347 = vadd.f32 %v3184, %v3346
    %v3348 = vpop.f32.mrb[0].mxu0
    %3349 = vmatprep.mubr.f32.mxu0 0.0
    %v3350 = vand.u32 %v2521, 4294901760
    %3351 = vmatmul.mubr.f32.gmra.mrb[0].mxu0 %v3350
    %v3352 = vpop.f32.mrb[0].mxu0
    %v3353 = vadd.f32 %v3192, %v3352
    %v3354 = vpop.f32.mrb[0].mxu0
    %3355 = vdwg.mxu0
    %3356 = vmatprep.subr.mxu0 0.0
    %v3357 = vand.u32 %v2523, 4294901760
    %3358 = vmatpush1.msra.mxu0 %v3357
    %3359 = vmatprep.subr.mxu0 0.0
    %v3360 = vand.u32 %v2524, 4294901760
    %3361 = vmatpush1.msra.mxu0 %v3360
    %3362 = vmatprep.subr.mxu0 0.0
    %v3363 = vand.u32 %v2525, 4294901760
    %3364 = vmatpush1.msra.mxu0 %v3363
    %3365 = vmatprep.subr.mxu0 0.0
    %v3366 = vand.u32 %v2526, 4294901760
    %3367 = vmatpush1.msra.mxu0 %v3366
    %3368 = vmatprep.subr.mxu0 0.0
    %v3369 = vand.u32 %v2527, 4294901760
    %3370 = vmatpush1.msra.mxu0 %v3369
    %3371 = vmatprep.subr.mxu0 0.0
    %v3372 = vand.u32 %v2528, 4294901760
    %3373 = vmatpush1.msra.mxu0 %v3372
    %3374 = vmatprep.subr.mxu0 0.0
    %v3375 = vand.u32 %v2529, 4294901760
    %3376 = vmatpush1.msra.mxu0 %v3375
    %3377 = vmatprep.subr.mxu0 0.0
    %v3378 = vand.u32 %v2530, 4294901760
    %3379 = vmatpush1.msra.mxu0 %v3378
    %3380 = vmatprep.subr.mxu0 0.0
    %v3381 = vand.u32 %v2531, 4294901760
    %3382 = vmatpush1.msra.mxu0 %v3381
    %3383 = vmatprep.subr.mxu0 0.0
    %v3384 = vand.u32 %v2532, 4294901760
    %3385 = vmatpush1.msra.mxu0 %v3384
    %3386 = vmatprep.subr.mxu0 0.0
    %v3387 = vand.u32 %v2533, 4294901760
    %3388 = vmatpush1.msra.mxu0 %v3387
    %3389 = vmatprep.subr.mxu0 0.0
    %v3390 = vand.u32 %v2534, 4294901760
    %3391 = vmatpush1.msra.mxu0 %v3390
    %3392 = vmatprep.subr.mxu0 0.0
    %v3393 = vand.u32 %v2535, 4294901760
    %3394 = vmatpush1.msra.mxu0 %v3393
    %3395 = vmatprep.subr.mxu0 0.0
    %v3396 = vand.u32 %v2536, 4294901760
    %3397 = vmatpush1.msra.mxu0 %v3396
    %3398 = vmatprep.subr.mxu0 0.0
    %v3399 = vand.u32 %v2537, 4294901760
    %3400 = vmatpush1.msra.mxu0 %v3399
    %3401 = vmatprep.subr.mxu0 0.0
    %v3402 = vand.u32 %v2538, 4294901760
    %3403 = vmatpush1.msra.mxu0 %v3402
    %3404 = vmatprep.subr.mxu0 0.0
    %3405 = vmatpush1.msra.mxu0 0.0
    %3406 = vmatprep.subr.mxu0 0.0
    %3407 = vmatpush1.msra.mxu0 0.0
    %3408 = vmatprep.subr.mxu0 0.0
    %3409 = vmatpush1.msra.mxu0 0.0
    %3410 = vmatprep.subr.mxu0 0.0
    %3411 = vmatpush1.msra.mxu0 0.0
    %3412 = vmatprep.subr.mxu0 0.0
    %3413 = vmatpush1.msra.mxu0 0.0
    %3414 = vmatprep.subr.mxu0 0.0
    %3415 = vmatpush1.msra.mxu0 0.0
    %3416 = vmatprep.subr.mxu0 0.0
    %3417 = vmatpush1.msra.mxu0 0.0
    %3418 = vmatprep.subr.mxu0 0.0
    %3419 = vmatpush1.msra.mxu0 0.0
    %3420 = vmatprep.subr.mxu0 0.0
    %3421 = vmatpush1.msra.mxu0 0.0
    %3422 = vmatprep.subr.mxu0 0.0
    %3423 = vmatpush1.msra.mxu0 0.0
    %3424 = vmatprep.subr.mxu0 0.0
    %3425 = vmatpush1.msra.mxu0 0.0
    %3426 = vmatprep.subr.mxu0 0.0
    %3427 = vmatpush1.msra.mxu0 0.0
    %3428 = vmatprep.subr.mxu0 0.0
    %3429 = vmatpush1.msra.mxu0 0.0
    %3430 = vmatprep.subr.mxu0 0.0
    %3431 = vmatpush1.msra.mxu0 0.0
    %3432 = vmatprep.subr.mxu0 0.0
    %3433 = vmatpush1.msra.mxu0 0.0
    %3434 = vmatprep.subr.mxu0 0.0
    %3435 = vmatpush1.msra.mxu0 0.0
    %3436 = vmatprep.mubr.f32.mxu0 0.0
    %v3437 = vand.u32 %v2514, 4294901760
    %3438 = vmatmul.mubr.f32.gmra.mrb[0].mxu0 %v3437
    %v3439 = vpop.f32.mrb[0].mxu0
    %v3440 = vadd.f32 %v3311, %v3439
    %v3441 = vpop.f32.mrb[0].mxu0
    %3442 = vmatprep.mubr.f32.mxu0 0.0
    %v3443 = vand.u32 %v2515, 4294901760
    %3444 = vmatmul.mubr.f32.gmra.mrb[0].mxu0 %v3443
    %v3445 = vpop.f32.mrb[0].mxu0
    %v3446 = vadd.f32 %v3317, %v3445
    %v3447 = vpop.f32.mrb[0].mxu0
    %3448 = vmatprep.mubr.f32.mxu0 0.0
    %v3449 = vand.u32 %v2516, 4294901760
    %3450 = vmatmul.mubr.f32.gmra.mrb[0].mxu0 %v3449
    %v3451 = vpop.f32.mrb[0].mxu0
    %v3452 = vadd.f32 %v3323, %v3451
    %v3453 = vpop.f32.mrb[0].mxu0
    %3454 = vmatprep.mubr.f32.mxu0 0.0
    %v3455 = vand.u32 %v2517, 4294901760
    %3456 = vmatmul.mubr.f32.gmra.mrb[0].mxu0 %v3455
    %v3457 = vpop.f32.mrb[0].mxu0
    %v3458 = vadd.f32 %v3329, %v3457
    %v3459 = vpop.f32.mrb[0].mxu0
    %3460 = vmatprep.mubr.f32.mxu0 0.0
    %v3461 = vand.u32 %v2518, 4294901760
    %3462 = vmatmul.mubr.f32.gmra.mrb[0].mxu0 %v3461
    %v3463 = vpop.f32.mrb[0].mxu0
    %v3464 = vadd.f32 %v3335, %v3463
    %v3465 = vpop.f32.mrb[0].mxu0
    %3466 = vmatprep.mubr.f32.mxu0 0.0
    %v3467 = vand.u32 %v2519, 4294901760
    %3468 = vmatmul.mubr.f32.gmra.mrb[0].mxu0 %v3467
    %v3469 = vpop.f32.mrb[0].mxu0
    %v3470 = vadd.f32 %v3341, %v3469
    %v3471 = vpop.f32.mrb[0].mxu0
    %3472 = vmatprep.mubr.f32.mxu0 0.0
    %v3473 = vand.u32 %v2520, 4294901760
    %3474 = vmatmul.mubr.f32.gmra.mrb[0].mxu0 %v3473
    %v3475 = vpop.f32.mrb[0].mxu0
    %v3476 = vadd.f32 %v3347, %v3475
    %v3477 = vpop.f32.mrb[0].mxu0
    %3478 = vmatprep.mubr.f32.mxu0 0.0
    %v3479 = vand.u32 %v2521, 4294901760
    %3480 = vmatmul.mubr.f32.gmra.mrb[0].mxu0 %v3479
    %v3481 = vpop.f32.mrb[0].mxu0
    %v3482 = vadd.f32 %v3353, %v3481
    %v3483 = vpop.f32.mrb[0].mxu0
    %3484 = vdwg.mxu0
    %v3485 = vsel %vm1359, %v3440, 0.0
    %v3486 = vsel %vm1360, %v3446, 0.0
    %v3487 = vsel %vm1361, %v3452, 0.0
    %v3488 = vsel %vm1362, %v3458, 0.0
    %v3489 = vsel %vm1363, %v3464, 0.0
    %v3490 = vsel %vm1364, %v3470, 0.0
    %v3491 = vsel %vm1365, %v3476, 0.0
    %v3492 = vsel %vm1366, %v3482, 0.0
    %v3493 = vadd.f32 %v3485, %v3486
    %v3494 = vadd.f32 %v3493, %v3487
    %v3495 = vadd.f32 %v3494, %v3488
    %v3496 = vadd.f32 %v3495, %v3489
    %v3497 = vadd.f32 %v3496, %v3490
    %v3498 = vadd.f32 %v3497, %v3491
    %v3499 = vadd.f32 %v3498, %v3492
    %v3500 = vrot.slane %v3499, 4
    %v3501 = vadd.f32 %v3499, %v3500
    %v3502 = vrot.slane %v3501, 2
    %v3503 = vadd.f32 %v3501, %v3502
    %v3504 = vrot.slane %v3503, 1
    %v3505 = vadd.f32 %v3503, %v3504
    %v3506 = vmul.f32 %v3505, 0.01923077
    %v3507 = vsub.f32 %v3440, %v3506
    %v3508 = vsub.f32 %v3446, %v3506
    %v3509 = vsub.f32 %v3452, %v3506
    %v3510 = vsub.f32 %v3458, %v3506
    %v3511 = vsub.f32 %v3464, %v3506
    %v3512 = vsub.f32 %v3470, %v3506
    %v3513 = vsub.f32 %v3476, %v3506
    %v3514 = vsub.f32 %v3482, %v3506
    %v3515 = vsel %vm1359, %v3507, 0.0
    %v3516 = vsel %vm1360, %v3508, 0.0
    %v3517 = vsel %vm1361, %v3509, 0.0
    %v3518 = vsel %vm1362, %v3510, 0.0
    %v3519 = vsel %vm1363, %v3511, 0.0
    %v3520 = vsel %vm1364, %v3512, 0.0
    %v3521 = vsel %vm1365, %v3513, 0.0
    %v3522 = vsel %vm1366, %v3514, 0.0
    %v3523 = vmul.f32 %v3515, %v3515
    %v3524 = vmul.f32 %v3516, %v3516
    %v3525 = vmul.f32 %v3517, %v3517
    %v3526 = vmul.f32 %v3518, %v3518
    %v3527 = vmul.f32 %v3519, %v3519
    %v3528 = vmul.f32 %v3520, %v3520
    %v3529 = vmul.f32 %v3521, %v3521
    %v3530 = vmul.f32 %v3522, %v3522
    %v3531 = vadd.f32 %v3523, %v3524
    %v3532 = vadd.f32 %v3531, %v3525
    %v3533 = vadd.f32 %v3532, %v3526
    %v3534 = vadd.f32 %v3533, %v3527
    %v3535 = vadd.f32 %v3534, %v3528
    %v3536 = vadd.f32 %v3535, %v3529
    %v3537 = vadd.f32 %v3536, %v3530
    %v3538 = vrot.slane %v3537, 4
    %v3539 = vadd.f32 %v3537, %v3538
    %v3540 = vrot.slane %v3539, 2
    %v3541 = vadd.f32 %v3539, %v3540
    %v3542 = vrot.slane %v3541, 1
    %v3543 = vadd.f32 %v3541, %v3542
    %v3544 = vmul.f32 %v3543, 0.01923077
    %v3545 = vadd.f32 %v3544, 1e-05
    %v3546 = vrsqrt.pop %v3545
    %v3547 = vmul.f32 %v3546, %v75
    %v3548 = vmul.f32 %v3506, %v3547
    %v3550 = vrot.slane %v3548, 7
    %v3552 = vsub.f32 %v75, %v3550
    %v3553 = vlaneseq
    %v3554 = vshrl.u32 %v3553, 7
    %v3555 = vsub.s32 1, %v3554
    %v3556 = vrot.slane %v3547, %v3555
    %v3557 = vmul.f32 %v3440, %v3556
    %v3558 = vmul.f32 %v3446, %v3556
    %v3559 = vmul.f32 %v3452, %v3556
    %v3560 = vmul.f32 %v3458, %v3556
    %v3561 = vmul.f32 %v3464, %v3556
    %v3562 = vmul.f32 %v3470, %v3556
    %v3563 = vmul.f32 %v3476, %v3556
    %v3564 = vmul.f32 %v3482, %v3556
    %v3565 = vlaneseq
    %v3566 = vshrl.u32 %v3565, 7
    %v3567 = vsub.s32 2, %v3566
    %v3568 = vrot.slane %v3552, %v3567
    %v3569 = vadd.f32 %v3557, %v3568
    %v3570 = vadd.f32 %v3558, %v3568
    %v3571 = vadd.f32 %v3559, %v3568
    %v3572 = vadd.f32 %v3560, %v3568
    %v3573 = vadd.f32 %v3561, %v3568
    %v3574 = vadd.f32 %v3562, %v3568
    %v3575 = vadd.f32 %v3563, %v3568
    %v3576 = vadd.f32 %v3564, %v3568
    %v3577 = vadd.f32 %v3569, %v1255
    %v3578 = vadd.f32 %v3570, %v1256
    %v3579 = vadd.f32 %v3571, %v1257
    %v3580 = vadd.f32 %v3572, %v1258
    %v3581 = vadd.f32 %v3573, %v1259
    %v3582 = vadd.f32 %v3574, %v1260
    %v3583 = vadd.f32 %v3575, %v1261
    %v3584 = vadd.f32 %v3576, %v1262
    %v3585 = vmax.f32 %v3577, 0.0
    %v3586 = vmax.f32 %v3578, 0.0
    %v3587 = vmax.f32 %v3579, 0.0
    %v3588 = vmax.f32 %v3580, 0.0
    %v3589 = vmax.f32 %v3581, 0.0
    %v3590 = vmax.f32 %v3582, 0.0
    %v3591 = vmax.f32 %v3583, 0.0
    %v3592 = vmax.f32 %v3584, 0.0
    %3593 = vst [vmem:[#allocation2 + $0x8] sm:$0xff] %v3585
    %3594 = vst [vmem:[#allocation2 + $0x10] sm:$0xff] %v3586
    %3595 = vst [vmem:[#allocation2 + $0x18] sm:$0xff] %v3587
    %3596 = vst [vmem:[#allocation2 + $0x20] sm:$0xff] %v3588
    %3597 = vst [vmem:[#allocation2 + $0x28] sm:$0xff] %v3589
    %3598 = vst [vmem:[#allocation2 + $0x30] sm:$0xff] %v3590
    %3599 = vst [vmem:[#allocation2 + $0x38] sm:$0xff] %v3591
    %3600 = vst [vmem:[#allocation2 + $0x40] sm:$0xff] %v3592
    %v3601 = vld [vmem:[#allocation2 + $0x4] sm:$0xff]
    %v3602 = vld [vmem:[#allocation2 + $0xc] sm:$0xff]
    %v3603 = vld [vmem:[#allocation2 + $0x14] sm:$0xff]
    %v3604 = vld [vmem:[#allocation2 + $0x1c] sm:$0xff]
    %v3605 = vld [vmem:[#allocation2 + $0x24] sm:$0xff]
    %v3606 = vld [vmem:[#allocation2 + $0x2c] sm:$0xff]
    %v3607 = vld [vmem:[#allocation2 + $0x34] sm:$0xff]
    %v3608 = vld [vmem:[#allocation2 + $0x3c] sm:$0xff]
    %v3609 = vlaneseq
    %v3610 = vshrl.u32 %v3609, 7
    %v3611 = vsub.s32 3, %v3610
    %v3612 = vrot.slane %v75, %v3611
    %v3613 = vmul.f32 %v3601, %v3612
    %v3614 = vmul.f32 %v3602, %v3612
    %v3615 = vmul.f32 %v3603, %v3612
    %v3616 = vmul.f32 %v3604, %v3612
    %v3617 = vmul.f32 %v3605, %v3612
    %v3618 = vmul.f32 %v3606, %v3612
    %v3619 = vmul.f32 %v3607, %v3612
    %v3620 = vmul.f32 %v3608, %v3612
    %v3621 = vld [vmem:[#allocation2 + $0x6] sm:$0xff]
    %v3622 = vld [vmem:[#allocation2 + $0xe] sm:$0xff]
    %v3623 = vld [vmem:[#allocation2 + $0x16] sm:$0xff]
    %v3624 = vld [vmem:[#allocation2 + $0x1e] sm:$0xff]
    %v3625 = vld [vmem:[#allocation2 + $0x26] sm:$0xff]
    %v3626 = vld [vmem:[#allocation2 + $0x2e] sm:$0xff]
    %v3627 = vld [vmem:[#allocation2 + $0x36] sm:$0xff]
    %v3628 = vld [vmem:[#allocation2 + $0x3e] sm:$0xff]
    %v3629 = vlaneseq
    %v3630 = vshrl.u32 %v3629, 7
    %v3631 = vsub.s32 4, %v3630
    %v3632 = vrot.slane %v75, %v3631
    %v3633 = vmul.f32 %v3621, %v3632
    %v3634 = vmul.f32 %v3622, %v3632
    %v3635 = vmul.f32 %v3623, %v3632
    %v3636 = vmul.f32 %v3624, %v3632
    %v3637 = vmul.f32 %v3625, %v3632
    %v3638 = vmul.f32 %v3626, %v3632
    %v3639 = vmul.f32 %v3627, %v3632
    %v3640 = vmul.f32 %v3628, %v3632
    %v3641 = vadd.f32 %v3613, %v3633
    %v3642 = vadd.f32 %v3614, %v3634
    %v3643 = vadd.f32 %v3615, %v3635
    %v3644 = vadd.f32 %v3616, %v3636
    %v3645 = vadd.f32 %v3617, %v3637
    %v3646 = vadd.f32 %v3618, %v3638
    %v3647 = vadd.f32 %v3619, %v3639
    %v3648 = vadd.f32 %v3620, %v3640
    %v3649 = vld [vmem:[#allocation2 + $0x8] sm:$0xff]
    %v3650 = vld [vmem:[#allocation2 + $0x10] sm:$0xff]
    %v3651 = vld [vmem:[#allocation2 + $0x18] sm:$0xff]
    %v3652 = vld [vmem:[#allocation2 + $0x20] sm:$0xff]
    %v3653 = vld [vmem:[#allocation2 + $0x28] sm:$0xff]
    %v3654 = vld [vmem:[#allocation2 + $0x30] sm:$0xff]
    %v3655 = vld [vmem:[#allocation2 + $0x38] sm:$0xff]
    %v3656 = vld [vmem:[#allocation2 + $0x40] sm:$0xff]
    %v3657 = vlaneseq
    %v3658 = vshrl.u32 %v3657, 7
    %v3659 = vsub.s32 5, %v3658
    %v3660 = vrot.slane %v75, %v3659
    %v3661 = vmul.f32 %v3649, %v3660
    %v3662 = vmul.f32 %v3650, %v3660
    %v3663 = vmul.f32 %v3651, %v3660
    %v3664 = vmul.f32 %v3652, %v3660
    %v3665 = vmul.f32 %v3653, %v3660
    %v3666 = vmul.f32 %v3654, %v3660
    %v3667 = vmul.f32 %v3655, %v3660
    %v3668 = vmul.f32 %v3656, %v3660
    %v3669 = vadd.f32 %v3641, %v3661
    %v3670 = vadd.f32 %v3642, %v3662
    %v3671 = vadd.f32 %v3643, %v3663
    %v3672 = vadd.f32 %v3644, %v3664
    %v3673 = vadd.f32 %v3645, %v3665
    %v3674 = vadd.f32 %v3646, %v3666
    %v3675 = vadd.f32 %v3647, %v3667
    %v3676 = vadd.f32 %v3648, %v3668
    %v3677 = vlaneseq
    %v3678 = vshrl.u32 %v3677, 7
    %v3679 = vsub.s32 6, %v3678
    %v3680 = vrot.slane %v75, %v3679
    %v3681 = vadd.f32 %v3669, %v3680
    %v3682 = vadd.f32 %v3670, %v3680
    %v3683 = vadd.f32 %v3671, %v3680
    %v3684 = vadd.f32 %v3672, %v3680
    %v3685 = vadd.f32 %v3673, %v3680
    %v3686 = vadd.f32 %v3674, %v3680
    %v3687 = vadd.f32 %v3675, %v3680
    %v3688 = vadd.f32 %v3676, %v3680
    %vm3689 = vcmp.ge.s32.totalorder %v80, 10
    %vm3690 = vcmp.ge.s32.totalorder %v81, 10
    %vm3691 = vcmp.ge.s32.totalorder %v82, 10
    %vm3692 = vcmp.ge.s32.totalorder %v83, 10
    %vm3693 = vcmp.ge.s32.totalorder %v84, 10
    %vm3694 = vcmp.ge.s32.totalorder %v85, 10
    %vm3695 = vcmp.ge.s32.totalorder %v86, 10
    %vm3696 = vcmp.ge.s32.totalorder %v87, 10
    %v3697 = vsel %vm3689, %v3681, 0.0
    %v3698 = vsel %vm3690, %v3682, 0.0
    %v3699 = vsel %vm3691, %v3683, 0.0
    %v3700 = vsel %vm3692, %v3684, 0.0
    %v3701 = vsel %vm3693, %v3685, 0.0
    %v3702 = vsel %vm3694, %v3686, 0.0
    %v3703 = vsel %vm3695, %v3687, 0.0
    %v3704 = vsel %vm3696, %v3688, 0.0
    %v3705 = vadd.f32 %v3697, %v3698
    %v3706 = vadd.f32 %v3705, %v3699
    %v3707 = vadd.f32 %v3706, %v3700
    %v3708 = vadd.f32 %v3707, %v3701
    %v3709 = vadd.f32 %v3708, %v3702
    %v3710 = vadd.f32 %v3709, %v3703
    %v3711 = vadd.f32 %v3710, %v3704
    %v3712 = vrot.slane %v3711, 4
    %v3713 = vadd.f32 %v3711, %v3712
    %v3714 = vrot.slane %v3713, 2
    %v3715 = vadd.f32 %v3713, %v3714
    %v3716 = vrot.slane %v3715, 1
    %v3717 = vadd.f32 %v3715, %v3716
    %v3718 = vmul.f32 %v3717, 0.022727273
    %v3719 = vsub.f32 %v3681, %v3718
    %v3720 = vsub.f32 %v3682, %v3718
    %v3721 = vsub.f32 %v3683, %v3718
    %v3722 = vsub.f32 %v3684, %v3718
    %v3723 = vsub.f32 %v3685, %v3718
    %v3724 = vsub.f32 %v3686, %v3718
    %v3725 = vsub.f32 %v3687, %v3718
    %v3726 = vsub.f32 %v3688, %v3718
    %v3727 = vsel %vm3689, %v3719, 0.0
    %v3728 = vsel %vm3690, %v3720, 0.0
    %v3729 = vsel %vm3691, %v3721, 0.0
    %v3730 = vsel %vm3692, %v3722, 0.0
    %v3731 = vsel %vm3693, %v3723, 0.0
    %v3732 = vsel %vm3694, %v3724, 0.0
    %v3733 = vsel %vm3695, %v3725, 0.0
    %v3734 = vsel %vm3696, %v3726, 0.0
    %v3735 = vmul.f32 %v3727, %v3727
    %v3736 = vmul.f32 %v3728, %v3728
    %v3737 = vmul.f32 %v3729, %v3729
    %v3738 = vmul.f32 %v3730, %v3730
    %v3739 = vmul.f32 %v3731, %v3731
    %v3740 = vmul.f32 %v3732, %v3732
    %v3741 = vmul.f32 %v3733, %v3733
    %v3742 = vmul.f32 %v3734, %v3734
    %v3743 = vadd.f32 %v3735, %v3736
    %v3744 = vadd.f32 %v3743, %v3737
    %v3745 = vadd.f32 %v3744, %v3738
    %v3746 = vadd.f32 %v3745, %v3739
    %v3747 = vadd.f32 %v3746, %v3740
    %v3748 = vadd.f32 %v3747, %v3741
    %v3749 = vadd.f32 %v3748, %v3742
    %v3750 = vrot.slane %v3749, 4
    %v3751 = vadd.f32 %v3749, %v3750
    %v3752 = vrot.slane %v3751, 2
    %v3753 = vadd.f32 %v3751, %v3752
    %v3754 = vrot.slane %v3753, 1
    %v3755 = vadd.f32 %v3753, %v3754
    %v3756 = vmul.f32 %v3755, 0.022727273
    %v3757 = vadd.f32 %v3756, 1e-05
    %v3758 = vrsqrt.pop %v3757
    %v3759 = vmul.f32 %v3758, %v75
    %v3760 = vmul.f32 %v3718, %v3759
    %v3762 = vrot.slane %v3760, 7
    %v3764 = vsub.f32 %v76, %v3762
    %v3765 = vlaneseq
    %v3766 = vshrl.u32 %v3765, 7
    %v3767 = vsub.s32 7, %v3766
    %v3768 = vrot.slane %v3759, %v3767
    %v3769 = vmul.f32 %v3681, %v3768
    %v3770 = vmul.f32 %v3682, %v3768
    %v3771 = vmul.f32 %v3683, %v3768
    %v3772 = vmul.f32 %v3684, %v3768
    %v3773 = vmul.f32 %v3685, %v3768
    %v3774 = vmul.f32 %v3686, %v3768
    %v3775 = vmul.f32 %v3687, %v3768
    %v3776 = vmul.f32 %v3688, %v3768
    %v3777 = vlaneseq
    %v3778 = vshrl.u32 %v3777, 7
    %v3779 = vsub.s32 0, %v3778
    %v3780 = vrot.slane %v3764, %v3779
    %v3781 = vadd.f32 %v3769, %v3780
    %v3782 = vadd.f32 %v3770, %v3780
    %v3783 = vadd.f32 %v3771, %v3780
    %v3784 = vadd.f32 %v3772, %v3780
    %v3785 = vadd.f32 %v3773, %v3780
    %v3786 = vadd.f32 %v3774, %v3780
    %v3787 = vadd.f32 %v3775, %v3780
    %v3788 = vadd.f32 %v3776, %v3780
    %s3789 = scalar_lea.vmem [#allocation9], 384
    %v3790 = vld [vmem:[%s3789] sm:$0xff]
    %v3791 = vld [vmem:[%s3789 + $0x8] sm:$0xff]
    %v3792 = vld [vmem:[%s3789 + $0x10] sm:$0xff]
    %v3793 = vld [vmem:[%s3789 + $0x18] sm:$0xff]
    %v3794 = vld [vmem:[%s3789 + $0x20] sm:$0xff]
    %v3795 = vld [vmem:[%s3789 + $0x28] sm:$0xff]
    %v3796 = vld [vmem:[%s3789 + $0x30] sm:$0xff]
    %v3797 = vld [vmem:[%s3789 + $0x38] sm:$0xff]
    %v3798 = vld [vmem:[%s3789 + $0x40] sm:$0xff]
    %v3799 = vld [vmem:[%s3789 + $0x48] sm:$0xff]
    %v3800 = vld [vmem:[%s3789 + $0x50] sm:$0xff]
    %v3801 = vld [vmem:[%s3789 + $0x58] sm:$0xff]
    %v3802 = vld [vmem:[%s3789 + $0x60] sm:$0xff]
    %v3803 = vld [vmem:[%s3789 + $0x68] sm:$0xff]
    %v3804 = vld [vmem:[%s3789 + $0x70] sm:$0xff]
    %v3805 = vld [vmem:[%s3789 + $0x78] sm:$0xff]
    %v3806 = vlaneseq
    %v3807 = vshrl.u32 %v3806, 7
    %v3808 = vsub.s32 1, %v3807
    %v3809 = vrot.slane %v76, %v3808
    %3810 = vmatprep.subr.mxu0 0.0
    %v3811 = vand.u32 %v3790, 4294901760
    %3812 = vmatpush1.msra.mxu0 %v3811
    %3813 = vmatprep.subr.mxu0 0.0
    %v3814 = vand.u32 %v3791, 4294901760
    %3815 = vmatpush1.msra.mxu0 %v3814
    %3816 = vmatprep.subr.mxu0 0.0
    %v3817 = vand.u32 %v3792, 4294901760
    %3818 = vmatpush1.msra.mxu0 %v3817
    %3819 = vmatprep.subr.mxu0 0.0
    %v3820 = vand.u32 %v3793, 4294901760
    %3821 = vmatpush1.msra.mxu0 %v3820
    %3822 = vmatprep.subr.mxu0 0.0
    %v3823 = vand.u32 %v3794, 4294901760
    %3824 = vmatpush1.msra.mxu0 %v3823
    %3825 = vmatprep.subr.mxu0 0.0
    %v3826 = vand.u32 %v3795, 4294901760
    %3827 = vmatpush1.msra.mxu0 %v3826
    %3828 = vmatprep.subr.mxu0 0.0
    %v3829 = vand.u32 %v3796, 4294901760
    %3830 = vmatpush1.msra.mxu0 %v3829
    %3831 = vmatprep.subr.mxu0 0.0
    %v3832 = vand.u32 %v3797, 4294901760
    %3833 = vmatpush1.msra.mxu0 %v3832
    %3834 = vmatprep.subr.mxu0 0.0
    %v3835 = vand.u32 %v3798, 4294901760
    %3836 = vmatpush1.msra.mxu0 %v3835
    %3837 = vmatprep.subr.mxu0 0.0
    %v3838 = vand.u32 %v3799, 4294901760
    %3839 = vmatpush1.msra.mxu0 %v3838
    %3840 = vmatprep.subr.mxu0 0.0
    %v3841 = vand.u32 %v3800, 4294901760
    %3842 = vmatpush1.msra.mxu0 %v3841
    %3843 = vmatprep.subr.mxu0 0.0
    %v3844 = vand.u32 %v3801, 4294901760
    %3845 = vmatpush1.msra.mxu0 %v3844
    %3846 = vmatprep.subr.mxu0 0.0
    %v3847 = vand.u32 %v3802, 4294901760
    %3848 = vmatpush1.msra.mxu0 %v3847
    %3849 = vmatprep.subr.mxu0 0.0
    %v3850 = vand.u32 %v3803, 4294901760
    %3851 = vmatpush1.msra.mxu0 %v3850
    %3852 = vmatprep.subr.mxu0 0.0
    %v3853 = vand.u32 %v3804, 4294901760
    %3854 = vmatpush1.msra.mxu0 %v3853
    %3855 = vmatprep.subr.mxu0 0.0
    %v3856 = vand.u32 %v3805, 4294901760
    %3857 = vmatpush1.msra.mxu0 %v3856
    %3858 = vmatprep.subr.mxu0 0.0
    %3859 = vmatpush1.msra.mxu0 0.0
    %3860 = vmatprep.subr.mxu0 0.0
    %3861 = vmatpush1.msra.mxu0 0.0
    %3862 = vmatprep.subr.mxu0 0.0
    %3863 = vmatpush1.msra.mxu0 0.0
    %3864 = vmatprep.subr.mxu0 0.0
    %3865 = vmatpush1.msra.mxu0 0.0
    %3866 = vmatprep.subr.mxu0 0.0
    %3867 = vmatpush1.msra.mxu0 0.0
    %3868 = vmatprep.subr.mxu0 0.0
    %3869 = vmatpush1.msra.mxu0 0.0
    %3870 = vmatprep.subr.mxu0 0.0
    %3871 = vmatpush1.msra.mxu0 0.0
    %3872 = vmatprep.subr.mxu0 0.0
    %3873 = vmatpush1.msra.mxu0 0.0
    %3874 = vmatprep.subr.mxu0 0.0
    %3875 = vmatpush1.msra.mxu0 0.0
    %3876 = vmatprep.subr.mxu0 0.0
    %3877 = vmatpush1.msra.mxu0 0.0
    %3878 = vmatprep.subr.mxu0 0.0
    %3879 = vmatpush1.msra.mxu0 0.0
    %3880 = vmatprep.subr.mxu0 0.0
    %3881 = vmatpush1.msra.mxu0 0.0
    %3882 = vmatprep.subr.mxu0 0.0
    %3883 = vmatpush1.msra.mxu0 0.0
    %3884 = vmatprep.subr.mxu0 0.0
    %3885 = vmatpush1.msra.mxu0 0.0
    %3886 = vmatprep.subr.mxu0 0.0
    %3887 = vmatpush1.msra.mxu0 0.0
    %3888 = vmatprep.subr.mxu0 0.0
    %3889 = vmatpush1.msra.mxu0 0.0
    %3890 = vmatprep.mubr.f32.mxu0 0.0
    %v3891 = vand.u32 %v3781, 4294901760
    %v3892 = vsub.f32 %v3781, %v3891
    %v3893 = vand.u32 %v3892, 4294901760
    %v3894 = vsub.f32 %v3892, %v3893
    %v3895 = vand.u32 %v3894, 4294901760
    %3896 = vmatmul.mubr.f32.gmra.mrb[0].mxu0 %v3895
    %v3897 = vpop.f32.mrb[0].mxu0
    %v3898 = vadd.f32 %v3809, %v3897
    %v3899 = vpop.f32.mrb[0].mxu0
    %3900 = vmatprep.mubr.f32.mxu0 0.0
    %v3901 = vand.u32 %v3782, 4294901760
    %v3902 = vsub.f32 %v3782, %v3901
    %v3903 = vand.u32 %v3902, 4294901760
    %v3904 = vsub.f32 %v3902, %v3903
    %v3905 = vand.u32 %v3904, 4294901760
    %3906 = vmatmul.mubr.f32.gmra.mrb[0].mxu0 %v3905
    %v3907 = vpop.f32.mrb[0].mxu0
    %v3908 = vadd.f32 %v3809, %v3907
    %v3909 = vpop.f32.mrb[0].mxu0
    %3910 = vmatprep.mubr.f32.mxu0 0.0
    %v3911 = vand.u32 %v3783, 4294901760
    %v3912 = vsub.f32 %v3783, %v3911
    %v3913 = vand.u32 %v3912, 4294901760
    %v3914 = vsub.f32 %v3912, %v3913
    %v3915 = vand.u32 %v3914, 4294901760
    %3916 = vmatmul.mubr.f32.gmra.mrb[0].mxu0 %v3915
    %v3917 = vpop.f32.mrb[0].mxu0
    %v3918 = vadd.f32 %v3809, %v3917
    %v3919 = vpop.f32.mrb[0].mxu0
    %3920 = vmatprep.mubr.f32.mxu0 0.0
    %v3921 = vand.u32 %v3784, 4294901760
    %v3922 = vsub.f32 %v3784, %v3921
    %v3923 = vand.u32 %v3922, 4294901760
    %v3924 = vsub.f32 %v3922, %v3923
    %v3925 = vand.u32 %v3924, 4294901760
    %3926 = vmatmul.mubr.f32.gmra.mrb[0].mxu0 %v3925
    %v3927 = vpop.f32.mrb[0].mxu0
    %v3928 = vadd.f32 %v3809, %v3927
    %v3929 = vpop.f32.mrb[0].mxu0
    %3930 = vmatprep.mubr.f32.mxu0 0.0
    %v3931 = vand.u32 %v3785, 4294901760
    %v3932 = vsub.f32 %v3785, %v3931
    %v3933 = vand.u32 %v3932, 4294901760
    %v3934 = vsub.f32 %v3932, %v3933
    %v3935 = vand.u32 %v3934, 4294901760
    %3936 = vmatmul.mubr.f32.gmra.mrb[0].mxu0 %v3935
    %v3937 = vpop.f32.mrb[0].mxu0
    %v3938 = vadd.f32 %v3809, %v3937
    %v3939 = vpop.f32.mrb[0].mxu0
    %3940 = vmatprep.mubr.f32.mxu0 0.0
    %v3941 = vand.u32 %v3786, 4294901760
    %v3942 = vsub.f32 %v3786, %v3941
    %v3943 = vand.u32 %v3942, 4294901760
    %v3944 = vsub.f32 %v3942, %v3943
    %v3945 = vand.u32 %v3944, 4294901760
    %3946 = vmatmul.mubr.f32.gmra.mrb[0].mxu0 %v3945
    %v3947 = vpop.f32.mrb[0].mxu0
    %v3948 = vadd.f32 %v3809, %v3947
    %v3949 = vpop.f32.mrb[0].mxu0
    %3950 = vmatprep.mubr.f32.mxu0 0.0
    %v3951 = vand.u32 %v3787, 4294901760
    %v3952 = vsub.f32 %v3787, %v3951
    %v3953 = vand.u32 %v3952, 4294901760
    %v3954 = vsub.f32 %v3952, %v3953
    %v3955 = vand.u32 %v3954, 4294901760
    %3956 = vmatmul.mubr.f32.gmra.mrb[0].mxu0 %v3955
    %v3957 = vpop.f32.mrb[0].mxu0
    %v3958 = vadd.f32 %v3809, %v3957
    %v3959 = vpop.f32.mrb[0].mxu0
    %3960 = vmatprep.mubr.f32.mxu0 0.0
    %v3961 = vand.u32 %v3788, 4294901760
    %v3962 = vsub.f32 %v3788, %v3961
    %v3963 = vand.u32 %v3962, 4294901760
    %v3964 = vsub.f32 %v3962, %v3963
    %v3965 = vand.u32 %v3964, 4294901760
    %3966 = vmatmul.mubr.f32.gmra.mrb[0].mxu0 %v3965
    %v3967 = vpop.f32.mrb[0].mxu0
    %v3968 = vadd.f32 %v3809, %v3967
    %v3969 = vpop.f32.mrb[0].mxu0
    %3970 = vdwg.mxu0
    %3971 = vmatprep.subr.mxu0 0.0
    %v3972 = vand.u32 %v3790, 4294901760
    %v3973 = vsub.f32 %v3790, %v3972
    %v3974 = vand.u32 %v3973, 4294901760
    %v3975 = vsub.f32 %v3973, %v3974
    %v3976 = vand.u32 %v3975, 4294901760
    %3977 = vmatpush1.msra.mxu0 %v3976
    %3978 = vmatprep.subr.mxu0 0.0
    %v3979 = vand.u32 %v3791, 4294901760
    %v3980 = vsub.f32 %v3791, %v3979
    %v3981 = vand.u32 %v3980, 4294901760
    %v3982 = vsub.f32 %v3980, %v3981
    %v3983 = vand.u32 %v3982, 4294901760
    %3984 = vmatpush1.msra.mxu0 %v3983
    %3985 = vmatprep.subr.mxu0 0.0
    %v3986 = vand.u32 %v3792, 4294901760
    %v3987 = vsub.f32 %v3792, %v3986
    %v3988 = vand.u32 %v3987, 4294901760
    %v3989 = vsub.f32 %v3987, %v3988
    %v3990 = vand.u32 %v3989, 4294901760
    %3991 = vmatpush1.msra.mxu0 %v3990
    %3992 = vmatprep.subr.mxu0 0.0
    %v3993 = vand.u32 %v3793, 4294901760
    %v3994 = vsub.f32 %v3793, %v3993
    %v3995 = vand.u32 %v3994, 4294901760
    %v3996 = vsub.f32 %v3994, %v3995
    %v3997 = vand.u32 %v3996, 4294901760
    %3998 = vmatpush1.msra.mxu0 %v3997
    %3999 = vmatprep.subr.mxu0 0.0
    %v4000 = vand.u32 %v3794, 4294901760
    %v4001 = vsub.f32 %v3794, %v4000
    %v4002 = vand.u32 %v4001, 4294901760
    %v4003 = vsub.f32 %v4001, %v4002
    %v4004 = vand.u32 %v4003, 4294901760
    %4005 = vmatpush1.msra.mxu0 %v4004
    %4006 = vmatprep.subr.mxu0 0.0
    %v4007 = vand.u32 %v3795, 4294901760
    %v4008 = vsub.f32 %v3795, %v4007
    %v4009 = vand.u32 %v4008, 4294901760
    %v4010 = vsub.f32 %v4008, %v4009
    %v4011 = vand.u32 %v4010, 4294901760
    %4012 = vmatpush1.msra.mxu0 %v4011
    %4013 = vmatprep.subr.mxu0 0.0
    %v4014 = vand.u32 %v3796, 4294901760
    %v4015 = vsub.f32 %v3796, %v4014
    %v4016 = vand.u32 %v4015, 4294901760
    %v4017 = vsub.f32 %v4015, %v4016
    %v4018 = vand.u32 %v4017, 4294901760
    %4019 = vmatpush1.msra.mxu0 %v4018
    %4020 = vmatprep.subr.mxu0 0.0
    %v4021 = vand.u32 %v3797, 4294901760
    %v4022 = vsub.f32 %v3797, %v4021
    %v4023 = vand.u32 %v4022, 4294901760
    %v4024 = vsub.f32 %v4022, %v4023
    %v4025 = vand.u32 %v4024, 4294901760
    %4026 = vmatpush1.msra.mxu0 %v4025
    %4027 = vmatprep.subr.mxu0 0.0
    %v4028 = vand.u32 %v3798, 4294901760
    %v4029 = vsub.f32 %v3798, %v4028
    %v4030 = vand.u32 %v4029, 4294901760
    %v4031 = vsub.f32 %v4029, %v4030
    %v4032 = vand.u32 %v4031, 4294901760
    %4033 = vmatpush1.msra.mxu0 %v4032
    %4034 = vmatprep.subr.mxu0 0.0
    %v4035 = vand.u32 %v3799, 4294901760
    %v4036 = vsub.f32 %v3799, %v4035
    %v4037 = vand.u32 %v4036, 4294901760
    %v4038 = vsub.f32 %v4036, %v4037
    %v4039 = vand.u32 %v4038, 4294901760
    %4040 = vmatpush1.msra.mxu0 %v4039
    %4041 = vmatprep.subr.mxu0 0.0
    %v4042 = vand.u32 %v3800, 4294901760
    %v4043 = vsub.f32 %v3800, %v4042
    %v4044 = vand.u32 %v4043, 4294901760
    %v4045 = vsub.f32 %v4043, %v4044
    %v4046 = vand.u32 %v4045, 4294901760
    %4047 = vmatpush1.msra.mxu0 %v4046
    %4048 = vmatprep.subr.mxu0 0.0
    %v4049 = vand.u32 %v3801, 4294901760
    %v4050 = vsub.f32 %v3801, %v4049
    %v4051 = vand.u32 %v4050, 4294901760
    %v4052 = vsub.f32 %v4050, %v4051
    %v4053 = vand.u32 %v4052, 4294901760
    %4054 = vmatpush1.msra.mxu0 %v4053
    %4055 = vmatprep.subr.mxu0 0.0
    %v4056 = vand.u32 %v3802, 4294901760
    %v4057 = vsub.f32 %v3802, %v4056
    %v4058 = vand.u32 %v4057, 4294901760
    %v4059 = vsub.f32 %v4057, %v4058
    %v4060 = vand.u32 %v4059, 4294901760
    %4061 = vmatpush1.msra.mxu0 %v4060
    %4062 = vmatprep.subr.mxu0 0.0
    %v4063 = vand.u32 %v3803, 4294901760
    %v4064 = vsub.f32 %v3803, %v4063
    %v4065 = vand.u32 %v4064, 4294901760
    %v4066 = vsub.f32 %v4064, %v4065
    %v4067 = vand.u32 %v4066, 4294901760
    %4068 = vmatpush1.msra.mxu0 %v4067
    %4069 = vmatprep.subr.mxu0 0.0
    %v4070 = vand.u32 %v3804, 4294901760
    %v4071 = vsub.f32 %v3804, %v4070
    %v4072 = vand.u32 %v4071, 4294901760
    %v4073 = vsub.f32 %v4071, %v4072
    %v4074 = vand.u32 %v4073, 4294901760
    %4075 = vmatpush1.msra.mxu0 %v4074
    %4076 = vmatprep.subr.mxu0 0.0
    %v4077 = vand.u32 %v3805, 4294901760
    %v4078 = vsub.f32 %v3805, %v4077
    %v4079 = vand.u32 %v4078, 4294901760
    %v4080 = vsub.f32 %v4078, %v4079
    %v4081 = vand.u32 %v4080, 4294901760
    %4082 = vmatpush1.msra.mxu0 %v4081
    %4083 = vmatprep.subr.mxu0 0.0
    %4084 = vmatpush1.msra.mxu0 0.0
    %4085 = vmatprep.subr.mxu0 0.0
    %4086 = vmatpush1.msra.mxu0 0.0
    %4087 = vmatprep.subr.mxu0 0.0
    %4088 = vmatpush1.msra.mxu0 0.0
    %4089 = vmatprep.subr.mxu0 0.0
    %4090 = vmatpush1.msra.mxu0 0.0
    %4091 = vmatprep.subr.mxu0 0.0
    %4092 = vmatpush1.msra.mxu0 0.0
    %4093 = vmatprep.subr.mxu0 0.0
    %4094 = vmatpush1.msra.mxu0 0.0
    %4095 = vmatprep.subr.mxu0 0.0
    %4096 = vmatpush1.msra.mxu0 0.0
    %4097 = vmatprep.subr.mxu0 0.0
    %4098 = vmatpush1.msra.mxu0 0.0
    %4099 = vmatprep.subr.mxu0 0.0
    %4100 = vmatpush1.msra.mxu0 0.0
    %4101 = vmatprep.subr.mxu0 0.0
    %4102 = vmatpush1.msra.mxu0 0.0
    %4103 = vmatprep.subr.mxu0 0.0
    %4104 = vmatpush1.msra.mxu0 0.0
    %4105 = vmatprep.subr.mxu0 0.0
    %4106 = vmatpush1.msra.mxu0 0.0
    %4107 = vmatprep.subr.mxu0 0.0
    %4108 = vmatpush1.msra.mxu0 0.0
    %4109 = vmatprep.subr.mxu0 0.0
    %4110 = vmatpush1.msra.mxu0 0.0
    %4111 = vmatprep.subr.mxu0 0.0
    %4112 = vmatpush1.msra.mxu0 0.0
    %4113 = vmatprep.subr.mxu0 0.0
    %4114 = vmatpush1.msra.mxu0 0.0
    %4115 = vmatprep.mubr.f32.mxu0 0.0
    %v4116 = vand.u32 %v3781, 4294901760
    %4117 = vmatmul.mubr.f32.gmra.mrb[0].mxu0 %v4116
    %v4118 = vpop.f32.mrb[0].mxu0
    %v4119 = vadd.f32 %v3898, %v4118
    %v4120 = vpop.f32.mrb[0].mxu0
    %4121 = vmatprep.mubr.f32.mxu0 0.0
    %v4122 = vand.u32 %v3782, 4294901760
    %4123 = vmatmul.mubr.f32.gmra.mrb[0].mxu0 %v4122
    %v4124 = vpop.f32.mrb[0].mxu0
    %v4125 = vadd.f32 %v3908, %v4124
    %v4126 = vpop.f32.mrb[0].mxu0
    %4127 = vmatprep.mubr.f32.mxu0 0.0
    %v4128 = vand.u32 %v3783, 4294901760
    %4129 = vmatmul.mubr.f32.gmra.mrb[0].mxu0 %v4128
    %v4130 = vpop.f32.mrb[0].mxu0
    %v4131 = vadd.f32 %v3918, %v4130
    %v4132 = vpop.f32.mrb[0].mxu0
    %4133 = vmatprep.mubr.f32.mxu0 0.0
    %v4134 = vand.u32 %v3784, 4294901760
    %4135 = vmatmul.mubr.f32.gmra.mrb[0].mxu0 %v4134
    %v4136 = vpop.f32.mrb[0].mxu0
    %v4137 = vadd.f32 %v3928, %v4136
    %v4138 = vpop.f32.mrb[0].mxu0
    %4139 = vmatprep.mubr.f32.mxu0 0.0
    %v4140 = vand.u32 %v3785, 4294901760
    %4141 = vmatmul.mubr.f32.gmra.mrb[0].mxu0 %v4140
    %v4142 = vpop.f32.mrb[0].mxu0
    %v4143 = vadd.f32 %v3938, %v4142
    %v4144 = vpop.f32.mrb[0].mxu0
    %4145 = vmatprep.mubr.f32.mxu0 0.0
    %v4146 = vand.u32 %v3786, 4294901760
    %4147 = vmatmul.mubr.f32.gmra.mrb[0].mxu0 %v4146
    %v4148 = vpop.f32.mrb[0].mxu0
    %v4149 = vadd.f32 %v3948, %v4148
    %v4150 = vpop.f32.mrb[0].mxu0
    %4151 = vmatprep.mubr.f32.mxu0 0.0
    %v4152 = vand.u32 %v3787, 4294901760
    %4153 = vmatmul.mubr.f32.gmra.mrb[0].mxu0 %v4152
    %v4154 = vpop.f32.mrb[0].mxu0
    %v4155 = vadd.f32 %v3958, %v4154
    %v4156 = vpop.f32.mrb[0].mxu0
    %4157 = vmatprep.mubr.f32.mxu0 0.0
    %v4158 = vand.u32 %v3788, 4294901760
    %4159 = vmatmul.mubr.f32.gmra.mrb[0].mxu0 %v4158
    %v4160 = vpop.f32.mrb[0].mxu0
    %v4161 = vadd.f32 %v3968, %v4160
    %v4162 = vpop.f32.mrb[0].mxu0
    %4163 = vdwg.mxu0
    %4164 = vmatprep.subr.mxu0 0.0
    %v4165 = vand.u32 %v3790, 4294901760
    %v4166 = vsub.f32 %v3790, %v4165
    %4167 = vmatpush1.msra.mxu0 %v4166
    %4168 = vmatprep.subr.mxu0 0.0
    %v4169 = vand.u32 %v3791, 4294901760
    %v4170 = vsub.f32 %v3791, %v4169
    %4171 = vmatpush1.msra.mxu0 %v4170
    %4172 = vmatprep.subr.mxu0 0.0
    %v4173 = vand.u32 %v3792, 4294901760
    %v4174 = vsub.f32 %v3792, %v4173
    %4175 = vmatpush1.msra.mxu0 %v4174
    %4176 = vmatprep.subr.mxu0 0.0
    %v4177 = vand.u32 %v3793, 4294901760
    %v4178 = vsub.f32 %v3793, %v4177
    %4179 = vmatpush1.msra.mxu0 %v4178
    %4180 = vmatprep.subr.mxu0 0.0
    %v4181 = vand.u32 %v3794, 4294901760
    %v4182 = vsub.f32 %v3794, %v4181
    %4183 = vmatpush1.msra.mxu0 %v4182
    %4184 = vmatprep.subr.mxu0 0.0
    %v4185 = vand.u32 %v3795, 4294901760
    %v4186 = vsub.f32 %v3795, %v4185
    %4187 = vmatpush1.msra.mxu0 %v4186
    %4188 = vmatprep.subr.mxu0 0.0
    %v4189 = vand.u32 %v3796, 4294901760
    %v4190 = vsub.f32 %v3796, %v4189
    %4191 = vmatpush1.msra.mxu0 %v4190
    %4192 = vmatprep.subr.mxu0 0.0
    %v4193 = vand.u32 %v3797, 4294901760
    %v4194 = vsub.f32 %v3797, %v4193
    %4195 = vmatpush1.msra.mxu0 %v4194
    %4196 = vmatprep.subr.mxu0 0.0
    %v4197 = vand.u32 %v3798, 4294901760
    %v4198 = vsub.f32 %v3798, %v4197
    %4199 = vmatpush1.msra.mxu0 %v4198
    %4200 = vmatprep.subr.mxu0 0.0
    %v4201 = vand.u32 %v3799, 4294901760
    %v4202 = vsub.f32 %v3799, %v4201
    %4203 = vmatpush1.msra.mxu0 %v4202
    %4204 = vmatprep.subr.mxu0 0.0
    %v4205 = vand.u32 %v3800, 4294901760
    %v4206 = vsub.f32 %v3800, %v4205
    %4207 = vmatpush1.msra.mxu0 %v4206
    %4208 = vmatprep.subr.mxu0 0.0
    %v4209 = vand.u32 %v3801, 4294901760
    %v4210 = vsub.f32 %v3801, %v4209
    %4211 = vmatpush1.msra.mxu0 %v4210
    %4212 = vmatprep.subr.mxu0 0.0
    %v4213 = vand.u32 %v3802, 4294901760
    %v4214 = vsub.f32 %v3802, %v4213
    %4215 = vmatpush1.msra.mxu0 %v4214
    %4216 = vmatprep.subr.mxu0 0.0
    %v4217 = vand.u32 %v3803, 4294901760
    %v4218 = vsub.f32 %v3803, %v4217
    %4219 = vmatpush1.msra.mxu0 %v4218
    %4220 = vmatprep.subr.mxu0 0.0
    %v4221 = vand.u32 %v3804, 4294901760
    %v4222 = vsub.f32 %v3804, %v4221
    %4223 = vmatpush1.msra.mxu0 %v4222
    %4224 = vmatprep.subr.mxu0 0.0
    %v4225 = vand.u32 %v3805, 4294901760
    %v4226 = vsub.f32 %v3805, %v4225
    %4227 = vmatpush1.msra.mxu0 %v4226
    %4228 = vmatprep.subr.mxu0 0.0
    %4229 = vmatpush1.msra.mxu0 0.0
    %4230 = vmatprep.subr.mxu0 0.0
    %4231 = vmatpush1.msra.mxu0 0.0
    %4232 = vmatprep.subr.mxu0 0.0
    %4233 = vmatpush1.msra.mxu0 0.0
    %4234 = vmatprep.subr.mxu0 0.0
    %4235 = vmatpush1.msra.mxu0 0.0
    %4236 = vmatprep.subr.mxu0 0.0
    %4237 = vmatpush1.msra.mxu0 0.0
    %4238 = vmatprep.subr.mxu0 0.0
    %4239 = vmatpush1.msra.mxu0 0.0
    %4240 = vmatprep.subr.mxu0 0.0
    %4241 = vmatpush1.msra.mxu0 0.0
    %4242 = vmatprep.subr.mxu0 0.0
    %4243 = vmatpush1.msra.mxu0 0.0
    %4244 = vmatprep.subr.mxu0 0.0
    %4245 = vmatpush1.msra.mxu0 0.0
    %4246 = vmatprep.subr.mxu0 0.0
    %4247 = vmatpush1.msra.mxu0 0.0
    %4248 = vmatprep.subr.mxu0 0.0
    %4249 = vmatpush1.msra.mxu0 0.0
    %4250 = vmatprep.subr.mxu0 0.0
    %4251 = vmatpush1.msra.mxu0 0.0
    %4252 = vmatprep.subr.mxu0 0.0
    %4253 = vmatpush1.msra.mxu0 0.0
    %4254 = vmatprep.subr.mxu0 0.0
    %4255 = vmatpush1.msra.mxu0 0.0
    %4256 = vmatprep.subr.mxu0 0.0
    %4257 = vmatpush1.msra.mxu0 0.0
    %4258 = vmatprep.subr.mxu0 0.0
    %4259 = vmatpush1.msra.mxu0 0.0
    %4260 = vmatprep.mubr.f32.mxu0 0.0
    %v4261 = vand.u32 %v3781, 4294901760
    %v4262 = vsub.f32 %v3781, %v4261
    %4263 = vmatmul.mubr.f32.gmra.mrb[0].mxu0 %v4262
    %v4264 = vpop.f32.mrb[0].mxu0
    %v4265 = vadd.f32 %v4119, %v4264
    %v4266 = vpop.f32.mrb[0].mxu0
    %4267 = vmatprep.mubr.f32.mxu0 0.0
    %v4268 = vand.u32 %v3782, 4294901760
    %v4269 = vsub.f32 %v3782, %v4268
    %4270 = vmatmul.mubr.f32.gmra.mrb[0].mxu0 %v4269
    %v4271 = vpop.f32.mrb[0].mxu0
    %v4272 = vadd.f32 %v4125, %v4271
    %v4273 = vpop.f32.mrb[0].mxu0
    %4274 = vmatprep.mubr.f32.mxu0 0.0
    %v4275 = vand.u32 %v3783, 4294901760
    %v4276 = vsub.f32 %v3783, %v4275
    %4277 = vmatmul.mubr.f32.gmra.mrb[0].mxu0 %v4276
    %v4278 = vpop.f32.mrb[0].mxu0
    %v4279 = vadd.f32 %v4131, %v4278
    %v4280 = vpop.f32.mrb[0].mxu0
    %4281 = vmatprep.mubr.f32.mxu0 0.0
    %v4282 = vand.u32 %v3784, 4294901760
    %v4283 = vsub.f32 %v3784, %v4282
    %4284 = vmatmul.mubr.f32.gmra.mrb[0].mxu0 %v4283
    %v4285 = vpop.f32.mrb[0].mxu0
    %v4286 = vadd.f32 %v4137, %v4285
    %v4287 = vpop.f32.mrb[0].mxu0
    %4288 = vmatprep.mubr.f32.mxu0 0.0
    %v4289 = vand.u32 %v3785, 4294901760
    %v4290 = vsub.f32 %v3785, %v4289
    %4291 = vmatmul.mubr.f32.gmra.mrb[0].mxu0 %v4290
    %v4292 = vpop.f32.mrb[0].mxu0
    %v4293 = vadd.f32 %v4143, %v4292
    %v4294 = vpop.f32.mrb[0].mxu0
    %4295 = vmatprep.mubr.f32.mxu0 0.0
    %v4296 = vand.u32 %v3786, 4294901760
    %v4297 = vsub.f32 %v3786, %v4296
    %4298 = vmatmul.mubr.f32.gmra.mrb[0].mxu0 %v4297
    %v4299 = vpop.f32.mrb[0].mxu0
    %v4300 = vadd.f32 %v4149, %v4299
    %v4301 = vpop.f32.mrb[0].mxu0
    %4302 = vmatprep.mubr.f32.mxu0 0.0
    %v4303 = vand.u32 %v3787, 4294901760
    %v4304 = vsub.f32 %v3787, %v4303
    %4305 = vmatmul.mubr.f32.gmra.mrb[0].mxu0 %v4304
    %v4306 = vpop.f32.mrb[0].mxu0
    %v4307 = vadd.f32 %v4155, %v4306
    %v4308 = vpop.f32.mrb[0].mxu0
    %4309 = vmatprep.mubr.f32.mxu0 0.0
    %v4310 = vand.u32 %v3788, 4294901760
    %v4311 = vsub.f32 %v3788, %v4310
    %4312 = vmatmul.mubr.f32.gmra.mrb[0].mxu0 %v4311
    %v4313 = vpop.f32.mrb[0].mxu0
    %v4314 = vadd.f32 %v4161, %v4313
    %v4315 = vpop.f32.mrb[0].mxu0
    %4316 = vdwg.mxu0
    %4317 = vmatprep.subr.mxu0 0.0
    %v4318 = vand.u32 %v3790, 4294901760
    %4319 = vmatpush1.msra.mxu0 %v4318
    %4320 = vmatprep.subr.mxu0 0.0
    %v4321 = vand.u32 %v3791, 4294901760
    %4322 = vmatpush1.msra.mxu0 %v4321
    %4323 = vmatprep.subr.mxu0 0.0
    %v4324 = vand.u32 %v3792, 4294901760
    %4325 = vmatpush1.msra.mxu0 %v4324
    %4326 = vmatprep.subr.mxu0 0.0
    %v4327 = vand.u32 %v3793, 4294901760
    %4328 = vmatpush1.msra.mxu0 %v4327
    %4329 = vmatprep.subr.mxu0 0.0
    %v4330 = vand.u32 %v3794, 4294901760
    %4331 = vmatpush1.msra.mxu0 %v4330
    %4332 = vmatprep.subr.mxu0 0.0
    %v4333 = vand.u32 %v3795, 4294901760
    %4334 = vmatpush1.msra.mxu0 %v4333
    %4335 = vmatprep.subr.mxu0 0.0
    %v4336 = vand.u32 %v3796, 4294901760
    %4337 = vmatpush1.msra.mxu0 %v4336
    %4338 = vmatprep.subr.mxu0 0.0
    %v4339 = vand.u32 %v3797, 4294901760
    %4340 = vmatpush1.msra.mxu0 %v4339
    %4341 = vmatprep.subr.mxu0 0.0
    %v4342 = vand.u32 %v3798, 4294901760
    %4343 = vmatpush1.msra.mxu0 %v4342
    %4344 = vmatprep.subr.mxu0 0.0
    %v4345 = vand.u32 %v3799, 4294901760
    %4346 = vmatpush1.msra.mxu0 %v4345
    %4347 = vmatprep.subr.mxu0 0.0
    %v4348 = vand.u32 %v3800, 4294901760
    %4349 = vmatpush1.msra.mxu0 %v4348
    %4350 = vmatprep.subr.mxu0 0.0
    %v4351 = vand.u32 %v3801, 4294901760
    %4352 = vmatpush1.msra.mxu0 %v4351
    %4353 = vmatprep.subr.mxu0 0.0
    %v4354 = vand.u32 %v3802, 4294901760
    %4355 = vmatpush1.msra.mxu0 %v4354
    %4356 = vmatprep.subr.mxu0 0.0
    %v4357 = vand.u32 %v3803, 4294901760
    %4358 = vmatpush1.msra.mxu0 %v4357
    %4359 = vmatprep.subr.mxu0 0.0
    %v4360 = vand.u32 %v3804, 4294901760
    %4361 = vmatpush1.msra.mxu0 %v4360
    %4362 = vmatprep.subr.mxu0 0.0
    %v4363 = vand.u32 %v3805, 4294901760
    %4364 = vmatpush1.msra.mxu0 %v4363
    %4365 = vmatprep.subr.mxu0 0.0
    %4366 = vmatpush1.msra.mxu0 0.0
    %4367 = vmatprep.subr.mxu0 0.0
    %4368 = vmatpush1.msra.mxu0 0.0
    %4369 = vmatprep.subr.mxu0 0.0
    %4370 = vmatpush1.msra.mxu0 0.0
    %4371 = vmatprep.subr.mxu0 0.0
    %4372 = vmatpush1.msra.mxu0 0.0
    %4373 = vmatprep.subr.mxu0 0.0
    %4374 = vmatpush1.msra.mxu0 0.0
    %4375 = vmatprep.subr.mxu0 0.0
    %4376 = vmatpush1.msra.mxu0 0.0
    %4377 = vmatprep.subr.mxu0 0.0
    %4378 = vmatpush1.msra.mxu0 0.0
    %4379 = vmatprep.subr.mxu0 0.0
    %4380 = vmatpush1.msra.mxu0 0.0
    %4381 = vmatprep.subr.mxu0 0.0
    %4382 = vmatpush1.msra.mxu0 0.0
    %4383 = vmatprep.subr.mxu0 0.0
    %4384 = vmatpush1.msra.mxu0 0.0
    %4385 = vmatprep.subr.mxu0 0.0
    %4386 = vmatpush1.msra.mxu0 0.0
    %4387 = vmatprep.subr.mxu0 0.0
    %4388 = vmatpush1.msra.mxu0 0.0
    %4389 = vmatprep.subr.mxu0 0.0
    %4390 = vmatpush1.msra.mxu0 0.0
    %4391 = vmatprep.subr.mxu0 0.0
    %4392 = vmatpush1.msra.mxu0 0.0
    %4393 = vmatprep.subr.mxu0 0.0
    %4394 = vmatpush1.msra.mxu0 0.0
    %4395 = vmatprep.subr.mxu0 0.0
    %4396 = vmatpush1.msra.mxu0 0.0
    %4397 = vmatprep.mubr.f32.mxu0 0.0
    %v4398 = vand.u32 %v3781, 4294901760
    %v4399 = vsub.f32 %v3781, %v4398
    %v4400 = vand.u32 %v4399, 4294901760
    %4401 = vmatmul.mubr.f32.gmra.mrb[0].mxu0 %v4400
    %v4402 = vpop.f32.mrb[0].mxu0
    %v4403 = vadd.f32 %v4265, %v4402
    %v4404 = vpop.f32.mrb[0].mxu0
    %4405 = vmatprep.mubr.f32.mxu0 0.0
    %v4406 = vand.u32 %v3782, 4294901760
    %v4407 = vsub.f32 %v3782, %v4406
    %v4408 = vand.u32 %v4407, 4294901760
    %4409 = vmatmul.mubr.f32.gmra.mrb[0].mxu0 %v4408
    %v4410 = vpop.f32.mrb[0].mxu0
    %v4411 = vadd.f32 %v4272, %v4410
    %v4412 = vpop.f32.mrb[0].mxu0
    %4413 = vmatprep.mubr.f32.mxu0 0.0
    %v4414 = vand.u32 %v3783, 4294901760
    %v4415 = vsub.f32 %v3783, %v4414
    %v4416 = vand.u32 %v4415, 4294901760
    %4417 = vmatmul.mubr.f32.gmra.mrb[0].mxu0 %v4416
    %v4418 = vpop.f32.mrb[0].mxu0
    %v4419 = vadd.f32 %v4279, %v4418
    %v4420 = vpop.f32.mrb[0].mxu0
    %4421 = vmatprep.mubr.f32.mxu0 0.0
    %v4422 = vand.u32 %v3784, 4294901760
    %v4423 = vsub.f32 %v3784, %v4422
    %v4424 = vand.u32 %v4423, 4294901760
    %4425 = vmatmul.mubr.f32.gmra.mrb[0].mxu0 %v4424
    %v4426 = vpop.f32.mrb[0].mxu0
    %v4427 = vadd.f32 %v4286, %v4426
    %v4428 = vpop.f32.mrb[0].mxu0
    %4429 = vmatprep.mubr.f32.mxu0 0.0
    %v4430 = vand.u32 %v3785, 4294901760
    %v4431 = vsub.f32 %v3785, %v4430
    %v4432 = vand.u32 %v4431, 4294901760
    %4433 = vmatmul.mubr.f32.gmra.mrb[0].mxu0 %v4432
    %v4434 = vpop.f32.mrb[0].mxu0
    %v4435 = vadd.f32 %v4293, %v4434
    %v4436 = vpop.f32.mrb[0].mxu0
    %4437 = vmatprep.mubr.f32.mxu0 0.0
    %v4438 = vand.u32 %v3786, 4294901760
    %v4439 = vsub.f32 %v3786, %v4438
    %v4440 = vand.u32 %v4439, 4294901760
    %4441 = vmatmul.mubr.f32.gmra.mrb[0].mxu0 %v4440
    %v4442 = vpop.f32.mrb[0].mxu0
    %v4443 = vadd.f32 %v4300, %v4442
    %v4444 = vpop.f32.mrb[0].mxu0
    %4445 = vmatprep.mubr.f32.mxu0 0.0
    %v4446 = vand.u32 %v3787, 4294901760
    %v4447 = vsub.f32 %v3787, %v4446
    %v4448 = vand.u32 %v4447, 4294901760
    %4449 = vmatmul.mubr.f32.gmra.mrb[0].mxu0 %v4448
    %v4450 = vpop.f32.mrb[0].mxu0
    %v4451 = vadd.f32 %v4307, %v4450
    %v4452 = vpop.f32.mrb[0].mxu0
    %4453 = vmatprep.mubr.f32.mxu0 0.0
    %v4454 = vand.u32 %v3788, 4294901760
    %v4455 = vsub.f32 %v3788, %v4454
    %v4456 = vand.u32 %v4455, 4294901760
    %4457 = vmatmul.mubr.f32.gmra.mrb[0].mxu0 %v4456
    %v4458 = vpop.f32.mrb[0].mxu0
    %v4459 = vadd.f32 %v4314, %v4458
    %v4460 = vpop.f32.mrb[0].mxu0
    %4461 = vdwg.mxu0
    %4462 = vmatprep.subr.mxu0 0.0
    %v4463 = vand.u32 %v3790, 4294901760
    %v4464 = vsub.f32 %v3790, %v4463
    %v4465 = vand.u32 %v4464, 4294901760
    %4466 = vmatpush1.msra.mxu0 %v4465
    %4467 = vmatprep.subr.mxu0 0.0
    %v4468 = vand.u32 %v3791, 4294901760
    %v4469 = vsub.f32 %v3791, %v4468
    %v4470 = vand.u32 %v4469, 4294901760
    %4471 = vmatpush1.msra.mxu0 %v4470
    %4472 = vmatprep.subr.mxu0 0.0
    %v4473 = vand.u32 %v3792, 4294901760
    %v4474 = vsub.f32 %v3792, %v4473
    %v4475 = vand.u32 %v4474, 4294901760
    %4476 = vmatpush1.msra.mxu0 %v4475
    %4477 = vmatprep.subr.mxu0 0.0
    %v4478 = vand.u32 %v3793, 4294901760
    %v4479 = vsub.f32 %v3793, %v4478
    %v4480 = vand.u32 %v4479, 4294901760
    %4481 = vmatpush1.msra.mxu0 %v4480
    %4482 = vmatprep.subr.mxu0 0.0
    %v4483 = vand.u32 %v3794, 4294901760
    %v4484 = vsub.f32 %v3794, %v4483
    %v4485 = vand.u32 %v4484, 4294901760
    %4486 = vmatpush1.msra.mxu0 %v4485
    %4487 = vmatprep.subr.mxu0 0.0
    %v4488 = vand.u32 %v3795, 4294901760
    %v4489 = vsub.f32 %v3795, %v4488
    %v4490 = vand.u32 %v4489, 4294901760
    %4491 = vmatpush1.msra.mxu0 %v4490
    %4492 = vmatprep.subr.mxu0 0.0
    %v4493 = vand.u32 %v3796, 4294901760
    %v4494 = vsub.f32 %v3796, %v4493
    %v4495 = vand.u32 %v4494, 4294901760
    %4496 = vmatpush1.msra.mxu0 %v4495
    %4497 = vmatprep.subr.mxu0 0.0
    %v4498 = vand.u32 %v3797, 4294901760
    %v4499 = vsub.f32 %v3797, %v4498
    %v4500 = vand.u32 %v4499, 4294901760
    %4501 = vmatpush1.msra.mxu0 %v4500
    %4502 = vmatprep.subr.mxu0 0.0
    %v4503 = vand.u32 %v3798, 4294901760
    %v4504 = vsub.f32 %v3798, %v4503
    %v4505 = vand.u32 %v4504, 4294901760
    %4506 = vmatpush1.msra.mxu0 %v4505
    %4507 = vmatprep.subr.mxu0 0.0
    %v4508 = vand.u32 %v3799, 4294901760
    %v4509 = vsub.f32 %v3799, %v4508
    %v4510 = vand.u32 %v4509, 4294901760
    %4511 = vmatpush1.msra.mxu0 %v4510
    %4512 = vmatprep.subr.mxu0 0.0
    %v4513 = vand.u32 %v3800, 4294901760
    %v4514 = vsub.f32 %v3800, %v4513
    %v4515 = vand.u32 %v4514, 4294901760
    %4516 = vmatpush1.msra.mxu0 %v4515
    %4517 = vmatprep.subr.mxu0 0.0
    %v4518 = vand.u32 %v3801, 4294901760
    %v4519 = vsub.f32 %v3801, %v4518
    %v4520 = vand.u32 %v4519, 4294901760
    %4521 = vmatpush1.msra.mxu0 %v4520
    %4522 = vmatprep.subr.mxu0 0.0
    %v4523 = vand.u32 %v3802, 4294901760
    %v4524 = vsub.f32 %v3802, %v4523
    %v4525 = vand.u32 %v4524, 4294901760
    %4526 = vmatpush1.msra.mxu0 %v4525
    %4527 = vmatprep.subr.mxu0 0.0
    %v4528 = vand.u32 %v3803, 4294901760
    %v4529 = vsub.f32 %v3803, %v4528
    %v4530 = vand.u32 %v4529, 4294901760
    %4531 = vmatpush1.msra.mxu0 %v4530
    %4532 = vmatprep.subr.mxu0 0.0
    %v4533 = vand.u32 %v3804, 4294901760
    %v4534 = vsub.f32 %v3804, %v4533
    %v4535 = vand.u32 %v4534, 4294901760
    %4536 = vmatpush1.msra.mxu0 %v4535
    %4537 = vmatprep.subr.mxu0 0.0
    %v4538 = vand.u32 %v3805, 4294901760
    %v4539 = vsub.f32 %v3805, %v4538
    %v4540 = vand.u32 %v4539, 4294901760
    %4541 = vmatpush1.msra.mxu0 %v4540
    %4542 = vmatprep.subr.mxu0 0.0
    %4543 = vmatpush1.msra.mxu0 0.0
    %4544 = vmatprep.subr.mxu0 0.0
    %4545 = vmatpush1.msra.mxu0 0.0
    %4546 = vmatprep.subr.mxu0 0.0
    %4547 = vmatpush1.msra.mxu0 0.0
    %4548 = vmatprep.subr.mxu0 0.0
    %4549 = vmatpush1.msra.mxu0 0.0
    %4550 = vmatprep.subr.mxu0 0.0
    %4551 = vmatpush1.msra.mxu0 0.0
    %4552 = vmatprep.subr.mxu0 0.0
    %4553 = vmatpush1.msra.mxu0 0.0
    %4554 = vmatprep.subr.mxu0 0.0
    %4555 = vmatpush1.msra.mxu0 0.0
    %4556 = vmatprep.subr.mxu0 0.0
    %4557 = vmatpush1.msra.mxu0 0.0
    %4558 = vmatprep.subr.mxu0 0.0
    %4559 = vmatpush1.msra.mxu0 0.0
    %4560 = vmatprep.subr.mxu0 0.0
    %4561 = vmatpush1.msra.mxu0 0.0
    %4562 = vmatprep.subr.mxu0 0.0
    %4563 = vmatpush1.msra.mxu0 0.0
    %4564 = vmatprep.subr.mxu0 0.0
    %4565 = vmatpush1.msra.mxu0 0.0
    %4566 = vmatprep.subr.mxu0 0.0
    %4567 = vmatpush1.msra.mxu0 0.0
    %4568 = vmatprep.subr.mxu0 0.0
    %4569 = vmatpush1.msra.mxu0 0.0
    %4570 = vmatprep.subr.mxu0 0.0
    %4571 = vmatpush1.msra.mxu0 0.0
    %4572 = vmatprep.subr.mxu0 0.0
    %4573 = vmatpush1.msra.mxu0 0.0
    %4574 = vmatprep.mubr.f32.mxu0 0.0
    %v4575 = vand.u32 %v3781, 4294901760
    %4576 = vmatmul.mubr.f32.gmra.mrb[0].mxu0 %v4575
    %v4577 = vpop.f32.mrb[0].mxu0
    %v4578 = vadd.f32 %v4403, %v4577
    %v4579 = vpop.f32.mrb[0].mxu0
    %4580 = vmatprep.mubr.f32.mxu0 0.0
    %v4581 = vand.u32 %v3782, 4294901760
    %4582 = vmatmul.mubr.f32.gmra.mrb[0].mxu0 %v4581
    %v4583 = vpop.f32.mrb[0].mxu0
    %v4584 = vadd.f32 %v4411, %v4583
    %v4585 = vpop.f32.mrb[0].mxu0
    %4586 = vmatprep.mubr.f32.mxu0 0.0
    %v4587 = vand.u32 %v3783, 4294901760
    %4588 = vmatmul.mubr.f32.gmra.mrb[0].mxu0 %v4587
    %v4589 = vpop.f32.mrb[0].mxu0
    %v4590 = vadd.f32 %v4419, %v4589
    %v4591 = vpop.f32.mrb[0].mxu0
    %4592 = vmatprep.mubr.f32.mxu0 0.0
    %v4593 = vand.u32 %v3784, 4294901760
    %4594 = vmatmul.mubr.f32.gmra.mrb[0].mxu0 %v4593
    %v4595 = vpop.f32.mrb[0].mxu0
    %v4596 = vadd.f32 %v4427, %v4595
    %v4597 = vpop.f32.mrb[0].mxu0
    %4598 = vmatprep.mubr.f32.mxu0 0.0
    %v4599 = vand.u32 %v3785, 4294901760
    %4600 = vmatmul.mubr.f32.gmra.mrb[0].mxu0 %v4599
    %v4601 = vpop.f32.mrb[0].mxu0
    %v4602 = vadd.f32 %v4435, %v4601
    %v4603 = vpop.f32.mrb[0].mxu0
    %4604 = vmatprep.mubr.f32.mxu0 0.0
    %v4605 = vand.u32 %v3786, 4294901760
    %4606 = vmatmul.mubr.f32.gmra.mrb[0].mxu0 %v4605
    %v4607 = vpop.f32.mrb[0].mxu0
    %v4608 = vadd.f32 %v4443, %v4607
    %v4609 = vpop.f32.mrb[0].mxu0
    %4610 = vmatprep.mubr.f32.mxu0 0.0
    %v4611 = vand.u32 %v3787, 4294901760
    %4612 = vmatmul.mubr.f32.gmra.mrb[0].mxu0 %v4611
    %v4613 = vpop.f32.mrb[0].mxu0
    %v4614 = vadd.f32 %v4451, %v4613
    %v4615 = vpop.f32.mrb[0].mxu0
    %4616 = vmatprep.mubr.f32.mxu0 0.0
    %v4617 = vand.u32 %v3788, 4294901760
    %4618 = vmatmul.mubr.f32.gmra.mrb[0].mxu0 %v4617
    %v4619 = vpop.f32.mrb[0].mxu0
    %v4620 = vadd.f32 %v4459, %v4619
    %v4621 = vpop.f32.mrb[0].mxu0
    %4622 = vdwg.mxu0
    %4623 = vmatprep.subr.mxu0 0.0
    %v4624 = vand.u32 %v3790, 4294901760
    %4625 = vmatpush1.msra.mxu0 %v4624
    %4626 = vmatprep.subr.mxu0 0.0
    %v4627 = vand.u32 %v3791, 4294901760
    %4628 = vmatpush1.msra.mxu0 %v4627
    %4629 = vmatprep.subr.mxu0 0.0
    %v4630 = vand.u32 %v3792, 4294901760
    %4631 = vmatpush1.msra.mxu0 %v4630
    %4632 = vmatprep.subr.mxu0 0.0
    %v4633 = vand.u32 %v3793, 4294901760
    %4634 = vmatpush1.msra.mxu0 %v4633
    %4635 = vmatprep.subr.mxu0 0.0
    %v4636 = vand.u32 %v3794, 4294901760
    %4637 = vmatpush1.msra.mxu0 %v4636
    %4638 = vmatprep.subr.mxu0 0.0
    %v4639 = vand.u32 %v3795, 4294901760
    %4640 = vmatpush1.msra.mxu0 %v4639
    %4641 = vmatprep.subr.mxu0 0.0
    %v4642 = vand.u32 %v3796, 4294901760
    %4643 = vmatpush1.msra.mxu0 %v4642
    %4644 = vmatprep.subr.mxu0 0.0
    %v4645 = vand.u32 %v3797, 4294901760
    %4646 = vmatpush1.msra.mxu0 %v4645
    %4647 = vmatprep.subr.mxu0 0.0
    %v4648 = vand.u32 %v3798, 4294901760
    %4649 = vmatpush1.msra.mxu0 %v4648
    %4650 = vmatprep.subr.mxu0 0.0
    %v4651 = vand.u32 %v3799, 4294901760
    %4652 = vmatpush1.msra.mxu0 %v4651
    %4653 = vmatprep.subr.mxu0 0.0
    %v4654 = vand.u32 %v3800, 4294901760
    %4655 = vmatpush1.msra.mxu0 %v4654
    %4656 = vmatprep.subr.mxu0 0.0
    %v4657 = vand.u32 %v3801, 4294901760
    %4658 = vmatpush1.msra.mxu0 %v4657
    %4659 = vmatprep.subr.mxu0 0.0
    %v4660 = vand.u32 %v3802, 4294901760
    %4661 = vmatpush1.msra.mxu0 %v4660
    %4662 = vmatprep.subr.mxu0 0.0
    %v4663 = vand.u32 %v3803, 4294901760
    %4664 = vmatpush1.msra.mxu0 %v4663
    %4665 = vmatprep.subr.mxu0 0.0
    %v4666 = vand.u32 %v3804, 4294901760
    %4667 = vmatpush1.msra.mxu0 %v4666
    %4668 = vmatprep.subr.mxu0 0.0
    %v4669 = vand.u32 %v3805, 4294901760
    %4670 = vmatpush1.msra.mxu0 %v4669
    %4671 = vmatprep.subr.mxu0 0.0
    %4672 = vmatpush1.msra.mxu0 0.0
    %4673 = vmatprep.subr.mxu0 0.0
    %4674 = vmatpush1.msra.mxu0 0.0
    %4675 = vmatprep.subr.mxu0 0.0
    %4676 = vmatpush1.msra.mxu0 0.0
    %4677 = vmatprep.subr.mxu0 0.0
    %4678 = vmatpush1.msra.mxu0 0.0
    %4679 = vmatprep.subr.mxu0 0.0
    %4680 = vmatpush1.msra.mxu0 0.0
    %4681 = vmatprep.subr.mxu0 0.0
    %4682 = vmatpush1.msra.mxu0 0.0
    %4683 = vmatprep.subr.mxu0 0.0
    %4684 = vmatpush1.msra.mxu0 0.0
    %4685 = vmatprep.subr.mxu0 0.0
    %4686 = vmatpush1.msra.mxu0 0.0
    %4687 = vmatprep.subr.mxu0 0.0
    %4688 = vmatpush1.msra.mxu0 0.0
    %4689 = vmatprep.subr.mxu0 0.0
    %4690 = vmatpush1.msra.mxu0 0.0
    %4691 = vmatprep.subr.mxu0 0.0
    %4692 = vmatpush1.msra.mxu0 0.0
    %4693 = vmatprep.subr.mxu0 0.0
    %4694 = vmatpush1.msra.mxu0 0.0
    %4695 = vmatprep.subr.mxu0 0.0
    %4696 = vmatpush1.msra.mxu0 0.0
    %4697 = vmatprep.subr.mxu0 0.0
    %4698 = vmatpush1.msra.mxu0 0.0
    %4699 = vmatprep.subr.mxu0 0.0
    %4700 = vmatpush1.msra.mxu0 0.0
    %4701 = vmatprep.subr.mxu0 0.0
    %4702 = vmatpush1.msra.mxu0 0.0
    %4703 = vmatprep.mubr.f32.mxu0 0.0
    %v4704 = vand.u32 %v3781, 4294901760
    %4705 = vmatmul.mubr.f32.gmra.mrb[0].mxu0 %v4704
    %v4706 = vpop.f32.mrb[0].mxu0
    %v4707 = vadd.f32 %v4578, %v4706
    %v4708 = vpop.f32.mrb[0].mxu0
    %4709 = vmatprep.mubr.f32.mxu0 0.0
    %v4710 = vand.u32 %v3782, 4294901760
    %4711 = vmatmul.mubr.f32.gmra.mrb[0].mxu0 %v4710
    %v4712 = vpop.f32.mrb[0].mxu0
    %v4713 = vadd.f32 %v4584, %v4712
    %v4714 = vpop.f32.mrb[0].mxu0
    %4715 = vmatprep.mubr.f32.mxu0 0.0
    %v4716 = vand.u32 %v3783, 4294901760
    %4717 = vmatmul.mubr.f32.gmra.mrb[0].mxu0 %v4716
    %v4718 = vpop.f32.mrb[0].mxu0
    %v4719 = vadd.f32 %v4590, %v4718
    %v4720 = vpop.f32.mrb[0].mxu0
    %4721 = vmatprep.mubr.f32.mxu0 0.0
    %v4722 = vand.u32 %v3784, 4294901760
    %4723 = vmatmul.mubr.f32.gmra.mrb[0].mxu0 %v4722
    %v4724 = vpop.f32.mrb[0].mxu0
    %v4725 = vadd.f32 %v4596, %v4724
    %v4726 = vpop.f32.mrb[0].mxu0
    %4727 = vmatprep.mubr.f32.mxu0 0.0
    %v4728 = vand.u32 %v3785, 4294901760
    %4729 = vmatmul.mubr.f32.gmra.mrb[0].mxu0 %v4728
    %v4730 = vpop.f32.mrb[0].mxu0
    %v4731 = vadd.f32 %v4602, %v4730
    %v4732 = vpop.f32.mrb[0].mxu0
    %4733 = vmatprep.mubr.f32.mxu0 0.0
    %v4734 = vand.u32 %v3786, 4294901760
    %4735 = vmatmul.mubr.f32.gmra.mrb[0].mxu0 %v4734
    %v4736 = vpop.f32.mrb[0].mxu0
    %v4737 = vadd.f32 %v4608, %v4736
    %v4738 = vpop.f32.mrb[0].mxu0
    %4739 = vmatprep.mubr.f32.mxu0 0.0
    %v4740 = vand.u32 %v3787, 4294901760
    %4741 = vmatmul.mubr.f32.gmra.mrb[0].mxu0 %v4740
    %v4742 = vpop.f32.mrb[0].mxu0
    %v4743 = vadd.f32 %v4614, %v4742
    %v4744 = vpop.f32.mrb[0].mxu0
    %4745 = vmatprep.mubr.f32.mxu0 0.0
    %v4746 = vand.u32 %v3788, 4294901760
    %4747 = vmatmul.mubr.f32.gmra.mrb[0].mxu0 %v4746
    %v4748 = vpop.f32.mrb[0].mxu0
    %v4749 = vadd.f32 %v4620, %v4748
    %v4750 = vpop.f32.mrb[0].mxu0
    %4751 = vdwg.mxu0
    %v4752 = vsel %vm3689, %v4707, 0.0
    %v4753 = vsel %vm3690, %v4713, 0.0
    %v4754 = vsel %vm3691, %v4719, 0.0
    %v4755 = vsel %vm3692, %v4725, 0.0
    %v4756 = vsel %vm3693, %v4731, 0.0
    %v4757 = vsel %vm3694, %v4737, 0.0
    %v4758 = vsel %vm3695, %v4743, 0.0
    %v4759 = vsel %vm3696, %v4749, 0.0
    %v4760 = vadd.f32 %v4752, %v4753
    %v4761 = vadd.f32 %v4760, %v4754
    %v4762 = vadd.f32 %v4761, %v4755
    %v4763 = vadd.f32 %v4762, %v4756
    %v4764 = vadd.f32 %v4763, %v4757
    %v4765 = vadd.f32 %v4764, %v4758
    %v4766 = vadd.f32 %v4765, %v4759
    %v4767 = vrot.slane %v4766, 4
    %v4768 = vadd.f32 %v4766, %v4767
    %v4769 = vrot.slane %v4768, 2
    %v4770 = vadd.f32 %v4768, %v4769
    %v4771 = vrot.slane %v4770, 1
    %v4772 = vadd.f32 %v4770, %v4771
    %v4773 = vmul.f32 %v4772, 0.022727273
    %v4774 = vsub.f32 %v4707, %v4773
    %v4775 = vsub.f32 %v4713, %v4773
    %v4776 = vsub.f32 %v4719, %v4773
    %v4777 = vsub.f32 %v4725, %v4773
    %v4778 = vsub.f32 %v4731, %v4773
    %v4779 = vsub.f32 %v4737, %v4773
    %v4780 = vsub.f32 %v4743, %v4773
    %v4781 = vsub.f32 %v4749, %v4773
    %v4782 = vsel %vm3689, %v4774, 0.0
    %v4783 = vsel %vm3690, %v4775, 0.0
    %v4784 = vsel %vm3691, %v4776, 0.0
    %v4785 = vsel %vm3692, %v4777, 0.0
    %v4786 = vsel %vm3693, %v4778, 0.0
    %v4787 = vsel %vm3694, %v4779, 0.0
    %v4788 = vsel %vm3695, %v4780, 0.0
    %v4789 = vsel %vm3696, %v4781, 0.0
    %v4790 = vmul.f32 %v4782, %v4782
    %v4791 = vmul.f32 %v4783, %v4783
    %v4792 = vmul.f32 %v4784, %v4784
    %v4793 = vmul.f32 %v4785, %v4785
    %v4794 = vmul.f32 %v4786, %v4786
    %v4795 = vmul.f32 %v4787, %v4787
    %v4796 = vmul.f32 %v4788, %v4788
    %v4797 = vmul.f32 %v4789, %v4789
    %v4798 = vadd.f32 %v4790, %v4791
    %v4799 = vadd.f32 %v4798, %v4792
    %v4800 = vadd.f32 %v4799, %v4793
    %v4801 = vadd.f32 %v4800, %v4794
    %v4802 = vadd.f32 %v4801, %v4795
    %v4803 = vadd.f32 %v4802, %v4796
    %v4804 = vadd.f32 %v4803, %v4797
    %v4805 = vrot.slane %v4804, 4
    %v4806 = vadd.f32 %v4804, %v4805
    %v4807 = vrot.slane %v4806, 2
    %v4808 = vadd.f32 %v4806, %v4807
    %v4809 = vrot.slane %v4808, 1
    %v4810 = vadd.f32 %v4808, %v4809
    %v4811 = vmul.f32 %v4810, 0.022727273
    %v4812 = vadd.f32 %v4811, 1e-05
    %v4813 = vrsqrt.pop %v4812
    %v4814 = vmul.f32 %v4813, %v76
    %v4815 = vmul.f32 %v4773, %v4814
    %v4817 = vrot.slane %v4815, 7
    %v4819 = vsub.f32 %v76, %v4817
    %v4820 = vlaneseq
    %v4821 = vshrl.u32 %v4820, 7
    %v4822 = vsub.s32 2, %v4821
    %v4823 = vrot.slane %v4814, %v4822
    %v4824 = vmul.f32 %v4707, %v4823
    %v4825 = vmul.f32 %v4713, %v4823
    %v4826 = vmul.f32 %v4719, %v4823
    %v4827 = vmul.f32 %v4725, %v4823
    %v4828 = vmul.f32 %v4731, %v4823
    %v4829 = vmul.f32 %v4737, %v4823
    %v4830 = vmul.f32 %v4743, %v4823
    %v4831 = vmul.f32 %v4749, %v4823
    %v4832 = vlaneseq
    %v4833 = vshrl.u32 %v4832, 7
    %v4834 = vsub.s32 3, %v4833
    %v4835 = vrot.slane %v4819, %v4834
    %v4836 = vadd.f32 %v4824, %v4835
    %v4837 = vadd.f32 %v4825, %v4835
    %v4838 = vadd.f32 %v4826, %v4835
    %v4839 = vadd.f32 %v4827, %v4835
    %v4840 = vadd.f32 %v4828, %v4835
    %v4841 = vadd.f32 %v4829, %v4835
    %v4842 = vadd.f32 %v4830, %v4835
    %v4843 = vadd.f32 %v4831, %v4835
    %v4844 = vmax.f32 %v4836, 0.0
    %v4845 = vmax.f32 %v4837, 0.0
    %v4846 = vmax.f32 %v4838, 0.0
    %v4847 = vmax.f32 %v4839, 0.0
    %v4848 = vmax.f32 %v4840, 0.0
    %v4849 = vmax.f32 %v4841, 0.0
    %v4850 = vmax.f32 %v4842, 0.0
    %v4851 = vmax.f32 %v4843, 0.0
    %s4852 = scalar_lea.vmem [#allocation9], 512
    %v4853 = vld [vmem:[%s4852] sm:$0xff]
    %v4854 = vld [vmem:[%s4852 + $0x8] sm:$0xff]
    %v4855 = vld [vmem:[%s4852 + $0x10] sm:$0xff]
    %v4856 = vld [vmem:[%s4852 + $0x18] sm:$0xff]
    %v4857 = vld [vmem:[%s4852 + $0x20] sm:$0xff]
    %v4858 = vld [vmem:[%s4852 + $0x28] sm:$0xff]
    %v4859 = vld [vmem:[%s4852 + $0x30] sm:$0xff]
    %v4860 = vld [vmem:[%s4852 + $0x38] sm:$0xff]
    %v4861 = vld [vmem:[%s4852 + $0x40] sm:$0xff]
    %v4862 = vld [vmem:[%s4852 + $0x48] sm:$0xff]
    %v4863 = vld [vmem:[%s4852 + $0x50] sm:$0xff]
    %v4864 = vld [vmem:[%s4852 + $0x58] sm:$0xff]
    %v4865 = vld [vmem:[%s4852 + $0x60] sm:$0xff]
    %v4866 = vld [vmem:[%s4852 + $0x68] sm:$0xff]
    %v4867 = vld [vmem:[%s4852 + $0x70] sm:$0xff]
    %v4868 = vld [vmem:[%s4852 + $0x78] sm:$0xff]
    %v4869 = vlaneseq
    %v4870 = vshrl.u32 %v4869, 7
    %v4871 = vsub.s32 4, %v4870
    %v4872 = vrot.slane %v76, %v4871
    %4873 = vmatprep.subr.mxu0 0.0
    %v4874 = vand.u32 %v4853, 4294901760
    %4875 = vmatpush1.msra.mxu0 %v4874
    %4876 = vmatprep.subr.mxu0 0.0
    %v4877 = vand.u32 %v4854, 4294901760
    %4878 = vmatpush1.msra.mxu0 %v4877
    %4879 = vmatprep.subr.mxu0 0.0
    %v4880 = vand.u32 %v4855, 4294901760
    %4881 = vmatpush1.msra.mxu0 %v4880
    %4882 = vmatprep.subr.mxu0 0.0
    %v4883 = vand.u32 %v4856, 4294901760
    %4884 = vmatpush1.msra.mxu0 %v4883
    %4885 = vmatprep.subr.mxu0 0.0
    %v4886 = vand.u32 %v4857, 4294901760
    %4887 = vmatpush1.msra.mxu0 %v4886
    %4888 = vmatprep.subr.mxu0 0.0
    %v4889 = vand.u32 %v4858, 4294901760
    %4890 = vmatpush1.msra.mxu0 %v4889
    %4891 = vmatprep.subr.mxu0 0.0
    %v4892 = vand.u32 %v4859, 4294901760
    %4893 = vmatpush1.msra.mxu0 %v4892
    %4894 = vmatprep.subr.mxu0 0.0
    %v4895 = vand.u32 %v4860, 4294901760
    %4896 = vmatpush1.msra.mxu0 %v4895
    %4897 = vmatprep.subr.mxu0 0.0
    %v4898 = vand.u32 %v4861, 4294901760
    %4899 = vmatpush1.msra.mxu0 %v4898
    %4900 = vmatprep.subr.mxu0 0.0
    %v4901 = vand.u32 %v4862, 4294901760
    %4902 = vmatpush1.msra.mxu0 %v4901
    %4903 = vmatprep.subr.mxu0 0.0
    %v4904 = vand.u32 %v4863, 4294901760
    %4905 = vmatpush1.msra.mxu0 %v4904
    %4906 = vmatprep.subr.mxu0 0.0
    %v4907 = vand.u32 %v4864, 4294901760
    %4908 = vmatpush1.msra.mxu0 %v4907
    %4909 = vmatprep.subr.mxu0 0.0
    %v4910 = vand.u32 %v4865, 4294901760
    %4911 = vmatpush1.msra.mxu0 %v4910
    %4912 = vmatprep.subr.mxu0 0.0
    %v4913 = vand.u32 %v4866, 4294901760
    %4914 = vmatpush1.msra.mxu0 %v4913
    %4915 = vmatprep.subr.mxu0 0.0
    %v4916 = vand.u32 %v4867, 4294901760
    %4917 = vmatpush1.msra.mxu0 %v4916
    %4918 = vmatprep.subr.mxu0 0.0
    %v4919 = vand.u32 %v4868, 4294901760
    %4920 = vmatpush1.msra.mxu0 %v4919
    %4921 = vmatprep.subr.mxu0 0.0
    %4922 = vmatpush1.msra.mxu0 0.0
    %4923 = vmatprep.subr.mxu0 0.0
    %4924 = vmatpush1.msra.mxu0 0.0
    %4925 = vmatprep.subr.mxu0 0.0
    %4926 = vmatpush1.msra.mxu0 0.0
    %4927 = vmatprep.subr.mxu0 0.0
    %4928 = vmatpush1.msra.mxu0 0.0
    %4929 = vmatprep.subr.mxu0 0.0
    %4930 = vmatpush1.msra.mxu0 0.0
    %4931 = vmatprep.subr.mxu0 0.0
    %4932 = vmatpush1.msra.mxu0 0.0
    %4933 = vmatprep.subr.mxu0 0.0
    %4934 = vmatpush1.msra.mxu0 0.0
    %4935 = vmatprep.subr.mxu0 0.0
    %4936 = vmatpush1.msra.mxu0 0.0
    %4937 = vmatprep.subr.mxu0 0.0
    %4938 = vmatpush1.msra.mxu0 0.0
    %4939 = vmatprep.subr.mxu0 0.0
    %4940 = vmatpush1.msra.mxu0 0.0
    %4941 = vmatprep.subr.mxu0 0.0
    %4942 = vmatpush1.msra.mxu0 0.0
    %4943 = vmatprep.subr.mxu0 0.0
    %4944 = vmatpush1.msra.mxu0 0.0
    %4945 = vmatprep.subr.mxu0 0.0
    %4946 = vmatpush1.msra.mxu0 0.0
    %4947 = vmatprep.subr.mxu0 0.0
    %4948 = vmatpush1.msra.mxu0 0.0
    %4949 = vmatprep.subr.mxu0 0.0
    %4950 = vmatpush1.msra.mxu0 0.0
    %4951 = vmatprep.subr.mxu0 0.0
    %4952 = vmatpush1.msra.mxu0 0.0
    %4953 = vmatprep.mubr.f32.mxu0 0.0
    %v4954 = vand.u32 %v4844, 4294901760
    %v4955 = vsub.f32 %v4844, %v4954
    %v4956 = vand.u32 %v4955, 4294901760
    %v4957 = vsub.f32 %v4955, %v4956
    %v4958 = vand.u32 %v4957, 4294901760
    %4959 = vmatmul.mubr.f32.gmra.mrb[0].mxu0 %v4958
    %v4960 = vpop.f32.mrb[0].mxu0
    %v4961 = vadd.f32 %v4872, %v4960
    %v4962 = vpop.f32.mrb[0].mxu0
    %4963 = vmatprep.mubr.f32.mxu0 0.0
    %v4964 = vand.u32 %v4845, 4294901760
    %v4965 = vsub.f32 %v4845, %v4964
    %v4966 = vand.u32 %v4965, 4294901760
    %v4967 = vsub.f32 %v4965, %v4966
    %v4968 = vand.u32 %v4967, 4294901760
    %4969 = vmatmul.mubr.f32.gmra.mrb[0].mxu0 %v4968
    %v4970 = vpop.f32.mrb[0].mxu0
    %v4971 = vadd.f32 %v4872, %v4970
    %v4972 = vpop.f32.mrb[0].mxu0
    %4973 = vmatprep.mubr.f32.mxu0 0.0
    %v4974 = vand.u32 %v4846, 4294901760
    %v4975 = vsub.f32 %v4846, %v4974
    %v4976 = vand.u32 %v4975, 4294901760
    %v4977 = vsub.f32 %v4975, %v4976
    %v4978 = vand.u32 %v4977, 4294901760
    %4979 = vmatmul.mubr.f32.gmra.mrb[0].mxu0 %v4978
    %v4980 = vpop.f32.mrb[0].mxu0
    %v4981 = vadd.f32 %v4872, %v4980
    %v4982 = vpop.f32.mrb[0].mxu0
    %4983 = vmatprep.mubr.f32.mxu0 0.0
    %v4984 = vand.u32 %v4847, 4294901760
    %v4985 = vsub.f32 %v4847, %v4984
    %v4986 = vand.u32 %v4985, 4294901760
    %v4987 = vsub.f32 %v4985, %v4986
    %v4988 = vand.u32 %v4987, 4294901760
    %4989 = vmatmul.mubr.f32.gmra.mrb[0].mxu0 %v4988
    %v4990 = vpop.f32.mrb[0].mxu0
    %v4991 = vadd.f32 %v4872, %v4990
    %v4992 = vpop.f32.mrb[0].mxu0
    %4993 = vmatprep.mubr.f32.mxu0 0.0
    %v4994 = vand.u32 %v4848, 4294901760
    %v4995 = vsub.f32 %v4848, %v4994
    %v4996 = vand.u32 %v4995, 4294901760
    %v4997 = vsub.f32 %v4995, %v4996
    %v4998 = vand.u32 %v4997, 4294901760
    %4999 = vmatmul.mubr.f32.gmra.mrb[0].mxu0 %v4998
    %v5000 = vpop.f32.mrb[0].mxu0
    %v5001 = vadd.f32 %v4872, %v5000
    %v5002 = vpop.f32.mrb[0].mxu0
    %5003 = vmatprep.mubr.f32.mxu0 0.0
    %v5004 = vand.u32 %v4849, 4294901760
    %v5005 = vsub.f32 %v4849, %v5004
    %v5006 = vand.u32 %v5005, 4294901760
    %v5007 = vsub.f32 %v5005, %v5006
    %v5008 = vand.u32 %v5007, 4294901760
    %5009 = vmatmul.mubr.f32.gmra.mrb[0].mxu0 %v5008
    %v5010 = vpop.f32.mrb[0].mxu0
    %v5011 = vadd.f32 %v4872, %v5010
    %v5012 = vpop.f32.mrb[0].mxu0
    %5013 = vmatprep.mubr.f32.mxu0 0.0
    %v5014 = vand.u32 %v4850, 4294901760
    %v5015 = vsub.f32 %v4850, %v5014
    %v5016 = vand.u32 %v5015, 4294901760
    %v5017 = vsub.f32 %v5015, %v5016
    %v5018 = vand.u32 %v5017, 4294901760
    %5019 = vmatmul.mubr.f32.gmra.mrb[0].mxu0 %v5018
    %v5020 = vpop.f32.mrb[0].mxu0
    %v5021 = vadd.f32 %v4872, %v5020
    %v5022 = vpop.f32.mrb[0].mxu0
    %5023 = vmatprep.mubr.f32.mxu0 0.0
    %v5024 = vand.u32 %v4851, 4294901760
    %v5025 = vsub.f32 %v4851, %v5024
    %v5026 = vand.u32 %v5025, 4294901760
    %v5027 = vsub.f32 %v5025, %v5026
    %v5028 = vand.u32 %v5027, 4294901760
    %5029 = vmatmul.mubr.f32.gmra.mrb[0].mxu0 %v5028
    %v5030 = vpop.f32.mrb[0].mxu0
    %v5031 = vadd.f32 %v4872, %v5030
    %v5032 = vpop.f32.mrb[0].mxu0
    %5033 = vdwg.mxu0
    %5034 = vmatprep.subr.mxu0 0.0
    %v5035 = vand.u32 %v4853, 4294901760
    %v5036 = vsub.f32 %v4853, %v5035
    %v5037 = vand.u32 %v5036, 4294901760
    %v5038 = vsub.f32 %v5036, %v5037
    %v5039 = vand.u32 %v5038, 4294901760
    %5040 = vmatpush1.msra.mxu0 %v5039
    %5041 = vmatprep.subr.mxu0 0.0
    %v5042 = vand.u32 %v4854, 4294901760
    %v5043 = vsub.f32 %v4854, %v5042
    %v5044 = vand.u32 %v5043, 4294901760
    %v5045 = vsub.f32 %v5043, %v5044
    %v5046 = vand.u32 %v5045, 4294901760
    %5047 = vmatpush1.msra.mxu0 %v5046
    %5048 = vmatprep.subr.mxu0 0.0
    %v5049 = vand.u32 %v4855, 4294901760
    %v5050 = vsub.f32 %v4855, %v5049
    %v5051 = vand.u32 %v5050, 4294901760
    %v5052 = vsub.f32 %v5050, %v5051
    %v5053 = vand.u32 %v5052, 4294901760
    %5054 = vmatpush1.msra.mxu0 %v5053
    %5055 = vmatprep.subr.mxu0 0.0
    %v5056 = vand.u32 %v4856, 4294901760
    %v5057 = vsub.f32 %v4856, %v5056
    %v5058 = vand.u32 %v5057, 4294901760
    %v5059 = vsub.f32 %v5057, %v5058
    %v5060 = vand.u32 %v5059, 4294901760
    %5061 = vmatpush1.msra.mxu0 %v5060
    %5062 = vmatprep.subr.mxu0 0.0
    %v5063 = vand.u32 %v4857, 4294901760
    %v5064 = vsub.f32 %v4857, %v5063
    %v5065 = vand.u32 %v5064, 4294901760
    %v5066 = vsub.f32 %v5064, %v5065
    %v5067 = vand.u32 %v5066, 4294901760
    %5068 = vmatpush1.msra.mxu0 %v5067
    %5069 = vmatprep.subr.mxu0 0.0
    %v5070 = vand.u32 %v4858, 4294901760
    %v5071 = vsub.f32 %v4858, %v5070
    %v5072 = vand.u32 %v5071, 4294901760
    %v5073 = vsub.f32 %v5071, %v5072
    %v5074 = vand.u32 %v5073, 4294901760
    %5075 = vmatpush1.msra.mxu0 %v5074
    %5076 = vmatprep.subr.mxu0 0.0
    %v5077 = vand.u32 %v4859, 4294901760
    %v5078 = vsub.f32 %v4859, %v5077
    %v5079 = vand.u32 %v5078, 4294901760
    %v5080 = vsub.f32 %v5078, %v5079
    %v5081 = vand.u32 %v5080, 4294901760
    %5082 = vmatpush1.msra.mxu0 %v5081
    %5083 = vmatprep.subr.mxu0 0.0
    %v5084 = vand.u32 %v4860, 4294901760
    %v5085 = vsub.f32 %v4860, %v5084
    %v5086 = vand.u32 %v5085, 4294901760
    %v5087 = vsub.f32 %v5085, %v5086
    %v5088 = vand.u32 %v5087, 4294901760
    %5089 = vmatpush1.msra.mxu0 %v5088
    %5090 = vmatprep.subr.mxu0 0.0
    %v5091 = vand.u32 %v4861, 4294901760
    %v5092 = vsub.f32 %v4861, %v5091
    %v5093 = vand.u32 %v5092, 4294901760
    %v5094 = vsub.f32 %v5092, %v5093
    %v5095 = vand.u32 %v5094, 4294901760
    %5096 = vmatpush1.msra.mxu0 %v5095
    %5097 = vmatprep.subr.mxu0 0.0
    %v5098 = vand.u32 %v4862, 4294901760
    %v5099 = vsub.f32 %v4862, %v5098
    %v5100 = vand.u32 %v5099, 4294901760
    %v5101 = vsub.f32 %v5099, %v5100
    %v5102 = vand.u32 %v5101, 4294901760
    %5103 = vmatpush1.msra.mxu0 %v5102
    %5104 = vmatprep.subr.mxu0 0.0
    %v5105 = vand.u32 %v4863, 4294901760
    %v5106 = vsub.f32 %v4863, %v5105
    %v5107 = vand.u32 %v5106, 4294901760
    %v5108 = vsub.f32 %v5106, %v5107
    %v5109 = vand.u32 %v5108, 4294901760
    %5110 = vmatpush1.msra.mxu0 %v5109
    %5111 = vmatprep.subr.mxu0 0.0
    %v5112 = vand.u32 %v4864, 4294901760
    %v5113 = vsub.f32 %v4864, %v5112
    %v5114 = vand.u32 %v5113, 4294901760
    %v5115 = vsub.f32 %v5113, %v5114
    %v5116 = vand.u32 %v5115, 4294901760
    %5117 = vmatpush1.msra.mxu0 %v5116
    %5118 = vmatprep.subr.mxu0 0.0
    %v5119 = vand.u32 %v4865, 4294901760
    %v5120 = vsub.f32 %v4865, %v5119
    %v5121 = vand.u32 %v5120, 4294901760
    %v5122 = vsub.f32 %v5120, %v5121
    %v5123 = vand.u32 %v5122, 4294901760
    %5124 = vmatpush1.msra.mxu0 %v5123
    %5125 = vmatprep.subr.mxu0 0.0
    %v5126 = vand.u32 %v4866, 4294901760
    %v5127 = vsub.f32 %v4866, %v5126
    %v5128 = vand.u32 %v5127, 4294901760
    %v5129 = vsub.f32 %v5127, %v5128
    %v5130 = vand.u32 %v5129, 4294901760
    %5131 = vmatpush1.msra.mxu0 %v5130
    %5132 = vmatprep.subr.mxu0 0.0
    %v5133 = vand.u32 %v4867, 4294901760
    %v5134 = vsub.f32 %v4867, %v5133
    %v5135 = vand.u32 %v5134, 4294901760
    %v5136 = vsub.f32 %v5134, %v5135
    %v5137 = vand.u32 %v5136, 4294901760
    %5138 = vmatpush1.msra.mxu0 %v5137
    %5139 = vmatprep.subr.mxu0 0.0
    %v5140 = vand.u32 %v4868, 4294901760
    %v5141 = vsub.f32 %v4868, %v5140
    %v5142 = vand.u32 %v5141, 4294901760
    %v5143 = vsub.f32 %v5141, %v5142
    %v5144 = vand.u32 %v5143, 4294901760
    %5145 = vmatpush1.msra.mxu0 %v5144
    %5146 = vmatprep.subr.mxu0 0.0
    %5147 = vmatpush1.msra.mxu0 0.0
    %5148 = vmatprep.subr.mxu0 0.0
    %5149 = vmatpush1.msra.mxu0 0.0
    %5150 = vmatprep.subr.mxu0 0.0
    %5151 = vmatpush1.msra.mxu0 0.0
    %5152 = vmatprep.subr.mxu0 0.0
    %5153 = vmatpush1.msra.mxu0 0.0
    %5154 = vmatprep.subr.mxu0 0.0
    %5155 = vmatpush1.msra.mxu0 0.0
    %5156 = vmatprep.subr.mxu0 0.0
    %5157 = vmatpush1.msra.mxu0 0.0
    %5158 = vmatprep.subr.mxu0 0.0
    %5159 = vmatpush1.msra.mxu0 0.0
    %5160 = vmatprep.subr.mxu0 0.0
    %5161 = vmatpush1.msra.mxu0 0.0
    %5162 = vmatprep.subr.mxu0 0.0
    %5163 = vmatpush1.msra.mxu0 0.0
    %5164 = vmatprep.subr.mxu0 0.0
    %5165 = vmatpush1.msra.mxu0 0.0
    %5166 = vmatprep.subr.mxu0 0.0
    %5167 = vmatpush1.msra.mxu0 0.0
    %5168 = vmatprep.subr.mxu0 0.0
    %5169 = vmatpush1.msra.mxu0 0.0
    %5170 = vmatprep.subr.mxu0 0.0
    %5171 = vmatpush1.msra.mxu0 0.0
    %5172 = vmatprep.subr.mxu0 0.0
    %5173 = vmatpush1.msra.mxu0 0.0
    %5174 = vmatprep.subr.mxu0 0.0
    %5175 = vmatpush1.msra.mxu0 0.0
    %5176 = vmatprep.subr.mxu0 0.0
    %5177 = vmatpush1.msra.mxu0 0.0
    %5178 = vmatprep.mubr.f32.mxu0 0.0
    %v5179 = vand.u32 %v4844, 4294901760
    %5180 = vmatmul.mubr.f32.gmra.mrb[0].mxu0 %v5179
    %v5181 = vpop.f32.mrb[0].mxu0
    %v5182 = vadd.f32 %v4961, %v5181
    %v5183 = vpop.f32.mrb[0].mxu0
    %5184 = vmatprep.mubr.f32.mxu0 0.0
    %v5185 = vand.u32 %v4845, 4294901760
    %5186 = vmatmul.mubr.f32.gmra.mrb[0].mxu0 %v5185
    %v5187 = vpop.f32.mrb[0].mxu0
    %v5188 = vadd.f32 %v4971, %v5187
    %v5189 = vpop.f32.mrb[0].mxu0
    %5190 = vmatprep.mubr.f32.mxu0 0.0
    %v5191 = vand.u32 %v4846, 4294901760
    %5192 = vmatmul.mubr.f32.gmra.mrb[0].mxu0 %v5191
    %v5193 = vpop.f32.mrb[0].mxu0
    %v5194 = vadd.f32 %v4981, %v5193
    %v5195 = vpop.f32.mrb[0].mxu0
    %5196 = vmatprep.mubr.f32.mxu0 0.0
    %v5197 = vand.u32 %v4847, 4294901760
    %5198 = vmatmul.mubr.f32.gmra.mrb[0].mxu0 %v5197
    %v5199 = vpop.f32.mrb[0].mxu0
    %v5200 = vadd.f32 %v4991, %v5199
    %v5201 = vpop.f32.mrb[0].mxu0
    %5202 = vmatprep.mubr.f32.mxu0 0.0
    %v5203 = vand.u32 %v4848, 4294901760
    %5204 = vmatmul.mubr.f32.gmra.mrb[0].mxu0 %v5203
    %v5205 = vpop.f32.mrb[0].mxu0
    %v5206 = vadd.f32 %v5001, %v5205
    %v5207 = vpop.f32.mrb[0].mxu0
    %5208 = vmatprep.mubr.f32.mxu0 0.0
    %v5209 = vand.u32 %v4849, 4294901760
    %5210 = vmatmul.mubr.f32.gmra.mrb[0].mxu0 %v5209
    %v5211 = vpop.f32.mrb[0].mxu0
    %v5212 = vadd.f32 %v5011, %v5211
    %v5213 = vpop.f32.mrb[0].mxu0
    %5214 = vmatprep.mubr.f32.mxu0 0.0
    %v5215 = vand.u32 %v4850, 4294901760
    %5216 = vmatmul.mubr.f32.gmra.mrb[0].mxu0 %v5215
    %v5217 = vpop.f32.mrb[0].mxu0
    %v5218 = vadd.f32 %v5021, %v5217
    %v5219 = vpop.f32.mrb[0].mxu0
    %5220 = vmatprep.mubr.f32.mxu0 0.0
    %v5221 = vand.u32 %v4851, 4294901760
    %5222 = vmatmul.mubr.f32.gmra.mrb[0].mxu0 %v5221
    %v5223 = vpop.f32.mrb[0].mxu0
    %v5224 = vadd.f32 %v5031, %v5223
    %v5225 = vpop.f32.mrb[0].mxu0
    %5226 = vdwg.mxu0
    %5227 = vmatprep.subr.mxu0 0.0
    %v5228 = vand.u32 %v4853, 4294901760
    %v5229 = vsub.f32 %v4853, %v5228
    %5230 = vmatpush1.msra.mxu0 %v5229
    %5231 = vmatprep.subr.mxu0 0.0
    %v5232 = vand.u32 %v4854, 4294901760
    %v5233 = vsub.f32 %v4854, %v5232
    %5234 = vmatpush1.msra.mxu0 %v5233
    %5235 = vmatprep.subr.mxu0 0.0
    %v5236 = vand.u32 %v4855, 4294901760
    %v5237 = vsub.f32 %v4855, %v5236
    %5238 = vmatpush1.msra.mxu0 %v5237
    %5239 = vmatprep.subr.mxu0 0.0
    %v5240 = vand.u32 %v4856, 4294901760
    %v5241 = vsub.f32 %v4856, %v5240
    %5242 = vmatpush1.msra.mxu0 %v5241
    %5243 = vmatprep.subr.mxu0 0.0
    %v5244 = vand.u32 %v4857, 4294901760
    %v5245 = vsub.f32 %v4857, %v5244
    %5246 = vmatpush1.msra.mxu0 %v5245
    %5247 = vmatprep.subr.mxu0 0.0
    %v5248 = vand.u32 %v4858, 4294901760
    %v5249 = vsub.f32 %v4858, %v5248
    %5250 = vmatpush1.msra.mxu0 %v5249
    %5251 = vmatprep.subr.mxu0 0.0
    %v5252 = vand.u32 %v4859, 4294901760
    %v5253 = vsub.f32 %v4859, %v5252
    %5254 = vmatpush1.msra.mxu0 %v5253
    %5255 = vmatprep.subr.mxu0 0.0
    %v5256 = vand.u32 %v4860, 4294901760
    %v5257 = vsub.f32 %v4860, %v5256
    %5258 = vmatpush1.msra.mxu0 %v5257
    %5259 = vmatprep.subr.mxu0 0.0
    %v5260 = vand.u32 %v4861, 4294901760
    %v5261 = vsub.f32 %v4861, %v5260
    %5262 = vmatpush1.msra.mxu0 %v5261
    %5263 = vmatprep.subr.mxu0 0.0
    %v5264 = vand.u32 %v4862, 4294901760
    %v5265 = vsub.f32 %v4862, %v5264
    %5266 = vmatpush1.msra.mxu0 %v5265
    %5267 = vmatprep.subr.mxu0 0.0
    %v5268 = vand.u32 %v4863, 4294901760
    %v5269 = vsub.f32 %v4863, %v5268
    %5270 = vmatpush1.msra.mxu0 %v5269
    %5271 = vmatprep.subr.mxu0 0.0
    %v5272 = vand.u32 %v4864, 4294901760
    %v5273 = vsub.f32 %v4864, %v5272
    %5274 = vmatpush1.msra.mxu0 %v5273
    %5275 = vmatprep.subr.mxu0 0.0
    %v5276 = vand.u32 %v4865, 4294901760
    %v5277 = vsub.f32 %v4865, %v5276
    %5278 = vmatpush1.msra.mxu0 %v5277
    %5279 = vmatprep.subr.mxu0 0.0
    %v5280 = vand.u32 %v4866, 4294901760
    %v5281 = vsub.f32 %v4866, %v5280
    %5282 = vmatpush1.msra.mxu0 %v5281
    %5283 = vmatprep.subr.mxu0 0.0
    %v5284 = vand.u32 %v4867, 4294901760
    %v5285 = vsub.f32 %v4867, %v5284
    %5286 = vmatpush1.msra.mxu0 %v5285
    %5287 = vmatprep.subr.mxu0 0.0
    %v5288 = vand.u32 %v4868, 4294901760
    %v5289 = vsub.f32 %v4868, %v5288
    %5290 = vmatpush1.msra.mxu0 %v5289
    %5291 = vmatprep.subr.mxu0 0.0
    %5292 = vmatpush1.msra.mxu0 0.0
    %5293 = vmatprep.subr.mxu0 0.0
    %5294 = vmatpush1.msra.mxu0 0.0
    %5295 = vmatprep.subr.mxu0 0.0
    %5296 = vmatpush1.msra.mxu0 0.0
    %5297 = vmatprep.subr.mxu0 0.0
    %5298 = vmatpush1.msra.mxu0 0.0
    %5299 = vmatprep.subr.mxu0 0.0
    %5300 = vmatpush1.msra.mxu0 0.0
    %5301 = vmatprep.subr.mxu0 0.0
    %5302 = vmatpush1.msra.mxu0 0.0
    %5303 = vmatprep.subr.mxu0 0.0
    %5304 = vmatpush1.msra.mxu0 0.0
    %5305 = vmatprep.subr.mxu0 0.0
    %5306 = vmatpush1.msra.mxu0 0.0
    %5307 = vmatprep.subr.mxu0 0.0
    %5308 = vmatpush1.msra.mxu0 0.0
    %5309 = vmatprep.subr.mxu0 0.0
    %5310 = vmatpush1.msra.mxu0 0.0
    %5311 = vmatprep.subr.mxu0 0.0
    %5312 = vmatpush1.msra.mxu0 0.0
    %5313 = vmatprep.subr.mxu0 0.0
    %5314 = vmatpush1.msra.mxu0 0.0
    %5315 = vmatprep.subr.mxu0 0.0
    %5316 = vmatpush1.msra.mxu0 0.0
    %5317 = vmatprep.subr.mxu0 0.0
    %5318 = vmatpush1.msra.mxu0 0.0
    %5319 = vmatprep.subr.mxu0 0.0
    %5320 = vmatpush1.msra.mxu0 0.0
    %5321 = vmatprep.subr.mxu0 0.0
    %5322 = vmatpush1.msra.mxu0 0.0
    %5323 = vmatprep.mubr.f32.mxu0 0.0
    %v5324 = vand.u32 %v4844, 4294901760
    %v5325 = vsub.f32 %v4844, %v5324
    %5326 = vmatmul.mubr.f32.gmra.mrb[0].mxu0 %v5325
    %v5327 = vpop.f32.mrb[0].mxu0
    %v5328 = vadd.f32 %v5182, %v5327
    %v5329 = vpop.f32.mrb[0].mxu0
    %5330 = vmatprep.mubr.f32.mxu0 0.0
    %v5331 = vand.u32 %v4845, 4294901760
    %v5332 = vsub.f32 %v4845, %v5331
    %5333 = vmatmul.mubr.f32.gmra.mrb[0].mxu0 %v5332
    %v5334 = vpop.f32.mrb[0].mxu0
    %v5335 = vadd.f32 %v5188, %v5334
    %v5336 = vpop.f32.mrb[0].mxu0
    %5337 = vmatprep.mubr.f32.mxu0 0.0
    %v5338 = vand.u32 %v4846, 4294901760
    %v5339 = vsub.f32 %v4846, %v5338
    %5340 = vmatmul.mubr.f32.gmra.mrb[0].mxu0 %v5339
    %v5341 = vpop.f32.mrb[0].mxu0
    %v5342 = vadd.f32 %v5194, %v5341
    %v5343 = vpop.f32.mrb[0].mxu0
    %5344 = vmatprep.mubr.f32.mxu0 0.0
    %v5345 = vand.u32 %v4847, 4294901760
    %v5346 = vsub.f32 %v4847, %v5345
    %5347 = vmatmul.mubr.f32.gmra.mrb[0].mxu0 %v5346
    %v5348 = vpop.f32.mrb[0].mxu0
    %v5349 = vadd.f32 %v5200, %v5348
    %v5350 = vpop.f32.mrb[0].mxu0
    %5351 = vmatprep.mubr.f32.mxu0 0.0
    %v5352 = vand.u32 %v4848, 4294901760
    %v5353 = vsub.f32 %v4848, %v5352
    %5354 = vmatmul.mubr.f32.gmra.mrb[0].mxu0 %v5353
    %v5355 = vpop.f32.mrb[0].mxu0
    %v5356 = vadd.f32 %v5206, %v5355
    %v5357 = vpop.f32.mrb[0].mxu0
    %5358 = vmatprep.mubr.f32.mxu0 0.0
    %v5359 = vand.u32 %v4849, 4294901760
    %v5360 = vsub.f32 %v4849, %v5359
    %5361 = vmatmul.mubr.f32.gmra.mrb[0].mxu0 %v5360
    %v5362 = vpop.f32.mrb[0].mxu0
    %v5363 = vadd.f32 %v5212, %v5362
    %v5364 = vpop.f32.mrb[0].mxu0
    %5365 = vmatprep.mubr.f32.mxu0 0.0
    %v5366 = vand.u32 %v4850, 4294901760
    %v5367 = vsub.f32 %v4850, %v5366
    %5368 = vmatmul.mubr.f32.gmra.mrb[0].mxu0 %v5367
    %v5369 = vpop.f32.mrb[0].mxu0
    %v5370 = vadd.f32 %v5218, %v5369
    %v5371 = vpop.f32.mrb[0].mxu0
    %5372 = vmatprep.mubr.f32.mxu0 0.0
    %v5373 = vand.u32 %v4851, 4294901760
    %v5374 = vsub.f32 %v4851, %v5373
    %5375 = vmatmul.mubr.f32.gmra.mrb[0].mxu0 %v5374
    %v5376 = vpop.f32.mrb[0].mxu0
    %v5377 = vadd.f32 %v5224, %v5376
    %v5378 = vpop.f32.mrb[0].mxu0
    %5379 = vdwg.mxu0
    %5380 = vmatprep.subr.mxu0 0.0
    %v5381 = vand.u32 %v4853, 4294901760
    %5382 = vmatpush1.msra.mxu0 %v5381
    %5383 = vmatprep.subr.mxu0 0.0
    %v5384 = vand.u32 %v4854, 4294901760
    %5385 = vmatpush1.msra.mxu0 %v5384
    %5386 = vmatprep.subr.mxu0 0.0
    %v5387 = vand.u32 %v4855, 4294901760
    %5388 = vmatpush1.msra.mxu0 %v5387
    %5389 = vmatprep.subr.mxu0 0.0
    %v5390 = vand.u32 %v4856, 4294901760
    %5391 = vmatpush1.msra.mxu0 %v5390
    %5392 = vmatprep.subr.mxu0 0.0
    %v5393 = vand.u32 %v4857, 4294901760
    %5394 = vmatpush1.msra.mxu0 %v5393
    %5395 = vmatprep.subr.mxu0 0.0
    %v5396 = vand.u32 %v4858, 4294901760
    %5397 = vmatpush1.msra.mxu0 %v5396
    %5398 = vmatprep.subr.mxu0 0.0
    %v5399 = vand.u32 %v4859, 4294901760
    %5400 = vmatpush1.msra.mxu0 %v5399
    %5401 = vmatprep.subr.mxu0 0.0
    %v5402 = vand.u32 %v4860, 4294901760
    %5403 = vmatpush1.msra.mxu0 %v5402
    %5404 = vmatprep.subr.mxu0 0.0
    %v5405 = vand.u32 %v4861, 4294901760
    %5406 = vmatpush1.msra.mxu0 %v5405
    %5407 = vmatprep.subr.mxu0 0.0
    %v5408 = vand.u32 %v4862, 4294901760
    %5409 = vmatpush1.msra.mxu0 %v5408
    %5410 = vmatprep.subr.mxu0 0.0
    %v5411 = vand.u32 %v4863, 4294901760
    %5412 = vmatpush1.msra.mxu0 %v5411
    %5413 = vmatprep.subr.mxu0 0.0
    %v5414 = vand.u32 %v4864, 4294901760
    %5415 = vmatpush1.msra.mxu0 %v5414
    %5416 = vmatprep.subr.mxu0 0.0
    %v5417 = vand.u32 %v4865, 4294901760
    %5418 = vmatpush1.msra.mxu0 %v5417
    %5419 = vmatprep.subr.mxu0 0.0
    %v5420 = vand.u32 %v4866, 4294901760
    %5421 = vmatpush1.msra.mxu0 %v5420
    %5422 = vmatprep.subr.mxu0 0.0
    %v5423 = vand.u32 %v4867, 4294901760
    %5424 = vmatpush1.msra.mxu0 %v5423
    %5425 = vmatprep.subr.mxu0 0.0
    %v5426 = vand.u32 %v4868, 4294901760
    %5427 = vmatpush1.msra.mxu0 %v5426
    %5428 = vmatprep.subr.mxu0 0.0
    %5429 = vmatpush1.msra.mxu0 0.0
    %5430 = vmatprep.subr.mxu0 0.0
    %5431 = vmatpush1.msra.mxu0 0.0
    %5432 = vmatprep.subr.mxu0 0.0
    %5433 = vmatpush1.msra.mxu0 0.0
    %5434 = vmatprep.subr.mxu0 0.0
    %5435 = vmatpush1.msra.mxu0 0.0
    %5436 = vmatprep.subr.mxu0 0.0
    %5437 = vmatpush1.msra.mxu0 0.0
    %5438 = vmatprep.subr.mxu0 0.0
    %5439 = vmatpush1.msra.mxu0 0.0
    %5440 = vmatprep.subr.mxu0 0.0
    %5441 = vmatpush1.msra.mxu0 0.0
    %5442 = vmatprep.subr.mxu0 0.0
    %5443 = vmatpush1.msra.mxu0 0.0
    %5444 = vmatprep.subr.mxu0 0.0
    %5445 = vmatpush1.msra.mxu0 0.0
    %5446 = vmatprep.subr.mxu0 0.0
    %5447 = vmatpush1.msra.mxu0 0.0
    %5448 = vmatprep.subr.mxu0 0.0
    %5449 = vmatpush1.msra.mxu0 0.0
    %5450 = vmatprep.subr.mxu0 0.0
    %5451 = vmatpush1.msra.mxu0 0.0
    %5452 = vmatprep.subr.mxu0 0.0
    %5453 = vmatpush1.msra.mxu0 0.0
    %5454 = vmatprep.subr.mxu0 0.0
    %5455 = vmatpush1.msra.mxu0 0.0
    %5456 = vmatprep.subr.mxu0 0.0
    %5457 = vmatpush1.msra.mxu0 0.0
    %5458 = vmatprep.subr.mxu0 0.0
    %5459 = vmatpush1.msra.mxu0 0.0
    %5460 = vmatprep.mubr.f32.mxu0 0.0
    %v5461 = vand.u32 %v4844, 4294901760
    %v5462 = vsub.f32 %v4844, %v5461
    %v5463 = vand.u32 %v5462, 4294901760
    %5464 = vmatmul.mubr.f32.gmra.mrb[0].mxu0 %v5463
    %v5465 = vpop.f32.mrb[0].mxu0
    %v5466 = vadd.f32 %v5328, %v5465
    %v5467 = vpop.f32.mrb[0].mxu0
    %5468 = vmatprep.mubr.f32.mxu0 0.0
    %v5469 = vand.u32 %v4845, 4294901760
    %v5470 = vsub.f32 %v4845, %v5469
    %v5471 = vand.u32 %v5470, 4294901760
    %5472 = vmatmul.mubr.f32.gmra.mrb[0].mxu0 %v5471
    %v5473 = vpop.f32.mrb[0].mxu0
    %v5474 = vadd.f32 %v5335, %v5473
    %v5475 = vpop.f32.mrb[0].mxu0
    %5476 = vmatprep.mubr.f32.mxu0 0.0
    %v5477 = vand.u32 %v4846, 4294901760
    %v5478 = vsub.f32 %v4846, %v5477
    %v5479 = vand.u32 %v5478, 4294901760
    %5480 = vmatmul.mubr.f32.gmra.mrb[0].mxu0 %v5479
    %v5481 = vpop.f32.mrb[0].mxu0
    %v5482 = vadd.f32 %v5342, %v5481
    %v5483 = vpop.f32.mrb[0].mxu0
    %5484 = vmatprep.mubr.f32.mxu0 0.0
    %v5485 = vand.u32 %v4847, 4294901760
    %v5486 = vsub.f32 %v4847, %v5485
    %v5487 = vand.u32 %v5486, 4294901760
    %5488 = vmatmul.mubr.f32.gmra.mrb[0].mxu0 %v5487
    %v5489 = vpop.f32.mrb[0].mxu0
    %v5490 = vadd.f32 %v5349, %v5489
    %v5491 = vpop.f32.mrb[0].mxu0
    %5492 = vmatprep.mubr.f32.mxu0 0.0
    %v5493 = vand.u32 %v4848, 4294901760
    %v5494 = vsub.f32 %v4848, %v5493
    %v5495 = vand.u32 %v5494, 4294901760
    %5496 = vmatmul.mubr.f32.gmra.mrb[0].mxu0 %v5495
    %v5497 = vpop.f32.mrb[0].mxu0
    %v5498 = vadd.f32 %v5356, %v5497
    %v5499 = vpop.f32.mrb[0].mxu0
    %5500 = vmatprep.mubr.f32.mxu0 0.0
    %v5501 = vand.u32 %v4849, 4294901760
    %v5502 = vsub.f32 %v4849, %v5501
    %v5503 = vand.u32 %v5502, 4294901760
    %5504 = vmatmul.mubr.f32.gmra.mrb[0].mxu0 %v5503
    %v5505 = vpop.f32.mrb[0].mxu0
    %v5506 = vadd.f32 %v5363, %v5505
    %v5507 = vpop.f32.mrb[0].mxu0
    %5508 = vmatprep.mubr.f32.mxu0 0.0
    %v5509 = vand.u32 %v4850, 4294901760
    %v5510 = vsub.f32 %v4850, %v5509
    %v5511 = vand.u32 %v5510, 4294901760
    %5512 = vmatmul.mubr.f32.gmra.mrb[0].mxu0 %v5511
    %v5513 = vpop.f32.mrb[0].mxu0
    %v5514 = vadd.f32 %v5370, %v5513
    %v5515 = vpop.f32.mrb[0].mxu0
    %5516 = vmatprep.mubr.f32.mxu0 0.0
    %v5517 = vand.u32 %v4851, 4294901760
    %v5518 = vsub.f32 %v4851, %v5517
    %v5519 = vand.u32 %v5518, 4294901760
    %5520 = vmatmul.mubr.f32.gmra.mrb[0].mxu0 %v5519
    %v5521 = vpop.f32.mrb[0].mxu0
    %v5522 = vadd.f32 %v5377, %v5521
    %v5523 = vpop.f32.mrb[0].mxu0
    %5524 = vdwg.mxu0
    %5525 = vmatprep.subr.mxu0 0.0
    %v5526 = vand.u32 %v4853, 4294901760
    %v5527 = vsub.f32 %v4853, %v5526
    %v5528 = vand.u32 %v5527, 4294901760
    %5529 = vmatpush1.msra.mxu0 %v5528
    %5530 = vmatprep.subr.mxu0 0.0
    %v5531 = vand.u32 %v4854, 4294901760
    %v5532 = vsub.f32 %v4854, %v5531
    %v5533 = vand.u32 %v5532, 4294901760
    %5534 = vmatpush1.msra.mxu0 %v5533
    %5535 = vmatprep.subr.mxu0 0.0
    %v5536 = vand.u32 %v4855, 4294901760
    %v5537 = vsub.f32 %v4855, %v5536
    %v5538 = vand.u32 %v5537, 4294901760
    %5539 = vmatpush1.msra.mxu0 %v5538
    %5540 = vmatprep.subr.mxu0 0.0
    %v5541 = vand.u32 %v4856, 4294901760
    %v5542 = vsub.f32 %v4856, %v5541
    %v5543 = vand.u32 %v5542, 4294901760
    %5544 = vmatpush1.msra.mxu0 %v5543
    %5545 = vmatprep.subr.mxu0 0.0
    %v5546 = vand.u32 %v4857, 4294901760
    %v5547 = vsub.f32 %v4857, %v5546
    %v5548 = vand.u32 %v5547, 4294901760
    %5549 = vmatpush1.msra.mxu0 %v5548
    %5550 = vmatprep.subr.mxu0 0.0
    %v5551 = vand.u32 %v4858, 4294901760
    %v5552 = vsub.f32 %v4858, %v5551
    %v5553 = vand.u32 %v5552, 4294901760
    %5554 = vmatpush1.msra.mxu0 %v5553
    %5555 = vmatprep.subr.mxu0 0.0
    %v5556 = vand.u32 %v4859, 4294901760
    %v5557 = vsub.f32 %v4859, %v5556
    %v5558 = vand.u32 %v5557, 4294901760
    %5559 = vmatpush1.msra.mxu0 %v5558
    %5560 = vmatprep.subr.mxu0 0.0
    %v5561 = vand.u32 %v4860, 4294901760
    %v5562 = vsub.f32 %v4860, %v5561
    %v5563 = vand.u32 %v5562, 4294901760
    %5564 = vmatpush1.msra.mxu0 %v5563
    %5565 = vmatprep.subr.mxu0 0.0
    %v5566 = vand.u32 %v4861, 4294901760
    %v5567 = vsub.f32 %v4861, %v5566
    %v5568 = vand.u32 %v5567, 4294901760
    %5569 = vmatpush1.msra.mxu0 %v5568
    %5570 = vmatprep.subr.mxu0 0.0
    %v5571 = vand.u32 %v4862, 4294901760
    %v5572 = vsub.f32 %v4862, %v5571
    %v5573 = vand.u32 %v5572, 4294901760
    %5574 = vmatpush1.msra.mxu0 %v5573
    %5575 = vmatprep.subr.mxu0 0.0
    %v5576 = vand.u32 %v4863, 4294901760
    %v5577 = vsub.f32 %v4863, %v5576
    %v5578 = vand.u32 %v5577, 4294901760
    %5579 = vmatpush1.msra.mxu0 %v5578
    %5580 = vmatprep.subr.mxu0 0.0
    %v5581 = vand.u32 %v4864, 4294901760
    %v5582 = vsub.f32 %v4864, %v5581
    %v5583 = vand.u32 %v5582, 4294901760
    %5584 = vmatpush1.msra.mxu0 %v5583
    %5585 = vmatprep.subr.mxu0 0.0
    %v5586 = vand.u32 %v4865, 4294901760
    %v5587 = vsub.f32 %v4865, %v5586
    %v5588 = vand.u32 %v5587, 4294901760
    %5589 = vmatpush1.msra.mxu0 %v5588
    %5590 = vmatprep.subr.mxu0 0.0
    %v5591 = vand.u32 %v4866, 4294901760
    %v5592 = vsub.f32 %v4866, %v5591
    %v5593 = vand.u32 %v5592, 4294901760
    %5594 = vmatpush1.msra.mxu0 %v5593
    %5595 = vmatprep.subr.mxu0 0.0
    %v5596 = vand.u32 %v4867, 4294901760
    %v5597 = vsub.f32 %v4867, %v5596
    %v5598 = vand.u32 %v5597, 4294901760
    %5599 = vmatpush1.msra.mxu0 %v5598
    %5600 = vmatprep.subr.mxu0 0.0
    %v5601 = vand.u32 %v4868, 4294901760
    %v5602 = vsub.f32 %v4868, %v5601
    %v5603 = vand.u32 %v5602, 4294901760
    %5604 = vmatpush1.msra.mxu0 %v5603
    %5605 = vmatprep.subr.mxu0 0.0
    %5606 = vmatpush1.msra.mxu0 0.0
    %5607 = vmatprep.subr.mxu0 0.0
    %5608 = vmatpush1.msra.mxu0 0.0
    %5609 = vmatprep.subr.mxu0 0.0
    %5610 = vmatpush1.msra.mxu0 0.0
    %5611 = vmatprep.subr.mxu0 0.0
    %5612 = vmatpush1.msra.mxu0 0.0
    %5613 = vmatprep.subr.mxu0 0.0
    %5614 = vmatpush1.msra.mxu0 0.0
    %5615 = vmatprep.subr.mxu0 0.0
    %5616 = vmatpush1.msra.mxu0 0.0
    %5617 = vmatprep.subr.mxu0 0.0
    %5618 = vmatpush1.msra.mxu0 0.0
    %5619 = vmatprep.subr.mxu0 0.0
    %5620 = vmatpush1.msra.mxu0 0.0
    %5621 = vmatprep.subr.mxu0 0.0
    %5622 = vmatpush1.msra.mxu0 0.0
    %5623 = vmatprep.subr.mxu0 0.0
    %5624 = vmatpush1.msra.mxu0 0.0
    %5625 = vmatprep.subr.mxu0 0.0
    %5626 = vmatpush1.msra.mxu0 0.0
    %5627 = vmatprep.subr.mxu0 0.0
    %5628 = vmatpush1.msra.mxu0 0.0
    %5629 = vmatprep.subr.mxu0 0.0
    %5630 = vmatpush1.msra.mxu0 0.0
    %5631 = vmatprep.subr.mxu0 0.0
    %5632 = vmatpush1.msra.mxu0 0.0
    %5633 = vmatprep.subr.mxu0 0.0
    %5634 = vmatpush1.msra.mxu0 0.0
    %5635 = vmatprep.subr.mxu0 0.0
    %5636 = vmatpush1.msra.mxu0 0.0
    %5637 = vmatprep.mubr.f32.mxu0 0.0
    %v5638 = vand.u32 %v4844, 4294901760
    %5639 = vmatmul.mubr.f32.gmra.mrb[0].mxu0 %v5638
    %v5640 = vpop.f32.mrb[0].mxu0
    %v5641 = vadd.f32 %v5466, %v5640
    %v5642 = vpop.f32.mrb[0].mxu0
    %5643 = vmatprep.mubr.f32.mxu0 0.0
    %v5644 = vand.u32 %v4845, 4294901760
    %5645 = vmatmul.mubr.f32.gmra.mrb[0].mxu0 %v5644
    %v5646 = vpop.f32.mrb[0].mxu0
    %v5647 = vadd.f32 %v5474, %v5646
    %v5648 = vpop.f32.mrb[0].mxu0
    %5649 = vmatprep.mubr.f32.mxu0 0.0
    %v5650 = vand.u32 %v4846, 4294901760
    %5651 = vmatmul.mubr.f32.gmra.mrb[0].mxu0 %v5650
    %v5652 = vpop.f32.mrb[0].mxu0
    %v5653 = vadd.f32 %v5482, %v5652
    %v5654 = vpop.f32.mrb[0].mxu0
    %5655 = vmatprep.mubr.f32.mxu0 0.0
    %v5656 = vand.u32 %v4847, 4294901760
    %5657 = vmatmul.mubr.f32.gmra.mrb[0].mxu0 %v5656
    %v5658 = vpop.f32.mrb[0].mxu0
    %v5659 = vadd.f32 %v5490, %v5658
    %v5660 = vpop.f32.mrb[0].mxu0
    %5661 = vmatprep.mubr.f32.mxu0 0.0
    %v5662 = vand.u32 %v4848, 4294901760
    %5663 = vmatmul.mubr.f32.gmra.mrb[0].mxu0 %v5662
    %v5664 = vpop.f32.mrb[0].mxu0
    %v5665 = vadd.f32 %v5498, %v5664
    %v5666 = vpop.f32.mrb[0].mxu0
    %5667 = vmatprep.mubr.f32.mxu0 0.0
    %v5668 = vand.u32 %v4849, 4294901760
    %5669 = vmatmul.mubr.f32.gmra.mrb[0].mxu0 %v5668
    %v5670 = vpop.f32.mrb[0].mxu0
    %v5671 = vadd.f32 %v5506, %v5670
    %v5672 = vpop.f32.mrb[0].mxu0
    %5673 = vmatprep.mubr.f32.mxu0 0.0
    %v5674 = vand.u32 %v4850, 4294901760
    %5675 = vmatmul.mubr.f32.gmra.mrb[0].mxu0 %v5674
    %v5676 = vpop.f32.mrb[0].mxu0
    %v5677 = vadd.f32 %v5514, %v5676
    %v5678 = vpop.f32.mrb[0].mxu0
    %5679 = vmatprep.mubr.f32.mxu0 0.0
    %v5680 = vand.u32 %v4851, 4294901760
    %5681 = vmatmul.mubr.f32.gmra.mrb[0].mxu0 %v5680
    %v5682 = vpop.f32.mrb[0].mxu0
    %v5683 = vadd.f32 %v5522, %v5682
    %v5684 = vpop.f32.mrb[0].mxu0
    %5685 = vdwg.mxu0
    %5686 = vmatprep.subr.mxu0 0.0
    %v5687 = vand.u32 %v4853, 4294901760
    %5688 = vmatpush1.msra.mxu0 %v5687
    %5689 = vmatprep.subr.mxu0 0.0
    %v5690 = vand.u32 %v4854, 4294901760
    %5691 = vmatpush1.msra.mxu0 %v5690
    %5692 = vmatprep.subr.mxu0 0.0
    %v5693 = vand.u32 %v4855, 4294901760
    %5694 = vmatpush1.msra.mxu0 %v5693
    %5695 = vmatprep.subr.mxu0 0.0
    %v5696 = vand.u32 %v4856, 4294901760
    %5697 = vmatpush1.msra.mxu0 %v5696
    %5698 = vmatprep.subr.mxu0 0.0
    %v5699 = vand.u32 %v4857, 4294901760
    %5700 = vmatpush1.msra.mxu0 %v5699
    %5701 = vmatprep.subr.mxu0 0.0
    %v5702 = vand.u32 %v4858, 4294901760
    %5703 = vmatpush1.msra.mxu0 %v5702
    %5704 = vmatprep.subr.mxu0 0.0
    %v5705 = vand.u32 %v4859, 4294901760
    %5706 = vmatpush1.msra.mxu0 %v5705
    %5707 = vmatprep.subr.mxu0 0.0
    %v5708 = vand.u32 %v4860, 4294901760
    %5709 = vmatpush1.msra.mxu0 %v5708
    %5710 = vmatprep.subr.mxu0 0.0
    %v5711 = vand.u32 %v4861, 4294901760
    %5712 = vmatpush1.msra.mxu0 %v5711
    %5713 = vmatprep.subr.mxu0 0.0
    %v5714 = vand.u32 %v4862, 4294901760
    %5715 = vmatpush1.msra.mxu0 %v5714
    %5716 = vmatprep.subr.mxu0 0.0
    %v5717 = vand.u32 %v4863, 4294901760
    %5718 = vmatpush1.msra.mxu0 %v5717
    %5719 = vmatprep.subr.mxu0 0.0
    %v5720 = vand.u32 %v4864, 4294901760
    %5721 = vmatpush1.msra.mxu0 %v5720
    %5722 = vmatprep.subr.mxu0 0.0
    %v5723 = vand.u32 %v4865, 4294901760
    %5724 = vmatpush1.msra.mxu0 %v5723
    %5725 = vmatprep.subr.mxu0 0.0
    %v5726 = vand.u32 %v4866, 4294901760
    %5727 = vmatpush1.msra.mxu0 %v5726
    %5728 = vmatprep.subr.mxu0 0.0
    %v5729 = vand.u32 %v4867, 4294901760
    %5730 = vmatpush1.msra.mxu0 %v5729
    %5731 = vmatprep.subr.mxu0 0.0
    %v5732 = vand.u32 %v4868, 4294901760
    %5733 = vmatpush1.msra.mxu0 %v5732
    %5734 = vmatprep.subr.mxu0 0.0
    %5735 = vmatpush1.msra.mxu0 0.0
    %5736 = vmatprep.subr.mxu0 0.0
    %5737 = vmatpush1.msra.mxu0 0.0
    %5738 = vmatprep.subr.mxu0 0.0
    %5739 = vmatpush1.msra.mxu0 0.0
    %5740 = vmatprep.subr.mxu0 0.0
    %5741 = vmatpush1.msra.mxu0 0.0
    %5742 = vmatprep.subr.mxu0 0.0
    %5743 = vmatpush1.msra.mxu0 0.0
    %5744 = vmatprep.subr.mxu0 0.0
    %5745 = vmatpush1.msra.mxu0 0.0
    %5746 = vmatprep.subr.mxu0 0.0
    %5747 = vmatpush1.msra.mxu0 0.0
    %5748 = vmatprep.subr.mxu0 0.0
    %5749 = vmatpush1.msra.mxu0 0.0
    %5750 = vmatprep.subr.mxu0 0.0
    %5751 = vmatpush1.msra.mxu0 0.0
    %5752 = vmatprep.subr.mxu0 0.0
    %5753 = vmatpush1.msra.mxu0 0.0
    %5754 = vmatprep.subr.mxu0 0.0
    %5755 = vmatpush1.msra.mxu0 0.0
    %5756 = vmatprep.subr.mxu0 0.0
    %5757 = vmatpush1.msra.mxu0 0.0
    %5758 = vmatprep.subr.mxu0 0.0
    %5759 = vmatpush1.msra.mxu0 0.0
    %5760 = vmatprep.subr.mxu0 0.0
    %5761 = vmatpush1.msra.mxu0 0.0
    %5762 = vmatprep.subr.mxu0 0.0
    %5763 = vmatpush1.msra.mxu0 0.0
    %5764 = vmatprep.subr.mxu0 0.0
    %5765 = vmatpush1.msra.mxu0 0.0
    %5766 = vmatprep.mubr.f32.mxu0 0.0
    %v5767 = vand.u32 %v4844, 4294901760
    %5768 = vmatmul.mubr.f32.gmra.mrb[0].mxu0 %v5767
    %v5769 = vpop.f32.mrb[0].mxu0
    %v5770 = vadd.f32 %v5641, %v5769
    %v5771 = vpop.f32.mrb[0].mxu0
    %5772 = vmatprep.mubr.f32.mxu0 0.0
    %v5773 = vand.u32 %v4845, 4294901760
    %5774 = vmatmul.mubr.f32.gmra.mrb[0].mxu0 %v5773
    %v5775 = vpop.f32.mrb[0].mxu0
    %v5776 = vadd.f32 %v5647, %v5775
    %v5777 = vpop.f32.mrb[0].mxu0
    %5778 = vmatprep.mubr.f32.mxu0 0.0
    %v5779 = vand.u32 %v4846, 4294901760
    %5780 = vmatmul.mubr.f32.gmra.mrb[0].mxu0 %v5779
    %v5781 = vpop.f32.mrb[0].mxu0
    %v5782 = vadd.f32 %v5653, %v5781
    %v5783 = vpop.f32.mrb[0].mxu0
    %5784 = vmatprep.mubr.f32.mxu0 0.0
    %v5785 = vand.u32 %v4847, 4294901760
    %5786 = vmatmul.mubr.f32.gmra.mrb[0].mxu0 %v5785
    %v5787 = vpop.f32.mrb[0].mxu0
    %v5788 = vadd.f32 %v5659, %v5787
    %v5789 = vpop.f32.mrb[0].mxu0
    %5790 = vmatprep.mubr.f32.mxu0 0.0
    %v5791 = vand.u32 %v4848, 4294901760
    %5792 = vmatmul.mubr.f32.gmra.mrb[0].mxu0 %v5791
    %v5793 = vpop.f32.mrb[0].mxu0
    %v5794 = vadd.f32 %v5665, %v5793
    %v5795 = vpop.f32.mrb[0].mxu0
    %5796 = vmatprep.mubr.f32.mxu0 0.0
    %v5797 = vand.u32 %v4849, 4294901760
    %5798 = vmatmul.mubr.f32.gmra.mrb[0].mxu0 %v5797
    %v5799 = vpop.f32.mrb[0].mxu0
    %v5800 = vadd.f32 %v5671, %v5799
    %v5801 = vpop.f32.mrb[0].mxu0
    %5802 = vmatprep.mubr.f32.mxu0 0.0
    %v5803 = vand.u32 %v4850, 4294901760
    %5804 = vmatmul.mubr.f32.gmra.mrb[0].mxu0 %v5803
    %v5805 = vpop.f32.mrb[0].mxu0
    %v5806 = vadd.f32 %v5677, %v5805
    %v5807 = vpop.f32.mrb[0].mxu0
    %5808 = vmatprep.mubr.f32.mxu0 0.0
    %v5809 = vand.u32 %v4851, 4294901760
    %5810 = vmatmul.mubr.f32.gmra.mrb[0].mxu0 %v5809
    %v5811 = vpop.f32.mrb[0].mxu0
    %v5812 = vadd.f32 %v5683, %v5811
    %v5813 = vpop.f32.mrb[0].mxu0
    %5814 = vdwg.mxu0
    %v5815 = vsel %vm3689, %v5770, 0.0
    %v5816 = vsel %vm3690, %v5776, 0.0
    %v5817 = vsel %vm3691, %v5782, 0.0
    %v5818 = vsel %vm3692, %v5788, 0.0
    %v5819 = vsel %vm3693, %v5794, 0.0
    %v5820 = vsel %vm3694, %v5800, 0.0
    %v5821 = vsel %vm3695, %v5806, 0.0
    %v5822 = vsel %vm3696, %v5812, 0.0
    %v5823 = vadd.f32 %v5815, %v5816
    %v5824 = vadd.f32 %v5823, %v5817
    %v5825 = vadd.f32 %v5824, %v5818
    %v5826 = vadd.f32 %v5825, %v5819
    %v5827 = vadd.f32 %v5826, %v5820
    %v5828 = vadd.f32 %v5827, %v5821
    %v5829 = vadd.f32 %v5828, %v5822
    %v5830 = vrot.slane %v5829, 4
    %v5831 = vadd.f32 %v5829, %v5830
    %v5832 = vrot.slane %v5831, 2
    %v5833 = vadd.f32 %v5831, %v5832
    %v5834 = vrot.slane %v5833, 1
    %v5835 = vadd.f32 %v5833, %v5834
    %v5836 = vmul.f32 %v5835, 0.022727273
    %v5837 = vsub.f32 %v5770, %v5836
    %v5838 = vsub.f32 %v5776, %v5836
    %v5839 = vsub.f32 %v5782, %v5836
    %v5840 = vsub.f32 %v5788, %v5836
    %v5841 = vsub.f32 %v5794, %v5836
    %v5842 = vsub.f32 %v5800, %v5836
    %v5843 = vsub.f32 %v5806, %v5836
    %v5844 = vsub.f32 %v5812, %v5836
    %v5845 = vsel %vm3689, %v5837, 0.0
    %v5846 = vsel %vm3690, %v5838, 0.0
    %v5847 = vsel %vm3691, %v5839, 0.0
    %v5848 = vsel %vm3692, %v5840, 0.0
    %v5849 = vsel %vm3693, %v5841, 0.0
    %v5850 = vsel %vm3694, %v5842, 0.0
    %v5851 = vsel %vm3695, %v5843, 0.0
    %v5852 = vsel %vm3696, %v5844, 0.0
    %v5853 = vmul.f32 %v5845, %v5845
    %v5854 = vmul.f32 %v5846, %v5846
    %v5855 = vmul.f32 %v5847, %v5847
    %v5856 = vmul.f32 %v5848, %v5848
    %v5857 = vmul.f32 %v5849, %v5849
    %v5858 = vmul.f32 %v5850, %v5850
    %v5859 = vmul.f32 %v5851, %v5851
    %v5860 = vmul.f32 %v5852, %v5852
    %v5861 = vadd.f32 %v5853, %v5854
    %v5862 = vadd.f32 %v5861, %v5855
    %v5863 = vadd.f32 %v5862, %v5856
    %v5864 = vadd.f32 %v5863, %v5857
    %v5865 = vadd.f32 %v5864, %v5858
    %v5866 = vadd.f32 %v5865, %v5859
    %v5867 = vadd.f32 %v5866, %v5860
    %v5868 = vrot.slane %v5867, 4
    %v5869 = vadd.f32 %v5867, %v5868
    %v5870 = vrot.slane %v5869, 2
    %v5871 = vadd.f32 %v5869, %v5870
    %v5872 = vrot.slane %v5871, 1
    %v5873 = vadd.f32 %v5871, %v5872
    %v5874 = vmul.f32 %v5873, 0.022727273
    %v5875 = vadd.f32 %v5874, 1e-05
    %v5876 = vrsqrt.pop %v5875
    %v5877 = vmul.f32 %v5876, %v76
    %v5878 = vmul.f32 %v5836, %v5877
    %v5880 = vrot.slane %v5878, 7
    %v5882 = vsub.f32 %v76, %v5880
    %v5883 = vlaneseq
    %v5884 = vshrl.u32 %v5883, 7
    %v5885 = vsub.s32 5, %v5884
    %v5886 = vrot.slane %v5877, %v5885
    %v5887 = vmul.f32 %v5770, %v5886
    %v5888 = vmul.f32 %v5776, %v5886
    %v5889 = vmul.f32 %v5782, %v5886
    %v5890 = vmul.f32 %v5788, %v5886
    %v5891 = vmul.f32 %v5794, %v5886
    %v5892 = vmul.f32 %v5800, %v5886
    %v5893 = vmul.f32 %v5806, %v5886
    %v5894 = vmul.f32 %v5812, %v5886
    %v5895 = vlaneseq
    %v5896 = vshrl.u32 %v5895, 7
    %v5897 = vsub.s32 6, %v5896
    %v5898 = vrot.slane %v5882, %v5897
    %v5899 = vadd.f32 %v5887, %v5898
    %v5900 = vadd.f32 %v5888, %v5898
    %v5901 = vadd.f32 %v5889, %v5898
    %v5902 = vadd.f32 %v5890, %v5898
    %v5903 = vadd.f32 %v5891, %v5898
    %v5904 = vadd.f32 %v5892, %v5898
    %v5905 = vadd.f32 %v5893, %v5898
    %v5906 = vadd.f32 %v5894, %v5898
    %v5907 = vadd.f32 %v5899, %v3585
    %v5908 = vadd.f32 %v5900, %v3586
    %v5909 = vadd.f32 %v5901, %v3587
    %v5910 = vadd.f32 %v5902, %v3588
    %v5911 = vadd.f32 %v5903, %v3589
    %v5912 = vadd.f32 %v5904, %v3590
    %v5913 = vadd.f32 %v5905, %v3591
    %v5914 = vadd.f32 %v5906, %v3592
    %v5915 = vmax.f32 %v5907, 0.0
    %v5916 = vmax.f32 %v5908, 0.0
    %v5917 = vmax.f32 %v5909, 0.0
    %v5918 = vmax.f32 %v5910, 0.0
    %v5919 = vmax.f32 %v5911, 0.0
    %v5920 = vmax.f32 %v5912, 0.0
    %v5921 = vmax.f32 %v5913, 0.0
    %v5922 = vmax.f32 %v5914, 0.0
    %5923 = vst [vmem:[#allocation2 + $0x8] sm:$0xff] %v5915
    %5924 = vst [vmem:[#allocation2 + $0x10] sm:$0xff] %v5916
    %5925 = vst [vmem:[#allocation2 + $0x18] sm:$0xff] %v5917
    %5926 = vst [vmem:[#allocation2 + $0x20] sm:$0xff] %v5918
    %5927 = vst [vmem:[#allocation2 + $0x28] sm:$0xff] %v5919
    %5928 = vst [vmem:[#allocation2 + $0x30] sm:$0xff] %v5920
    %5929 = vst [vmem:[#allocation2 + $0x38] sm:$0xff] %v5921
    %5930 = vst [vmem:[#allocation2 + $0x40] sm:$0xff] %v5922
    %v5931 = vld [vmem:[#allocation2 + $0x6] sm:$0xff]
    %v5932 = vld [vmem:[#allocation2 + $0xe] sm:$0xff]
    %v5933 = vld [vmem:[#allocation2 + $0x16] sm:$0xff]
    %v5934 = vld [vmem:[#allocation2 + $0x1e] sm:$0xff]
    %v5935 = vld [vmem:[#allocation2 + $0x26] sm:$0xff]
    %v5936 = vld [vmem:[#allocation2 + $0x2e] sm:$0xff]
    %v5937 = vld [vmem:[#allocation2 + $0x36] sm:$0xff]
    %v5938 = vld [vmem:[#allocation2 + $0x3e] sm:$0xff]
    %v5939 = vlaneseq
    %v5940 = vshrl.u32 %v5939, 7
    %v5941 = vsub.s32 7, %v5940
    %v5942 = vrot.slane %v76, %v5941
    %v5943 = vmul.f32 %v5931, %v5942
    %v5944 = vmul.f32 %v5932, %v5942
    %v5945 = vmul.f32 %v5933, %v5942
    %v5946 = vmul.f32 %v5934, %v5942
    %v5947 = vmul.f32 %v5935, %v5942
    %v5948 = vmul.f32 %v5936, %v5942
    %v5949 = vmul.f32 %v5937, %v5942
    %v5950 = vmul.f32 %v5938, %v5942
    %v5951 = vld [vmem:[#allocation2 + $0x7] sm:$0xff]
    %v5952 = vld [vmem:[#allocation2 + $0xf] sm:$0xff]
    %v5953 = vld [vmem:[#allocation2 + $0x17] sm:$0xff]
    %v5954 = vld [vmem:[#allocation2 + $0x1f] sm:$0xff]
    %v5955 = vld [vmem:[#allocation2 + $0x27] sm:$0xff]
    %v5956 = vld [vmem:[#allocation2 + $0x2f] sm:$0xff]
    %v5957 = vld [vmem:[#allocation2 + $0x37] sm:$0xff]
    %v5958 = vld [vmem:[#allocation2 + $0x3f] sm:$0xff]
    %v5959 = vlaneseq
    %v5960 = vshrl.u32 %v5959, 7
    %v5961 = vsub.s32 0, %v5960
    %v5962 = vrot.slane %v77, %v5961
    %v5963 = vmul.f32 %v5951, %v5962
    %v5964 = vmul.f32 %v5952, %v5962
    %v5965 = vmul.f32 %v5953, %v5962
    %v5966 = vmul.f32 %v5954, %v5962
    %v5967 = vmul.f32 %v5955, %v5962
    %v5968 = vmul.f32 %v5956, %v5962
    %v5969 = vmul.f32 %v5957, %v5962
    %v5970 = vmul.f32 %v5958, %v5962
    %v5971 = vadd.f32 %v5943, %v5963
    %v5972 = vadd.f32 %v5944, %v5964
    %v5973 = vadd.f32 %v5945, %v5965
    %v5974 = vadd.f32 %v5946, %v5966
    %v5975 = vadd.f32 %v5947, %v5967
    %v5976 = vadd.f32 %v5948, %v5968
    %v5977 = vadd.f32 %v5949, %v5969
    %v5978 = vadd.f32 %v5950, %v5970
    %v5979 = vld [vmem:[#allocation2 + $0x8] sm:$0xff]
    %v5980 = vld [vmem:[#allocation2 + $0x10] sm:$0xff]
    %v5981 = vld [vmem:[#allocation2 + $0x18] sm:$0xff]
    %v5982 = vld [vmem:[#allocation2 + $0x20] sm:$0xff]
    %v5983 = vld [vmem:[#allocation2 + $0x28] sm:$0xff]
    %v5984 = vld [vmem:[#allocation2 + $0x30] sm:$0xff]
    %v5985 = vld [vmem:[#allocation2 + $0x38] sm:$0xff]
    %v5986 = vld [vmem:[#allocation2 + $0x40] sm:$0xff]
    %v5987 = vlaneseq
    %v5988 = vshrl.u32 %v5987, 7
    %v5989 = vsub.s32 1, %v5988
    %v5990 = vrot.slane %v77, %v5989
    %v5991 = vmul.f32 %v5979, %v5990
    %v5992 = vmul.f32 %v5980, %v5990
    %v5993 = vmul.f32 %v5981, %v5990
    %v5994 = vmul.f32 %v5982, %v5990
    %v5995 = vmul.f32 %v5983, %v5990
    %v5996 = vmul.f32 %v5984, %v5990
    %v5997 = vmul.f32 %v5985, %v5990
    %v5998 = vmul.f32 %v5986, %v5990
    %v5999 = vadd.f32 %v5971, %v5991
    %v6000 = vadd.f32 %v5972, %v5992
    %v6001 = vadd.f32 %v5973, %v5993
    %v6002 = vadd.f32 %v5974, %v5994
    %v6003 = vadd.f32 %v5975, %v5995
    %v6004 = vadd.f32 %v5976, %v5996
    %v6005 = vadd.f32 %v5977, %v5997
    %v6006 = vadd.f32 %v5978, %v5998
    %v6007 = vlaneseq
    %v6008 = vshrl.u32 %v6007, 7
    %v6009 = vsub.s32 2, %v6008
    %v6010 = vrot.slane %v77, %v6009
    %v6011 = vadd.f32 %v5999, %v6010
    %v6012 = vadd.f32 %v6000, %v6010
    %v6013 = vadd.f32 %v6001, %v6010
    %v6014 = vadd.f32 %v6002, %v6010
    %v6015 = vadd.f32 %v6003, %v6010
    %v6016 = vadd.f32 %v6004, %v6010
    %v6017 = vadd.f32 %v6005, %v6010
    %v6018 = vadd.f32 %v6006, %v6010
    %vm6019 = vcmp.ge.s32.totalorder %v80, 12
    %vm6020 = vcmp.ge.s32.totalorder %v81, 12
    %vm6021 = vcmp.ge.s32.totalorder %v82, 12
    %vm6022 = vcmp.ge.s32.totalorder %v83, 12
    %vm6023 = vcmp.ge.s32.totalorder %v84, 12
    %vm6024 = vcmp.ge.s32.totalorder %v85, 12
    %vm6025 = vcmp.ge.s32.totalorder %v86, 12
    %vm6026 = vcmp.ge.s32.totalorder %v87, 12
    %v6027 = vsel %vm6019, %v6011, 0.0
    %v6028 = vsel %vm6020, %v6012, 0.0
    %v6029 = vsel %vm6021, %v6013, 0.0
    %v6030 = vsel %vm6022, %v6014, 0.0
    %v6031 = vsel %vm6023, %v6015, 0.0
    %v6032 = vsel %vm6024, %v6016, 0.0
    %v6033 = vsel %vm6025, %v6017, 0.0
    %v6034 = vsel %vm6026, %v6018, 0.0
    %v6035 = vadd.f32 %v6027, %v6028
    %v6036 = vadd.f32 %v6035, %v6029
    %v6037 = vadd.f32 %v6036, %v6030
    %v6038 = vadd.f32 %v6037, %v6031
    %v6039 = vadd.f32 %v6038, %v6032
    %v6040 = vadd.f32 %v6039, %v6033
    %v6041 = vadd.f32 %v6040, %v6034
    %v6042 = vrot.slane %v6041, 4
    %v6043 = vadd.f32 %v6041, %v6042
    %v6044 = vrot.slane %v6043, 2
    %v6045 = vadd.f32 %v6043, %v6044
    %v6046 = vrot.slane %v6045, 1
    %v6047 = vadd.f32 %v6045, %v6046
    %v6048 = vmul.f32 %v6047, 0.025
    %v6049 = vsub.f32 %v6011, %v6048
    %v6050 = vsub.f32 %v6012, %v6048
    %v6051 = vsub.f32 %v6013, %v6048
    %v6052 = vsub.f32 %v6014, %v6048
    %v6053 = vsub.f32 %v6015, %v6048
    %v6054 = vsub.f32 %v6016, %v6048
    %v6055 = vsub.f32 %v6017, %v6048
    %v6056 = vsub.f32 %v6018, %v6048
    %v6057 = vsel %vm6019, %v6049, 0.0
    %v6058 = vsel %vm6020, %v6050, 0.0
    %v6059 = vsel %vm6021, %v6051, 0.0
    %v6060 = vsel %vm6022, %v6052, 0.0
    %v6061 = vsel %vm6023, %v6053, 0.0
    %v6062 = vsel %vm6024, %v6054, 0.0
    %v6063 = vsel %vm6025, %v6055, 0.0
    %v6064 = vsel %vm6026, %v6056, 0.0
    %v6065 = vmul.f32 %v6057, %v6057
    %v6066 = vmul.f32 %v6058, %v6058
    %v6067 = vmul.f32 %v6059, %v6059
    %v6068 = vmul.f32 %v6060, %v6060
    %v6069 = vmul.f32 %v6061, %v6061
    %v6070 = vmul.f32 %v6062, %v6062
    %v6071 = vmul.f32 %v6063, %v6063
    %v6072 = vmul.f32 %v6064, %v6064
    %v6073 = vadd.f32 %v6065, %v6066
    %v6074 = vadd.f32 %v6073, %v6067
    %v6075 = vadd.f32 %v6074, %v6068
    %v6076 = vadd.f32 %v6075, %v6069
    %v6077 = vadd.f32 %v6076, %v6070
    %v6078 = vadd.f32 %v6077, %v6071
    %v6079 = vadd.f32 %v6078, %v6072
    %v6080 = vrot.slane %v6079, 4
    %v6081 = vadd.f32 %v6079, %v6080
    %v6082 = vrot.slane %v6081, 2
    %v6083 = vadd.f32 %v6081, %v6082
    %v6084 = vrot.slane %v6083, 1
    %v6085 = vadd.f32 %v6083, %v6084
    %v6086 = vmul.f32 %v6085, 0.025
    %v6087 = vadd.f32 %v6086, 1e-05
    %v6088 = vrsqrt.pop %v6087
    %v6089 = vmul.f32 %v6088, %v77
    %v6090 = vmul.f32 %v6048, %v6089
    %v6092 = vrot.slane %v6090, 7
    %v6094 = vsub.f32 %v77, %v6092
    %v6095 = vlaneseq
    %v6096 = vshrl.u32 %v6095, 7
    %v6097 = vsub.s32 3, %v6096
    %v6098 = vrot.slane %v6089, %v6097
    %v6099 = vmul.f32 %v6011, %v6098
    %v6100 = vmul.f32 %v6012, %v6098
    %v6101 = vmul.f32 %v6013, %v6098
    %v6102 = vmul.f32 %v6014, %v6098
    %v6103 = vmul.f32 %v6015, %v6098
    %v6104 = vmul.f32 %v6016, %v6098
    %v6105 = vmul.f32 %v6017, %v6098
    %v6106 = vmul.f32 %v6018, %v6098
    %v6107 = vlaneseq
    %v6108 = vshrl.u32 %v6107, 7
    %v6109 = vsub.s32 4, %v6108
    %v6110 = vrot.slane %v6094, %v6109
    %v6111 = vadd.f32 %v6099, %v6110
    %v6112 = vadd.f32 %v6100, %v6110
    %v6113 = vadd.f32 %v6101, %v6110
    %v6114 = vadd.f32 %v6102, %v6110
    %v6115 = vadd.f32 %v6103, %v6110
    %v6116 = vadd.f32 %v6104, %v6110
    %v6117 = vadd.f32 %v6105, %v6110
    %v6118 = vadd.f32 %v6106, %v6110
    %s6119 = scalar_lea.vmem [#allocation9], 640
    %v6120 = vld [vmem:[%s6119] sm:$0xff]
    %v6121 = vld [vmem:[%s6119 + $0x8] sm:$0xff]
    %v6122 = vld [vmem:[%s6119 + $0x10] sm:$0xff]
    %v6123 = vld [vmem:[%s6119 + $0x18] sm:$0xff]
    %v6124 = vld [vmem:[%s6119 + $0x20] sm:$0xff]
    %v6125 = vld [vmem:[%s6119 + $0x28] sm:$0xff]
    %v6126 = vld [vmem:[%s6119 + $0x30] sm:$0xff]
    %v6127 = vld [vmem:[%s6119 + $0x38] sm:$0xff]
    %v6128 = vld [vmem:[%s6119 + $0x40] sm:$0xff]
    %v6129 = vld [vmem:[%s6119 + $0x48] sm:$0xff]
    %v6130 = vld [vmem:[%s6119 + $0x50] sm:$0xff]
    %v6131 = vld [vmem:[%s6119 + $0x58] sm:$0xff]
    %v6132 = vld [vmem:[%s6119 + $0x60] sm:$0xff]
    %v6133 = vld [vmem:[%s6119 + $0x68] sm:$0xff]
    %v6134 = vld [vmem:[%s6119 + $0x70] sm:$0xff]
    %v6135 = vld [vmem:[%s6119 + $0x78] sm:$0xff]
    %v6136 = vlaneseq
    %v6137 = vshrl.u32 %v6136, 7
    %v6138 = vsub.s32 5, %v6137
    %v6139 = vrot.slane %v77, %v6138
    %6140 = vmatprep.subr.mxu0 0.0
    %v6141 = vand.u32 %v6120, 4294901760
    %6142 = vmatpush1.msra.mxu0 %v6141
    %6143 = vmatprep.subr.mxu0 0.0
    %v6144 = vand.u32 %v6121, 4294901760
    %6145 = vmatpush1.msra.mxu0 %v6144
    %6146 = vmatprep.subr.mxu0 0.0
    %v6147 = vand.u32 %v6122, 4294901760
    %6148 = vmatpush1.msra.mxu0 %v6147
    %6149 = vmatprep.subr.mxu0 0.0
    %v6150 = vand.u32 %v6123, 4294901760
    %6151 = vmatpush1.msra.mxu0 %v6150
    %6152 = vmatprep.subr.mxu0 0.0
    %v6153 = vand.u32 %v6124, 4294901760
    %6154 = vmatpush1.msra.mxu0 %v6153
    %6155 = vmatprep.subr.mxu0 0.0
    %v6156 = vand.u32 %v6125, 4294901760
    %6157 = vmatpush1.msra.mxu0 %v6156
    %6158 = vmatprep.subr.mxu0 0.0
    %v6159 = vand.u32 %v6126, 4294901760
    %6160 = vmatpush1.msra.mxu0 %v6159
    %6161 = vmatprep.subr.mxu0 0.0
    %v6162 = vand.u32 %v6127, 4294901760
    %6163 = vmatpush1.msra.mxu0 %v6162
    %6164 = vmatprep.subr.mxu0 0.0
    %v6165 = vand.u32 %v6128, 4294901760
    %6166 = vmatpush1.msra.mxu0 %v6165
    %6167 = vmatprep.subr.mxu0 0.0
    %v6168 = vand.u32 %v6129, 4294901760
    %6169 = vmatpush1.msra.mxu0 %v6168
    %6170 = vmatprep.subr.mxu0 0.0
    %v6171 = vand.u32 %v6130, 4294901760
    %6172 = vmatpush1.msra.mxu0 %v6171
    %6173 = vmatprep.subr.mxu0 0.0
    %v6174 = vand.u32 %v6131, 4294901760
    %6175 = vmatpush1.msra.mxu0 %v6174
    %6176 = vmatprep.subr.mxu0 0.0
    %v6177 = vand.u32 %v6132, 4294901760
    %6178 = vmatpush1.msra.mxu0 %v6177
    %6179 = vmatprep.subr.mxu0 0.0
    %v6180 = vand.u32 %v6133, 4294901760
    %6181 = vmatpush1.msra.mxu0 %v6180
    %6182 = vmatprep.subr.mxu0 0.0
    %v6183 = vand.u32 %v6134, 4294901760
    %6184 = vmatpush1.msra.mxu0 %v6183
    %6185 = vmatprep.subr.mxu0 0.0
    %v6186 = vand.u32 %v6135, 4294901760
    %6187 = vmatpush1.msra.mxu0 %v6186
    %6188 = vmatprep.subr.mxu0 0.0
    %6189 = vmatpush1.msra.mxu0 0.0
    %6190 = vmatprep.subr.mxu0 0.0
    %6191 = vmatpush1.msra.mxu0 0.0
    %6192 = vmatprep.subr.mxu0 0.0
    %6193 = vmatpush1.msra.mxu0 0.0
    %6194 = vmatprep.subr.mxu0 0.0
    %6195 = vmatpush1.msra.mxu0 0.0
    %6196 = vmatprep.subr.mxu0 0.0
    %6197 = vmatpush1.msra.mxu0 0.0
    %6198 = vmatprep.subr.mxu0 0.0
    %6199 = vmatpush1.msra.mxu0 0.0
    %6200 = vmatprep.subr.mxu0 0.0
    %6201 = vmatpush1.msra.mxu0 0.0
    %6202 = vmatprep.subr.mxu0 0.0
    %6203 = vmatpush1.msra.mxu0 0.0
    %6204 = vmatprep.subr.mxu0 0.0
    %6205 = vmatpush1.msra.mxu0 0.0
    %6206 = vmatprep.subr.mxu0 0.0
    %6207 = vmatpush1.msra.mxu0 0.0
    %6208 = vmatprep.subr.mxu0 0.0
    %6209 = vmatpush1.msra.mxu0 0.0
    %6210 = vmatprep.subr.mxu0 0.0
    %6211 = vmatpush1.msra.mxu0 0.0
    %6212 = vmatprep.subr.mxu0 0.0
    %6213 = vmatpush1.msra.mxu0 0.0
    %6214 = vmatprep.subr.mxu0 0.0
    %6215 = vmatpush1.msra.mxu0 0.0
    %6216 = vmatprep.subr.mxu0 0.0
    %6217 = vmatpush1.msra.mxu0 0.0
    %6218 = vmatprep.subr.mxu0 0.0
    %6219 = vmatpush1.msra.mxu0 0.0
    %6220 = vmatprep.mubr.f32.mxu0 0.0
    %v6221 = vand.u32 %v6111, 4294901760
    %v6222 = vsub.f32 %v6111, %v6221
    %v6223 = vand.u32 %v6222, 4294901760
    %v6224 = vsub.f32 %v6222, %v6223
    %v6225 = vand.u32 %v6224, 4294901760
    %6226 = vmatmul.mubr.f32.gmra.mrb[0].mxu0 %v6225
    %v6227 = vpop.f32.mrb[0].mxu0
    %v6228 = vadd.f32 %v6139, %v6227
    %v6229 = vpop.f32.mrb[0].mxu0
    %6230 = vmatprep.mubr.f32.mxu0 0.0
    %v6231 = vand.u32 %v6112, 4294901760
    %v6232 = vsub.f32 %v6112, %v6231
    %v6233 = vand.u32 %v6232, 4294901760
    %v6234 = vsub.f32 %v6232, %v6233
    %v6235 = vand.u32 %v6234, 4294901760
    %6236 = vmatmul.mubr.f32.gmra.mrb[0].mxu0 %v6235
    %v6237 = vpop.f32.mrb[0].mxu0
    %v6238 = vadd.f32 %v6139, %v6237
    %v6239 = vpop.f32.mrb[0].mxu0
    %6240 = vmatprep.mubr.f32.mxu0 0.0
    %v6241 = vand.u32 %v6113, 4294901760
    %v6242 = vsub.f32 %v6113, %v6241
    %v6243 = vand.u32 %v6242, 4294901760
    %v6244 = vsub.f32 %v6242, %v6243
    %v6245 = vand.u32 %v6244, 4294901760
    %6246 = vmatmul.mubr.f32.gmra.mrb[0].mxu0 %v6245
    %v6247 = vpop.f32.mrb[0].mxu0
    %v6248 = vadd.f32 %v6139, %v6247
    %v6249 = vpop.f32.mrb[0].mxu0
    %6250 = vmatprep.mubr.f32.mxu0 0.0
    %v6251 = vand.u32 %v6114, 4294901760
    %v6252 = vsub.f32 %v6114, %v6251
    %v6253 = vand.u32 %v6252, 4294901760
    %v6254 = vsub.f32 %v6252, %v6253
    %v6255 = vand.u32 %v6254, 4294901760
    %6256 = vmatmul.mubr.f32.gmra.mrb[0].mxu0 %v6255
    %v6257 = vpop.f32.mrb[0].mxu0
    %v6258 = vadd.f32 %v6139, %v6257
    %v6259 = vpop.f32.mrb[0].mxu0
    %6260 = vmatprep.mubr.f32.mxu0 0.0
    %v6261 = vand.u32 %v6115, 4294901760
    %v6262 = vsub.f32 %v6115, %v6261
    %v6263 = vand.u32 %v6262, 4294901760
    %v6264 = vsub.f32 %v6262, %v6263
    %v6265 = vand.u32 %v6264, 4294901760
    %6266 = vmatmul.mubr.f32.gmra.mrb[0].mxu0 %v6265
    %v6267 = vpop.f32.mrb[0].mxu0
    %v6268 = vadd.f32 %v6139, %v6267
    %v6269 = vpop.f32.mrb[0].mxu0
    %6270 = vmatprep.mubr.f32.mxu0 0.0
    %v6271 = vand.u32 %v6116, 4294901760
    %v6272 = vsub.f32 %v6116, %v6271
    %v6273 = vand.u32 %v6272, 4294901760
    %v6274 = vsub.f32 %v6272, %v6273
    %v6275 = vand.u32 %v6274, 4294901760
    %6276 = vmatmul.mubr.f32.gmra.mrb[0].mxu0 %v6275
    %v6277 = vpop.f32.mrb[0].mxu0
    %v6278 = vadd.f32 %v6139, %v6277
    %v6279 = vpop.f32.mrb[0].mxu0
    %6280 = vmatprep.mubr.f32.mxu0 0.0
    %v6281 = vand.u32 %v6117, 4294901760
    %v6282 = vsub.f32 %v6117, %v6281
    %v6283 = vand.u32 %v6282, 4294901760
    %v6284 = vsub.f32 %v6282, %v6283
    %v6285 = vand.u32 %v6284, 4294901760
    %6286 = vmatmul.mubr.f32.gmra.mrb[0].mxu0 %v6285
    %v6287 = vpop.f32.mrb[0].mxu0
    %v6288 = vadd.f32 %v6139, %v6287
    %v6289 = vpop.f32.mrb[0].mxu0
    %6290 = vmatprep.mubr.f32.mxu0 0.0
    %v6291 = vand.u32 %v6118, 4294901760
    %v6292 = vsub.f32 %v6118, %v6291
    %v6293 = vand.u32 %v6292, 4294901760
    %v6294 = vsub.f32 %v6292, %v6293
    %v6295 = vand.u32 %v6294, 4294901760
    %6296 = vmatmul.mubr.f32.gmra.mrb[0].mxu0 %v6295
    %v6297 = vpop.f32.mrb[0].mxu0
    %v6298 = vadd.f32 %v6139, %v6297
    %v6299 = vpop.f32.mrb[0].mxu0
    %6300 = vdwg.mxu0
    %6301 = vmatprep.subr.mxu0 0.0
    %v6302 = vand.u32 %v6120, 4294901760
    %v6303 = vsub.f32 %v6120, %v6302
    %v6304 = vand.u32 %v6303, 4294901760
    %v6305 = vsub.f32 %v6303, %v6304
    %v6306 = vand.u32 %v6305, 4294901760
    %6307 = vmatpush1.msra.mxu0 %v6306
    %6308 = vmatprep.subr.mxu0 0.0
    %v6309 = vand.u32 %v6121, 4294901760
    %v6310 = vsub.f32 %v6121, %v6309
    %v6311 = vand.u32 %v6310, 4294901760
    %v6312 = vsub.f32 %v6310, %v6311
    %v6313 = vand.u32 %v6312, 4294901760
    %6314 = vmatpush1.msra.mxu0 %v6313
    %6315 = vmatprep.subr.mxu0 0.0
    %v6316 = vand.u32 %v6122, 4294901760
    %v6317 = vsub.f32 %v6122, %v6316
    %v6318 = vand.u32 %v6317, 4294901760
    %v6319 = vsub.f32 %v6317, %v6318
    %v6320 = vand.u32 %v6319, 4294901760
    %6321 = vmatpush1.msra.mxu0 %v6320
    %6322 = vmatprep.subr.mxu0 0.0
    %v6323 = vand.u32 %v6123, 4294901760
    %v6324 = vsub.f32 %v6123, %v6323
    %v6325 = vand.u32 %v6324, 4294901760
    %v6326 = vsub.f32 %v6324, %v6325
    %v6327 = vand.u32 %v6326, 4294901760
    %6328 = vmatpush1.msra.mxu0 %v6327
    %6329 = vmatprep.subr.mxu0 0.0
    %v6330 = vand.u32 %v6124, 4294901760
    %v6331 = vsub.f32 %v6124, %v6330
    %v6332 = vand.u32 %v6331, 4294901760
    %v6333 = vsub.f32 %v6331, %v6332
    %v6334 = vand.u32 %v6333, 4294901760
    %6335 = vmatpush1.msra.mxu0 %v6334
    %6336 = vmatprep.subr.mxu0 0.0
    %v6337 = vand.u32 %v6125, 4294901760
    %v6338 = vsub.f32 %v6125, %v6337
    %v6339 = vand.u32 %v6338, 4294901760
    %v6340 = vsub.f32 %v6338, %v6339
    %v6341 = vand.u32 %v6340, 4294901760
    %6342 = vmatpush1.msra.mxu0 %v6341
    %6343 = vmatprep.subr.mxu0 0.0
    %v6344 = vand.u32 %v6126, 4294901760
    %v6345 = vsub.f32 %v6126, %v6344
    %v6346 = vand.u32 %v6345, 4294901760
    %v6347 = vsub.f32 %v6345, %v6346
    %v6348 = vand.u32 %v6347, 4294901760
    %6349 = vmatpush1.msra.mxu0 %v6348
    %6350 = vmatprep.subr.mxu0 0.0
    %v6351 = vand.u32 %v6127, 4294901760
    %v6352 = vsub.f32 %v6127, %v6351
    %v6353 = vand.u32 %v6352, 4294901760
    %v6354 = vsub.f32 %v6352, %v6353
    %v6355 = vand.u32 %v6354, 4294901760
    %6356 = vmatpush1.msra.mxu0 %v6355
    %6357 = vmatprep.subr.mxu0 0.0
    %v6358 = vand.u32 %v6128, 4294901760
    %v6359 = vsub.f32 %v6128, %v6358
    %v6360 = vand.u32 %v6359, 4294901760
    %v6361 = vsub.f32 %v6359, %v6360
    %v6362 = vand.u32 %v6361, 4294901760
    %6363 = vmatpush1.msra.mxu0 %v6362
    %6364 = vmatprep.subr.mxu0 0.0
    %v6365 = vand.u32 %v6129, 4294901760
    %v6366 = vsub.f32 %v6129, %v6365
    %v6367 = vand.u32 %v6366, 4294901760
    %v6368 = vsub.f32 %v6366, %v6367
    %v6369 = vand.u32 %v6368, 4294901760
    %6370 = vmatpush1.msra.mxu0 %v6369
    %6371 = vmatprep.subr.mxu0 0.0
    %v6372 = vand.u32 %v6130, 4294901760
    %v6373 = vsub.f32 %v6130, %v6372
    %v6374 = vand.u32 %v6373, 4294901760
    %v6375 = vsub.f32 %v6373, %v6374
    %v6376 = vand.u32 %v6375, 4294901760
    %6377 = vmatpush1.msra.mxu0 %v6376
    %6378 = vmatprep.subr.mxu0 0.0
    %v6379 = vand.u32 %v6131, 4294901760
    %v6380 = vsub.f32 %v6131, %v6379
    %v6381 = vand.u32 %v6380, 4294901760
    %v6382 = vsub.f32 %v6380, %v6381
    %v6383 = vand.u32 %v6382, 4294901760
    %6384 = vmatpush1.msra.mxu0 %v6383
    %6385 = vmatprep.subr.mxu0 0.0
    %v6386 = vand.u32 %v6132, 4294901760
    %v6387 = vsub.f32 %v6132, %v6386
    %v6388 = vand.u32 %v6387, 4294901760
    %v6389 = vsub.f32 %v6387, %v6388
    %v6390 = vand.u32 %v6389, 4294901760
    %6391 = vmatpush1.msra.mxu0 %v6390
    %6392 = vmatprep.subr.mxu0 0.0
    %v6393 = vand.u32 %v6133, 4294901760
    %v6394 = vsub.f32 %v6133, %v6393
    %v6395 = vand.u32 %v6394, 4294901760
    %v6396 = vsub.f32 %v6394, %v6395
    %v6397 = vand.u32 %v6396, 4294901760
    %6398 = vmatpush1.msra.mxu0 %v6397
    %6399 = vmatprep.subr.mxu0 0.0
    %v6400 = vand.u32 %v6134, 4294901760
    %v6401 = vsub.f32 %v6134, %v6400
    %v6402 = vand.u32 %v6401, 4294901760
    %v6403 = vsub.f32 %v6401, %v6402
    %v6404 = vand.u32 %v6403, 4294901760
    %6405 = vmatpush1.msra.mxu0 %v6404
    %6406 = vmatprep.subr.mxu0 0.0
    %v6407 = vand.u32 %v6135, 4294901760
    %v6408 = vsub.f32 %v6135, %v6407
    %v6409 = vand.u32 %v6408, 4294901760
    %v6410 = vsub.f32 %v6408, %v6409
    %v6411 = vand.u32 %v6410, 4294901760
    %6412 = vmatpush1.msra.mxu0 %v6411
    %6413 = vmatprep.subr.mxu0 0.0
    %6414 = vmatpush1.msra.mxu0 0.0
    %6415 = vmatprep.subr.mxu0 0.0
    %6416 = vmatpush1.msra.mxu0 0.0
    %6417 = vmatprep.subr.mxu0 0.0
    %6418 = vmatpush1.msra.mxu0 0.0
    %6419 = vmatprep.subr.mxu0 0.0
    %6420 = vmatpush1.msra.mxu0 0.0
    %6421 = vmatprep.subr.mxu0 0.0
    %6422 = vmatpush1.msra.mxu0 0.0
    %6423 = vmatprep.subr.mxu0 0.0
    %6424 = vmatpush1.msra.mxu0 0.0
    %6425 = vmatprep.subr.mxu0 0.0
    %6426 = vmatpush1.msra.mxu0 0.0
    %6427 = vmatprep.subr.mxu0 0.0
    %6428 = vmatpush1.msra.mxu0 0.0
    %6429 = vmatprep.subr.mxu0 0.0
    %6430 = vmatpush1.msra.mxu0 0.0
    %6431 = vmatprep.subr.mxu0 0.0
    %6432 = vmatpush1.msra.mxu0 0.0
    %6433 = vmatprep.subr.mxu0 0.0
    %6434 = vmatpush1.msra.mxu0 0.0
    %6435 = vmatprep.subr.mxu0 0.0
    %6436 = vmatpush1.msra.mxu0 0.0
    %6437 = vmatprep.subr.mxu0 0.0
    %6438 = vmatpush1.msra.mxu0 0.0
    %6439 = vmatprep.subr.mxu0 0.0
    %6440 = vmatpush1.msra.mxu0 0.0
    %6441 = vmatprep.subr.mxu0 0.0
    %6442 = vmatpush1.msra.mxu0 0.0
    %6443 = vmatprep.subr.mxu0 0.0
    %6444 = vmatpush1.msra.mxu0 0.0
    %6445 = vmatprep.mubr.f32.mxu0 0.0
    %v6446 = vand.u32 %v6111, 4294901760
    %6447 = vmatmul.mubr.f32.gmra.mrb[0].mxu0 %v6446
    %v6448 = vpop.f32.mrb[0].mxu0
    %v6449 = vadd.f32 %v6228, %v6448
    %v6450 = vpop.f32.mrb[0].mxu0
    %6451 = vmatprep.mubr.f32.mxu0 0.0
    %v6452 = vand.u32 %v6112, 4294901760
    %6453 = vmatmul.mubr.f32.gmra.mrb[0].mxu0 %v6452
    %v6454 = vpop.f32.mrb[0].mxu0
    %v6455 = vadd.f32 %v6238, %v6454
    %v6456 = vpop.f32.mrb[0].mxu0
    %6457 = vmatprep.mubr.f32.mxu0 0.0
    %v6458 = vand.u32 %v6113, 4294901760
    %6459 = vmatmul.mubr.f32.gmra.mrb[0].mxu0 %v6458
    %v6460 = vpop.f32.mrb[0].mxu0
    %v6461 = vadd.f32 %v6248, %v6460
    %v6462 = vpop.f32.mrb[0].mxu0
    %6463 = vmatprep.mubr.f32.mxu0 0.0
    %v6464 = vand.u32 %v6114, 4294901760
    %6465 = vmatmul.mubr.f32.gmra.mrb[0].mxu0 %v6464
    %v6466 = vpop.f32.mrb[0].mxu0
    %v6467 = vadd.f32 %v6258, %v6466
    %v6468 = vpop.f32.mrb[0].mxu0
    %6469 = vmatprep.mubr.f32.mxu0 0.0
    %v6470 = vand.u32 %v6115, 4294901760
    %6471 = vmatmul.mubr.f32.gmra.mrb[0].mxu0 %v6470
    %v6472 = vpop.f32.mrb[0].mxu0
    %v6473 = vadd.f32 %v6268, %v6472
    %v6474 = vpop.f32.mrb[0].mxu0
    %6475 = vmatprep.mubr.f32.mxu0 0.0
    %v6476 = vand.u32 %v6116, 4294901760
    %6477 = vmatmul.mubr.f32.gmra.mrb[0].mxu0 %v6476
    %v6478 = vpop.f32.mrb[0].mxu0
    %v6479 = vadd.f32 %v6278, %v6478
    %v6480 = vpop.f32.mrb[0].mxu0
    %6481 = vmatprep.mubr.f32.mxu0 0.0
    %v6482 = vand.u32 %v6117, 4294901760
    %6483 = vmatmul.mubr.f32.gmra.mrb[0].mxu0 %v6482
    %v6484 = vpop.f32.mrb[0].mxu0
    %v6485 = vadd.f32 %v6288, %v6484
    %v6486 = vpop.f32.mrb[0].mxu0
    %6487 = vmatprep.mubr.f32.mxu0 0.0
    %v6488 = vand.u32 %v6118, 4294901760
    %6489 = vmatmul.mubr.f32.gmra.mrb[0].mxu0 %v6488
    %v6490 = vpop.f32.mrb[0].mxu0
    %v6491 = vadd.f32 %v6298, %v6490
    %v6492 = vpop.f32.mrb[0].mxu0
    %6493 = vdwg.mxu0
    %6494 = vmatprep.subr.mxu0 0.0
    %v6495 = vand.u32 %v6120, 4294901760
    %v6496 = vsub.f32 %v6120, %v6495
    %6497 = vmatpush1.msra.mxu0 %v6496
    %6498 = vmatprep.subr.mxu0 0.0
    %v6499 = vand.u32 %v6121, 4294901760
    %v6500 = vsub.f32 %v6121, %v6499
    %6501 = vmatpush1.msra.mxu0 %v6500
    %6502 = vmatprep.subr.mxu0 0.0
    %v6503 = vand.u32 %v6122, 4294901760
    %v6504 = vsub.f32 %v6122, %v6503
    %6505 = vmatpush1.msra.mxu0 %v6504
    %6506 = vmatprep.subr.mxu0 0.0
    %v6507 = vand.u32 %v6123, 4294901760
    %v6508 = vsub.f32 %v6123, %v6507
    %6509 = vmatpush1.msra.mxu0 %v6508
    %6510 = vmatprep.subr.mxu0 0.0
    %v6511 = vand.u32 %v6124, 4294901760
    %v6512 = vsub.f32 %v6124, %v6511
    %6513 = vmatpush1.msra.mxu0 %v6512
    %6514 = vmatprep.subr.mxu0 0.0
    %v6515 = vand.u32 %v6125, 4294901760
    %v6516 = vsub.f32 %v6125, %v6515
    %6517 = vmatpush1.msra.mxu0 %v6516
    %6518 = vmatprep.subr.mxu0 0.0
    %v6519 = vand.u32 %v6126, 4294901760
    %v6520 = vsub.f32 %v6126, %v6519
    %6521 = vmatpush1.msra.mxu0 %v6520
    %6522 = vmatprep.subr.mxu0 0.0
    %v6523 = vand.u32 %v6127, 4294901760
    %v6524 = vsub.f32 %v6127, %v6523
    %6525 = vmatpush1.msra.mxu0 %v6524
    %6526 = vmatprep.subr.mxu0 0.0
    %v6527 = vand.u32 %v6128, 4294901760
    %v6528 = vsub.f32 %v6128, %v6527
    %6529 = vmatpush1.msra.mxu0 %v6528
    %6530 = vmatprep.subr.mxu0 0.0
    %v6531 = vand.u32 %v6129, 4294901760
    %v6532 = vsub.f32 %v6129, %v6531
    %6533 = vmatpush1.msra.mxu0 %v6532
    %6534 = vmatprep.subr.mxu0 0.0
    %v6535 = vand.u32 %v6130, 4294901760
    %v6536 = vsub.f32 %v6130, %v6535
    %6537 = vmatpush1.msra.mxu0 %v6536
    %6538 = vmatprep.subr.mxu0 0.0
    %v6539 = vand.u32 %v6131, 4294901760
    %v6540 = vsub.f32 %v6131, %v6539
    %6541 = vmatpush1.msra.mxu0 %v6540
    %6542 = vmatprep.subr.mxu0 0.0
    %v6543 = vand.u32 %v6132, 4294901760
    %v6544 = vsub.f32 %v6132, %v6543
    %6545 = vmatpush1.msra.mxu0 %v6544
    %6546 = vmatprep.subr.mxu0 0.0
    %v6547 = vand.u32 %v6133, 4294901760
    %v6548 = vsub.f32 %v6133, %v6547
    %6549 = vmatpush1.msra.mxu0 %v6548
    %6550 = vmatprep.subr.mxu0 0.0
    %v6551 = vand.u32 %v6134, 4294901760
    %v6552 = vsub.f32 %v6134, %v6551
    %6553 = vmatpush1.msra.mxu0 %v6552
    %6554 = vmatprep.subr.mxu0 0.0
    %v6555 = vand.u32 %v6135, 4294901760
    %v6556 = vsub.f32 %v6135, %v6555
    %6557 = vmatpush1.msra.mxu0 %v6556
    %6558 = vmatprep.subr.mxu0 0.0
    %6559 = vmatpush1.msra.mxu0 0.0
    %6560 = vmatprep.subr.mxu0 0.0
    %6561 = vmatpush1.msra.mxu0 0.0
    %6562 = vmatprep.subr.mxu0 0.0
    %6563 = vmatpush1.msra.mxu0 0.0
    %6564 = vmatprep.subr.mxu0 0.0
    %6565 = vmatpush1.msra.mxu0 0.0
    %6566 = vmatprep.subr.mxu0 0.0
    %6567 = vmatpush1.msra.mxu0 0.0
    %6568 = vmatprep.subr.mxu0 0.0
    %6569 = vmatpush1.msra.mxu0 0.0
    %6570 = vmatprep.subr.mxu0 0.0
    %6571 = vmatpush1.msra.mxu0 0.0
    %6572 = vmatprep.subr.mxu0 0.0
    %6573 = vmatpush1.msra.mxu0 0.0
    %6574 = vmatprep.subr.mxu0 0.0
    %6575 = vmatpush1.msra.mxu0 0.0
    %6576 = vmatprep.subr.mxu0 0.0
    %6577 = vmatpush1.msra.mxu0 0.0
    %6578 = vmatprep.subr.mxu0 0.0
    %6579 = vmatpush1.msra.mxu0 0.0
    %6580 = vmatprep.subr.mxu0 0.0
    %6581 = vmatpush1.msra.mxu0 0.0
    %6582 = vmatprep.subr.mxu0 0.0
    %6583 = vmatpush1.msra.mxu0 0.0
    %6584 = vmatprep.subr.mxu0 0.0
    %6585 = vmatpush1.msra.mxu0 0.0
    %6586 = vmatprep.subr.mxu0 0.0
    %6587 = vmatpush1.msra.mxu0 0.0
    %6588 = vmatprep.subr.mxu0 0.0
    %6589 = vmatpush1.msra.mxu0 0.0
    %6590 = vmatprep.mubr.f32.mxu0 0.0
    %v6591 = vand.u32 %v6111, 4294901760
    %v6592 = vsub.f32 %v6111, %v6591
    %6593 = vmatmul.mubr.f32.gmra.mrb[0].mxu0 %v6592
    %v6594 = vpop.f32.mrb[0].mxu0
    %v6595 = vadd.f32 %v6449, %v6594
    %v6596 = vpop.f32.mrb[0].mxu0
    %6597 = vmatprep.mubr.f32.mxu0 0.0
    %v6598 = vand.u32 %v6112, 4294901760
    %v6599 = vsub.f32 %v6112, %v6598
    %6600 = vmatmul.mubr.f32.gmra.mrb[0].mxu0 %v6599
    %v6601 = vpop.f32.mrb[0].mxu0
    %v6602 = vadd.f32 %v6455, %v6601
    %v6603 = vpop.f32.mrb[0].mxu0
    %6604 = vmatprep.mubr.f32.mxu0 0.0
    %v6605 = vand.u32 %v6113, 4294901760
    %v6606 = vsub.f32 %v6113, %v6605
    %6607 = vmatmul.mubr.f32.gmra.mrb[0].mxu0 %v6606
    %v6608 = vpop.f32.mrb[0].mxu0
    %v6609 = vadd.f32 %v6461, %v6608
    %v6610 = vpop.f32.mrb[0].mxu0
    %6611 = vmatprep.mubr.f32.mxu0 0.0
    %v6612 = vand.u32 %v6114, 4294901760
    %v6613 = vsub.f32 %v6114, %v6612
    %6614 = vmatmul.mubr.f32.gmra.mrb[0].mxu0 %v6613
    %v6615 = vpop.f32.mrb[0].mxu0
    %v6616 = vadd.f32 %v6467, %v6615
    %v6617 = vpop.f32.mrb[0].mxu0
    %6618 = vmatprep.mubr.f32.mxu0 0.0
    %v6619 = vand.u32 %v6115, 4294901760
    %v6620 = vsub.f32 %v6115, %v6619
    %6621 = vmatmul.mubr.f32.gmra.mrb[0].mxu0 %v6620
    %v6622 = vpop.f32.mrb[0].mxu0
    %v6623 = vadd.f32 %v6473, %v6622
    %v6624 = vpop.f32.mrb[0].mxu0
    %6625 = vmatprep.mubr.f32.mxu0 0.0
    %v6626 = vand.u32 %v6116, 4294901760
    %v6627 = vsub.f32 %v6116, %v6626
    %6628 = vmatmul.mubr.f32.gmra.mrb[0].mxu0 %v6627
    %v6629 = vpop.f32.mrb[0].mxu0
    %v6630 = vadd.f32 %v6479, %v6629
    %v6631 = vpop.f32.mrb[0].mxu0
    %6632 = vmatprep.mubr.f32.mxu0 0.0
    %v6633 = vand.u32 %v6117, 4294901760
    %v6634 = vsub.f32 %v6117, %v6633
    %6635 = vmatmul.mubr.f32.gmra.mrb[0].mxu0 %v6634
    %v6636 = vpop.f32.mrb[0].mxu0
    %v6637 = vadd.f32 %v6485, %v6636
    %v6638 = vpop.f32.mrb[0].mxu0
    %6639 = vmatprep.mubr.f32.mxu0 0.0
    %v6640 = vand.u32 %v6118, 4294901760
    %v6641 = vsub.f32 %v6118, %v6640
    %6642 = vmatmul.mubr.f32.gmra.mrb[0].mxu0 %v6641
    %v6643 = vpop.f32.mrb[0].mxu0
    %v6644 = vadd.f32 %v6491, %v6643
    %v6645 = vpop.f32.mrb[0].mxu0
    %6646 = vdwg.mxu0
    %6647 = vmatprep.subr.mxu0 0.0
    %v6648 = vand.u32 %v6120, 4294901760
    %6649 = vmatpush1.msra.mxu0 %v6648
    %6650 = vmatprep.subr.mxu0 0.0
    %v6651 = vand.u32 %v6121, 4294901760
    %6652 = vmatpush1.msra.mxu0 %v6651
    %6653 = vmatprep.subr.mxu0 0.0
    %v6654 = vand.u32 %v6122, 4294901760
    %6655 = vmatpush1.msra.mxu0 %v6654
    %6656 = vmatprep.subr.mxu0 0.0
    %v6657 = vand.u32 %v6123, 4294901760
    %6658 = vmatpush1.msra.mxu0 %v6657
    %6659 = vmatprep.subr.mxu0 0.0
    %v6660 = vand.u32 %v6124, 4294901760
    %6661 = vmatpush1.msra.mxu0 %v6660
    %6662 = vmatprep.subr.mxu0 0.0
    %v6663 = vand.u32 %v6125, 4294901760
    %6664 = vmatpush1.msra.mxu0 %v6663
    %6665 = vmatprep.subr.mxu0 0.0
    %v6666 = vand.u32 %v6126, 4294901760
    %6667 = vmatpush1.msra.mxu0 %v6666
    %6668 = vmatprep.subr.mxu0 0.0
    %v6669 = vand.u32 %v6127, 4294901760
    %6670 = vmatpush1.msra.mxu0 %v6669
    %6671 = vmatprep.subr.mxu0 0.0
    %v6672 = vand.u32 %v6128, 4294901760
    %6673 = vmatpush1.msra.mxu0 %v6672
    %6674 = vmatprep.subr.mxu0 0.0
    %v6675 = vand.u32 %v6129, 4294901760
    %6676 = vmatpush1.msra.mxu0 %v6675
    %6677 = vmatprep.subr.mxu0 0.0
    %v6678 = vand.u32 %v6130, 4294901760
    %6679 = vmatpush1.msra.mxu0 %v6678
    %6680 = vmatprep.subr.mxu0 0.0
    %v6681 = vand.u32 %v6131, 4294901760
    %6682 = vmatpush1.msra.mxu0 %v6681
    %6683 = vmatprep.subr.mxu0 0.0
    %v6684 = vand.u32 %v6132, 4294901760
    %6685 = vmatpush1.msra.mxu0 %v6684
    %6686 = vmatprep.subr.mxu0 0.0
    %v6687 = vand.u32 %v6133, 4294901760
    %6688 = vmatpush1.msra.mxu0 %v6687
    %6689 = vmatprep.subr.mxu0 0.0
    %v6690 = vand.u32 %v6134, 4294901760
    %6691 = vmatpush1.msra.mxu0 %v6690
    %6692 = vmatprep.subr.mxu0 0.0
    %v6693 = vand.u32 %v6135, 4294901760
    %6694 = vmatpush1.msra.mxu0 %v6693
    %6695 = vmatprep.subr.mxu0 0.0
    %6696 = vmatpush1.msra.mxu0 0.0
    %6697 = vmatprep.subr.mxu0 0.0
    %6698 = vmatpush1.msra.mxu0 0.0
    %6699 = vmatprep.subr.mxu0 0.0
    %6700 = vmatpush1.msra.mxu0 0.0
    %6701 = vmatprep.subr.mxu0 0.0
    %6702 = vmatpush1.msra.mxu0 0.0
    %6703 = vmatprep.subr.mxu0 0.0
    %6704 = vmatpush1.msra.mxu0 0.0
    %6705 = vmatprep.subr.mxu0 0.0
    %6706 = vmatpush1.msra.mxu0 0.0
    %6707 = vmatprep.subr.mxu0 0.0
    %6708 = vmatpush1.msra.mxu0 0.0
    %6709 = vmatprep.subr.mxu0 0.0
    %6710 = vmatpush1.msra.mxu0 0.0
    %6711 = vmatprep.subr.mxu0 0.0
    %6712 = vmatpush1.msra.mxu0 0.0
    %6713 = vmatprep.subr.mxu0 0.0
    %6714 = vmatpush1.msra.mxu0 0.0
    %6715 = vmatprep.subr.mxu0 0.0
    %6716 = vmatpush1.msra.mxu0 0.0
    %6717 = vmatprep.subr.mxu0 0.0
    %6718 = vmatpush1.msra.mxu0 0.0
    %6719 = vmatprep.subr.mxu0 0.0
    %6720 = vmatpush1.msra.mxu0 0.0
    %6721 = vmatprep.subr.mxu0 0.0
    %6722 = vmatpush1.msra.mxu0 0.0
    %6723 = vmatprep.subr.mxu0 0.0
    %6724 = vmatpush1.msra.mxu0 0.0
    %6725 = vmatprep.subr.mxu0 0.0
    %6726 = vmatpush1.msra.mxu0 0.0
    %6727 = vmatprep.mubr.f32.mxu0 0.0
    %v6728 = vand.u32 %v6111, 4294901760
    %v6729 = vsub.f32 %v6111, %v6728
    %v6730 = vand.u32 %v6729, 4294901760
    %6731 = vmatmul.mubr.f32.gmra.mrb[0].mxu0 %v6730
    %v6732 = vpop.f32.mrb[0].mxu0
    %v6733 = vadd.f32 %v6595, %v6732
    %v6734 = vpop.f32.mrb[0].mxu0
    %6735 = vmatprep.mubr.f32.mxu0 0.0
    %v6736 = vand.u32 %v6112, 4294901760
    %v6737 = vsub.f32 %v6112, %v6736
    %v6738 = vand.u32 %v6737, 4294901760
    %6739 = vmatmul.mubr.f32.gmra.mrb[0].mxu0 %v6738
    %v6740 = vpop.f32.mrb[0].mxu0
    %v6741 = vadd.f32 %v6602, %v6740
    %v6742 = vpop.f32.mrb[0].mxu0
    %6743 = vmatprep.mubr.f32.mxu0 0.0
    %v6744 = vand.u32 %v6113, 4294901760
    %v6745 = vsub.f32 %v6113, %v6744
    %v6746 = vand.u32 %v6745, 4294901760
    %6747 = vmatmul.mubr.f32.gmra.mrb[0].mxu0 %v6746
    %v6748 = vpop.f32.mrb[0].mxu0
    %v6749 = vadd.f32 %v6609, %v6748
    %v6750 = vpop.f32.mrb[0].mxu0
    %6751 = vmatprep.mubr.f32.mxu0 0.0
    %v6752 = vand.u32 %v6114, 4294901760
    %v6753 = vsub.f32 %v6114, %v6752
    %v6754 = vand.u32 %v6753, 4294901760
    %6755 = vmatmul.mubr.f32.gmra.mrb[0].mxu0 %v6754
    %v6756 = vpop.f32.mrb[0].mxu0
    %v6757 = vadd.f32 %v6616, %v6756
    %v6758 = vpop.f32.mrb[0].mxu0
    %6759 = vmatprep.mubr.f32.mxu0 0.0
    %v6760 = vand.u32 %v6115, 4294901760
    %v6761 = vsub.f32 %v6115, %v6760
    %v6762 = vand.u32 %v6761, 4294901760
    %6763 = vmatmul.mubr.f32.gmra.mrb[0].mxu0 %v6762
    %v6764 = vpop.f32.mrb[0].mxu0
    %v6765 = vadd.f32 %v6623, %v6764
    %v6766 = vpop.f32.mrb[0].mxu0
    %6767 = vmatprep.mubr.f32.mxu0 0.0
    %v6768 = vand.u32 %v6116, 4294901760
    %v6769 = vsub.f32 %v6116, %v6768
    %v6770 = vand.u32 %v6769, 4294901760
    %6771 = vmatmul.mubr.f32.gmra.mrb[0].mxu0 %v6770
    %v6772 = vpop.f32.mrb[0].mxu0
    %v6773 = vadd.f32 %v6630, %v6772
    %v6774 = vpop.f32.mrb[0].mxu0
    %6775 = vmatprep.mubr.f32.mxu0 0.0
    %v6776 = vand.u32 %v6117, 4294901760
    %v6777 = vsub.f32 %v6117, %v6776
    %v6778 = vand.u32 %v6777, 4294901760
    %6779 = vmatmul.mubr.f32.gmra.mrb[0].mxu0 %v6778
    %v6780 = vpop.f32.mrb[0].mxu0
    %v6781 = vadd.f32 %v6637, %v6780
    %v6782 = vpop.f32.mrb[0].mxu0
    %6783 = vmatprep.mubr.f32.mxu0 0.0
    %v6784 = vand.u32 %v6118, 4294901760
    %v6785 = vsub.f32 %v6118, %v6784
    %v6786 = vand.u32 %v6785, 4294901760
    %6787 = vmatmul.mubr.f32.gmra.mrb[0].mxu0 %v6786
    %v6788 = vpop.f32.mrb[0].mxu0
    %v6789 = vadd.f32 %v6644, %v6788
    %v6790 = vpop.f32.mrb[0].mxu0
    %6791 = vdwg.mxu0
    %6792 = vmatprep.subr.mxu0 0.0
    %v6793 = vand.u32 %v6120, 4294901760
    %v6794 = vsub.f32 %v6120, %v6793
    %v6795 = vand.u32 %v6794, 4294901760
    %6796 = vmatpush1.msra.mxu0 %v6795
    %6797 = vmatprep.subr.mxu0 0.0
    %v6798 = vand.u32 %v6121, 4294901760
    %v6799 = vsub.f32 %v6121, %v6798
    %v6800 = vand.u32 %v6799, 4294901760
    %6801 = vmatpush1.msra.mxu0 %v6800
    %6802 = vmatprep.subr.mxu0 0.0
    %v6803 = vand.u32 %v6122, 4294901760
    %v6804 = vsub.f32 %v6122, %v6803
    %v6805 = vand.u32 %v6804, 4294901760
    %6806 = vmatpush1.msra.mxu0 %v6805
    %6807 = vmatprep.subr.mxu0 0.0
    %v6808 = vand.u32 %v6123, 4294901760
    %v6809 = vsub.f32 %v6123, %v6808
    %v6810 = vand.u32 %v6809, 4294901760
    %6811 = vmatpush1.msra.mxu0 %v6810
    %6812 = vmatprep.subr.mxu0 0.0
    %v6813 = vand.u32 %v6124, 4294901760
    %v6814 = vsub.f32 %v6124, %v6813
    %v6815 = vand.u32 %v6814, 4294901760
    %6816 = vmatpush1.msra.mxu0 %v6815
    %6817 = vmatprep.subr.mxu0 0.0
    %v6818 = vand.u32 %v6125, 4294901760
    %v6819 = vsub.f32 %v6125, %v6818
    %v6820 = vand.u32 %v6819, 4294901760
    %6821 = vmatpush1.msra.mxu0 %v6820
    %6822 = vmatprep.subr.mxu0 0.0
    %v6823 = vand.u32 %v6126, 4294901760
    %v6824 = vsub.f32 %v6126, %v6823
    %v6825 = vand.u32 %v6824, 4294901760
    %6826 = vmatpush1.msra.mxu0 %v6825
    %6827 = vmatprep.subr.mxu0 0.0
    %v6828 = vand.u32 %v6127, 4294901760
    %v6829 = vsub.f32 %v6127, %v6828
    %v6830 = vand.u32 %v6829, 4294901760
    %6831 = vmatpush1.msra.mxu0 %v6830
    %6832 = vmatprep.subr.mxu0 0.0
    %v6833 = vand.u32 %v6128, 4294901760
    %v6834 = vsub.f32 %v6128, %v6833
    %v6835 = vand.u32 %v6834, 4294901760
    %6836 = vmatpush1.msra.mxu0 %v6835
    %6837 = vmatprep.subr.mxu0 0.0
    %v6838 = vand.u32 %v6129, 4294901760
    %v6839 = vsub.f32 %v6129, %v6838
    %v6840 = vand.u32 %v6839, 4294901760
    %6841 = vmatpush1.msra.mxu0 %v6840
    %6842 = vmatprep.subr.mxu0 0.0
    %v6843 = vand.u32 %v6130, 4294901760
    %v6844 = vsub.f32 %v6130, %v6843
    %v6845 = vand.u32 %v6844, 4294901760
    %6846 = vmatpush1.msra.mxu0 %v6845
    %6847 = vmatprep.subr.mxu0 0.0
    %v6848 = vand.u32 %v6131, 4294901760
    %v6849 = vsub.f32 %v6131, %v6848
    %v6850 = vand.u32 %v6849, 4294901760
    %6851 = vmatpush1.msra.mxu0 %v6850
    %6852 = vmatprep.subr.mxu0 0.0
    %v6853 = vand.u32 %v6132, 4294901760
    %v6854 = vsub.f32 %v6132, %v6853
    %v6855 = vand.u32 %v6854, 4294901760
    %6856 = vmatpush1.msra.mxu0 %v6855
    %6857 = vmatprep.subr.mxu0 0.0
    %v6858 = vand.u32 %v6133, 4294901760
    %v6859 = vsub.f32 %v6133, %v6858
    %v6860 = vand.u32 %v6859, 4294901760
    %6861 = vmatpush1.msra.mxu0 %v6860
    %6862 = vmatprep.subr.mxu0 0.0
    %v6863 = vand.u32 %v6134, 4294901760
    %v6864 = vsub.f32 %v6134, %v6863
    %v6865 = vand.u32 %v6864, 4294901760
    %6866 = vmatpush1.msra.mxu0 %v6865
    %6867 = vmatprep.subr.mxu0 0.0
    %v6868 = vand.u32 %v6135, 4294901760
    %v6869 = vsub.f32 %v6135, %v6868
    %v6870 = vand.u32 %v6869, 4294901760
    %6871 = vmatpush1.msra.mxu0 %v6870
    %6872 = vmatprep.subr.mxu0 0.0
    %6873 = vmatpush1.msra.mxu0 0.0
    %6874 = vmatprep.subr.mxu0 0.0
    %6875 = vmatpush1.msra.mxu0 0.0
    %6876 = vmatprep.subr.mxu0 0.0
    %6877 = vmatpush1.msra.mxu0 0.0
    %6878 = vmatprep.subr.mxu0 0.0
    %6879 = vmatpush1.msra.mxu0 0.0
    %6880 = vmatprep.subr.mxu0 0.0
    %6881 = vmatpush1.msra.mxu0 0.0
    %6882 = vmatprep.subr.mxu0 0.0
    %6883 = vmatpush1.msra.mxu0 0.0
    %6884 = vmatprep.subr.mxu0 0.0
    %6885 = vmatpush1.msra.mxu0 0.0
    %6886 = vmatprep.subr.mxu0 0.0
    %6887 = vmatpush1.msra.mxu0 0.0
    %6888 = vmatprep.subr.mxu0 0.0
    %6889 = vmatpush1.msra.mxu0 0.0
    %6890 = vmatprep.subr.mxu0 0.0
    %6891 = vmatpush1.msra.mxu0 0.0
    %6892 = vmatprep.subr.mxu0 0.0
    %6893 = vmatpush1.msra.mxu0 0.0
    %6894 = vmatprep.subr.mxu0 0.0
    %6895 = vmatpush1.msra.mxu0 0.0
    %6896 = vmatprep.subr.mxu0 0.0
    %6897 = vmatpush1.msra.mxu0 0.0
    %6898 = vmatprep.subr.mxu0 0.0
    %6899 = vmatpush1.msra.mxu0 0.0
    %6900 = vmatprep.subr.mxu0 0.0
    %6901 = vmatpush1.msra.mxu0 0.0
    %6902 = vmatprep.subr.mxu0 0.0
    %6903 = vmatpush1.msra.mxu0 0.0
    %6904 = vmatprep.mubr.f32.mxu0 0.0
    %v6905 = vand.u32 %v6111, 4294901760
    %6906 = vmatmul.mubr.f32.gmra.mrb[0].mxu0 %v6905
    %v6907 = vpop.f32.mrb[0].mxu0
    %v6908 = vadd.f32 %v6733, %v6907
    %v6909 = vpop.f32.mrb[0].mxu0
    %6910 = vmatprep.mubr.f32.mxu0 0.0
    %v6911 = vand.u32 %v6112, 4294901760
    %6912 = vmatmul.mubr.f32.gmra.mrb[0].mxu0 %v6911
    %v6913 = vpop.f32.mrb[0].mxu0
    %v6914 = vadd.f32 %v6741, %v6913
    %v6915 = vpop.f32.mrb[0].mxu0
    %6916 = vmatprep.mubr.f32.mxu0 0.0
    %v6917 = vand.u32 %v6113, 4294901760
    %6918 = vmatmul.mubr.f32.gmra.mrb[0].mxu0 %v6917
    %v6919 = vpop.f32.mrb[0].mxu0
    %v6920 = vadd.f32 %v6749, %v6919
    %v6921 = vpop.f32.mrb[0].mxu0
    %6922 = vmatprep.mubr.f32.mxu0 0.0
    %v6923 = vand.u32 %v6114, 4294901760
    %6924 = vmatmul.mubr.f32.gmra.mrb[0].mxu0 %v6923
    %v6925 = vpop.f32.mrb[0].mxu0
    %v6926 = vadd.f32 %v6757, %v6925
    %v6927 = vpop.f32.mrb[0].mxu0
    %6928 = vmatprep.mubr.f32.mxu0 0.0
    %v6929 = vand.u32 %v6115, 4294901760
    %6930 = vmatmul.mubr.f32.gmra.mrb[0].mxu0 %v6929
    %v6931 = vpop.f32.mrb[0].mxu0
    %v6932 = vadd.f32 %v6765, %v6931
    %v6933 = vpop.f32.mrb[0].mxu0
    %6934 = vmatprep.mubr.f32.mxu0 0.0
    %v6935 = vand.u32 %v6116, 4294901760
    %6936 = vmatmul.mubr.f32.gmra.mrb[0].mxu0 %v6935
    %v6937 = vpop.f32.mrb[0].mxu0
    %v6938 = vadd.f32 %v6773, %v6937
    %v6939 = vpop.f32.mrb[0].mxu0
    %6940 = vmatprep.mubr.f32.mxu0 0.0
    %v6941 = vand.u32 %v6117, 4294901760
    %6942 = vmatmul.mubr.f32.gmra.mrb[0].mxu0 %v6941
    %v6943 = vpop.f32.mrb[0].mxu0
    %v6944 = vadd.f32 %v6781, %v6943
    %v6945 = vpop.f32.mrb[0].mxu0
    %6946 = vmatprep.mubr.f32.mxu0 0.0
    %v6947 = vand.u32 %v6118, 4294901760
    %6948 = vmatmul.mubr.f32.gmra.mrb[0].mxu0 %v6947
    %v6949 = vpop.f32.mrb[0].mxu0
    %v6950 = vadd.f32 %v6789, %v6949
    %v6951 = vpop.f32.mrb[0].mxu0
    %6952 = vdwg.mxu0
    %6953 = vmatprep.subr.mxu0 0.0
    %v6954 = vand.u32 %v6120, 4294901760
    %6955 = vmatpush1.msra.mxu0 %v6954
    %6956 = vmatprep.subr.mxu0 0.0
    %v6957 = vand.u32 %v6121, 4294901760
    %6958 = vmatpush1.msra.mxu0 %v6957
    %6959 = vmatprep.subr.mxu0 0.0
    %v6960 = vand.u32 %v6122, 4294901760
    %6961 = vmatpush1.msra.mxu0 %v6960
    %6962 = vmatprep.subr.mxu0 0.0
    %v6963 = vand.u32 %v6123, 4294901760
    %6964 = vmatpush1.msra.mxu0 %v6963
    %6965 = vmatprep.subr.mxu0 0.0
    %v6966 = vand.u32 %v6124, 4294901760
    %6967 = vmatpush1.msra.mxu0 %v6966
    %6968 = vmatprep.subr.mxu0 0.0
    %v6969 = vand.u32 %v6125, 4294901760
    %6970 = vmatpush1.msra.mxu0 %v6969
    %6971 = vmatprep.subr.mxu0 0.0
    %v6972 = vand.u32 %v6126, 4294901760
    %6973 = vmatpush1.msra.mxu0 %v6972
    %6974 = vmatprep.subr.mxu0 0.0
    %v6975 = vand.u32 %v6127, 4294901760
    %6976 = vmatpush1.msra.mxu0 %v6975
    %6977 = vmatprep.subr.mxu0 0.0
    %v6978 = vand.u32 %v6128, 4294901760
    %6979 = vmatpush1.msra.mxu0 %v6978
    %6980 = vmatprep.subr.mxu0 0.0
    %v6981 = vand.u32 %v6129, 4294901760
    %6982 = vmatpush1.msra.mxu0 %v6981
    %6983 = vmatprep.subr.mxu0 0.0
    %v6984 = vand.u32 %v6130, 4294901760
    %6985 = vmatpush1.msra.mxu0 %v6984
    %6986 = vmatprep.subr.mxu0 0.0
    %v6987 = vand.u32 %v6131, 4294901760
    %6988 = vmatpush1.msra.mxu0 %v6987
    %6989 = vmatprep.subr.mxu0 0.0
    %v6990 = vand.u32 %v6132, 4294901760
    %6991 = vmatpush1.msra.mxu0 %v6990
    %6992 = vmatprep.subr.mxu0 0.0
    %v6993 = vand.u32 %v6133, 4294901760
    %6994 = vmatpush1.msra.mxu0 %v6993
    %6995 = vmatprep.subr.mxu0 0.0
    %v6996 = vand.u32 %v6134, 4294901760
    %6997 = vmatpush1.msra.mxu0 %v6996
    %6998 = vmatprep.subr.mxu0 0.0
    %v6999 = vand.u32 %v6135, 4294901760
    %7000 = vmatpush1.msra.mxu0 %v6999
    %7001 = vmatprep.subr.mxu0 0.0
    %7002 = vmatpush1.msra.mxu0 0.0
    %7003 = vmatprep.subr.mxu0 0.0
    %7004 = vmatpush1.msra.mxu0 0.0
    %7005 = vmatprep.subr.mxu0 0.0
    %7006 = vmatpush1.msra.mxu0 0.0
    %7007 = vmatprep.subr.mxu0 0.0
    %7008 = vmatpush1.msra.mxu0 0.0
    %7009 = vmatprep.subr.mxu0 0.0
    %7010 = vmatpush1.msra.mxu0 0.0
    %7011 = vmatprep.subr.mxu0 0.0
    %7012 = vmatpush1.msra.mxu0 0.0
    %7013 = vmatprep.subr.mxu0 0.0
    %7014 = vmatpush1.msra.mxu0 0.0
    %7015 = vmatprep.subr.mxu0 0.0
    %7016 = vmatpush1.msra.mxu0 0.0
    %7017 = vmatprep.subr.mxu0 0.0
    %7018 = vmatpush1.msra.mxu0 0.0
    %7019 = vmatprep.subr.mxu0 0.0
    %7020 = vmatpush1.msra.mxu0 0.0
    %7021 = vmatprep.subr.mxu0 0.0
    %7022 = vmatpush1.msra.mxu0 0.0
    %7023 = vmatprep.subr.mxu0 0.0
    %7024 = vmatpush1.msra.mxu0 0.0
    %7025 = vmatprep.subr.mxu0 0.0
    %7026 = vmatpush1.msra.mxu0 0.0
    %7027 = vmatprep.subr.mxu0 0.0
    %7028 = vmatpush1.msra.mxu0 0.0
    %7029 = vmatprep.subr.mxu0 0.0
    %7030 = vmatpush1.msra.mxu0 0.0
    %7031 = vmatprep.subr.mxu0 0.0
    %7032 = vmatpush1.msra.mxu0 0.0
    %7033 = vmatprep.mubr.f32.mxu0 0.0
    %v7034 = vand.u32 %v6111, 4294901760
    %7035 = vmatmul.mubr.f32.gmra.mrb[0].mxu0 %v7034
    %v7036 = vpop.f32.mrb[0].mxu0
    %v7037 = vadd.f32 %v6908, %v7036
    %v7038 = vpop.f32.mrb[0].mxu0
    %7039 = vmatprep.mubr.f32.mxu0 0.0
    %v7040 = vand.u32 %v6112, 4294901760
    %7041 = vmatmul.mubr.f32.gmra.mrb[0].mxu0 %v7040
    %v7042 = vpop.f32.mrb[0].mxu0
    %v7043 = vadd.f32 %v6914, %v7042
    %v7044 = vpop.f32.mrb[0].mxu0
    %7045 = vmatprep.mubr.f32.mxu0 0.0
    %v7046 = vand.u32 %v6113, 4294901760
    %7047 = vmatmul.mubr.f32.gmra.mrb[0].mxu0 %v7046
    %v7048 = vpop.f32.mrb[0].mxu0
    %v7049 = vadd.f32 %v6920, %v7048
    %v7050 = vpop.f32.mrb[0].mxu0
    %7051 = vmatprep.mubr.f32.mxu0 0.0
    %v7052 = vand.u32 %v6114, 4294901760
    %7053 = vmatmul.mubr.f32.gmra.mrb[0].mxu0 %v7052
    %v7054 = vpop.f32.mrb[0].mxu0
    %v7055 = vadd.f32 %v6926, %v7054
    %v7056 = vpop.f32.mrb[0].mxu0
    %7057 = vmatprep.mubr.f32.mxu0 0.0
    %v7058 = vand.u32 %v6115, 4294901760
    %7059 = vmatmul.mubr.f32.gmra.mrb[0].mxu0 %v7058
    %v7060 = vpop.f32.mrb[0].mxu0
    %v7061 = vadd.f32 %v6932, %v7060
    %v7062 = vpop.f32.mrb[0].mxu0
    %7063 = vmatprep.mubr.f32.mxu0 0.0
    %v7064 = vand.u32 %v6116, 4294901760
    %7065 = vmatmul.mubr.f32.gmra.mrb[0].mxu0 %v7064
    %v7066 = vpop.f32.mrb[0].mxu0
    %v7067 = vadd.f32 %v6938, %v7066
    %v7068 = vpop.f32.mrb[0].mxu0
    %7069 = vmatprep.mubr.f32.mxu0 0.0
    %v7070 = vand.u32 %v6117, 4294901760
    %7071 = vmatmul.mubr.f32.gmra.mrb[0].mxu0 %v7070
    %v7072 = vpop.f32.mrb[0].mxu0
    %v7073 = vadd.f32 %v6944, %v7072
    %v7074 = vpop.f32.mrb[0].mxu0
    %7075 = vmatprep.mubr.f32.mxu0 0.0
    %v7076 = vand.u32 %v6118, 4294901760
    %7077 = vmatmul.mubr.f32.gmra.mrb[0].mxu0 %v7076
    %v7078 = vpop.f32.mrb[0].mxu0
    %v7079 = vadd.f32 %v6950, %v7078
    %v7080 = vpop.f32.mrb[0].mxu0
    %7081 = vdwg.mxu0
    %v7082 = vsel %vm6019, %v7037, 0.0
    %v7083 = vsel %vm6020, %v7043, 0.0
    %v7084 = vsel %vm6021, %v7049, 0.0
    %v7085 = vsel %vm6022, %v7055, 0.0
    %v7086 = vsel %vm6023, %v7061, 0.0
    %v7087 = vsel %vm6024, %v7067, 0.0
    %v7088 = vsel %vm6025, %v7073, 0.0
    %v7089 = vsel %vm6026, %v7079, 0.0
    %v7090 = vadd.f32 %v7082, %v7083
    %v7091 = vadd.f32 %v7090, %v7084
    %v7092 = vadd.f32 %v7091, %v7085
    %v7093 = vadd.f32 %v7092, %v7086
    %v7094 = vadd.f32 %v7093, %v7087
    %v7095 = vadd.f32 %v7094, %v7088
    %v7096 = vadd.f32 %v7095, %v7089
    %v7097 = vrot.slane %v7096, 4
    %v7098 = vadd.f32 %v7096, %v7097
    %v7099 = vrot.slane %v7098, 2
    %v7100 = vadd.f32 %v7098, %v7099
    %v7101 = vrot.slane %v7100, 1
    %v7102 = vadd.f32 %v7100, %v7101
    %v7103 = vmul.f32 %v7102, 0.025
    %v7104 = vsub.f32 %v7037, %v7103
    %v7105 = vsub.f32 %v7043, %v7103
    %v7106 = vsub.f32 %v7049, %v7103
    %v7107 = vsub.f32 %v7055, %v7103
    %v7108 = vsub.f32 %v7061, %v7103
    %v7109 = vsub.f32 %v7067, %v7103
    %v7110 = vsub.f32 %v7073, %v7103
    %v7111 = vsub.f32 %v7079, %v7103
    %v7112 = vsel %vm6019, %v7104, 0.0
    %v7113 = vsel %vm6020, %v7105, 0.0
    %v7114 = vsel %vm6021, %v7106, 0.0
    %v7115 = vsel %vm6022, %v7107, 0.0
    %v7116 = vsel %vm6023, %v7108, 0.0
    %v7117 = vsel %vm6024, %v7109, 0.0
    %v7118 = vsel %vm6025, %v7110, 0.0
    %v7119 = vsel %vm6026, %v7111, 0.0
    %v7120 = vmul.f32 %v7112, %v7112
    %v7121 = vmul.f32 %v7113, %v7113
    %v7122 = vmul.f32 %v7114, %v7114
    %v7123 = vmul.f32 %v7115, %v7115
    %v7124 = vmul.f32 %v7116, %v7116
    %v7125 = vmul.f32 %v7117, %v7117
    %v7126 = vmul.f32 %v7118, %v7118
    %v7127 = vmul.f32 %v7119, %v7119
    %v7128 = vadd.f32 %v7120, %v7121
    %v7129 = vadd.f32 %v7128, %v7122
    %v7130 = vadd.f32 %v7129, %v7123
    %v7131 = vadd.f32 %v7130, %v7124
    %v7132 = vadd.f32 %v7131, %v7125
    %v7133 = vadd.f32 %v7132, %v7126
    %v7134 = vadd.f32 %v7133, %v7127
    %v7135 = vrot.slane %v7134, 4
    %v7136 = vadd.f32 %v7134, %v7135
    %v7137 = vrot.slane %v7136, 2
    %v7138 = vadd.f32 %v7136, %v7137
    %v7139 = vrot.slane %v7138, 1
    %v7140 = vadd.f32 %v7138, %v7139
    %v7141 = vmul.f32 %v7140, 0.025
    %v7142 = vadd.f32 %v7141, 1e-05
    %v7143 = vrsqrt.pop %v7142
    %v7144 = vmul.f32 %v7143, %v77
    %v7145 = vmul.f32 %v7103, %v7144
    %v7147 = vrot.slane %v7145, 7
    %v7149 = vsub.f32 %v77, %v7147
    %v7150 = vlaneseq
    %v7151 = vshrl.u32 %v7150, 7
    %v7152 = vsub.s32 6, %v7151
    %v7153 = vrot.slane %v7144, %v7152
    %v7154 = vmul.f32 %v7037, %v7153
    %v7155 = vmul.f32 %v7043, %v7153
    %v7156 = vmul.f32 %v7049, %v7153
    %v7157 = vmul.f32 %v7055, %v7153
    %v7158 = vmul.f32 %v7061, %v7153
    %v7159 = vmul.f32 %v7067, %v7153
    %v7160 = vmul.f32 %v7073, %v7153
    %v7161 = vmul.f32 %v7079, %v7153
    %v7162 = vlaneseq
    %v7163 = vshrl.u32 %v7162, 7
    %v7164 = vsub.s32 7, %v7163
    %v7165 = vrot.slane %v7149, %v7164
    %v7166 = vadd.f32 %v7154, %v7165
    %v7167 = vadd.f32 %v7155, %v7165
    %v7168 = vadd.f32 %v7156, %v7165
    %v7169 = vadd.f32 %v7157, %v7165
    %v7170 = vadd.f32 %v7158, %v7165
    %v7171 = vadd.f32 %v7159, %v7165
    %v7172 = vadd.f32 %v7160, %v7165
    %v7173 = vadd.f32 %v7161, %v7165
    %v7174 = vmax.f32 %v7166, 0.0
    %v7175 = vmax.f32 %v7167, 0.0
    %v7176 = vmax.f32 %v7168, 0.0
    %v7177 = vmax.f32 %v7169, 0.0
    %v7178 = vmax.f32 %v7170, 0.0
    %v7179 = vmax.f32 %v7171, 0.0
    %v7180 = vmax.f32 %v7172, 0.0
    %v7181 = vmax.f32 %v7173, 0.0
    %s7182 = scalar_lea.vmem [#allocation9], 768
    %v7183 = vld [vmem:[%s7182] sm:$0xff]
    %v7184 = vld [vmem:[%s7182 + $0x8] sm:$0xff]
    %v7185 = vld [vmem:[%s7182 + $0x10] sm:$0xff]
    %v7186 = vld [vmem:[%s7182 + $0x18] sm:$0xff]
    %v7187 = vld [vmem:[%s7182 + $0x20] sm:$0xff]
    %v7188 = vld [vmem:[%s7182 + $0x28] sm:$0xff]
    %v7189 = vld [vmem:[%s7182 + $0x30] sm:$0xff]
    %v7190 = vld [vmem:[%s7182 + $0x38] sm:$0xff]
    %v7191 = vld [vmem:[%s7182 + $0x40] sm:$0xff]
    %v7192 = vld [vmem:[%s7182 + $0x48] sm:$0xff]
    %v7193 = vld [vmem:[%s7182 + $0x50] sm:$0xff]
    %v7194 = vld [vmem:[%s7182 + $0x58] sm:$0xff]
    %v7195 = vld [vmem:[%s7182 + $0x60] sm:$0xff]
    %v7196 = vld [vmem:[%s7182 + $0x68] sm:$0xff]
    %v7197 = vld [vmem:[%s7182 + $0x70] sm:$0xff]
    %v7198 = vld [vmem:[%s7182 + $0x78] sm:$0xff]
    %v7199 = vlaneseq
    %v7200 = vshrl.u32 %v7199, 7
    %v7201 = vsub.s32 0, %v7200
    %v7202 = vrot.slane %v78, %v7201
    %7203 = vmatprep.subr.mxu0 0.0
    %v7204 = vand.u32 %v7183, 4294901760
    %7205 = vmatpush1.msra.mxu0 %v7204
    %7206 = vmatprep.subr.mxu0 0.0
    %v7207 = vand.u32 %v7184, 4294901760
    %7208 = vmatpush1.msra.mxu0 %v7207
    %7209 = vmatprep.subr.mxu0 0.0
    %v7210 = vand.u32 %v7185, 4294901760
    %7211 = vmatpush1.msra.mxu0 %v7210
    %7212 = vmatprep.subr.mxu0 0.0
    %v7213 = vand.u32 %v7186, 4294901760
    %7214 = vmatpush1.msra.mxu0 %v7213
    %7215 = vmatprep.subr.mxu0 0.0
    %v7216 = vand.u32 %v7187, 4294901760
    %7217 = vmatpush1.msra.mxu0 %v7216
    %7218 = vmatprep.subr.mxu0 0.0
    %v7219 = vand.u32 %v7188, 4294901760
    %7220 = vmatpush1.msra.mxu0 %v7219
    %7221 = vmatprep.subr.mxu0 0.0
    %v7222 = vand.u32 %v7189, 4294901760
    %7223 = vmatpush1.msra.mxu0 %v7222
    %7224 = vmatprep.subr.mxu0 0.0
    %v7225 = vand.u32 %v7190, 4294901760
    %7226 = vmatpush1.msra.mxu0 %v7225
    %7227 = vmatprep.subr.mxu0 0.0
    %v7228 = vand.u32 %v7191, 4294901760
    %7229 = vmatpush1.msra.mxu0 %v7228
    %7230 = vmatprep.subr.mxu0 0.0
    %v7231 = vand.u32 %v7192, 4294901760
    %7232 = vmatpush1.msra.mxu0 %v7231
    %7233 = vmatprep.subr.mxu0 0.0
    %v7234 = vand.u32 %v7193, 4294901760
    %7235 = vmatpush1.msra.mxu0 %v7234
    %7236 = vmatprep.subr.mxu0 0.0
    %v7237 = vand.u32 %v7194, 4294901760
    %7238 = vmatpush1.msra.mxu0 %v7237
    %7239 = vmatprep.subr.mxu0 0.0
    %v7240 = vand.u32 %v7195, 4294901760
    %7241 = vmatpush1.msra.mxu0 %v7240
    %7242 = vmatprep.subr.mxu0 0.0
    %v7243 = vand.u32 %v7196, 4294901760
    %7244 = vmatpush1.msra.mxu0 %v7243
    %7245 = vmatprep.subr.mxu0 0.0
    %v7246 = vand.u32 %v7197, 4294901760
    %7247 = vmatpush1.msra.mxu0 %v7246
    %7248 = vmatprep.subr.mxu0 0.0
    %v7249 = vand.u32 %v7198, 4294901760
    %7250 = vmatpush1.msra.mxu0 %v7249
    %7251 = vmatprep.subr.mxu0 0.0
    %7252 = vmatpush1.msra.mxu0 0.0
    %7253 = vmatprep.subr.mxu0 0.0
    %7254 = vmatpush1.msra.mxu0 0.0
    %7255 = vmatprep.subr.mxu0 0.0
    %7256 = vmatpush1.msra.mxu0 0.0
    %7257 = vmatprep.subr.mxu0 0.0
    %7258 = vmatpush1.msra.mxu0 0.0
    %7259 = vmatprep.subr.mxu0 0.0
    %7260 = vmatpush1.msra.mxu0 0.0
    %7261 = vmatprep.subr.mxu0 0.0
    %7262 = vmatpush1.msra.mxu0 0.0
    %7263 = vmatprep.subr.mxu0 0.0
    %7264 = vmatpush1.msra.mxu0 0.0
    %7265 = vmatprep.subr.mxu0 0.0
    %7266 = vmatpush1.msra.mxu0 0.0
    %7267 = vmatprep.subr.mxu0 0.0
    %7268 = vmatpush1.msra.mxu0 0.0
    %7269 = vmatprep.subr.mxu0 0.0
    %7270 = vmatpush1.msra.mxu0 0.0
    %7271 = vmatprep.subr.mxu0 0.0
    %7272 = vmatpush1.msra.mxu0 0.0
    %7273 = vmatprep.subr.mxu0 0.0
    %7274 = vmatpush1.msra.mxu0 0.0
    %7275 = vmatprep.subr.mxu0 0.0
    %7276 = vmatpush1.msra.mxu0 0.0
    %7277 = vmatprep.subr.mxu0 0.0
    %7278 = vmatpush1.msra.mxu0 0.0
    %7279 = vmatprep.subr.mxu0 0.0
    %7280 = vmatpush1.msra.mxu0 0.0
    %7281 = vmatprep.subr.mxu0 0.0
    %7282 = vmatpush1.msra.mxu0 0.0
    %7283 = vmatprep.mubr.f32.mxu0 0.0
    %v7284 = vand.u32 %v7174, 4294901760
    %v7285 = vsub.f32 %v7174, %v7284
    %v7286 = vand.u32 %v7285, 4294901760
    %v7287 = vsub.f32 %v7285, %v7286
    %v7288 = vand.u32 %v7287, 4294901760
    %7289 = vmatmul.mubr.f32.gmra.mrb[0].mxu0 %v7288
    %v7290 = vpop.f32.mrb[0].mxu0
    %v7291 = vadd.f32 %v7202, %v7290
    %v7292 = vpop.f32.mrb[0].mxu0
    %7293 = vmatprep.mubr.f32.mxu0 0.0
    %v7294 = vand.u32 %v7175, 4294901760
    %v7295 = vsub.f32 %v7175, %v7294
    %v7296 = vand.u32 %v7295, 4294901760
    %v7297 = vsub.f32 %v7295, %v7296
    %v7298 = vand.u32 %v7297, 4294901760
    %7299 = vmatmul.mubr.f32.gmra.mrb[0].mxu0 %v7298
    %v7300 = vpop.f32.mrb[0].mxu0
    %v7301 = vadd.f32 %v7202, %v7300
    %v7302 = vpop.f32.mrb[0].mxu0
    %7303 = vmatprep.mubr.f32.mxu0 0.0
    %v7304 = vand.u32 %v7176, 4294901760
    %v7305 = vsub.f32 %v7176, %v7304
    %v7306 = vand.u32 %v7305, 4294901760
    %v7307 = vsub.f32 %v7305, %v7306
    %v7308 = vand.u32 %v7307, 4294901760
    %7309 = vmatmul.mubr.f32.gmra.mrb[0].mxu0 %v7308
    %v7310 = vpop.f32.mrb[0].mxu0
    %v7311 = vadd.f32 %v7202, %v7310
    %v7312 = vpop.f32.mrb[0].mxu0
    %7313 = vmatprep.mubr.f32.mxu0 0.0
    %v7314 = vand.u32 %v7177, 4294901760
    %v7315 = vsub.f32 %v7177, %v7314
    %v7316 = vand.u32 %v7315, 4294901760
    %v7317 = vsub.f32 %v7315, %v7316
    %v7318 = vand.u32 %v7317, 4294901760
    %7319 = vmatmul.mubr.f32.gmra.mrb[0].mxu0 %v7318
    %v7320 = vpop.f32.mrb[0].mxu0
    %v7321 = vadd.f32 %v7202, %v7320
    %v7322 = vpop.f32.mrb[0].mxu0
    %7323 = vmatprep.mubr.f32.mxu0 0.0
    %v7324 = vand.u32 %v7178, 4294901760
    %v7325 = vsub.f32 %v7178, %v7324
    %v7326 = vand.u32 %v7325, 4294901760
    %v7327 = vsub.f32 %v7325, %v7326
    %v7328 = vand.u32 %v7327, 4294901760
    %7329 = vmatmul.mubr.f32.gmra.mrb[0].mxu0 %v7328
    %v7330 = vpop.f32.mrb[0].mxu0
    %v7331 = vadd.f32 %v7202, %v7330
    %v7332 = vpop.f32.mrb[0].mxu0
    %7333 = vmatprep.mubr.f32.mxu0 0.0
    %v7334 = vand.u32 %v7179, 4294901760
    %v7335 = vsub.f32 %v7179, %v7334
    %v7336 = vand.u32 %v7335, 4294901760
    %v7337 = vsub.f32 %v7335, %v7336
    %v7338 = vand.u32 %v7337, 4294901760
    %7339 = vmatmul.mubr.f32.gmra.mrb[0].mxu0 %v7338
    %v7340 = vpop.f32.mrb[0].mxu0
    %v7341 = vadd.f32 %v7202, %v7340
    %v7342 = vpop.f32.mrb[0].mxu0
    %7343 = vmatprep.mubr.f32.mxu0 0.0
    %v7344 = vand.u32 %v7180, 4294901760
    %v7345 = vsub.f32 %v7180, %v7344
    %v7346 = vand.u32 %v7345, 4294901760
    %v7347 = vsub.f32 %v7345, %v7346
    %v7348 = vand.u32 %v7347, 4294901760
    %7349 = vmatmul.mubr.f32.gmra.mrb[0].mxu0 %v7348
    %v7350 = vpop.f32.mrb[0].mxu0
    %v7351 = vadd.f32 %v7202, %v7350
    %v7352 = vpop.f32.mrb[0].mxu0
    %7353 = vmatprep.mubr.f32.mxu0 0.0
    %v7354 = vand.u32 %v7181, 4294901760
    %v7355 = vsub.f32 %v7181, %v7354
    %v7356 = vand.u32 %v7355, 4294901760
    %v7357 = vsub.f32 %v7355, %v7356
    %v7358 = vand.u32 %v7357, 4294901760
    %7359 = vmatmul.mubr.f32.gmra.mrb[0].mxu0 %v7358
    %v7360 = vpop.f32.mrb[0].mxu0
    %v7361 = vadd.f32 %v7202, %v7360
    %v7362 = vpop.f32.mrb[0].mxu0
    %7363 = vdwg.mxu0
    %7364 = vmatprep.subr.mxu0 0.0
    %v7365 = vand.u32 %v7183, 4294901760
    %v7366 = vsub.f32 %v7183, %v7365
    %v7367 = vand.u32 %v7366, 4294901760
    %v7368 = vsub.f32 %v7366, %v7367
    %v7369 = vand.u32 %v7368, 4294901760
    %7370 = vmatpush1.msra.mxu0 %v7369
    %7371 = vmatprep.subr.mxu0 0.0
    %v7372 = vand.u32 %v7184, 4294901760
    %v7373 = vsub.f32 %v7184, %v7372
    %v7374 = vand.u32 %v7373, 4294901760
    %v7375 = vsub.f32 %v7373, %v7374
    %v7376 = vand.u32 %v7375, 4294901760
    %7377 = vmatpush1.msra.mxu0 %v7376
    %7378 = vmatprep.subr.mxu0 0.0
    %v7379 = vand.u32 %v7185, 4294901760
    %v7380 = vsub.f32 %v7185, %v7379
    %v7381 = vand.u32 %v7380, 4294901760
    %v7382 = vsub.f32 %v7380, %v7381
    %v7383 = vand.u32 %v7382, 4294901760
    %7384 = vmatpush1.msra.mxu0 %v7383
    %7385 = vmatprep.subr.mxu0 0.0
    %v7386 = vand.u32 %v7186, 4294901760
    %v7387 = vsub.f32 %v7186, %v7386
    %v7388 = vand.u32 %v7387, 4294901760
    %v7389 = vsub.f32 %v7387, %v7388
    %v7390 = vand.u32 %v7389, 4294901760
    %7391 = vmatpush1.msra.mxu0 %v7390
    %7392 = vmatprep.subr.mxu0 0.0
    %v7393 = vand.u32 %v7187, 4294901760
    %v7394 = vsub.f32 %v7187, %v7393
    %v7395 = vand.u32 %v7394, 4294901760
    %v7396 = vsub.f32 %v7394, %v7395
    %v7397 = vand.u32 %v7396, 4294901760
    %7398 = vmatpush1.msra.mxu0 %v7397
    %7399 = vmatprep.subr.mxu0 0.0
    %v7400 = vand.u32 %v7188, 4294901760
    %v7401 = vsub.f32 %v7188, %v7400
    %v7402 = vand.u32 %v7401, 4294901760
    %v7403 = vsub.f32 %v7401, %v7402
    %v7404 = vand.u32 %v7403, 4294901760
    %7405 = vmatpush1.msra.mxu0 %v7404
    %7406 = vmatprep.subr.mxu0 0.0
    %v7407 = vand.u32 %v7189, 4294901760
    %v7408 = vsub.f32 %v7189, %v7407
    %v7409 = vand.u32 %v7408, 4294901760
    %v7410 = vsub.f32 %v7408, %v7409
    %v7411 = vand.u32 %v7410, 4294901760
    %7412 = vmatpush1.msra.mxu0 %v7411
    %7413 = vmatprep.subr.mxu0 0.0
    %v7414 = vand.u32 %v7190, 4294901760
    %v7415 = vsub.f32 %v7190, %v7414
    %v7416 = vand.u32 %v7415, 4294901760
    %v7417 = vsub.f32 %v7415, %v7416
    %v7418 = vand.u32 %v7417, 4294901760
    %7419 = vmatpush1.msra.mxu0 %v7418
    %7420 = vmatprep.subr.mxu0 0.0
    %v7421 = vand.u32 %v7191, 4294901760
    %v7422 = vsub.f32 %v7191, %v7421
    %v7423 = vand.u32 %v7422, 4294901760
    %v7424 = vsub.f32 %v7422, %v7423
    %v7425 = vand.u32 %v7424, 4294901760
    %7426 = vmatpush1.msra.mxu0 %v7425
    %7427 = vmatprep.subr.mxu0 0.0
    %v7428 = vand.u32 %v7192, 4294901760
    %v7429 = vsub.f32 %v7192, %v7428
    %v7430 = vand.u32 %v7429, 4294901760
    %v7431 = vsub.f32 %v7429, %v7430
    %v7432 = vand.u32 %v7431, 4294901760
    %7433 = vmatpush1.msra.mxu0 %v7432
    %7434 = vmatprep.subr.mxu0 0.0
    %v7435 = vand.u32 %v7193, 4294901760
    %v7436 = vsub.f32 %v7193, %v7435
    %v7437 = vand.u32 %v7436, 4294901760
    %v7438 = vsub.f32 %v7436, %v7437
    %v7439 = vand.u32 %v7438, 4294901760
    %7440 = vmatpush1.msra.mxu0 %v7439
    %7441 = vmatprep.subr.mxu0 0.0
    %v7442 = vand.u32 %v7194, 4294901760
    %v7443 = vsub.f32 %v7194, %v7442
    %v7444 = vand.u32 %v7443, 4294901760
    %v7445 = vsub.f32 %v7443, %v7444
    %v7446 = vand.u32 %v7445, 4294901760
    %7447 = vmatpush1.msra.mxu0 %v7446
    %7448 = vmatprep.subr.mxu0 0.0
    %v7449 = vand.u32 %v7195, 4294901760
    %v7450 = vsub.f32 %v7195, %v7449
    %v7451 = vand.u32 %v7450, 4294901760
    %v7452 = vsub.f32 %v7450, %v7451
    %v7453 = vand.u32 %v7452, 4294901760
    %7454 = vmatpush1.msra.mxu0 %v7453
    %7455 = vmatprep.subr.mxu0 0.0
    %v7456 = vand.u32 %v7196, 4294901760
    %v7457 = vsub.f32 %v7196, %v7456
    %v7458 = vand.u32 %v7457, 4294901760
    %v7459 = vsub.f32 %v7457, %v7458
    %v7460 = vand.u32 %v7459, 4294901760
    %7461 = vmatpush1.msra.mxu0 %v7460
    %7462 = vmatprep.subr.mxu0 0.0
    %v7463 = vand.u32 %v7197, 4294901760
    %v7464 = vsub.f32 %v7197, %v7463
    %v7465 = vand.u32 %v7464, 4294901760
    %v7466 = vsub.f32 %v7464, %v7465
    %v7467 = vand.u32 %v7466, 4294901760
    %7468 = vmatpush1.msra.mxu0 %v7467
    %7469 = vmatprep.subr.mxu0 0.0
    %v7470 = vand.u32 %v7198, 4294901760
    %v7471 = vsub.f32 %v7198, %v7470
    %v7472 = vand.u32 %v7471, 4294901760
    %v7473 = vsub.f32 %v7471, %v7472
    %v7474 = vand.u32 %v7473, 4294901760
    %7475 = vmatpush1.msra.mxu0 %v7474
    %7476 = vmatprep.subr.mxu0 0.0
    %7477 = vmatpush1.msra.mxu0 0.0
    %7478 = vmatprep.subr.mxu0 0.0
    %7479 = vmatpush1.msra.mxu0 0.0
    %7480 = vmatprep.subr.mxu0 0.0
    %7481 = vmatpush1.msra.mxu0 0.0
    %7482 = vmatprep.subr.mxu0 0.0
    %7483 = vmatpush1.msra.mxu0 0.0
    %7484 = vmatprep.subr.mxu0 0.0
    %7485 = vmatpush1.msra.mxu0 0.0
    %7486 = vmatprep.subr.mxu0 0.0
    %7487 = vmatpush1.msra.mxu0 0.0
    %7488 = vmatprep.subr.mxu0 0.0
    %7489 = vmatpush1.msra.mxu0 0.0
    %7490 = vmatprep.subr.mxu0 0.0
    %7491 = vmatpush1.msra.mxu0 0.0
    %7492 = vmatprep.subr.mxu0 0.0
    %7493 = vmatpush1.msra.mxu0 0.0
    %7494 = vmatprep.subr.mxu0 0.0
    %7495 = vmatpush1.msra.mxu0 0.0
    %7496 = vmatprep.subr.mxu0 0.0
    %7497 = vmatpush1.msra.mxu0 0.0
    %7498 = vmatprep.subr.mxu0 0.0
    %7499 = vmatpush1.msra.mxu0 0.0
    %7500 = vmatprep.subr.mxu0 0.0
    %7501 = vmatpush1.msra.mxu0 0.0
    %7502 = vmatprep.subr.mxu0 0.0
    %7503 = vmatpush1.msra.mxu0 0.0
    %7504 = vmatprep.subr.mxu0 0.0
    %7505 = vmatpush1.msra.mxu0 0.0
    %7506 = vmatprep.subr.mxu0 0.0
    %7507 = vmatpush1.msra.mxu0 0.0
    %7508 = vmatprep.mubr.f32.mxu0 0.0
    %v7509 = vand.u32 %v7174, 4294901760
    %7510 = vmatmul.mubr.f32.gmra.mrb[0].mxu0 %v7509
    %v7511 = vpop.f32.mrb[0].mxu0
    %v7512 = vadd.f32 %v7291, %v7511
    %v7513 = vpop.f32.mrb[0].mxu0
    %7514 = vmatprep.mubr.f32.mxu0 0.0
    %v7515 = vand.u32 %v7175, 4294901760
    %7516 = vmatmul.mubr.f32.gmra.mrb[0].mxu0 %v7515
    %v7517 = vpop.f32.mrb[0].mxu0
    %v7518 = vadd.f32 %v7301, %v7517
    %v7519 = vpop.f32.mrb[0].mxu0
    %7520 = vmatprep.mubr.f32.mxu0 0.0
    %v7521 = vand.u32 %v7176, 4294901760
    %7522 = vmatmul.mubr.f32.gmra.mrb[0].mxu0 %v7521
    %v7523 = vpop.f32.mrb[0].mxu0
    %v7524 = vadd.f32 %v7311, %v7523
    %v7525 = vpop.f32.mrb[0].mxu0
    %7526 = vmatprep.mubr.f32.mxu0 0.0
    %v7527 = vand.u32 %v7177, 4294901760
    %7528 = vmatmul.mubr.f32.gmra.mrb[0].mxu0 %v7527
    %v7529 = vpop.f32.mrb[0].mxu0
    %v7530 = vadd.f32 %v7321, %v7529
    %v7531 = vpop.f32.mrb[0].mxu0
    %7532 = vmatprep.mubr.f32.mxu0 0.0
    %v7533 = vand.u32 %v7178, 4294901760
    %7534 = vmatmul.mubr.f32.gmra.mrb[0].mxu0 %v7533
    %v7535 = vpop.f32.mrb[0].mxu0
    %v7536 = vadd.f32 %v7331, %v7535
    %v7537 = vpop.f32.mrb[0].mxu0
    %7538 = vmatprep.mubr.f32.mxu0 0.0
    %v7539 = vand.u32 %v7179, 4294901760
    %7540 = vmatmul.mubr.f32.gmra.mrb[0].mxu0 %v7539
    %v7541 = vpop.f32.mrb[0].mxu0
    %v7542 = vadd.f32 %v7341, %v7541
    %v7543 = vpop.f32.mrb[0].mxu0
    %7544 = vmatprep.mubr.f32.mxu0 0.0
    %v7545 = vand.u32 %v7180, 4294901760
    %7546 = vmatmul.mubr.f32.gmra.mrb[0].mxu0 %v7545
    %v7547 = vpop.f32.mrb[0].mxu0
    %v7548 = vadd.f32 %v7351, %v7547
    %v7549 = vpop.f32.mrb[0].mxu0
    %7550 = vmatprep.mubr.f32.mxu0 0.0
    %v7551 = vand.u32 %v7181, 4294901760
    %7552 = vmatmul.mubr.f32.gmra.mrb[0].mxu0 %v7551
    %v7553 = vpop.f32.mrb[0].mxu0
    %v7554 = vadd.f32 %v7361, %v7553
    %v7555 = vpop.f32.mrb[0].mxu0
    %7556 = vdwg.mxu0
    %7557 = vmatprep.subr.mxu0 0.0
    %v7558 = vand.u32 %v7183, 4294901760
    %v7559 = vsub.f32 %v7183, %v7558
    %7560 = vmatpush1.msra.mxu0 %v7559
    %7561 = vmatprep.subr.mxu0 0.0
    %v7562 = vand.u32 %v7184, 4294901760
    %v7563 = vsub.f32 %v7184, %v7562
    %7564 = vmatpush1.msra.mxu0 %v7563
    %7565 = vmatprep.subr.mxu0 0.0
    %v7566 = vand.u32 %v7185, 4294901760
    %v7567 = vsub.f32 %v7185, %v7566
    %7568 = vmatpush1.msra.mxu0 %v7567
    %7569 = vmatprep.subr.mxu0 0.0
    %v7570 = vand.u32 %v7186, 4294901760
    %v7571 = vsub.f32 %v7186, %v7570
    %7572 = vmatpush1.msra.mxu0 %v7571
    %7573 = vmatprep.subr.mxu0 0.0
    %v7574 = vand.u32 %v7187, 4294901760
    %v7575 = vsub.f32 %v7187, %v7574
    %7576 = vmatpush1.msra.mxu0 %v7575
    %7577 = vmatprep.subr.mxu0 0.0
    %v7578 = vand.u32 %v7188, 4294901760
    %v7579 = vsub.f32 %v7188, %v7578
    %7580 = vmatpush1.msra.mxu0 %v7579
    %7581 = vmatprep.subr.mxu0 0.0
    %v7582 = vand.u32 %v7189, 4294901760
    %v7583 = vsub.f32 %v7189, %v7582
    %7584 = vmatpush1.msra.mxu0 %v7583
    %7585 = vmatprep.subr.mxu0 0.0
    %v7586 = vand.u32 %v7190, 4294901760
    %v7587 = vsub.f32 %v7190, %v7586
    %7588 = vmatpush1.msra.mxu0 %v7587
    %7589 = vmatprep.subr.mxu0 0.0
    %v7590 = vand.u32 %v7191, 4294901760
    %v7591 = vsub.f32 %v7191, %v7590
    %7592 = vmatpush1.msra.mxu0 %v7591
    %7593 = vmatprep.subr.mxu0 0.0
    %v7594 = vand.u32 %v7192, 4294901760
    %v7595 = vsub.f32 %v7192, %v7594
    %7596 = vmatpush1.msra.mxu0 %v7595
    %7597 = vmatprep.subr.mxu0 0.0
    %v7598 = vand.u32 %v7193, 4294901760
    %v7599 = vsub.f32 %v7193, %v7598
    %7600 = vmatpush1.msra.mxu0 %v7599
    %7601 = vmatprep.subr.mxu0 0.0
    %v7602 = vand.u32 %v7194, 4294901760
    %v7603 = vsub.f32 %v7194, %v7602
    %7604 = vmatpush1.msra.mxu0 %v7603
    %7605 = vmatprep.subr.mxu0 0.0
    %v7606 = vand.u32 %v7195, 4294901760
    %v7607 = vsub.f32 %v7195, %v7606
    %7608 = vmatpush1.msra.mxu0 %v7607
    %7609 = vmatprep.subr.mxu0 0.0
    %v7610 = vand.u32 %v7196, 4294901760
    %v7611 = vsub.f32 %v7196, %v7610
    %7612 = vmatpush1.msra.mxu0 %v7611
    %7613 = vmatprep.subr.mxu0 0.0
    %v7614 = vand.u32 %v7197, 4294901760
    %v7615 = vsub.f32 %v7197, %v7614
    %7616 = vmatpush1.msra.mxu0 %v7615
    %7617 = vmatprep.subr.mxu0 0.0
    %v7618 = vand.u32 %v7198, 4294901760
    %v7619 = vsub.f32 %v7198, %v7618
    %7620 = vmatpush1.msra.mxu0 %v7619
    %7621 = vmatprep.subr.mxu0 0.0
    %7622 = vmatpush1.msra.mxu0 0.0
    %7623 = vmatprep.subr.mxu0 0.0
    %7624 = vmatpush1.msra.mxu0 0.0
    %7625 = vmatprep.subr.mxu0 0.0
    %7626 = vmatpush1.msra.mxu0 0.0
    %7627 = vmatprep.subr.mxu0 0.0
    %7628 = vmatpush1.msra.mxu0 0.0
    %7629 = vmatprep.subr.mxu0 0.0
    %7630 = vmatpush1.msra.mxu0 0.0
    %7631 = vmatprep.subr.mxu0 0.0
    %7632 = vmatpush1.msra.mxu0 0.0
    %7633 = vmatprep.subr.mxu0 0.0
    %7634 = vmatpush1.msra.mxu0 0.0
    %7635 = vmatprep.subr.mxu0 0.0
    %7636 = vmatpush1.msra.mxu0 0.0
    %7637 = vmatprep.subr.mxu0 0.0
    %7638 = vmatpush1.msra.mxu0 0.0
    %7639 = vmatprep.subr.mxu0 0.0
    %7640 = vmatpush1.msra.mxu0 0.0
    %7641 = vmatprep.subr.mxu0 0.0
    %7642 = vmatpush1.msra.mxu0 0.0
    %7643 = vmatprep.subr.mxu0 0.0
    %7644 = vmatpush1.msra.mxu0 0.0
    %7645 = vmatprep.subr.mxu0 0.0
    %7646 = vmatpush1.msra.mxu0 0.0
    %7647 = vmatprep.subr.mxu0 0.0
    %7648 = vmatpush1.msra.mxu0 0.0
    %7649 = vmatprep.subr.mxu0 0.0
    %7650 = vmatpush1.msra.mxu0 0.0
    %7651 = vmatprep.subr.mxu0 0.0
    %7652 = vmatpush1.msra.mxu0 0.0
    %7653 = vmatprep.mubr.f32.mxu0 0.0
    %v7654 = vand.u32 %v7174, 4294901760
    %v7655 = vsub.f32 %v7174, %v7654
    %7656 = vmatmul.mubr.f32.gmra.mrb[0].mxu0 %v7655
    %v7657 = vpop.f32.mrb[0].mxu0
    %v7658 = vadd.f32 %v7512, %v7657
    %v7659 = vpop.f32.mrb[0].mxu0
    %7660 = vmatprep.mubr.f32.mxu0 0.0
    %v7661 = vand.u32 %v7175, 4294901760
    %v7662 = vsub.f32 %v7175, %v7661
    %7663 = vmatmul.mubr.f32.gmra.mrb[0].mxu0 %v7662
    %v7664 = vpop.f32.mrb[0].mxu0
    %v7665 = vadd.f32 %v7518, %v7664
    %v7666 = vpop.f32.mrb[0].mxu0
    %7667 = vmatprep.mubr.f32.mxu0 0.0
    %v7668 = vand.u32 %v7176, 4294901760
    %v7669 = vsub.f32 %v7176, %v7668
    %7670 = vmatmul.mubr.f32.gmra.mrb[0].mxu0 %v7669
    %v7671 = vpop.f32.mrb[0].mxu0
    %v7672 = vadd.f32 %v7524, %v7671
    %v7673 = vpop.f32.mrb[0].mxu0
    %7674 = vmatprep.mubr.f32.mxu0 0.0
    %v7675 = vand.u32 %v7177, 4294901760
    %v7676 = vsub.f32 %v7177, %v7675
    %7677 = vmatmul.mubr.f32.gmra.mrb[0].mxu0 %v7676
    %v7678 = vpop.f32.mrb[0].mxu0
    %v7679 = vadd.f32 %v7530, %v7678
    %v7680 = vpop.f32.mrb[0].mxu0
    %7681 = vmatprep.mubr.f32.mxu0 0.0
    %v7682 = vand.u32 %v7178, 4294901760
    %v7683 = vsub.f32 %v7178, %v7682
    %7684 = vmatmul.mubr.f32.gmra.mrb[0].mxu0 %v7683
    %v7685 = vpop.f32.mrb[0].mxu0
    %v7686 = vadd.f32 %v7536, %v7685
    %v7687 = vpop.f32.mrb[0].mxu0
    %7688 = vmatprep.mubr.f32.mxu0 0.0
    %v7689 = vand.u32 %v7179, 4294901760
    %v7690 = vsub.f32 %v7179, %v7689
    %7691 = vmatmul.mubr.f32.gmra.mrb[0].mxu0 %v7690
    %v7692 = vpop.f32.mrb[0].mxu0
    %v7693 = vadd.f32 %v7542, %v7692
    %v7694 = vpop.f32.mrb[0].mxu0
    %7695 = vmatprep.mubr.f32.mxu0 0.0
    %v7696 = vand.u32 %v7180, 4294901760
    %v7697 = vsub.f32 %v7180, %v7696
    %7698 = vmatmul.mubr.f32.gmra.mrb[0].mxu0 %v7697
    %v7699 = vpop.f32.mrb[0].mxu0
    %v7700 = vadd.f32 %v7548, %v7699
    %v7701 = vpop.f32.mrb[0].mxu0
    %7702 = vmatprep.mubr.f32.mxu0 0.0
    %v7703 = vand.u32 %v7181, 4294901760
    %v7704 = vsub.f32 %v7181, %v7703
    %7705 = vmatmul.mubr.f32.gmra.mrb[0].mxu0 %v7704
    %v7706 = vpop.f32.mrb[0].mxu0
    %v7707 = vadd.f32 %v7554, %v7706
    %v7708 = vpop.f32.mrb[0].mxu0
    %7709 = vdwg.mxu0
    %7710 = vmatprep.subr.mxu0 0.0
    %v7711 = vand.u32 %v7183, 4294901760
    %7712 = vmatpush1.msra.mxu0 %v7711
    %7713 = vmatprep.subr.mxu0 0.0
    %v7714 = vand.u32 %v7184, 4294901760
    %7715 = vmatpush1.msra.mxu0 %v7714
    %7716 = vmatprep.subr.mxu0 0.0
    %v7717 = vand.u32 %v7185, 4294901760
    %7718 = vmatpush1.msra.mxu0 %v7717
    %7719 = vmatprep.subr.mxu0 0.0
    %v7720 = vand.u32 %v7186, 4294901760
    %7721 = vmatpush1.msra.mxu0 %v7720
    %7722 = vmatprep.subr.mxu0 0.0
    %v7723 = vand.u32 %v7187, 4294901760
    %7724 = vmatpush1.msra.mxu0 %v7723
    %7725 = vmatprep.subr.mxu0 0.0
    %v7726 = vand.u32 %v7188, 4294901760
    %7727 = vmatpush1.msra.mxu0 %v7726
    %7728 = vmatprep.subr.mxu0 0.0
    %v7729 = vand.u32 %v7189, 4294901760
    %7730 = vmatpush1.msra.mxu0 %v7729
    %7731 = vmatprep.subr.mxu0 0.0
    %v7732 = vand.u32 %v7190, 4294901760
    %7733 = vmatpush1.msra.mxu0 %v7732
    %7734 = vmatprep.subr.mxu0 0.0
    %v7735 = vand.u32 %v7191, 4294901760
    %7736 = vmatpush1.msra.mxu0 %v7735
    %7737 = vmatprep.subr.mxu0 0.0
    %v7738 = vand.u32 %v7192, 4294901760
    %7739 = vmatpush1.msra.mxu0 %v7738
    %7740 = vmatprep.subr.mxu0 0.0
    %v7741 = vand.u32 %v7193, 4294901760
    %7742 = vmatpush1.msra.mxu0 %v7741
    %7743 = vmatprep.subr.mxu0 0.0
    %v7744 = vand.u32 %v7194, 4294901760
    %7745 = vmatpush1.msra.mxu0 %v7744
    %7746 = vmatprep.subr.mxu0 0.0
    %v7747 = vand.u32 %v7195, 4294901760
    %7748 = vmatpush1.msra.mxu0 %v7747
    %7749 = vmatprep.subr.mxu0 0.0
    %v7750 = vand.u32 %v7196, 4294901760
    %7751 = vmatpush1.msra.mxu0 %v7750
    %7752 = vmatprep.subr.mxu0 0.0
    %v7753 = vand.u32 %v7197, 4294901760
    %7754 = vmatpush1.msra.mxu0 %v7753
    %7755 = vmatprep.subr.mxu0 0.0
    %v7756 = vand.u32 %v7198, 4294901760
    %7757 = vmatpush1.msra.mxu0 %v7756
    %7758 = vmatprep.subr.mxu0 0.0
    %7759 = vmatpush1.msra.mxu0 0.0
    %7760 = vmatprep.subr.mxu0 0.0
    %7761 = vmatpush1.msra.mxu0 0.0
    %7762 = vmatprep.subr.mxu0 0.0
    %7763 = vmatpush1.msra.mxu0 0.0
    %7764 = vmatprep.subr.mxu0 0.0
    %7765 = vmatpush1.msra.mxu0 0.0
    %7766 = vmatprep.subr.mxu0 0.0
    %7767 = vmatpush1.msra.mxu0 0.0
    %7768 = vmatprep.subr.mxu0 0.0
    %7769 = vmatpush1.msra.mxu0 0.0
    %7770 = vmatprep.subr.mxu0 0.0
    %7771 = vmatpush1.msra.mxu0 0.0
    %7772 = vmatprep.subr.mxu0 0.0
    %7773 = vmatpush1.msra.mxu0 0.0
    %7774 = vmatprep.subr.mxu0 0.0
    %7775 = vmatpush1.msra.mxu0 0.0
    %7776 = vmatprep.subr.mxu0 0.0
    %7777 = vmatpush1.msra.mxu0 0.0
    %7778 = vmatprep.subr.mxu0 0.0
    %7779 = vmatpush1.msra.mxu0 0.0
    %7780 = vmatprep.subr.mxu0 0.0
    %7781 = vmatpush1.msra.mxu0 0.0
    %7782 = vmatprep.subr.mxu0 0.0
    %7783 = vmatpush1.msra.mxu0 0.0
    %7784 = vmatprep.subr.mxu0 0.0
    %7785 = vmatpush1.msra.mxu0 0.0
    %7786 = vmatprep.subr.mxu0 0.0
    %7787 = vmatpush1.msra.mxu0 0.0
    %7788 = vmatprep.subr.mxu0 0.0
    %7789 = vmatpush1.msra.mxu0 0.0
    %7790 = vmatprep.mubr.f32.mxu0 0.0
    %v7791 = vand.u32 %v7174, 4294901760
    %v7792 = vsub.f32 %v7174, %v7791
    %v7793 = vand.u32 %v7792, 4294901760
    %7794 = vmatmul.mubr.f32.gmra.mrb[0].mxu0 %v7793
    %v7795 = vpop.f32.mrb[0].mxu0
    %v7796 = vadd.f32 %v7658, %v7795
    %v7797 = vpop.f32.mrb[0].mxu0
    %7798 = vmatprep.mubr.f32.mxu0 0.0
    %v7799 = vand.u32 %v7175, 4294901760
    %v7800 = vsub.f32 %v7175, %v7799
    %v7801 = vand.u32 %v7800, 4294901760
    %7802 = vmatmul.mubr.f32.gmra.mrb[0].mxu0 %v7801
    %v7803 = vpop.f32.mrb[0].mxu0
    %v7804 = vadd.f32 %v7665, %v7803
    %v7805 = vpop.f32.mrb[0].mxu0
    %7806 = vmatprep.mubr.f32.mxu0 0.0
    %v7807 = vand.u32 %v7176, 4294901760
    %v7808 = vsub.f32 %v7176, %v7807
    %v7809 = vand.u32 %v7808, 4294901760
    %7810 = vmatmul.mubr.f32.gmra.mrb[0].mxu0 %v7809
    %v7811 = vpop.f32.mrb[0].mxu0
    %v7812 = vadd.f32 %v7672, %v7811
    %v7813 = vpop.f32.mrb[0].mxu0
    %7814 = vmatprep.mubr.f32.mxu0 0.0
    %v7815 = vand.u32 %v7177, 4294901760
    %v7816 = vsub.f32 %v7177, %v7815
    %v7817 = vand.u32 %v7816, 4294901760
    %7818 = vmatmul.mubr.f32.gmra.mrb[0].mxu0 %v7817
    %v7819 = vpop.f32.mrb[0].mxu0
    %v7820 = vadd.f32 %v7679, %v7819
    %v7821 = vpop.f32.mrb[0].mxu0
    %7822 = vmatprep.mubr.f32.mxu0 0.0
    %v7823 = vand.u32 %v7178, 4294901760
    %v7824 = vsub.f32 %v7178, %v7823
    %v7825 = vand.u32 %v7824, 4294901760
    %7826 = vmatmul.mubr.f32.gmra.mrb[0].mxu0 %v7825
    %v7827 = vpop.f32.mrb[0].mxu0
    %v7828 = vadd.f32 %v7686, %v7827
    %v7829 = vpop.f32.mrb[0].mxu0
    %7830 = vmatprep.mubr.f32.mxu0 0.0
    %v7831 = vand.u32 %v7179, 4294901760
    %v7832 = vsub.f32 %v7179, %v7831
    %v7833 = vand.u32 %v7832, 4294901760
    %7834 = vmatmul.mubr.f32.gmra.mrb[0].mxu0 %v7833
    %v7835 = vpop.f32.mrb[0].mxu0
    %v7836 = vadd.f32 %v7693, %v7835
    %v7837 = vpop.f32.mrb[0].mxu0
    %7838 = vmatprep.mubr.f32.mxu0 0.0
    %v7839 = vand.u32 %v7180, 4294901760
    %v7840 = vsub.f32 %v7180, %v7839
    %v7841 = vand.u32 %v7840, 4294901760
    %7842 = vmatmul.mubr.f32.gmra.mrb[0].mxu0 %v7841
    %v7843 = vpop.f32.mrb[0].mxu0
    %v7844 = vadd.f32 %v7700, %v7843
    %v7845 = vpop.f32.mrb[0].mxu0
    %7846 = vmatprep.mubr.f32.mxu0 0.0
    %v7847 = vand.u32 %v7181, 4294901760
    %v7848 = vsub.f32 %v7181, %v7847
    %v7849 = vand.u32 %v7848, 4294901760
    %7850 = vmatmul.mubr.f32.gmra.mrb[0].mxu0 %v7849
    %v7851 = vpop.f32.mrb[0].mxu0
    %v7852 = vadd.f32 %v7707, %v7851
    %v7853 = vpop.f32.mrb[0].mxu0
    %7854 = vdwg.mxu0
    %7855 = vmatprep.subr.mxu0 0.0
    %v7856 = vand.u32 %v7183, 4294901760
    %v7857 = vsub.f32 %v7183, %v7856
    %v7858 = vand.u32 %v7857, 4294901760
    %7859 = vmatpush1.msra.mxu0 %v7858
    %7860 = vmatprep.subr.mxu0 0.0
    %v7861 = vand.u32 %v7184, 4294901760
    %v7862 = vsub.f32 %v7184, %v7861
    %v7863 = vand.u32 %v7862, 4294901760
    %7864 = vmatpush1.msra.mxu0 %v7863
    %7865 = vmatprep.subr.mxu0 0.0
    %v7866 = vand.u32 %v7185, 4294901760
    %v7867 = vsub.f32 %v7185, %v7866
    %v7868 = vand.u32 %v7867, 4294901760
    %7869 = vmatpush1.msra.mxu0 %v7868
    %7870 = vmatprep.subr.mxu0 0.0
    %v7871 = vand.u32 %v7186, 4294901760
    %v7872 = vsub.f32 %v7186, %v7871
    %v7873 = vand.u32 %v7872, 4294901760
    %7874 = vmatpush1.msra.mxu0 %v7873
    %7875 = vmatprep.subr.mxu0 0.0
    %v7876 = vand.u32 %v7187, 4294901760
    %v7877 = vsub.f32 %v7187, %v7876
    %v7878 = vand.u32 %v7877, 4294901760
    %7879 = vmatpush1.msra.mxu0 %v7878
    %7880 = vmatprep.subr.mxu0 0.0
    %v7881 = vand.u32 %v7188, 4294901760
    %v7882 = vsub.f32 %v7188, %v7881
    %v7883 = vand.u32 %v7882, 4294901760
    %7884 = vmatpush1.msra.mxu0 %v7883
    %7885 = vmatprep.subr.mxu0 0.0
    %v7886 = vand.u32 %v7189, 4294901760
    %v7887 = vsub.f32 %v7189, %v7886
    %v7888 = vand.u32 %v7887, 4294901760
    %7889 = vmatpush1.msra.mxu0 %v7888
    %7890 = vmatprep.subr.mxu0 0.0
    %v7891 = vand.u32 %v7190, 4294901760
    %v7892 = vsub.f32 %v7190, %v7891
    %v7893 = vand.u32 %v7892, 4294901760
    %7894 = vmatpush1.msra.mxu0 %v7893
    %7895 = vmatprep.subr.mxu0 0.0
    %v7896 = vand.u32 %v7191, 4294901760
    %v7897 = vsub.f32 %v7191, %v7896
    %v7898 = vand.u32 %v7897, 4294901760
    %7899 = vmatpush1.msra.mxu0 %v7898
    %7900 = vmatprep.subr.mxu0 0.0
    %v7901 = vand.u32 %v7192, 4294901760
    %v7902 = vsub.f32 %v7192, %v7901
    %v7903 = vand.u32 %v7902, 4294901760
    %7904 = vmatpush1.msra.mxu0 %v7903
    %7905 = vmatprep.subr.mxu0 0.0
    %v7906 = vand.u32 %v7193, 4294901760
    %v7907 = vsub.f32 %v7193, %v7906
    %v7908 = vand.u32 %v7907, 4294901760
    %7909 = vmatpush1.msra.mxu0 %v7908
    %7910 = vmatprep.subr.mxu0 0.0
    %v7911 = vand.u32 %v7194, 4294901760
    %v7912 = vsub.f32 %v7194, %v7911
    %v7913 = vand.u32 %v7912, 4294901760
    %7914 = vmatpush1.msra.mxu0 %v7913
    %7915 = vmatprep.subr.mxu0 0.0
    %v7916 = vand.u32 %v7195, 4294901760
    %v7917 = vsub.f32 %v7195, %v7916
    %v7918 = vand.u32 %v7917, 4294901760
    %7919 = vmatpush1.msra.mxu0 %v7918
    %7920 = vmatprep.subr.mxu0 0.0
    %v7921 = vand.u32 %v7196, 4294901760
    %v7922 = vsub.f32 %v7196, %v7921
    %v7923 = vand.u32 %v7922, 4294901760
    %7924 = vmatpush1.msra.mxu0 %v7923
    %7925 = vmatprep.subr.mxu0 0.0
    %v7926 = vand.u32 %v7197, 4294901760
    %v7927 = vsub.f32 %v7197, %v7926
    %v7928 = vand.u32 %v7927, 4294901760
    %7929 = vmatpush1.msra.mxu0 %v7928
    %7930 = vmatprep.subr.mxu0 0.0
    %v7931 = vand.u32 %v7198, 4294901760
    %v7932 = vsub.f32 %v7198, %v7931
    %v7933 = vand.u32 %v7932, 4294901760
    %7934 = vmatpush1.msra.mxu0 %v7933
    %7935 = vmatprep.subr.mxu0 0.0
    %7936 = vmatpush1.msra.mxu0 0.0
    %7937 = vmatprep.subr.mxu0 0.0
    %7938 = vmatpush1.msra.mxu0 0.0
    %7939 = vmatprep.subr.mxu0 0.0
    %7940 = vmatpush1.msra.mxu0 0.0
    %7941 = vmatprep.subr.mxu0 0.0
    %7942 = vmatpush1.msra.mxu0 0.0
    %7943 = vmatprep.subr.mxu0 0.0
    %7944 = vmatpush1.msra.mxu0 0.0
    %7945 = vmatprep.subr.mxu0 0.0
    %7946 = vmatpush1.msra.mxu0 0.0
    %7947 = vmatprep.subr.mxu0 0.0
    %7948 = vmatpush1.msra.mxu0 0.0
    %7949 = vmatprep.subr.mxu0 0.0
    %7950 = vmatpush1.msra.mxu0 0.0
    %7951 = vmatprep.subr.mxu0 0.0
    %7952 = vmatpush1.msra.mxu0 0.0
    %7953 = vmatprep.subr.mxu0 0.0
    %7954 = vmatpush1.msra.mxu0 0.0
    %7955 = vmatprep.subr.mxu0 0.0
    %7956 = vmatpush1.msra.mxu0 0.0
    %7957 = vmatprep.subr.mxu0 0.0
    %7958 = vmatpush1.msra.mxu0 0.0
    %7959 = vmatprep.subr.mxu0 0.0
    %7960 = vmatpush1.msra.mxu0 0.0
    %7961 = vmatprep.subr.mxu0 0.0
    %7962 = vmatpush1.msra.mxu0 0.0
    %7963 = vmatprep.subr.mxu0 0.0
    %7964 = vmatpush1.msra.mxu0 0.0
    %7965 = vmatprep.subr.mxu0 0.0
    %7966 = vmatpush1.msra.mxu0 0.0
    %7967 = vmatprep.mubr.f32.mxu0 0.0
    %v7968 = vand.u32 %v7174, 4294901760
    %7969 = vmatmul.mubr.f32.gmra.mrb[0].mxu0 %v7968
    %v7970 = vpop.f32.mrb[0].mxu0
    %v7971 = vadd.f32 %v7796, %v7970
    %v7972 = vpop.f32.mrb[0].mxu0
    %7973 = vmatprep.mubr.f32.mxu0 0.0
    %v7974 = vand.u32 %v7175, 4294901760
    %7975 = vmatmul.mubr.f32.gmra.mrb[0].mxu0 %v7974
    %v7976 = vpop.f32.mrb[0].mxu0
    %v7977 = vadd.f32 %v7804, %v7976
    %v7978 = vpop.f32.mrb[0].mxu0
    %7979 = vmatprep.mubr.f32.mxu0 0.0
    %v7980 = vand.u32 %v7176, 4294901760
    %7981 = vmatmul.mubr.f32.gmra.mrb[0].mxu0 %v7980
    %v7982 = vpop.f32.mrb[0].mxu0
    %v7983 = vadd.f32 %v7812, %v7982
    %v7984 = vpop.f32.mrb[0].mxu0
    %7985 = vmatprep.mubr.f32.mxu0 0.0
    %v7986 = vand.u32 %v7177, 4294901760
    %7987 = vmatmul.mubr.f32.gmra.mrb[0].mxu0 %v7986
    %v7988 = vpop.f32.mrb[0].mxu0
    %v7989 = vadd.f32 %v7820, %v7988
    %v7990 = vpop.f32.mrb[0].mxu0
    %7991 = vmatprep.mubr.f32.mxu0 0.0
    %v7992 = vand.u32 %v7178, 4294901760
    %7993 = vmatmul.mubr.f32.gmra.mrb[0].mxu0 %v7992
    %v7994 = vpop.f32.mrb[0].mxu0
    %v7995 = vadd.f32 %v7828, %v7994
    %v7996 = vpop.f32.mrb[0].mxu0
    %7997 = vmatprep.mubr.f32.mxu0 0.0
    %v7998 = vand.u32 %v7179, 4294901760
    %7999 = vmatmul.mubr.f32.gmra.mrb[0].mxu0 %v7998
    %v8000 = vpop.f32.mrb[0].mxu0
    %v8001 = vadd.f32 %v7836, %v8000
    %v8002 = vpop.f32.mrb[0].mxu0
    %8003 = vmatprep.mubr.f32.mxu0 0.0
    %v8004 = vand.u32 %v7180, 4294901760
    %8005 = vmatmul.mubr.f32.gmra.mrb[0].mxu0 %v8004
    %v8006 = vpop.f32.mrb[0].mxu0
    %v8007 = vadd.f32 %v7844, %v8006
    %v8008 = vpop.f32.mrb[0].mxu0
    %8009 = vmatprep.mubr.f32.mxu0 0.0
    %v8010 = vand.u32 %v7181, 4294901760
    %8011 = vmatmul.mubr.f32.gmra.mrb[0].mxu0 %v8010
    %v8012 = vpop.f32.mrb[0].mxu0
    %v8013 = vadd.f32 %v7852, %v8012
    %v8014 = vpop.f32.mrb[0].mxu0
    %8015 = vdwg.mxu0
    %8016 = vmatprep.subr.mxu0 0.0
    %v8017 = vand.u32 %v7183, 4294901760
    %8018 = vmatpush1.msra.mxu0 %v8017
    %8019 = vmatprep.subr.mxu0 0.0
    %v8020 = vand.u32 %v7184, 4294901760
    %8021 = vmatpush1.msra.mxu0 %v8020
    %8022 = vmatprep.subr.mxu0 0.0
    %v8023 = vand.u32 %v7185, 4294901760
    %8024 = vmatpush1.msra.mxu0 %v8023
    %8025 = vmatprep.subr.mxu0 0.0
    %v8026 = vand.u32 %v7186, 4294901760
    %8027 = vmatpush1.msra.mxu0 %v8026
    %8028 = vmatprep.subr.mxu0 0.0
    %v8029 = vand.u32 %v7187, 4294901760
    %8030 = vmatpush1.msra.mxu0 %v8029
    %8031 = vmatprep.subr.mxu0 0.0
    %v8032 = vand.u32 %v7188, 4294901760
    %8033 = vmatpush1.msra.mxu0 %v8032
    %8034 = vmatprep.subr.mxu0 0.0
    %v8035 = vand.u32 %v7189, 4294901760
    %8036 = vmatpush1.msra.mxu0 %v8035
    %8037 = vmatprep.subr.mxu0 0.0
    %v8038 = vand.u32 %v7190, 4294901760
    %8039 = vmatpush1.msra.mxu0 %v8038
    %8040 = vmatprep.subr.mxu0 0.0
    %v8041 = vand.u32 %v7191, 4294901760
    %8042 = vmatpush1.msra.mxu0 %v8041
    %8043 = vmatprep.subr.mxu0 0.0
    %v8044 = vand.u32 %v7192, 4294901760
    %8045 = vmatpush1.msra.mxu0 %v8044
    %8046 = vmatprep.subr.mxu0 0.0
    %v8047 = vand.u32 %v7193, 4294901760
    %8048 = vmatpush1.msra.mxu0 %v8047
    %8049 = vmatprep.subr.mxu0 0.0
    %v8050 = vand.u32 %v7194, 4294901760
    %8051 = vmatpush1.msra.mxu0 %v8050
    %8052 = vmatprep.subr.mxu0 0.0
    %v8053 = vand.u32 %v7195, 4294901760
    %8054 = vmatpush1.msra.mxu0 %v8053
    %8055 = vmatprep.subr.mxu0 0.0
    %v8056 = vand.u32 %v7196, 4294901760
    %8057 = vmatpush1.msra.mxu0 %v8056
    %8058 = vmatprep.subr.mxu0 0.0
    %v8059 = vand.u32 %v7197, 4294901760
    %8060 = vmatpush1.msra.mxu0 %v8059
    %8061 = vmatprep.subr.mxu0 0.0
    %v8062 = vand.u32 %v7198, 4294901760
    %8063 = vmatpush1.msra.mxu0 %v8062
    %8064 = vmatprep.subr.mxu0 0.0
    %8065 = vmatpush1.msra.mxu0 0.0
    %8066 = vmatprep.subr.mxu0 0.0
    %8067 = vmatpush1.msra.mxu0 0.0
    %8068 = vmatprep.subr.mxu0 0.0
    %8069 = vmatpush1.msra.mxu0 0.0
    %8070 = vmatprep.subr.mxu0 0.0
    %8071 = vmatpush1.msra.mxu0 0.0
    %8072 = vmatprep.subr.mxu0 0.0
    %8073 = vmatpush1.msra.mxu0 0.0
    %8074 = vmatprep.subr.mxu0 0.0
    %8075 = vmatpush1.msra.mxu0 0.0
    %8076 = vmatprep.subr.mxu0 0.0
    %8077 = vmatpush1.msra.mxu0 0.0
    %8078 = vmatprep.subr.mxu0 0.0
    %8079 = vmatpush1.msra.mxu0 0.0
    %8080 = vmatprep.subr.mxu0 0.0
    %8081 = vmatpush1.msra.mxu0 0.0
    %8082 = vmatprep.subr.mxu0 0.0
    %8083 = vmatpush1.msra.mxu0 0.0
    %8084 = vmatprep.subr.mxu0 0.0
    %8085 = vmatpush1.msra.mxu0 0.0
    %8086 = vmatprep.subr.mxu0 0.0
    %8087 = vmatpush1.msra.mxu0 0.0
    %8088 = vmatprep.subr.mxu0 0.0
    %8089 = vmatpush1.msra.mxu0 0.0
    %8090 = vmatprep.subr.mxu0 0.0
    %8091 = vmatpush1.msra.mxu0 0.0
    %8092 = vmatprep.subr.mxu0 0.0
    %8093 = vmatpush1.msra.mxu0 0.0
    %8094 = vmatprep.subr.mxu0 0.0
    %8095 = vmatpush1.msra.mxu0 0.0
    %8096 = vmatprep.mubr.f32.mxu0 0.0
    %v8097 = vand.u32 %v7174, 4294901760
    %8098 = vmatmul.mubr.f32.gmra.mrb[0].mxu0 %v8097
    %v8099 = vpop.f32.mrb[0].mxu0
    %v8100 = vadd.f32 %v7971, %v8099
    %v8101 = vpop.f32.mrb[0].mxu0
    %8102 = vmatprep.mubr.f32.mxu0 0.0
    %v8103 = vand.u32 %v7175, 4294901760
    %8104 = vmatmul.mubr.f32.gmra.mrb[0].mxu0 %v8103
    %v8105 = vpop.f32.mrb[0].mxu0
    %v8106 = vadd.f32 %v7977, %v8105
    %v8107 = vpop.f32.mrb[0].mxu0
    %8108 = vmatprep.mubr.f32.mxu0 0.0
    %v8109 = vand.u32 %v7176, 4294901760
    %8110 = vmatmul.mubr.f32.gmra.mrb[0].mxu0 %v8109
    %v8111 = vpop.f32.mrb[0].mxu0
    %v8112 = vadd.f32 %v7983, %v8111
    %v8113 = vpop.f32.mrb[0].mxu0
    %8114 = vmatprep.mubr.f32.mxu0 0.0
    %v8115 = vand.u32 %v7177, 4294901760
    %8116 = vmatmul.mubr.f32.gmra.mrb[0].mxu0 %v8115
    %v8117 = vpop.f32.mrb[0].mxu0
    %v8118 = vadd.f32 %v7989, %v8117
    %v8119 = vpop.f32.mrb[0].mxu0
    %8120 = vmatprep.mubr.f32.mxu0 0.0
    %v8121 = vand.u32 %v7178, 4294901760
    %8122 = vmatmul.mubr.f32.gmra.mrb[0].mxu0 %v8121
    %v8123 = vpop.f32.mrb[0].mxu0
    %v8124 = vadd.f32 %v7995, %v8123
    %v8125 = vpop.f32.mrb[0].mxu0
    %8126 = vmatprep.mubr.f32.mxu0 0.0
    %v8127 = vand.u32 %v7179, 4294901760
    %8128 = vmatmul.mubr.f32.gmra.mrb[0].mxu0 %v8127
    %v8129 = vpop.f32.mrb[0].mxu0
    %v8130 = vadd.f32 %v8001, %v8129
    %v8131 = vpop.f32.mrb[0].mxu0
    %8132 = vmatprep.mubr.f32.mxu0 0.0
    %v8133 = vand.u32 %v7180, 4294901760
    %8134 = vmatmul.mubr.f32.gmra.mrb[0].mxu0 %v8133
    %v8135 = vpop.f32.mrb[0].mxu0
    %v8136 = vadd.f32 %v8007, %v8135
    %v8137 = vpop.f32.mrb[0].mxu0
    %8138 = vmatprep.mubr.f32.mxu0 0.0
    %v8139 = vand.u32 %v7181, 4294901760
    %8140 = vmatmul.mubr.f32.gmra.mrb[0].mxu0 %v8139
    %v8141 = vpop.f32.mrb[0].mxu0
    %v8142 = vadd.f32 %v8013, %v8141
    %v8143 = vpop.f32.mrb[0].mxu0
    %8144 = vdwg.mxu0
    %v8145 = vsel %vm6019, %v8100, 0.0
    %v8146 = vsel %vm6020, %v8106, 0.0
    %v8147 = vsel %vm6021, %v8112, 0.0
    %v8148 = vsel %vm6022, %v8118, 0.0
    %v8149 = vsel %vm6023, %v8124, 0.0
    %v8150 = vsel %vm6024, %v8130, 0.0
    %v8151 = vsel %vm6025, %v8136, 0.0
    %v8152 = vsel %vm6026, %v8142, 0.0
    %v8153 = vadd.f32 %v8145, %v8146
    %v8154 = vadd.f32 %v8153, %v8147
    %v8155 = vadd.f32 %v8154, %v8148
    %v8156 = vadd.f32 %v8155, %v8149
    %v8157 = vadd.f32 %v8156, %v8150
    %v8158 = vadd.f32 %v8157, %v8151
    %v8159 = vadd.f32 %v8158, %v8152
    %v8160 = vrot.slane %v8159, 4
    %v8161 = vadd.f32 %v8159, %v8160
    %v8162 = vrot.slane %v8161, 2
    %v8163 = vadd.f32 %v8161, %v8162
    %v8164 = vrot.slane %v8163, 1
    %v8165 = vadd.f32 %v8163, %v8164
    %v8166 = vmul.f32 %v8165, 0.025
    %v8167 = vsub.f32 %v8100, %v8166
    %v8168 = vsub.f32 %v8106, %v8166
    %v8169 = vsub.f32 %v8112, %v8166
    %v8170 = vsub.f32 %v8118, %v8166
    %v8171 = vsub.f32 %v8124, %v8166
    %v8172 = vsub.f32 %v8130, %v8166
    %v8173 = vsub.f32 %v8136, %v8166
    %v8174 = vsub.f32 %v8142, %v8166
    %v8175 = vsel %vm6019, %v8167, 0.0
    %v8176 = vsel %vm6020, %v8168, 0.0
    %v8177 = vsel %vm6021, %v8169, 0.0
    %v8178 = vsel %vm6022, %v8170, 0.0
    %v8179 = vsel %vm6023, %v8171, 0.0
    %v8180 = vsel %vm6024, %v8172, 0.0
    %v8181 = vsel %vm6025, %v8173, 0.0
    %v8182 = vsel %vm6026, %v8174, 0.0
    %v8183 = vmul.f32 %v8175, %v8175
    %v8184 = vmul.f32 %v8176, %v8176
    %v8185 = vmul.f32 %v8177, %v8177
    %v8186 = vmul.f32 %v8178, %v8178
    %v8187 = vmul.f32 %v8179, %v8179
    %v8188 = vmul.f32 %v8180, %v8180
    %v8189 = vmul.f32 %v8181, %v8181
    %v8190 = vmul.f32 %v8182, %v8182
    %v8191 = vadd.f32 %v8183, %v8184
    %v8192 = vadd.f32 %v8191, %v8185
    %v8193 = vadd.f32 %v8192, %v8186
    %v8194 = vadd.f32 %v8193, %v8187
    %v8195 = vadd.f32 %v8194, %v8188
    %v8196 = vadd.f32 %v8195, %v8189
    %v8197 = vadd.f32 %v8196, %v8190
    %v8198 = vrot.slane %v8197, 4
    %v8199 = vadd.f32 %v8197, %v8198
    %v8200 = vrot.slane %v8199, 2
    %v8201 = vadd.f32 %v8199, %v8200
    %v8202 = vrot.slane %v8201, 1
    %v8203 = vadd.f32 %v8201, %v8202
    %v8204 = vmul.f32 %v8203, 0.025
    %v8205 = vadd.f32 %v8204, 1e-05
    %v8206 = vrsqrt.pop %v8205
    %v8207 = vmul.f32 %v8206, %v78
    %v8208 = vmul.f32 %v8166, %v8207
    %v8210 = vrot.slane %v8208, 7
    %v8212 = vsub.f32 %v78, %v8210
    %v8213 = vlaneseq
    %v8214 = vshrl.u32 %v8213, 7
    %v8215 = vsub.s32 1, %v8214
    %v8216 = vrot.slane %v8207, %v8215
    %v8217 = vmul.f32 %v8100, %v8216
    %v8218 = vmul.f32 %v8106, %v8216
    %v8219 = vmul.f32 %v8112, %v8216
    %v8220 = vmul.f32 %v8118, %v8216
    %v8221 = vmul.f32 %v8124, %v8216
    %v8222 = vmul.f32 %v8130, %v8216
    %v8223 = vmul.f32 %v8136, %v8216
    %v8224 = vmul.f32 %v8142, %v8216
    %v8225 = vlaneseq
    %v8226 = vshrl.u32 %v8225, 7
    %v8227 = vsub.s32 2, %v8226
    %v8228 = vrot.slane %v8212, %v8227
    %v8229 = vadd.f32 %v8217, %v8228
    %v8230 = vadd.f32 %v8218, %v8228
    %v8231 = vadd.f32 %v8219, %v8228
    %v8232 = vadd.f32 %v8220, %v8228
    %v8233 = vadd.f32 %v8221, %v8228
    %v8234 = vadd.f32 %v8222, %v8228
    %v8235 = vadd.f32 %v8223, %v8228
    %v8236 = vadd.f32 %v8224, %v8228
    %v8237 = vadd.f32 %v8229, %v5915
    %v8238 = vadd.f32 %v8230, %v5916
    %v8239 = vadd.f32 %v8231, %v5917
    %v8240 = vadd.f32 %v8232, %v5918
    %v8241 = vadd.f32 %v8233, %v5919
    %v8242 = vadd.f32 %v8234, %v5920
    %v8243 = vadd.f32 %v8235, %v5921
    %v8244 = vadd.f32 %v8236, %v5922
    %v8245 = vmax.f32 %v8237, 0.0
    %v8246 = vmax.f32 %v8238, 0.0
    %v8247 = vmax.f32 %v8239, 0.0
    %v8248 = vmax.f32 %v8240, 0.0
    %v8249 = vmax.f32 %v8241, 0.0
    %v8250 = vmax.f32 %v8242, 0.0
    %v8251 = vmax.f32 %v8243, 0.0
    %v8252 = vmax.f32 %v8244, 0.0
    %8253 = vst [vmem:[#allocation2 + $0x8] sm:$0xff] %v8245
    %8254 = vst [vmem:[#allocation2 + $0x10] sm:$0xff] %v8246
    %8255 = vst [vmem:[#allocation2 + $0x18] sm:$0xff] %v8247
    %8256 = vst [vmem:[#allocation2 + $0x20] sm:$0xff] %v8248
    %8257 = vst [vmem:[#allocation2 + $0x28] sm:$0xff] %v8249
    %8258 = vst [vmem:[#allocation2 + $0x30] sm:$0xff] %v8250
    %8259 = vst [vmem:[#allocation2 + $0x38] sm:$0xff] %v8251
    %8260 = vst [vmem:[#allocation2 + $0x40] sm:$0xff] %v8252
    %v8261 = vld [vmem:[#allocation2 + $0x4] sm:$0xff]
    %v8262 = vld [vmem:[#allocation2 + $0xc] sm:$0xff]
    %v8263 = vld [vmem:[#allocation2 + $0x14] sm:$0xff]
    %v8264 = vld [vmem:[#allocation2 + $0x1c] sm:$0xff]
    %v8265 = vld [vmem:[#allocation2 + $0x24] sm:$0xff]
    %v8266 = vld [vmem:[#allocation2 + $0x2c] sm:$0xff]
    %v8267 = vld [vmem:[#allocation2 + $0x34] sm:$0xff]
    %v8268 = vld [vmem:[#allocation2 + $0x3c] sm:$0xff]
    %v8269 = vlaneseq
    %v8270 = vshrl.u32 %v8269, 7
    %v8271 = vsub.s32 3, %v8270
    %v8272 = vrot.slane %v78, %v8271
    %v8273 = vmul.f32 %v8261, %v8272
    %v8274 = vmul.f32 %v8262, %v8272
    %v8275 = vmul.f32 %v8263, %v8272
    %v8276 = vmul.f32 %v8264, %v8272
    %v8277 = vmul.f32 %v8265, %v8272
    %v8278 = vmul.f32 %v8266, %v8272
    %v8279 = vmul.f32 %v8267, %v8272
    %v8280 = vmul.f32 %v8268, %v8272
    %v8281 = vld [vmem:[#allocation2 + $0x6] sm:$0xff]
    %v8282 = vld [vmem:[#allocation2 + $0xe] sm:$0xff]
    %v8283 = vld [vmem:[#allocation2 + $0x16] sm:$0xff]
    %v8284 = vld [vmem:[#allocation2 + $0x1e] sm:$0xff]
    %v8285 = vld [vmem:[#allocation2 + $0x26] sm:$0xff]
    %v8286 = vld [vmem:[#allocation2 + $0x2e] sm:$0xff]
    %v8287 = vld [vmem:[#allocation2 + $0x36] sm:$0xff]
    %v8288 = vld [vmem:[#allocation2 + $0x3e] sm:$0xff]
    %v8289 = vlaneseq
    %v8290 = vshrl.u32 %v8289, 7
    %v8291 = vsub.s32 4, %v8290
    %v8292 = vrot.slane %v78, %v8291
    %v8293 = vmul.f32 %v8281, %v8292
    %v8294 = vmul.f32 %v8282, %v8292
    %v8295 = vmul.f32 %v8283, %v8292
    %v8296 = vmul.f32 %v8284, %v8292
    %v8297 = vmul.f32 %v8285, %v8292
    %v8298 = vmul.f32 %v8286, %v8292
    %v8299 = vmul.f32 %v8287, %v8292
    %v8300 = vmul.f32 %v8288, %v8292
    %v8301 = vadd.f32 %v8273, %v8293
    %v8302 = vadd.f32 %v8274, %v8294
    %v8303 = vadd.f32 %v8275, %v8295
    %v8304 = vadd.f32 %v8276, %v8296
    %v8305 = vadd.f32 %v8277, %v8297
    %v8306 = vadd.f32 %v8278, %v8298
    %v8307 = vadd.f32 %v8279, %v8299
    %v8308 = vadd.f32 %v8280, %v8300
    %v8309 = vld [vmem:[#allocation2 + $0x8] sm:$0xff]
    %v8310 = vld [vmem:[#allocation2 + $0x10] sm:$0xff]
    %v8311 = vld [vmem:[#allocation2 + $0x18] sm:$0xff]
    %v8312 = vld [vmem:[#allocation2 + $0x20] sm:$0xff]
    %v8313 = vld [vmem:[#allocation2 + $0x28] sm:$0xff]
    %v8314 = vld [vmem:[#allocation2 + $0x30] sm:$0xff]
    %v8315 = vld [vmem:[#allocation2 + $0x38] sm:$0xff]
    %v8316 = vld [vmem:[#allocation2 + $0x40] sm:$0xff]
    %v8317 = vlaneseq
    %v8318 = vshrl.u32 %v8317, 7
    %v8319 = vsub.s32 5, %v8318
    %v8320 = vrot.slane %v78, %v8319
    %v8321 = vmul.f32 %v8309, %v8320
    %v8322 = vmul.f32 %v8310, %v8320
    %v8323 = vmul.f32 %v8311, %v8320
    %v8324 = vmul.f32 %v8312, %v8320
    %v8325 = vmul.f32 %v8313, %v8320
    %v8326 = vmul.f32 %v8314, %v8320
    %v8327 = vmul.f32 %v8315, %v8320
    %v8328 = vmul.f32 %v8316, %v8320
    %v8329 = vadd.f32 %v8301, %v8321
    %v8330 = vadd.f32 %v8302, %v8322
    %v8331 = vadd.f32 %v8303, %v8323
    %v8332 = vadd.f32 %v8304, %v8324
    %v8333 = vadd.f32 %v8305, %v8325
    %v8334 = vadd.f32 %v8306, %v8326
    %v8335 = vadd.f32 %v8307, %v8327
    %v8336 = vadd.f32 %v8308, %v8328
    %v8337 = vlaneseq
    %v8338 = vshrl.u32 %v8337, 7
    %v8339 = vsub.s32 6, %v8338
    %v8340 = vrot.slane %v78, %v8339
    %v8341 = vadd.f32 %v8329, %v8340
    %v8342 = vadd.f32 %v8330, %v8340
    %v8343 = vadd.f32 %v8331, %v8340
    %v8344 = vadd.f32 %v8332, %v8340
    %v8345 = vadd.f32 %v8333, %v8340
    %v8346 = vadd.f32 %v8334, %v8340
    %v8347 = vadd.f32 %v8335, %v8340
    %v8348 = vadd.f32 %v8336, %v8340
    %vm8349 = vcmp.ge.s32.totalorder %v80, 16
    %vm8350 = vcmp.ge.s32.totalorder %v81, 16
    %vm8351 = vcmp.ge.s32.totalorder %v82, 16
    %vm8352 = vcmp.ge.s32.totalorder %v83, 16
    %vm8353 = vcmp.ge.s32.totalorder %v84, 16
    %vm8354 = vcmp.ge.s32.totalorder %v85, 16
    %vm8355 = vcmp.ge.s32.totalorder %v86, 16
    %vm8356 = vcmp.ge.s32.totalorder %v87, 16
    %v8357 = vsel %vm8349, %v8341, 0.0
    %v8358 = vsel %vm8350, %v8342, 0.0
    %v8359 = vsel %vm8351, %v8343, 0.0
    %v8360 = vsel %vm8352, %v8344, 0.0
    %v8361 = vsel %vm8353, %v8345, 0.0
    %v8362 = vsel %vm8354, %v8346, 0.0
    %v8363 = vsel %vm8355, %v8347, 0.0
    %v8364 = vsel %vm8356, %v8348, 0.0
    %v8365 = vadd.f32 %v8357, %v8358
    %v8366 = vadd.f32 %v8365, %v8359
    %v8367 = vadd.f32 %v8366, %v8360
    %v8368 = vadd.f32 %v8367, %v8361
    %v8369 = vadd.f32 %v8368, %v8362
    %v8370 = vadd.f32 %v8369, %v8363
    %v8371 = vadd.f32 %v8370, %v8364
    %v8372 = vrot.slane %v8371, 4
    %v8373 = vadd.f32 %v8371, %v8372
    %v8374 = vrot.slane %v8373, 2
    %v8375 = vadd.f32 %v8373, %v8374
    %v8376 = vrot.slane %v8375, 1
    %v8377 = vadd.f32 %v8375, %v8376
    %v8378 = vmul.f32 %v8377, 0.03125
    %v8379 = vsub.f32 %v8341, %v8378
    %v8380 = vsub.f32 %v8342, %v8378
    %v8381 = vsub.f32 %v8343, %v8378
    %v8382 = vsub.f32 %v8344, %v8378
    %v8383 = vsub.f32 %v8345, %v8378
    %v8384 = vsub.f32 %v8346, %v8378
    %v8385 = vsub.f32 %v8347, %v8378
    %v8386 = vsub.f32 %v8348, %v8378
    %v8387 = vsel %vm8349, %v8379, 0.0
    %v8388 = vsel %vm8350, %v8380, 0.0
    %v8389 = vsel %vm8351, %v8381, 0.0
    %v8390 = vsel %vm8352, %v8382, 0.0
    %v8391 = vsel %vm8353, %v8383, 0.0
    %v8392 = vsel %vm8354, %v8384, 0.0
    %v8393 = vsel %vm8355, %v8385, 0.0
    %v8394 = vsel %vm8356, %v8386, 0.0
    %v8395 = vmul.f32 %v8387, %v8387
    %v8396 = vmul.f32 %v8388, %v8388
    %v8397 = vmul.f32 %v8389, %v8389
    %v8398 = vmul.f32 %v8390, %v8390
    %v8399 = vmul.f32 %v8391, %v8391
    %v8400 = vmul.f32 %v8392, %v8392
    %v8401 = vmul.f32 %v8393, %v8393
    %v8402 = vmul.f32 %v8394, %v8394
    %v8403 = vadd.f32 %v8395, %v8396
    %v8404 = vadd.f32 %v8403, %v8397
    %v8405 = vadd.f32 %v8404, %v8398
    %v8406 = vadd.f32 %v8405, %v8399
    %v8407 = vadd.f32 %v8406, %v8400
    %v8408 = vadd.f32 %v8407, %v8401
    %v8409 = vadd.f32 %v8408, %v8402
    %v8410 = vrot.slane %v8409, 4
    %v8411 = vadd.f32 %v8409, %v8410
    %v8412 = vrot.slane %v8411, 2
    %v8413 = vadd.f32 %v8411, %v8412
    %v8414 = vrot.slane %v8413, 1
    %v8415 = vadd.f32 %v8413, %v8414
    %v8416 = vmul.f32 %v8415, 0.03125
    %v8417 = vadd.f32 %v8416, 1e-05
    %v8418 = vrsqrt.pop %v8417
    %v8419 = vmul.f32 %v8418, %v78
    %v8420 = vmul.f32 %v8378, %v8419
    %v8422 = vrot.slane %v8420, 7
    %v8424 = vsub.f32 %v79, %v8422
    %v8425 = vlaneseq
    %v8426 = vshrl.u32 %v8425, 7
    %v8427 = vsub.s32 7, %v8426
    %v8428 = vrot.slane %v8419, %v8427
    %v8429 = vmul.f32 %v8341, %v8428
    %v8430 = vmul.f32 %v8342, %v8428
    %v8431 = vmul.f32 %v8343, %v8428
    %v8432 = vmul.f32 %v8344, %v8428
    %v8433 = vmul.f32 %v8345, %v8428
    %v8434 = vmul.f32 %v8346, %v8428
    %v8435 = vmul.f32 %v8347, %v8428
    %v8436 = vmul.f32 %v8348, %v8428
    %v8437 = vlaneseq
    %v8438 = vshrl.u32 %v8437, 7
    %v8439 = vsub.s32 0, %v8438
    %v8440 = vrot.slane %v8424, %v8439
    %v8441 = vadd.f32 %v8429, %v8440
    %v8442 = vadd.f32 %v8430, %v8440
    %v8443 = vadd.f32 %v8431, %v8440
    %v8444 = vadd.f32 %v8432, %v8440
    %v8445 = vadd.f32 %v8433, %v8440
    %v8446 = vadd.f32 %v8434, %v8440
    %v8447 = vadd.f32 %v8435, %v8440
    %v8448 = vadd.f32 %v8436, %v8440
    %s8449 = scalar_lea.vmem [#allocation9], 896
    %v8450 = vld [vmem:[%s8449] sm:$0xff]
    %v8451 = vld [vmem:[%s8449 + $0x8] sm:$0xff]
    %v8452 = vld [vmem:[%s8449 + $0x10] sm:$0xff]
    %v8453 = vld [vmem:[%s8449 + $0x18] sm:$0xff]
    %v8454 = vld [vmem:[%s8449 + $0x20] sm:$0xff]
    %v8455 = vld [vmem:[%s8449 + $0x28] sm:$0xff]
    %v8456 = vld [vmem:[%s8449 + $0x30] sm:$0xff]
    %v8457 = vld [vmem:[%s8449 + $0x38] sm:$0xff]
    %v8458 = vld [vmem:[%s8449 + $0x40] sm:$0xff]
    %v8459 = vld [vmem:[%s8449 + $0x48] sm:$0xff]
    %v8460 = vld [vmem:[%s8449 + $0x50] sm:$0xff]
    %v8461 = vld [vmem:[%s8449 + $0x58] sm:$0xff]
    %v8462 = vld [vmem:[%s8449 + $0x60] sm:$0xff]
    %v8463 = vld [vmem:[%s8449 + $0x68] sm:$0xff]
    %v8464 = vld [vmem:[%s8449 + $0x70] sm:$0xff]
    %v8465 = vld [vmem:[%s8449 + $0x78] sm:$0xff]
    %v8466 = vlaneseq
    %v8467 = vshrl.u32 %v8466, 7
    %v8468 = vsub.s32 1, %v8467
    %v8469 = vrot.slane %v79, %v8468
    %8470 = vmatprep.subr.mxu0 0.0
    %v8471 = vand.u32 %v8450, 4294901760
    %8472 = vmatpush1.msra.mxu0 %v8471
    %8473 = vmatprep.subr.mxu0 0.0
    %v8474 = vand.u32 %v8451, 4294901760
    %8475 = vmatpush1.msra.mxu0 %v8474
    %8476 = vmatprep.subr.mxu0 0.0
    %v8477 = vand.u32 %v8452, 4294901760
    %8478 = vmatpush1.msra.mxu0 %v8477
    %8479 = vmatprep.subr.mxu0 0.0
    %v8480 = vand.u32 %v8453, 4294901760
    %8481 = vmatpush1.msra.mxu0 %v8480
    %8482 = vmatprep.subr.mxu0 0.0
    %v8483 = vand.u32 %v8454, 4294901760
    %8484 = vmatpush1.msra.mxu0 %v8483
    %8485 = vmatprep.subr.mxu0 0.0
    %v8486 = vand.u32 %v8455, 4294901760
    %8487 = vmatpush1.msra.mxu0 %v8486
    %8488 = vmatprep.subr.mxu0 0.0
    %v8489 = vand.u32 %v8456, 4294901760
    %8490 = vmatpush1.msra.mxu0 %v8489
    %8491 = vmatprep.subr.mxu0 0.0
    %v8492 = vand.u32 %v8457, 4294901760
    %8493 = vmatpush1.msra.mxu0 %v8492
    %8494 = vmatprep.subr.mxu0 0.0
    %v8495 = vand.u32 %v8458, 4294901760
    %8496 = vmatpush1.msra.mxu0 %v8495
    %8497 = vmatprep.subr.mxu0 0.0
    %v8498 = vand.u32 %v8459, 4294901760
    %8499 = vmatpush1.msra.mxu0 %v8498
    %8500 = vmatprep.subr.mxu0 0.0
    %v8501 = vand.u32 %v8460, 4294901760
    %8502 = vmatpush1.msra.mxu0 %v8501
    %8503 = vmatprep.subr.mxu0 0.0
    %v8504 = vand.u32 %v8461, 4294901760
    %8505 = vmatpush1.msra.mxu0 %v8504
    %8506 = vmatprep.subr.mxu0 0.0
    %v8507 = vand.u32 %v8462, 4294901760
    %8508 = vmatpush1.msra.mxu0 %v8507
    %8509 = vmatprep.subr.mxu0 0.0
    %v8510 = vand.u32 %v8463, 4294901760
    %8511 = vmatpush1.msra.mxu0 %v8510
    %8512 = vmatprep.subr.mxu0 0.0
    %v8513 = vand.u32 %v8464, 4294901760
    %8514 = vmatpush1.msra.mxu0 %v8513
    %8515 = vmatprep.subr.mxu0 0.0
    %v8516 = vand.u32 %v8465, 4294901760
    %8517 = vmatpush1.msra.mxu0 %v8516
    %8518 = vmatprep.subr.mxu0 0.0
    %8519 = vmatpush1.msra.mxu0 0.0
    %8520 = vmatprep.subr.mxu0 0.0
    %8521 = vmatpush1.msra.mxu0 0.0
    %8522 = vmatprep.subr.mxu0 0.0
    %8523 = vmatpush1.msra.mxu0 0.0
    %8524 = vmatprep.subr.mxu0 0.0
    %8525 = vmatpush1.msra.mxu0 0.0
    %8526 = vmatprep.subr.mxu0 0.0
    %8527 = vmatpush1.msra.mxu0 0.0
    %8528 = vmatprep.subr.mxu0 0.0
    %8529 = vmatpush1.msra.mxu0 0.0
    %8530 = vmatprep.subr.mxu0 0.0
    %8531 = vmatpush1.msra.mxu0 0.0
    %8532 = vmatprep.subr.mxu0 0.0
    %8533 = vmatpush1.msra.mxu0 0.0
    %8534 = vmatprep.subr.mxu0 0.0
    %8535 = vmatpush1.msra.mxu0 0.0
    %8536 = vmatprep.subr.mxu0 0.0
    %8537 = vmatpush1.msra.mxu0 0.0
    %8538 = vmatprep.subr.mxu0 0.0
    %8539 = vmatpush1.msra.mxu0 0.0
    %8540 = vmatprep.subr.mxu0 0.0
    %8541 = vmatpush1.msra.mxu0 0.0
    %8542 = vmatprep.subr.mxu0 0.0
    %8543 = vmatpush1.msra.mxu0 0.0
    %8544 = vmatprep.subr.mxu0 0.0
    %8545 = vmatpush1.msra.mxu0 0.0
    %8546 = vmatprep.subr.mxu0 0.0
    %8547 = vmatpush1.msra.mxu0 0.0
    %8548 = vmatprep.subr.mxu0 0.0
    %8549 = vmatpush1.msra.mxu0 0.0
    %8550 = vmatprep.mubr.f32.mxu0 0.0
    %v8551 = vand.u32 %v8441, 4294901760
    %v8552 = vsub.f32 %v8441, %v8551
    %v8553 = vand.u32 %v8552, 4294901760
    %v8554 = vsub.f32 %v8552, %v8553
    %v8555 = vand.u32 %v8554, 4294901760
    %8556 = vmatmul.mubr.f32.gmra.mrb[0].mxu0 %v8555
    %v8557 = vpop.f32.mrb[0].mxu0
    %v8558 = vadd.f32 %v8469, %v8557
    %v8559 = vpop.f32.mrb[0].mxu0
    %8560 = vmatprep.mubr.f32.mxu0 0.0
    %v8561 = vand.u32 %v8442, 4294901760
    %v8562 = vsub.f32 %v8442, %v8561
    %v8563 = vand.u32 %v8562, 4294901760
    %v8564 = vsub.f32 %v8562, %v8563
    %v8565 = vand.u32 %v8564, 4294901760
    %8566 = vmatmul.mubr.f32.gmra.mrb[0].mxu0 %v8565
    %v8567 = vpop.f32.mrb[0].mxu0
    %v8568 = vadd.f32 %v8469, %v8567
    %v8569 = vpop.f32.mrb[0].mxu0
    %8570 = vmatprep.mubr.f32.mxu0 0.0
    %v8571 = vand.u32 %v8443, 4294901760
    %v8572 = vsub.f32 %v8443, %v8571
    %v8573 = vand.u32 %v8572, 4294901760
    %v8574 = vsub.f32 %v8572, %v8573
    %v8575 = vand.u32 %v8574, 4294901760
    %8576 = vmatmul.mubr.f32.gmra.mrb[0].mxu0 %v8575
    %v8577 = vpop.f32.mrb[0].mxu0
    %v8578 = vadd.f32 %v8469, %v8577
    %v8579 = vpop.f32.mrb[0].mxu0
    %8580 = vmatprep.mubr.f32.mxu0 0.0
    %v8581 = vand.u32 %v8444, 4294901760
    %v8582 = vsub.f32 %v8444, %v8581
    %v8583 = vand.u32 %v8582, 4294901760
    %v8584 = vsub.f32 %v8582, %v8583
    %v8585 = vand.u32 %v8584, 4294901760
    %8586 = vmatmul.mubr.f32.gmra.mrb[0].mxu0 %v8585
    %v8587 = vpop.f32.mrb[0].mxu0
    %v8588 = vadd.f32 %v8469, %v8587
    %v8589 = vpop.f32.mrb[0].mxu0
    %8590 = vmatprep.mubr.f32.mxu0 0.0
    %v8591 = vand.u32 %v8445, 4294901760
    %v8592 = vsub.f32 %v8445, %v8591
    %v8593 = vand.u32 %v8592, 4294901760
    %v8594 = vsub.f32 %v8592, %v8593
    %v8595 = vand.u32 %v8594, 4294901760
    %8596 = vmatmul.mubr.f32.gmra.mrb[0].mxu0 %v8595
    %v8597 = vpop.f32.mrb[0].mxu0
    %v8598 = vadd.f32 %v8469, %v8597
    %v8599 = vpop.f32.mrb[0].mxu0
    %8600 = vmatprep.mubr.f32.mxu0 0.0
    %v8601 = vand.u32 %v8446, 4294901760
    %v8602 = vsub.f32 %v8446, %v8601
    %v8603 = vand.u32 %v8602, 4294901760
    %v8604 = vsub.f32 %v8602, %v8603
    %v8605 = vand.u32 %v8604, 4294901760
    %8606 = vmatmul.mubr.f32.gmra.mrb[0].mxu0 %v8605
    %v8607 = vpop.f32.mrb[0].mxu0
    %v8608 = vadd.f32 %v8469, %v8607
    %v8609 = vpop.f32.mrb[0].mxu0
    %8610 = vmatprep.mubr.f32.mxu0 0.0
    %v8611 = vand.u32 %v8447, 4294901760
    %v8612 = vsub.f32 %v8447, %v8611
    %v8613 = vand.u32 %v8612, 4294901760
    %v8614 = vsub.f32 %v8612, %v8613
    %v8615 = vand.u32 %v8614, 4294901760
    %8616 = vmatmul.mubr.f32.gmra.mrb[0].mxu0 %v8615
    %v8617 = vpop.f32.mrb[0].mxu0
    %v8618 = vadd.f32 %v8469, %v8617
    %v8619 = vpop.f32.mrb[0].mxu0
    %8620 = vmatprep.mubr.f32.mxu0 0.0
    %v8621 = vand.u32 %v8448, 4294901760
    %v8622 = vsub.f32 %v8448, %v8621
    %v8623 = vand.u32 %v8622, 4294901760
    %v8624 = vsub.f32 %v8622, %v8623
    %v8625 = vand.u32 %v8624, 4294901760
    %8626 = vmatmul.mubr.f32.gmra.mrb[0].mxu0 %v8625
    %v8627 = vpop.f32.mrb[0].mxu0
    %v8628 = vadd.f32 %v8469, %v8627
    %v8629 = vpop.f32.mrb[0].mxu0
    %8630 = vdwg.mxu0
    %8631 = vmatprep.subr.mxu0 0.0
    %v8632 = vand.u32 %v8450, 4294901760
    %v8633 = vsub.f32 %v8450, %v8632
    %v8634 = vand.u32 %v8633, 4294901760
    %v8635 = vsub.f32 %v8633, %v8634
    %v8636 = vand.u32 %v8635, 4294901760
    %8637 = vmatpush1.msra.mxu0 %v8636
    %8638 = vmatprep.subr.mxu0 0.0
    %v8639 = vand.u32 %v8451, 4294901760
    %v8640 = vsub.f32 %v8451, %v8639
    %v8641 = vand.u32 %v8640, 4294901760
    %v8642 = vsub.f32 %v8640, %v8641
    %v8643 = vand.u32 %v8642, 4294901760
    %8644 = vmatpush1.msra.mxu0 %v8643
    %8645 = vmatprep.subr.mxu0 0.0
    %v8646 = vand.u32 %v8452, 4294901760
    %v8647 = vsub.f32 %v8452, %v8646
    %v8648 = vand.u32 %v8647, 4294901760
    %v8649 = vsub.f32 %v8647, %v8648
    %v8650 = vand.u32 %v8649, 4294901760
    %8651 = vmatpush1.msra.mxu0 %v8650
    %8652 = vmatprep.subr.mxu0 0.0
    %v8653 = vand.u32 %v8453, 4294901760
    %v8654 = vsub.f32 %v8453, %v8653
    %v8655 = vand.u32 %v8654, 4294901760
    %v8656 = vsub.f32 %v8654, %v8655
    %v8657 = vand.u32 %v8656, 4294901760
    %8658 = vmatpush1.msra.mxu0 %v8657
    %8659 = vmatprep.subr.mxu0 0.0
    %v8660 = vand.u32 %v8454, 4294901760
    %v8661 = vsub.f32 %v8454, %v8660
    %v8662 = vand.u32 %v8661, 4294901760
    %v8663 = vsub.f32 %v8661, %v8662
    %v8664 = vand.u32 %v8663, 4294901760
    %8665 = vmatpush1.msra.mxu0 %v8664
    %8666 = vmatprep.subr.mxu0 0.0
    %v8667 = vand.u32 %v8455, 4294901760
    %v8668 = vsub.f32 %v8455, %v8667
    %v8669 = vand.u32 %v8668, 4294901760
    %v8670 = vsub.f32 %v8668, %v8669
    %v8671 = vand.u32 %v8670, 4294901760
    %8672 = vmatpush1.msra.mxu0 %v8671
    %8673 = vmatprep.subr.mxu0 0.0
    %v8674 = vand.u32 %v8456, 4294901760
    %v8675 = vsub.f32 %v8456, %v8674
    %v8676 = vand.u32 %v8675, 4294901760
    %v8677 = vsub.f32 %v8675, %v8676
    %v8678 = vand.u32 %v8677, 4294901760
    %8679 = vmatpush1.msra.mxu0 %v8678
    %8680 = vmatprep.subr.mxu0 0.0
    %v8681 = vand.u32 %v8457, 4294901760
    %v8682 = vsub.f32 %v8457, %v8681
    %v8683 = vand.u32 %v8682, 4294901760
    %v8684 = vsub.f32 %v8682, %v8683
    %v8685 = vand.u32 %v8684, 4294901760
    %8686 = vmatpush1.msra.mxu0 %v8685
    %8687 = vmatprep.subr.mxu0 0.0
    %v8688 = vand.u32 %v8458, 4294901760
    %v8689 = vsub.f32 %v8458, %v8688
    %v8690 = vand.u32 %v8689, 4294901760
    %v8691 = vsub.f32 %v8689, %v8690
    %v8692 = vand.u32 %v8691, 4294901760
    %8693 = vmatpush1.msra.mxu0 %v8692
    %8694 = vmatprep.subr.mxu0 0.0
    %v8695 = vand.u32 %v8459, 4294901760
    %v8696 = vsub.f32 %v8459, %v8695
    %v8697 = vand.u32 %v8696, 4294901760
    %v8698 = vsub.f32 %v8696, %v8697
    %v8699 = vand.u32 %v8698, 4294901760
    %8700 = vmatpush1.msra.mxu0 %v8699
    %8701 = vmatprep.subr.mxu0 0.0
    %v8702 = vand.u32 %v8460, 4294901760
    %v8703 = vsub.f32 %v8460, %v8702
    %v8704 = vand.u32 %v8703, 4294901760
    %v8705 = vsub.f32 %v8703, %v8704
    %v8706 = vand.u32 %v8705, 4294901760
    %8707 = vmatpush1.msra.mxu0 %v8706
    %8708 = vmatprep.subr.mxu0 0.0
    %v8709 = vand.u32 %v8461, 4294901760
    %v8710 = vsub.f32 %v8461, %v8709
    %v8711 = vand.u32 %v8710, 4294901760
    %v8712 = vsub.f32 %v8710, %v8711
    %v8713 = vand.u32 %v8712, 4294901760
    %8714 = vmatpush1.msra.mxu0 %v8713
    %8715 = vmatprep.subr.mxu0 0.0
    %v8716 = vand.u32 %v8462, 4294901760
    %v8717 = vsub.f32 %v8462, %v8716
    %v8718 = vand.u32 %v8717, 4294901760
    %v8719 = vsub.f32 %v8717, %v8718
    %v8720 = vand.u32 %v8719, 4294901760
    %8721 = vmatpush1.msra.mxu0 %v8720
    %8722 = vmatprep.subr.mxu0 0.0
    %v8723 = vand.u32 %v8463, 4294901760
    %v8724 = vsub.f32 %v8463, %v8723
    %v8725 = vand.u32 %v8724, 4294901760
    %v8726 = vsub.f32 %v8724, %v8725
    %v8727 = vand.u32 %v8726, 4294901760
    %8728 = vmatpush1.msra.mxu0 %v8727
    %8729 = vmatprep.subr.mxu0 0.0
    %v8730 = vand.u32 %v8464, 4294901760
    %v8731 = vsub.f32 %v8464, %v8730
    %v8732 = vand.u32 %v8731, 4294901760
    %v8733 = vsub.f32 %v8731, %v8732
    %v8734 = vand.u32 %v8733, 4294901760
    %8735 = vmatpush1.msra.mxu0 %v8734
    %8736 = vmatprep.subr.mxu0 0.0
    %v8737 = vand.u32 %v8465, 4294901760
    %v8738 = vsub.f32 %v8465, %v8737
    %v8739 = vand.u32 %v8738, 4294901760
    %v8740 = vsub.f32 %v8738, %v8739
    %v8741 = vand.u32 %v8740, 4294901760
    %8742 = vmatpush1.msra.mxu0 %v8741
    %8743 = vmatprep.subr.mxu0 0.0
    %8744 = vmatpush1.msra.mxu0 0.0
    %8745 = vmatprep.subr.mxu0 0.0
    %8746 = vmatpush1.msra.mxu0 0.0
    %8747 = vmatprep.subr.mxu0 0.0
    %8748 = vmatpush1.msra.mxu0 0.0
    %8749 = vmatprep.subr.mxu0 0.0
    %8750 = vmatpush1.msra.mxu0 0.0
    %8751 = vmatprep.subr.mxu0 0.0
    %8752 = vmatpush1.msra.mxu0 0.0
    %8753 = vmatprep.subr.mxu0 0.0
    %8754 = vmatpush1.msra.mxu0 0.0
    %8755 = vmatprep.subr.mxu0 0.0
    %8756 = vmatpush1.msra.mxu0 0.0
    %8757 = vmatprep.subr.mxu0 0.0
    %8758 = vmatpush1.msra.mxu0 0.0
    %8759 = vmatprep.subr.mxu0 0.0
    %8760 = vmatpush1.msra.mxu0 0.0
    %8761 = vmatprep.subr.mxu0 0.0
    %8762 = vmatpush1.msra.mxu0 0.0
    %8763 = vmatprep.subr.mxu0 0.0
    %8764 = vmatpush1.msra.mxu0 0.0
    %8765 = vmatprep.subr.mxu0 0.0
    %8766 = vmatpush1.msra.mxu0 0.0
    %8767 = vmatprep.subr.mxu0 0.0
    %8768 = vmatpush1.msra.mxu0 0.0
    %8769 = vmatprep.subr.mxu0 0.0
    %8770 = vmatpush1.msra.mxu0 0.0
    %8771 = vmatprep.subr.mxu0 0.0
    %8772 = vmatpush1.msra.mxu0 0.0
    %8773 = vmatprep.subr.mxu0 0.0
    %8774 = vmatpush1.msra.mxu0 0.0
    %8775 = vmatprep.mubr.f32.mxu0 0.0
    %v8776 = vand.u32 %v8441, 4294901760
    %8777 = vmatmul.mubr.f32.gmra.mrb[0].mxu0 %v8776
    %v8778 = vpop.f32.mrb[0].mxu0
    %v8779 = vadd.f32 %v8558, %v8778
    %v8780 = vpop.f32.mrb[0].mxu0
    %8781 = vmatprep.mubr.f32.mxu0 0.0
    %v8782 = vand.u32 %v8442, 4294901760
    %8783 = vmatmul.mubr.f32.gmra.mrb[0].mxu0 %v8782
    %v8784 = vpop.f32.mrb[0].mxu0
    %v8785 = vadd.f32 %v8568, %v8784
    %v8786 = vpop.f32.mrb[0].mxu0
    %8787 = vmatprep.mubr.f32.mxu0 0.0
    %v8788 = vand.u32 %v8443, 4294901760
    %8789 = vmatmul.mubr.f32.gmra.mrb[0].mxu0 %v8788
    %v8790 = vpop.f32.mrb[0].mxu0
    %v8791 = vadd.f32 %v8578, %v8790
    %v8792 = vpop.f32.mrb[0].mxu0
    %8793 = vmatprep.mubr.f32.mxu0 0.0
    %v8794 = vand.u32 %v8444, 4294901760
    %8795 = vmatmul.mubr.f32.gmra.mrb[0].mxu0 %v8794
    %v8796 = vpop.f32.mrb[0].mxu0
    %v8797 = vadd.f32 %v8588, %v8796
    %v8798 = vpop.f32.mrb[0].mxu0
    %8799 = vmatprep.mubr.f32.mxu0 0.0
    %v8800 = vand.u32 %v8445, 4294901760
    %8801 = vmatmul.mubr.f32.gmra.mrb[0].mxu0 %v8800
    %v8802 = vpop.f32.mrb[0].mxu0
    %v8803 = vadd.f32 %v8598, %v8802
    %v8804 = vpop.f32.mrb[0].mxu0
    %8805 = vmatprep.mubr.f32.mxu0 0.0
    %v8806 = vand.u32 %v8446, 4294901760
    %8807 = vmatmul.mubr.f32.gmra.mrb[0].mxu0 %v8806
    %v8808 = vpop.f32.mrb[0].mxu0
    %v8809 = vadd.f32 %v8608, %v8808
    %v8810 = vpop.f32.mrb[0].mxu0
    %8811 = vmatprep.mubr.f32.mxu0 0.0
    %v8812 = vand.u32 %v8447, 4294901760
    %8813 = vmatmul.mubr.f32.gmra.mrb[0].mxu0 %v8812
    %v8814 = vpop.f32.mrb[0].mxu0
    %v8815 = vadd.f32 %v8618, %v8814
    %v8816 = vpop.f32.mrb[0].mxu0
    %8817 = vmatprep.mubr.f32.mxu0 0.0
    %v8818 = vand.u32 %v8448, 4294901760
    %8819 = vmatmul.mubr.f32.gmra.mrb[0].mxu0 %v8818
    %v8820 = vpop.f32.mrb[0].mxu0
    %v8821 = vadd.f32 %v8628, %v8820
    %v8822 = vpop.f32.mrb[0].mxu0
    %8823 = vdwg.mxu0
    %8824 = vmatprep.subr.mxu0 0.0
    %v8825 = vand.u32 %v8450, 4294901760
    %v8826 = vsub.f32 %v8450, %v8825
    %8827 = vmatpush1.msra.mxu0 %v8826
    %8828 = vmatprep.subr.mxu0 0.0
    %v8829 = vand.u32 %v8451, 4294901760
    %v8830 = vsub.f32 %v8451, %v8829
    %8831 = vmatpush1.msra.mxu0 %v8830
    %8832 = vmatprep.subr.mxu0 0.0
    %v8833 = vand.u32 %v8452, 4294901760
    %v8834 = vsub.f32 %v8452, %v8833
    %8835 = vmatpush1.msra.mxu0 %v8834
    %8836 = vmatprep.subr.mxu0 0.0
    %v8837 = vand.u32 %v8453, 4294901760
    %v8838 = vsub.f32 %v8453, %v8837
    %8839 = vmatpush1.msra.mxu0 %v8838
    %8840 = vmatprep.subr.mxu0 0.0
    %v8841 = vand.u32 %v8454, 4294901760
    %v8842 = vsub.f32 %v8454, %v8841
    %8843 = vmatpush1.msra.mxu0 %v8842
    %8844 = vmatprep.subr.mxu0 0.0
    %v8845 = vand.u32 %v8455, 4294901760
    %v8846 = vsub.f32 %v8455, %v8845
    %8847 = vmatpush1.msra.mxu0 %v8846
    %8848 = vmatprep.subr.mxu0 0.0
    %v8849 = vand.u32 %v8456, 4294901760
    %v8850 = vsub.f32 %v8456, %v8849
    %8851 = vmatpush1.msra.mxu0 %v8850
    %8852 = vmatprep.subr.mxu0 0.0
    %v8853 = vand.u32 %v8457, 4294901760
    %v8854 = vsub.f32 %v8457, %v8853
    %8855 = vmatpush1.msra.mxu0 %v8854
    %8856 = vmatprep.subr.mxu0 0.0
    %v8857 = vand.u32 %v8458, 4294901760
    %v8858 = vsub.f32 %v8458, %v8857
    %8859 = vmatpush1.msra.mxu0 %v8858
    %8860 = vmatprep.subr.mxu0 0.0
    %v8861 = vand.u32 %v8459, 4294901760
    %v8862 = vsub.f32 %v8459, %v8861
    %8863 = vmatpush1.msra.mxu0 %v8862
    %8864 = vmatprep.subr.mxu0 0.0
    %v8865 = vand.u32 %v8460, 4294901760
    %v8866 = vsub.f32 %v8460, %v8865
    %8867 = vmatpush1.msra.mxu0 %v8866
    %8868 = vmatprep.subr.mxu0 0.0
    %v8869 = vand.u32 %v8461, 4294901760
    %v8870 = vsub.f32 %v8461, %v8869
    %8871 = vmatpush1.msra.mxu0 %v8870
    %8872 = vmatprep.subr.mxu0 0.0
    %v8873 = vand.u32 %v8462, 4294901760
    %v8874 = vsub.f32 %v8462, %v8873
    %8875 = vmatpush1.msra.mxu0 %v8874
    %8876 = vmatprep.subr.mxu0 0.0
    %v8877 = vand.u32 %v8463, 4294901760
    %v8878 = vsub.f32 %v8463, %v8877
    %8879 = vmatpush1.msra.mxu0 %v8878
    %8880 = vmatprep.subr.mxu0 0.0
    %v8881 = vand.u32 %v8464, 4294901760
    %v8882 = vsub.f32 %v8464, %v8881
    %8883 = vmatpush1.msra.mxu0 %v8882
    %8884 = vmatprep.subr.mxu0 0.0
    %v8885 = vand.u32 %v8465, 4294901760
    %v8886 = vsub.f32 %v8465, %v8885
    %8887 = vmatpush1.msra.mxu0 %v8886
    %8888 = vmatprep.subr.mxu0 0.0
    %8889 = vmatpush1.msra.mxu0 0.0
    %8890 = vmatprep.subr.mxu0 0.0
    %8891 = vmatpush1.msra.mxu0 0.0
    %8892 = vmatprep.subr.mxu0 0.0
    %8893 = vmatpush1.msra.mxu0 0.0
    %8894 = vmatprep.subr.mxu0 0.0
    %8895 = vmatpush1.msra.mxu0 0.0
    %8896 = vmatprep.subr.mxu0 0.0
    %8897 = vmatpush1.msra.mxu0 0.0
    %8898 = vmatprep.subr.mxu0 0.0
    %8899 = vmatpush1.msra.mxu0 0.0
    %8900 = vmatprep.subr.mxu0 0.0
    %8901 = vmatpush1.msra.mxu0 0.0
    %8902 = vmatprep.subr.mxu0 0.0
    %8903 = vmatpush1.msra.mxu0 0.0
    %8904 = vmatprep.subr.mxu0 0.0
    %8905 = vmatpush1.msra.mxu0 0.0
    %8906 = vmatprep.subr.mxu0 0.0
    %8907 = vmatpush1.msra.mxu0 0.0
    %8908 = vmatprep.subr.mxu0 0.0
    %8909 = vmatpush1.msra.mxu0 0.0
    %8910 = vmatprep.subr.mxu0 0.0
    %8911 = vmatpush1.msra.mxu0 0.0
    %8912 = vmatprep.subr.mxu0 0.0
    %8913 = vmatpush1.msra.mxu0 0.0
    %8914 = vmatprep.subr.mxu0 0.0
    %8915 = vmatpush1.msra.mxu0 0.0
    %8916 = vmatprep.subr.mxu0 0.0
    %8917 = vmatpush1.msra.mxu0 0.0
    %8918 = vmatprep.subr.mxu0 0.0
    %8919 = vmatpush1.msra.mxu0 0.0
    %8920 = vmatprep.mubr.f32.mxu0 0.0
    %v8921 = vand.u32 %v8441, 4294901760
    %v8922 = vsub.f32 %v8441, %v8921
    %8923 = vmatmul.mubr.f32.gmra.mrb[0].mxu0 %v8922
    %v8924 = vpop.f32.mrb[0].mxu0
    %v8925 = vadd.f32 %v8779, %v8924
    %v8926 = vpop.f32.mrb[0].mxu0
    %8927 = vmatprep.mubr.f32.mxu0 0.0
    %v8928 = vand.u32 %v8442, 4294901760
    %v8929 = vsub.f32 %v8442, %v8928
    %8930 = vmatmul.mubr.f32.gmra.mrb[0].mxu0 %v8929
    %v8931 = vpop.f32.mrb[0].mxu0
    %v8932 = vadd.f32 %v8785, %v8931
    %v8933 = vpop.f32.mrb[0].mxu0
    %8934 = vmatprep.mubr.f32.mxu0 0.0
    %v8935 = vand.u32 %v8443, 4294901760
    %v8936 = vsub.f32 %v8443, %v8935
    %8937 = vmatmul.mubr.f32.gmra.mrb[0].mxu0 %v8936
    %v8938 = vpop.f32.mrb[0].mxu0
    %v8939 = vadd.f32 %v8791, %v8938
    %v8940 = vpop.f32.mrb[0].mxu0
    %8941 = vmatprep.mubr.f32.mxu0 0.0
    %v8942 = vand.u32 %v8444, 4294901760
    %v8943 = vsub.f32 %v8444, %v8942
    %8944 = vmatmul.mubr.f32.gmra.mrb[0].mxu0 %v8943
    %v8945 = vpop.f32.mrb[0].mxu0
    %v8946 = vadd.f32 %v8797, %v8945
    %v8947 = vpop.f32.mrb[0].mxu0
    %8948 = vmatprep.mubr.f32.mxu0 0.0
    %v8949 = vand.u32 %v8445, 4294901760
    %v8950 = vsub.f32 %v8445, %v8949
    %8951 = vmatmul.mubr.f32.gmra.mrb[0].mxu0 %v8950
    %v8952 = vpop.f32.mrb[0].mxu0
    %v8953 = vadd.f32 %v8803, %v8952
    %v8954 = vpop.f32.mrb[0].mxu0
    %8955 = vmatprep.mubr.f32.mxu0 0.0
    %v8956 = vand.u32 %v8446, 4294901760
    %v8957 = vsub.f32 %v8446, %v8956
    %8958 = vmatmul.mubr.f32.gmra.mrb[0].mxu0 %v8957
    %v8959 = vpop.f32.mrb[0].mxu0
    %v8960 = vadd.f32 %v8809, %v8959
    %v8961 = vpop.f32.mrb[0].mxu0
    %8962 = vmatprep.mubr.f32.mxu0 0.0
    %v8963 = vand.u32 %v8447, 4294901760
    %v8964 = vsub.f32 %v8447, %v8963
    %8965 = vmatmul.mubr.f32.gmra.mrb[0].mxu0 %v8964
    %v8966 = vpop.f32.mrb[0].mxu0
    %v8967 = vadd.f32 %v8815, %v8966
    %v8968 = vpop.f32.mrb[0].mxu0
    %8969 = vmatprep.mubr.f32.mxu0 0.0
    %v8970 = vand.u32 %v8448, 4294901760
    %v8971 = vsub.f32 %v8448, %v8970
    %8972 = vmatmul.mubr.f32.gmra.mrb[0].mxu0 %v8971
    %v8973 = vpop.f32.mrb[0].mxu0
    %v8974 = vadd.f32 %v8821, %v8973
    %v8975 = vpop.f32.mrb[0].mxu0
    %8976 = vdwg.mxu0
    %8977 = vmatprep.subr.mxu0 0.0
    %v8978 = vand.u32 %v8450, 4294901760
    %8979 = vmatpush1.msra.mxu0 %v8978
    %8980 = vmatprep.subr.mxu0 0.0
    %v8981 = vand.u32 %v8451, 4294901760
    %8982 = vmatpush1.msra.mxu0 %v8981
    %8983 = vmatprep.subr.mxu0 0.0
    %v8984 = vand.u32 %v8452, 4294901760
    %8985 = vmatpush1.msra.mxu0 %v8984
    %8986 = vmatprep.subr.mxu0 0.0
    %v8987 = vand.u32 %v8453, 4294901760
    %8988 = vmatpush1.msra.mxu0 %v8987
    %8989 = vmatprep.subr.mxu0 0.0
    %v8990 = vand.u32 %v8454, 4294901760
    %8991 = vmatpush1.msra.mxu0 %v8990
    %8992 = vmatprep.subr.mxu0 0.0
    %v8993 = vand.u32 %v8455, 4294901760
    %8994 = vmatpush1.msra.mxu0 %v8993
    %8995 = vmatprep.subr.mxu0 0.0
    %v8996 = vand.u32 %v8456, 4294901760
    %8997 = vmatpush1.msra.mxu0 %v8996
    %8998 = vmatprep.subr.mxu0 0.0
    %v8999 = vand.u32 %v8457, 4294901760
    %9000 = vmatpush1.msra.mxu0 %v8999
    %9001 = vmatprep.subr.mxu0 0.0
    %v9002 = vand.u32 %v8458, 4294901760
    %9003 = vmatpush1.msra.mxu0 %v9002
    %9004 = vmatprep.subr.mxu0 0.0
    %v9005 = vand.u32 %v8459, 4294901760
    %9006 = vmatpush1.msra.mxu0 %v9005
    %9007 = vmatprep.subr.mxu0 0.0
    %v9008 = vand.u32 %v8460, 4294901760
    %9009 = vmatpush1.msra.mxu0 %v9008
    %9010 = vmatprep.subr.mxu0 0.0
    %v9011 = vand.u32 %v8461, 4294901760
    %9012 = vmatpush1.msra.mxu0 %v9011
    %9013 = vmatprep.subr.mxu0 0.0
    %v9014 = vand.u32 %v8462, 4294901760
    %9015 = vmatpush1.msra.mxu0 %v9014
    %9016 = vmatprep.subr.mxu0 0.0
    %v9017 = vand.u32 %v8463, 4294901760
    %9018 = vmatpush1.msra.mxu0 %v9017
    %9019 = vmatprep.subr.mxu0 0.0
    %v9020 = vand.u32 %v8464, 4294901760
    %9021 = vmatpush1.msra.mxu0 %v9020
    %9022 = vmatprep.subr.mxu0 0.0
    %v9023 = vand.u32 %v8465, 4294901760
    %9024 = vmatpush1.msra.mxu0 %v9023
    %9025 = vmatprep.subr.mxu0 0.0
    %9026 = vmatpush1.msra.mxu0 0.0
    %9027 = vmatprep.subr.mxu0 0.0
    %9028 = vmatpush1.msra.mxu0 0.0
    %9029 = vmatprep.subr.mxu0 0.0
    %9030 = vmatpush1.msra.mxu0 0.0
    %9031 = vmatprep.subr.mxu0 0.0
    %9032 = vmatpush1.msra.mxu0 0.0
    %9033 = vmatprep.subr.mxu0 0.0
    %9034 = vmatpush1.msra.mxu0 0.0
    %9035 = vmatprep.subr.mxu0 0.0
    %9036 = vmatpush1.msra.mxu0 0.0
    %9037 = vmatprep.subr.mxu0 0.0
    %9038 = vmatpush1.msra.mxu0 0.0
    %9039 = vmatprep.subr.mxu0 0.0
    %9040 = vmatpush1.msra.mxu0 0.0
    %9041 = vmatprep.subr.mxu0 0.0
    %9042 = vmatpush1.msra.mxu0 0.0
    %9043 = vmatprep.subr.mxu0 0.0
    %9044 = vmatpush1.msra.mxu0 0.0
    %9045 = vmatprep.subr.mxu0 0.0
    %9046 = vmatpush1.msra.mxu0 0.0
    %9047 = vmatprep.subr.mxu0 0.0
    %9048 = vmatpush1.msra.mxu0 0.0
    %9049 = vmatprep.subr.mxu0 0.0
    %9050 = vmatpush1.msra.mxu0 0.0
    %9051 = vmatprep.subr.mxu0 0.0
    %9052 = vmatpush1.msra.mxu0 0.0
    %9053 = vmatprep.subr.mxu0 0.0
    %9054 = vmatpush1.msra.mxu0 0.0
    %9055 = vmatprep.subr.mxu0 0.0
    %9056 = vmatpush1.msra.mxu0 0.0
    %9057 = vmatprep.mubr.f32.mxu0 0.0
    %v9058 = vand.u32 %v8441, 4294901760
    %v9059 = vsub.f32 %v8441, %v9058
    %v9060 = vand.u32 %v9059, 4294901760
    %9061 = vmatmul.mubr.f32.gmra.mrb[0].mxu0 %v9060
    %v9062 = vpop.f32.mrb[0].mxu0
    %v9063 = vadd.f32 %v8925, %v9062
    %v9064 = vpop.f32.mrb[0].mxu0
    %9065 = vmatprep.mubr.f32.mxu0 0.0
    %v9066 = vand.u32 %v8442, 4294901760
    %v9067 = vsub.f32 %v8442, %v9066
    %v9068 = vand.u32 %v9067, 4294901760
    %9069 = vmatmul.mubr.f32.gmra.mrb[0].mxu0 %v9068
    %v9070 = vpop.f32.mrb[0].mxu0
    %v9071 = vadd.f32 %v8932, %v9070
    %v9072 = vpop.f32.mrb[0].mxu0
    %9073 = vmatprep.mubr.f32.mxu0 0.0
    %v9074 = vand.u32 %v8443, 4294901760
    %v9075 = vsub.f32 %v8443, %v9074
    %v9076 = vand.u32 %v9075, 4294901760
    %9077 = vmatmul.mubr.f32.gmra.mrb[0].mxu0 %v9076
    %v9078 = vpop.f32.mrb[0].mxu0
    %v9079 = vadd.f32 %v8939, %v9078
    %v9080 = vpop.f32.mrb[0].mxu0
    %9081 = vmatprep.mubr.f32.mxu0 0.0
    %v9082 = vand.u32 %v8444, 4294901760
    %v9083 = vsub.f32 %v8444, %v9082
    %v9084 = vand.u32 %v9083, 4294901760
    %9085 = vmatmul.mubr.f32.gmra.mrb[0].mxu0 %v9084
    %v9086 = vpop.f32.mrb[0].mxu0
    %v9087 = vadd.f32 %v8946, %v9086
    %v9088 = vpop.f32.mrb[0].mxu0
    %9089 = vmatprep.mubr.f32.mxu0 0.0
    %v9090 = vand.u32 %v8445, 4294901760
    %v9091 = vsub.f32 %v8445, %v9090
    %v9092 = vand.u32 %v9091, 4294901760
    %9093 = vmatmul.mubr.f32.gmra.mrb[0].mxu0 %v9092
    %v9094 = vpop.f32.mrb[0].mxu0
    %v9095 = vadd.f32 %v8953, %v9094
    %v9096 = vpop.f32.mrb[0].mxu0
    %9097 = vmatprep.mubr.f32.mxu0 0.0
    %v9098 = vand.u32 %v8446, 4294901760
    %v9099 = vsub.f32 %v8446, %v9098
    %v9100 = vand.u32 %v9099, 4294901760
    %9101 = vmatmul.mubr.f32.gmra.mrb[0].mxu0 %v9100
    %v9102 = vpop.f32.mrb[0].mxu0
    %v9103 = vadd.f32 %v8960, %v9102
    %v9104 = vpop.f32.mrb[0].mxu0
    %9105 = vmatprep.mubr.f32.mxu0 0.0
    %v9106 = vand.u32 %v8447, 4294901760
    %v9107 = vsub.f32 %v8447, %v9106
    %v9108 = vand.u32 %v9107, 4294901760
    %9109 = vmatmul.mubr.f32.gmra.mrb[0].mxu0 %v9108
    %v9110 = vpop.f32.mrb[0].mxu0
    %v9111 = vadd.f32 %v8967, %v9110
    %v9112 = vpop.f32.mrb[0].mxu0
    %9113 = vmatprep.mubr.f32.mxu0 0.0
    %v9114 = vand.u32 %v8448, 4294901760
    %v9115 = vsub.f32 %v8448, %v9114
    %v9116 = vand.u32 %v9115, 4294901760
    %9117 = vmatmul.mubr.f32.gmra.mrb[0].mxu0 %v9116
    %v9118 = vpop.f32.mrb[0].mxu0
    %v9119 = vadd.f32 %v8974, %v9118
    %v9120 = vpop.f32.mrb[0].mxu0
    %9121 = vdwg.mxu0
    %9122 = vmatprep.subr.mxu0 0.0
    %v9123 = vand.u32 %v8450, 4294901760
    %v9124 = vsub.f32 %v8450, %v9123
    %v9125 = vand.u32 %v9124, 4294901760
    %9126 = vmatpush1.msra.mxu0 %v9125
    %9127 = vmatprep.subr.mxu0 0.0
    %v9128 = vand.u32 %v8451, 4294901760
    %v9129 = vsub.f32 %v8451, %v9128
    %v9130 = vand.u32 %v9129, 4294901760
    %9131 = vmatpush1.msra.mxu0 %v9130
    %9132 = vmatprep.subr.mxu0 0.0
    %v9133 = vand.u32 %v8452, 4294901760
    %v9134 = vsub.f32 %v8452, %v9133
    %v9135 = vand.u32 %v9134, 4294901760
    %9136 = vmatpush1.msra.mxu0 %v9135
    %9137 = vmatprep.subr.mxu0 0.0
    %v9138 = vand.u32 %v8453, 4294901760
    %v9139 = vsub.f32 %v8453, %v9138
    %v9140 = vand.u32 %v9139, 4294901760
    %9141 = vmatpush1.msra.mxu0 %v9140
    %9142 = vmatprep.subr.mxu0 0.0
    %v9143 = vand.u32 %v8454, 4294901760
    %v9144 = vsub.f32 %v8454, %v9143
    %v9145 = vand.u32 %v9144, 4294901760
    %9146 = vmatpush1.msra.mxu0 %v9145
    %9147 = vmatprep.subr.mxu0 0.0
    %v9148 = vand.u32 %v8455, 4294901760
    %v9149 = vsub.f32 %v8455, %v9148
    %v9150 = vand.u32 %v9149, 4294901760
    %9151 = vmatpush1.msra.mxu0 %v9150
    %9152 = vmatprep.subr.mxu0 0.0
    %v9153 = vand.u32 %v8456, 4294901760
    %v9154 = vsub.f32 %v8456, %v9153
    %v9155 = vand.u32 %v9154, 4294901760
    %9156 = vmatpush1.msra.mxu0 %v9155
    %9157 = vmatprep.subr.mxu0 0.0
    %v9158 = vand.u32 %v8457, 4294901760
    %v9159 = vsub.f32 %v8457, %v9158
    %v9160 = vand.u32 %v9159, 4294901760
    %9161 = vmatpush1.msra.mxu0 %v9160
    %9162 = vmatprep.subr.mxu0 0.0
    %v9163 = vand.u32 %v8458, 4294901760
    %v9164 = vsub.f32 %v8458, %v9163
    %v9165 = vand.u32 %v9164, 4294901760
    %9166 = vmatpush1.msra.mxu0 %v9165
    %9167 = vmatprep.subr.mxu0 0.0
    %v9168 = vand.u32 %v8459, 4294901760
    %v9169 = vsub.f32 %v8459, %v9168
    %v9170 = vand.u32 %v9169, 4294901760
    %9171 = vmatpush1.msra.mxu0 %v9170
    %9172 = vmatprep.subr.mxu0 0.0
    %v9173 = vand.u32 %v8460, 4294901760
    %v9174 = vsub.f32 %v8460, %v9173
    %v9175 = vand.u32 %v9174, 4294901760
    %9176 = vmatpush1.msra.mxu0 %v9175
    %9177 = vmatprep.subr.mxu0 0.0
    %v9178 = vand.u32 %v8461, 4294901760
    %v9179 = vsub.f32 %v8461, %v9178
    %v9180 = vand.u32 %v9179, 4294901760
    %9181 = vmatpush1.msra.mxu0 %v9180
    %9182 = vmatprep.subr.mxu0 0.0
    %v9183 = vand.u32 %v8462, 4294901760
    %v9184 = vsub.f32 %v8462, %v9183
    %v9185 = vand.u32 %v9184, 4294901760
    %9186 = vmatpush1.msra.mxu0 %v9185
    %9187 = vmatprep.subr.mxu0 0.0
    %v9188 = vand.u32 %v8463, 4294901760
    %v9189 = vsub.f32 %v8463, %v9188
    %v9190 = vand.u32 %v9189, 4294901760
    %9191 = vmatpush1.msra.mxu0 %v9190
    %9192 = vmatprep.subr.mxu0 0.0
    %v9193 = vand.u32 %v8464, 4294901760
    %v9194 = vsub.f32 %v8464, %v9193
    %v9195 = vand.u32 %v9194, 4294901760
    %9196 = vmatpush1.msra.mxu0 %v9195
    %9197 = vmatprep.subr.mxu0 0.0
    %v9198 = vand.u32 %v8465, 4294901760
    %v9199 = vsub.f32 %v8465, %v9198
    %v9200 = vand.u32 %v9199, 4294901760
    %9201 = vmatpush1.msra.mxu0 %v9200
    %9202 = vmatprep.subr.mxu0 0.0
    %9203 = vmatpush1.msra.mxu0 0.0
    %9204 = vmatprep.subr.mxu0 0.0
    %9205 = vmatpush1.msra.mxu0 0.0
    %9206 = vmatprep.subr.mxu0 0.0
    %9207 = vmatpush1.msra.mxu0 0.0
    %9208 = vmatprep.subr.mxu0 0.0
    %9209 = vmatpush1.msra.mxu0 0.0
    %9210 = vmatprep.subr.mxu0 0.0
    %9211 = vmatpush1.msra.mxu0 0.0
    %9212 = vmatprep.subr.mxu0 0.0
    %9213 = vmatpush1.msra.mxu0 0.0
    %9214 = vmatprep.subr.mxu0 0.0
    %9215 = vmatpush1.msra.mxu0 0.0
    %9216 = vmatprep.subr.mxu0 0.0
    %9217 = vmatpush1.msra.mxu0 0.0
    %9218 = vmatprep.subr.mxu0 0.0
    %9219 = vmatpush1.msra.mxu0 0.0
    %9220 = vmatprep.subr.mxu0 0.0
    %9221 = vmatpush1.msra.mxu0 0.0
    %9222 = vmatprep.subr.mxu0 0.0
    %9223 = vmatpush1.msra.mxu0 0.0
    %9224 = vmatprep.subr.mxu0 0.0
    %9225 = vmatpush1.msra.mxu0 0.0
    %9226 = vmatprep.subr.mxu0 0.0
    %9227 = vmatpush1.msra.mxu0 0.0
    %9228 = vmatprep.subr.mxu0 0.0
    %9229 = vmatpush1.msra.mxu0 0.0
    %9230 = vmatprep.subr.mxu0 0.0
    %9231 = vmatpush1.msra.mxu0 0.0
    %9232 = vmatprep.subr.mxu0 0.0
    %9233 = vmatpush1.msra.mxu0 0.0
    %9234 = vmatprep.mubr.f32.mxu0 0.0
    %v9235 = vand.u32 %v8441, 4294901760
    %9236 = vmatmul.mubr.f32.gmra.mrb[0].mxu0 %v9235
    %v9237 = vpop.f32.mrb[0].mxu0
    %v9238 = vadd.f32 %v9063, %v9237
    %v9239 = vpop.f32.mrb[0].mxu0
    %9240 = vmatprep.mubr.f32.mxu0 0.0
    %v9241 = vand.u32 %v8442, 4294901760
    %9242 = vmatmul.mubr.f32.gmra.mrb[0].mxu0 %v9241
    %v9243 = vpop.f32.mrb[0].mxu0
    %v9244 = vadd.f32 %v9071, %v9243
    %v9245 = vpop.f32.mrb[0].mxu0
    %9246 = vmatprep.mubr.f32.mxu0 0.0
    %v9247 = vand.u32 %v8443, 4294901760
    %9248 = vmatmul.mubr.f32.gmra.mrb[0].mxu0 %v9247
    %v9249 = vpop.f32.mrb[0].mxu0
    %v9250 = vadd.f32 %v9079, %v9249
    %v9251 = vpop.f32.mrb[0].mxu0
    %9252 = vmatprep.mubr.f32.mxu0 0.0
    %v9253 = vand.u32 %v8444, 4294901760
    %9254 = vmatmul.mubr.f32.gmra.mrb[0].mxu0 %v9253
    %v9255 = vpop.f32.mrb[0].mxu0
    %v9256 = vadd.f32 %v9087, %v9255
    %v9257 = vpop.f32.mrb[0].mxu0
    %9258 = vmatprep.mubr.f32.mxu0 0.0
    %v9259 = vand.u32 %v8445, 4294901760
    %9260 = vmatmul.mubr.f32.gmra.mrb[0].mxu0 %v9259
    %v9261 = vpop.f32.mrb[0].mxu0
    %v9262 = vadd.f32 %v9095, %v9261
    %v9263 = vpop.f32.mrb[0].mxu0
    %9264 = vmatprep.mubr.f32.mxu0 0.0
    %v9265 = vand.u32 %v8446, 4294901760
    %9266 = vmatmul.mubr.f32.gmra.mrb[0].mxu0 %v9265
    %v9267 = vpop.f32.mrb[0].mxu0
    %v9268 = vadd.f32 %v9103, %v9267
    %v9269 = vpop.f32.mrb[0].mxu0
    %9270 = vmatprep.mubr.f32.mxu0 0.0
    %v9271 = vand.u32 %v8447, 4294901760
    %9272 = vmatmul.mubr.f32.gmra.mrb[0].mxu0 %v9271
    %v9273 = vpop.f32.mrb[0].mxu0
    %v9274 = vadd.f32 %v9111, %v9273
    %v9275 = vpop.f32.mrb[0].mxu0
    %9276 = vmatprep.mubr.f32.mxu0 0.0
    %v9277 = vand.u32 %v8448, 4294901760
    %9278 = vmatmul.mubr.f32.gmra.mrb[0].mxu0 %v9277
    %v9279 = vpop.f32.mrb[0].mxu0
    %v9280 = vadd.f32 %v9119, %v9279
    %v9281 = vpop.f32.mrb[0].mxu0
    %9282 = vdwg.mxu0
    %9283 = vmatprep.subr.mxu0 0.0
    %v9284 = vand.u32 %v8450, 4294901760
    %9285 = vmatpush1.msra.mxu0 %v9284
    %9286 = vmatprep.subr.mxu0 0.0
    %v9287 = vand.u32 %v8451, 4294901760
    %9288 = vmatpush1.msra.mxu0 %v9287
    %9289 = vmatprep.subr.mxu0 0.0
    %v9290 = vand.u32 %v8452, 4294901760
    %9291 = vmatpush1.msra.mxu0 %v9290
    %9292 = vmatprep.subr.mxu0 0.0
    %v9293 = vand.u32 %v8453, 4294901760
    %9294 = vmatpush1.msra.mxu0 %v9293
    %9295 = vmatprep.subr.mxu0 0.0
    %v9296 = vand.u32 %v8454, 4294901760
    %9297 = vmatpush1.msra.mxu0 %v9296
    %9298 = vmatprep.subr.mxu0 0.0
    %v9299 = vand.u32 %v8455, 4294901760
    %9300 = vmatpush1.msra.mxu0 %v9299
    %9301 = vmatprep.subr.mxu0 0.0
    %v9302 = vand.u32 %v8456, 4294901760
    %9303 = vmatpush1.msra.mxu0 %v9302
    %9304 = vmatprep.subr.mxu0 0.0
    %v9305 = vand.u32 %v8457, 4294901760
    %9306 = vmatpush1.msra.mxu0 %v9305
    %9307 = vmatprep.subr.mxu0 0.0
    %v9308 = vand.u32 %v8458, 4294901760
    %9309 = vmatpush1.msra.mxu0 %v9308
    %9310 = vmatprep.subr.mxu0 0.0
    %v9311 = vand.u32 %v8459, 4294901760
    %9312 = vmatpush1.msra.mxu0 %v9311
    %9313 = vmatprep.subr.mxu0 0.0
    %v9314 = vand.u32 %v8460, 4294901760
    %9315 = vmatpush1.msra.mxu0 %v9314
    %9316 = vmatprep.subr.mxu0 0.0
    %v9317 = vand.u32 %v8461, 4294901760
    %9318 = vmatpush1.msra.mxu0 %v9317
    %9319 = vmatprep.subr.mxu0 0.0
    %v9320 = vand.u32 %v8462, 4294901760
    %9321 = vmatpush1.msra.mxu0 %v9320
    %9322 = vmatprep.subr.mxu0 0.0
    %v9323 = vand.u32 %v8463, 4294901760
    %9324 = vmatpush1.msra.mxu0 %v9323
    %9325 = vmatprep.subr.mxu0 0.0
    %v9326 = vand.u32 %v8464, 4294901760
    %9327 = vmatpush1.msra.mxu0 %v9326
    %9328 = vmatprep.subr.mxu0 0.0
    %v9329 = vand.u32 %v8465, 4294901760
    %9330 = vmatpush1.msra.mxu0 %v9329
    %9331 = vmatprep.subr.mxu0 0.0
    %9332 = vmatpush1.msra.mxu0 0.0
    %9333 = vmatprep.subr.mxu0 0.0
    %9334 = vmatpush1.msra.mxu0 0.0
    %9335 = vmatprep.subr.mxu0 0.0
    %9336 = vmatpush1.msra.mxu0 0.0
    %9337 = vmatprep.subr.mxu0 0.0
    %9338 = vmatpush1.msra.mxu0 0.0
    %9339 = vmatprep.subr.mxu0 0.0
    %9340 = vmatpush1.msra.mxu0 0.0
    %9341 = vmatprep.subr.mxu0 0.0
    %9342 = vmatpush1.msra.mxu0 0.0
    %9343 = vmatprep.subr.mxu0 0.0
    %9344 = vmatpush1.msra.mxu0 0.0
    %9345 = vmatprep.subr.mxu0 0.0
    %9346 = vmatpush1.msra.mxu0 0.0
    %9347 = vmatprep.subr.mxu0 0.0
    %9348 = vmatpush1.msra.mxu0 0.0
    %9349 = vmatprep.subr.mxu0 0.0
    %9350 = vmatpush1.msra.mxu0 0.0
    %9351 = vmatprep.subr.mxu0 0.0
    %9352 = vmatpush1.msra.mxu0 0.0
    %9353 = vmatprep.subr.mxu0 0.0
    %9354 = vmatpush1.msra.mxu0 0.0
    %9355 = vmatprep.subr.mxu0 0.0
    %9356 = vmatpush1.msra.mxu0 0.0
    %9357 = vmatprep.subr.mxu0 0.0
    %9358 = vmatpush1.msra.mxu0 0.0
    %9359 = vmatprep.subr.mxu0 0.0
    %9360 = vmatpush1.msra.mxu0 0.0
    %9361 = vmatprep.subr.mxu0 0.0
    %9362 = vmatpush1.msra.mxu0 0.0
    %9363 = vmatprep.mubr.f32.mxu0 0.0
    %v9364 = vand.u32 %v8441, 4294901760
    %9365 = vmatmul.mubr.f32.gmra.mrb[0].mxu0 %v9364
    %v9366 = vpop.f32.mrb[0].mxu0
    %v9367 = vadd.f32 %v9238, %v9366
    %v9368 = vpop.f32.mrb[0].mxu0
    %9369 = vmatprep.mubr.f32.mxu0 0.0
    %v9370 = vand.u32 %v8442, 4294901760
    %9371 = vmatmul.mubr.f32.gmra.mrb[0].mxu0 %v9370
    %v9372 = vpop.f32.mrb[0].mxu0
    %v9373 = vadd.f32 %v9244, %v9372
    %v9374 = vpop.f32.mrb[0].mxu0
    %9375 = vmatprep.mubr.f32.mxu0 0.0
    %v9376 = vand.u32 %v8443, 4294901760
    %9377 = vmatmul.mubr.f32.gmra.mrb[0].mxu0 %v9376
    %v9378 = vpop.f32.mrb[0].mxu0
    %v9379 = vadd.f32 %v9250, %v9378
    %v9380 = vpop.f32.mrb[0].mxu0
    %9381 = vmatprep.mubr.f32.mxu0 0.0
    %v9382 = vand.u32 %v8444, 4294901760
    %9383 = vmatmul.mubr.f32.gmra.mrb[0].mxu0 %v9382
    %v9384 = vpop.f32.mrb[0].mxu0
    %v9385 = vadd.f32 %v9256, %v9384
    %v9386 = vpop.f32.mrb[0].mxu0
    %9387 = vmatprep.mubr.f32.mxu0 0.0
    %v9388 = vand.u32 %v8445, 4294901760
    %9389 = vmatmul.mubr.f32.gmra.mrb[0].mxu0 %v9388
    %v9390 = vpop.f32.mrb[0].mxu0
    %v9391 = vadd.f32 %v9262, %v9390
    %v9392 = vpop.f32.mrb[0].mxu0
    %9393 = vmatprep.mubr.f32.mxu0 0.0
    %v9394 = vand.u32 %v8446, 4294901760
    %9395 = vmatmul.mubr.f32.gmra.mrb[0].mxu0 %v9394
    %v9396 = vpop.f32.mrb[0].mxu0
    %v9397 = vadd.f32 %v9268, %v9396
    %v9398 = vpop.f32.mrb[0].mxu0
    %9399 = vmatprep.mubr.f32.mxu0 0.0
    %v9400 = vand.u32 %v8447, 4294901760
    %9401 = vmatmul.mubr.f32.gmra.mrb[0].mxu0 %v9400
    %v9402 = vpop.f32.mrb[0].mxu0
    %v9403 = vadd.f32 %v9274, %v9402
    %v9404 = vpop.f32.mrb[0].mxu0
    %9405 = vmatprep.mubr.f32.mxu0 0.0
    %v9406 = vand.u32 %v8448, 4294901760
    %9407 = vmatmul.mubr.f32.gmra.mrb[0].mxu0 %v9406
    %v9408 = vpop.f32.mrb[0].mxu0
    %v9409 = vadd.f32 %v9280, %v9408
    %v9410 = vpop.f32.mrb[0].mxu0
    %9411 = vdwg.mxu0
    %v9412 = vsel %vm8349, %v9367, 0.0
    %v9413 = vsel %vm8350, %v9373, 0.0
    %v9414 = vsel %vm8351, %v9379, 0.0
    %v9415 = vsel %vm8352, %v9385, 0.0
    %v9416 = vsel %vm8353, %v9391, 0.0
    %v9417 = vsel %vm8354, %v9397, 0.0
    %v9418 = vsel %vm8355, %v9403, 0.0
    %v9419 = vsel %vm8356, %v9409, 0.0
    %v9420 = vadd.f32 %v9412, %v9413
    %v9421 = vadd.f32 %v9420, %v9414
    %v9422 = vadd.f32 %v9421, %v9415
    %v9423 = vadd.f32 %v9422, %v9416
    %v9424 = vadd.f32 %v9423, %v9417
    %v9425 = vadd.f32 %v9424, %v9418
    %v9426 = vadd.f32 %v9425, %v9419
    %v9427 = vrot.slane %v9426, 4
    %v9428 = vadd.f32 %v9426, %v9427
    %v9429 = vrot.slane %v9428, 2
    %v9430 = vadd.f32 %v9428, %v9429
    %v9431 = vrot.slane %v9430, 1
    %v9432 = vadd.f32 %v9430, %v9431
    %v9433 = vmul.f32 %v9432, 0.03125
    %v9434 = vsub.f32 %v9367, %v9433
    %v9435 = vsub.f32 %v9373, %v9433
    %v9436 = vsub.f32 %v9379, %v9433
    %v9437 = vsub.f32 %v9385, %v9433
    %v9438 = vsub.f32 %v9391, %v9433
    %v9439 = vsub.f32 %v9397, %v9433
    %v9440 = vsub.f32 %v9403, %v9433
    %v9441 = vsub.f32 %v9409, %v9433
    %v9442 = vsel %vm8349, %v9434, 0.0
    %v9443 = vsel %vm8350, %v9435, 0.0
    %v9444 = vsel %vm8351, %v9436, 0.0
    %v9445 = vsel %vm8352, %v9437, 0.0
    %v9446 = vsel %vm8353, %v9438, 0.0
    %v9447 = vsel %vm8354, %v9439, 0.0
    %v9448 = vsel %vm8355, %v9440, 0.0
    %v9449 = vsel %vm8356, %v9441, 0.0
    %v9450 = vmul.f32 %v9442, %v9442
    %v9451 = vmul.f32 %v9443, %v9443
    %v9452 = vmul.f32 %v9444, %v9444
    %v9453 = vmul.f32 %v9445, %v9445
    %v9454 = vmul.f32 %v9446, %v9446
    %v9455 = vmul.f32 %v9447, %v9447
    %v9456 = vmul.f32 %v9448, %v9448
    %v9457 = vmul.f32 %v9449, %v9449
    %v9458 = vadd.f32 %v9450, %v9451
    %v9459 = vadd.f32 %v9458, %v9452
    %v9460 = vadd.f32 %v9459, %v9453
    %v9461 = vadd.f32 %v9460, %v9454
    %v9462 = vadd.f32 %v9461, %v9455
    %v9463 = vadd.f32 %v9462, %v9456
    %v9464 = vadd.f32 %v9463, %v9457
    %v9465 = vrot.slane %v9464, 4
    %v9466 = vadd.f32 %v9464, %v9465
    %v9467 = vrot.slane %v9466, 2
    %v9468 = vadd.f32 %v9466, %v9467
    %v9469 = vrot.slane %v9468, 1
    %v9470 = vadd.f32 %v9468, %v9469
    %v9471 = vmul.f32 %v9470, 0.03125
    %v9472 = vadd.f32 %v9471, 1e-05
    %v9473 = vrsqrt.pop %v9472
    %v9474 = vmul.f32 %v9473, %v79
    %v9475 = vmul.f32 %v9433, %v9474
    %v9477 = vrot.slane %v9475, 7
    %v9479 = vsub.f32 %v79, %v9477
    %v9480 = vlaneseq
    %v9481 = vshrl.u32 %v9480, 7
    %v9482 = vsub.s32 2, %v9481
    %v9483 = vrot.slane %v9474, %v9482
    %v9484 = vmul.f32 %v9367, %v9483
    %v9485 = vmul.f32 %v9373, %v9483
    %v9486 = vmul.f32 %v9379, %v9483
    %v9487 = vmul.f32 %v9385, %v9483
    %v9488 = vmul.f32 %v9391, %v9483
    %v9489 = vmul.f32 %v9397, %v9483
    %v9490 = vmul.f32 %v9403, %v9483
    %v9491 = vmul.f32 %v9409, %v9483
    %v9492 = vlaneseq
    %v9493 = vshrl.u32 %v9492, 7
    %v9494 = vsub.s32 3, %v9493
    %v9495 = vrot.slane %v9479, %v9494
    %v9496 = vadd.f32 %v9484, %v9495
    %v9497 = vadd.f32 %v9485, %v9495
    %v9498 = vadd.f32 %v9486, %v9495
    %v9499 = vadd.f32 %v9487, %v9495
    %v9500 = vadd.f32 %v9488, %v9495
    %v9501 = vadd.f32 %v9489, %v9495
    %v9502 = vadd.f32 %v9490, %v9495
    %v9503 = vadd.f32 %v9491, %v9495
    %v9504 = vmax.f32 %v9496, 0.0
    %v9505 = vmax.f32 %v9497, 0.0
    %v9506 = vmax.f32 %v9498, 0.0
    %v9507 = vmax.f32 %v9499, 0.0
    %v9508 = vmax.f32 %v9500, 0.0
    %v9509 = vmax.f32 %v9501, 0.0
    %v9510 = vmax.f32 %v9502, 0.0
    %v9511 = vmax.f32 %v9503, 0.0
    %s9512 = scalar_lea.vmem [#allocation9], 1024
    %v9513 = vld [vmem:[%s9512] sm:$0xff]
    %v9514 = vld [vmem:[%s9512 + $0x8] sm:$0xff]
    %v9515 = vld [vmem:[%s9512 + $0x10] sm:$0xff]
    %v9516 = vld [vmem:[%s9512 + $0x18] sm:$0xff]
    %v9517 = vld [vmem:[%s9512 + $0x20] sm:$0xff]
    %v9518 = vld [vmem:[%s9512 + $0x28] sm:$0xff]
    %v9519 = vld [vmem:[%s9512 + $0x30] sm:$0xff]
    %v9520 = vld [vmem:[%s9512 + $0x38] sm:$0xff]
    %v9521 = vld [vmem:[%s9512 + $0x40] sm:$0xff]
    %v9522 = vld [vmem:[%s9512 + $0x48] sm:$0xff]
    %v9523 = vld [vmem:[%s9512 + $0x50] sm:$0xff]
    %v9524 = vld [vmem:[%s9512 + $0x58] sm:$0xff]
    %v9525 = vld [vmem:[%s9512 + $0x60] sm:$0xff]
    %v9526 = vld [vmem:[%s9512 + $0x68] sm:$0xff]
    %v9527 = vld [vmem:[%s9512 + $0x70] sm:$0xff]
    %v9528 = vld [vmem:[%s9512 + $0x78] sm:$0xff]
    %v9529 = vlaneseq
    %v9530 = vshrl.u32 %v9529, 7
    %v9531 = vsub.s32 4, %v9530
    %v9532 = vrot.slane %v79, %v9531
    %9533 = vmatprep.subr.mxu0 0.0
    %v9534 = vand.u32 %v9513, 4294901760
    %9535 = vmatpush1.msra.mxu0 %v9534
    %9536 = vmatprep.subr.mxu0 0.0
    %v9537 = vand.u32 %v9514, 4294901760
    %9538 = vmatpush1.msra.mxu0 %v9537
    %9539 = vmatprep.subr.mxu0 0.0
    %v9540 = vand.u32 %v9515, 4294901760
    %9541 = vmatpush1.msra.mxu0 %v9540
    %9542 = vmatprep.subr.mxu0 0.0
    %v9543 = vand.u32 %v9516, 4294901760
    %9544 = vmatpush1.msra.mxu0 %v9543
    %9545 = vmatprep.subr.mxu0 0.0
    %v9546 = vand.u32 %v9517, 4294901760
    %9547 = vmatpush1.msra.mxu0 %v9546
    %9548 = vmatprep.subr.mxu0 0.0
    %v9549 = vand.u32 %v9518, 4294901760
    %9550 = vmatpush1.msra.mxu0 %v9549
    %9551 = vmatprep.subr.mxu0 0.0
    %v9552 = vand.u32 %v9519, 4294901760
    %9553 = vmatpush1.msra.mxu0 %v9552
    %9554 = vmatprep.subr.mxu0 0.0
    %v9555 = vand.u32 %v9520, 4294901760
    %9556 = vmatpush1.msra.mxu0 %v9555
    %9557 = vmatprep.subr.mxu0 0.0
    %v9558 = vand.u32 %v9521, 4294901760
    %9559 = vmatpush1.msra.mxu0 %v9558
    %9560 = vmatprep.subr.mxu0 0.0
    %v9561 = vand.u32 %v9522, 4294901760
    %9562 = vmatpush1.msra.mxu0 %v9561
    %9563 = vmatprep.subr.mxu0 0.0
    %v9564 = vand.u32 %v9523, 4294901760
    %9565 = vmatpush1.msra.mxu0 %v9564
    %9566 = vmatprep.subr.mxu0 0.0
    %v9567 = vand.u32 %v9524, 4294901760
    %9568 = vmatpush1.msra.mxu0 %v9567
    %9569 = vmatprep.subr.mxu0 0.0
    %v9570 = vand.u32 %v9525, 4294901760
    %9571 = vmatpush1.msra.mxu0 %v9570
    %9572 = vmatprep.subr.mxu0 0.0
    %v9573 = vand.u32 %v9526, 4294901760
    %9574 = vmatpush1.msra.mxu0 %v9573
    %9575 = vmatprep.subr.mxu0 0.0
    %v9576 = vand.u32 %v9527, 4294901760
    %9577 = vmatpush1.msra.mxu0 %v9576
    %9578 = vmatprep.subr.mxu0 0.0
    %v9579 = vand.u32 %v9528, 4294901760
    %9580 = vmatpush1.msra.mxu0 %v9579
    %9581 = vmatprep.subr.mxu0 0.0
    %9582 = vmatpush1.msra.mxu0 0.0
    %9583 = vmatprep.subr.mxu0 0.0
    %9584 = vmatpush1.msra.mxu0 0.0
    %9585 = vmatprep.subr.mxu0 0.0
    %9586 = vmatpush1.msra.mxu0 0.0
    %9587 = vmatprep.subr.mxu0 0.0
    %9588 = vmatpush1.msra.mxu0 0.0
    %9589 = vmatprep.subr.mxu0 0.0
    %9590 = vmatpush1.msra.mxu0 0.0
    %9591 = vmatprep.subr.mxu0 0.0
    %9592 = vmatpush1.msra.mxu0 0.0
    %9593 = vmatprep.subr.mxu0 0.0
    %9594 = vmatpush1.msra.mxu0 0.0
    %9595 = vmatprep.subr.mxu0 0.0
    %9596 = vmatpush1.msra.mxu0 0.0
    %9597 = vmatprep.subr.mxu0 0.0
    %9598 = vmatpush1.msra.mxu0 0.0
    %9599 = vmatprep.subr.mxu0 0.0
    %9600 = vmatpush1.msra.mxu0 0.0
    %9601 = vmatprep.subr.mxu0 0.0
    %9602 = vmatpush1.msra.mxu0 0.0
    %9603 = vmatprep.subr.mxu0 0.0
    %9604 = vmatpush1.msra.mxu0 0.0
    %9605 = vmatprep.subr.mxu0 0.0
    %9606 = vmatpush1.msra.mxu0 0.0
    %9607 = vmatprep.subr.mxu0 0.0
    %9608 = vmatpush1.msra.mxu0 0.0
    %9609 = vmatprep.subr.mxu0 0.0
    %9610 = vmatpush1.msra.mxu0 0.0
    %9611 = vmatprep.subr.mxu0 0.0
    %9612 = vmatpush1.msra.mxu0 0.0
    %9613 = vmatprep.mubr.f32.mxu0 0.0
    %v9614 = vand.u32 %v9504, 4294901760
    %v9615 = vsub.f32 %v9504, %v9614
    %v9616 = vand.u32 %v9615, 4294901760
    %v9617 = vsub.f32 %v9615, %v9616
    %v9618 = vand.u32 %v9617, 4294901760
    %9619 = vmatmul.mubr.f32.gmra.mrb[0].mxu0 %v9618
    %v9620 = vpop.f32.mrb[0].mxu0
    %v9621 = vadd.f32 %v9532, %v9620
    %v9622 = vpop.f32.mrb[0].mxu0
    %9623 = vmatprep.mubr.f32.mxu0 0.0
    %v9624 = vand.u32 %v9505, 4294901760
    %v9625 = vsub.f32 %v9505, %v9624
    %v9626 = vand.u32 %v9625, 4294901760
    %v9627 = vsub.f32 %v9625, %v9626
    %v9628 = vand.u32 %v9627, 4294901760
    %9629 = vmatmul.mubr.f32.gmra.mrb[0].mxu0 %v9628
    %v9630 = vpop.f32.mrb[0].mxu0
    %v9631 = vadd.f32 %v9532, %v9630
    %v9632 = vpop.f32.mrb[0].mxu0
    %9633 = vmatprep.mubr.f32.mxu0 0.0
    %v9634 = vand.u32 %v9506, 4294901760
    %v9635 = vsub.f32 %v9506, %v9634
    %v9636 = vand.u32 %v9635, 4294901760
    %v9637 = vsub.f32 %v9635, %v9636
    %v9638 = vand.u32 %v9637, 4294901760
    %9639 = vmatmul.mubr.f32.gmra.mrb[0].mxu0 %v9638
    %v9640 = vpop.f32.mrb[0].mxu0
    %v9641 = vadd.f32 %v9532, %v9640
    %v9642 = vpop.f32.mrb[0].mxu0
    %9643 = vmatprep.mubr.f32.mxu0 0.0
    %v9644 = vand.u32 %v9507, 4294901760
    %v9645 = vsub.f32 %v9507, %v9644
    %v9646 = vand.u32 %v9645, 4294901760
    %v9647 = vsub.f32 %v9645, %v9646
    %v9648 = vand.u32 %v9647, 4294901760
    %9649 = vmatmul.mubr.f32.gmra.mrb[0].mxu0 %v9648
    %v9650 = vpop.f32.mrb[0].mxu0
    %v9651 = vadd.f32 %v9532, %v9650
    %v9652 = vpop.f32.mrb[0].mxu0
    %9653 = vmatprep.mubr.f32.mxu0 0.0
    %v9654 = vand.u32 %v9508, 4294901760
    %v9655 = vsub.f32 %v9508, %v9654
    %v9656 = vand.u32 %v9655, 4294901760
    %v9657 = vsub.f32 %v9655, %v9656
    %v9658 = vand.u32 %v9657, 4294901760
    %9659 = vmatmul.mubr.f32.gmra.mrb[0].mxu0 %v9658
    %v9660 = vpop.f32.mrb[0].mxu0
    %v9661 = vadd.f32 %v9532, %v9660
    %v9662 = vpop.f32.mrb[0].mxu0
    %9663 = vmatprep.mubr.f32.mxu0 0.0
    %v9664 = vand.u32 %v9509, 4294901760
    %v9665 = vsub.f32 %v9509, %v9664
    %v9666 = vand.u32 %v9665, 4294901760
    %v9667 = vsub.f32 %v9665, %v9666
    %v9668 = vand.u32 %v9667, 4294901760
    %9669 = vmatmul.mubr.f32.gmra.mrb[0].mxu0 %v9668
    %v9670 = vpop.f32.mrb[0].mxu0
    %v9671 = vadd.f32 %v9532, %v9670
    %v9672 = vpop.f32.mrb[0].mxu0
    %9673 = vmatprep.mubr.f32.mxu0 0.0
    %v9674 = vand.u32 %v9510, 4294901760
    %v9675 = vsub.f32 %v9510, %v9674
    %v9676 = vand.u32 %v9675, 4294901760
    %v9677 = vsub.f32 %v9675, %v9676
    %v9678 = vand.u32 %v9677, 4294901760
    %9679 = vmatmul.mubr.f32.gmra.mrb[0].mxu0 %v9678
    %v9680 = vpop.f32.mrb[0].mxu0
    %v9681 = vadd.f32 %v9532, %v9680
    %v9682 = vpop.f32.mrb[0].mxu0
    %9683 = vmatprep.mubr.f32.mxu0 0.0
    %v9684 = vand.u32 %v9511, 4294901760
    %v9685 = vsub.f32 %v9511, %v9684
    %v9686 = vand.u32 %v9685, 4294901760
    %v9687 = vsub.f32 %v9685, %v9686
    %v9688 = vand.u32 %v9687, 4294901760
    %9689 = vmatmul.mubr.f32.gmra.mrb[0].mxu0 %v9688
    %v9690 = vpop.f32.mrb[0].mxu0
    %v9691 = vadd.f32 %v9532, %v9690
    %v9692 = vpop.f32.mrb[0].mxu0
    %9693 = vdwg.mxu0
    %9694 = vmatprep.subr.mxu0 0.0
    %v9695 = vand.u32 %v9513, 4294901760
    %v9696 = vsub.f32 %v9513, %v9695
    %v9697 = vand.u32 %v9696, 4294901760
    %v9698 = vsub.f32 %v9696, %v9697
    %v9699 = vand.u32 %v9698, 4294901760
    %9700 = vmatpush1.msra.mxu0 %v9699
    %9701 = vmatprep.subr.mxu0 0.0
    %v9702 = vand.u32 %v9514, 4294901760
    %v9703 = vsub.f32 %v9514, %v9702
    %v9704 = vand.u32 %v9703, 4294901760
    %v9705 = vsub.f32 %v9703, %v9704
    %v9706 = vand.u32 %v9705, 4294901760
    %9707 = vmatpush1.msra.mxu0 %v9706
    %9708 = vmatprep.subr.mxu0 0.0
    %v9709 = vand.u32 %v9515, 4294901760
    %v9710 = vsub.f32 %v9515, %v9709
    %v9711 = vand.u32 %v9710, 4294901760
    %v9712 = vsub.f32 %v9710, %v9711
    %v9713 = vand.u32 %v9712, 4294901760
    %9714 = vmatpush1.msra.mxu0 %v9713
    %9715 = vmatprep.subr.mxu0 0.0
    %v9716 = vand.u32 %v9516, 4294901760
    %v9717 = vsub.f32 %v9516, %v9716
    %v9718 = vand.u32 %v9717, 4294901760
    %v9719 = vsub.f32 %v9717, %v9718
    %v9720 = vand.u32 %v9719, 4294901760
    %9721 = vmatpush1.msra.mxu0 %v9720
    %9722 = vmatprep.subr.mxu0 0.0
    %v9723 = vand.u32 %v9517, 4294901760
    %v9724 = vsub.f32 %v9517, %v9723
    %v9725 = vand.u32 %v9724, 4294901760
    %v9726 = vsub.f32 %v9724, %v9725
    %v9727 = vand.u32 %v9726, 4294901760
    %9728 = vmatpush1.msra.mxu0 %v9727
    %9729 = vmatprep.subr.mxu0 0.0
    %v9730 = vand.u32 %v9518, 4294901760
    %v9731 = vsub.f32 %v9518, %v9730
    %v9732 = vand.u32 %v9731, 4294901760
    %v9733 = vsub.f32 %v9731, %v9732
    %v9734 = vand.u32 %v9733, 4294901760
    %9735 = vmatpush1.msra.mxu0 %v9734
    %9736 = vmatprep.subr.mxu0 0.0
    %v9737 = vand.u32 %v9519, 4294901760
    %v9738 = vsub.f32 %v9519, %v9737
    %v9739 = vand.u32 %v9738, 4294901760
    %v9740 = vsub.f32 %v9738, %v9739
    %v9741 = vand.u32 %v9740, 4294901760
    %9742 = vmatpush1.msra.mxu0 %v9741
    %9743 = vmatprep.subr.mxu0 0.0
    %v9744 = vand.u32 %v9520, 4294901760
    %v9745 = vsub.f32 %v9520, %v9744
    %v9746 = vand.u32 %v9745, 4294901760
    %v9747 = vsub.f32 %v9745, %v9746
    %v9748 = vand.u32 %v9747, 4294901760
    %9749 = vmatpush1.msra.mxu0 %v9748
    %9750 = vmatprep.subr.mxu0 0.0
    %v9751 = vand.u32 %v9521, 4294901760
    %v9752 = vsub.f32 %v9521, %v9751
    %v9753 = vand.u32 %v9752, 4294901760
    %v9754 = vsub.f32 %v9752, %v9753
    %v9755 = vand.u32 %v9754, 4294901760
    %9756 = vmatpush1.msra.mxu0 %v9755
    %9757 = vmatprep.subr.mxu0 0.0
    %v9758 = vand.u32 %v9522, 4294901760
    %v9759 = vsub.f32 %v9522, %v9758
    %v9760 = vand.u32 %v9759, 4294901760
    %v9761 = vsub.f32 %v9759, %v9760
    %v9762 = vand.u32 %v9761, 4294901760
    %9763 = vmatpush1.msra.mxu0 %v9762
    %9764 = vmatprep.subr.mxu0 0.0
    %v9765 = vand.u32 %v9523, 4294901760
    %v9766 = vsub.f32 %v9523, %v9765
    %v9767 = vand.u32 %v9766, 4294901760
    %v9768 = vsub.f32 %v9766, %v9767
    %v9769 = vand.u32 %v9768, 4294901760
    %9770 = vmatpush1.msra.mxu0 %v9769
    %9771 = vmatprep.subr.mxu0 0.0
    %v9772 = vand.u32 %v9524, 4294901760
    %v9773 = vsub.f32 %v9524, %v9772
    %v9774 = vand.u32 %v9773, 4294901760
    %v9775 = vsub.f32 %v9773, %v9774
    %v9776 = vand.u32 %v9775, 4294901760
    %9777 = vmatpush1.msra.mxu0 %v9776
    %9778 = vmatprep.subr.mxu0 0.0
    %v9779 = vand.u32 %v9525, 4294901760
    %v9780 = vsub.f32 %v9525, %v9779
    %v9781 = vand.u32 %v9780, 4294901760
    %v9782 = vsub.f32 %v9780, %v9781
    %v9783 = vand.u32 %v9782, 4294901760
    %9784 = vmatpush1.msra.mxu0 %v9783
    %9785 = vmatprep.subr.mxu0 0.0
    %v9786 = vand.u32 %v9526, 4294901760
    %v9787 = vsub.f32 %v9526, %v9786
    %v9788 = vand.u32 %v9787, 4294901760
    %v9789 = vsub.f32 %v9787, %v9788
    %v9790 = vand.u32 %v9789, 4294901760
    %9791 = vmatpush1.msra.mxu0 %v9790
    %9792 = vmatprep.subr.mxu0 0.0
    %v9793 = vand.u32 %v9527, 4294901760
    %v9794 = vsub.f32 %v9527, %v9793
    %v9795 = vand.u32 %v9794, 4294901760
    %v9796 = vsub.f32 %v9794, %v9795
    %v9797 = vand.u32 %v9796, 4294901760
    %9798 = vmatpush1.msra.mxu0 %v9797
    %9799 = vmatprep.subr.mxu0 0.0
    %v9800 = vand.u32 %v9528, 4294901760
    %v9801 = vsub.f32 %v9528, %v9800
    %v9802 = vand.u32 %v9801, 4294901760
    %v9803 = vsub.f32 %v9801, %v9802
    %v9804 = vand.u32 %v9803, 4294901760
    %9805 = vmatpush1.msra.mxu0 %v9804
    %9806 = vmatprep.subr.mxu0 0.0
    %9807 = vmatpush1.msra.mxu0 0.0
    %9808 = vmatprep.subr.mxu0 0.0
    %9809 = vmatpush1.msra.mxu0 0.0
    %9810 = vmatprep.subr.mxu0 0.0
    %9811 = vmatpush1.msra.mxu0 0.0
    %9812 = vmatprep.subr.mxu0 0.0
    %9813 = vmatpush1.msra.mxu0 0.0
    %9814 = vmatprep.subr.mxu0 0.0
    %9815 = vmatpush1.msra.mxu0 0.0
    %9816 = vmatprep.subr.mxu0 0.0
    %9817 = vmatpush1.msra.mxu0 0.0
    %9818 = vmatprep.subr.mxu0 0.0
    %9819 = vmatpush1.msra.mxu0 0.0
    %9820 = vmatprep.subr.mxu0 0.0
    %9821 = vmatpush1.msra.mxu0 0.0
    %9822 = vmatprep.subr.mxu0 0.0
    %9823 = vmatpush1.msra.mxu0 0.0
    %9824 = vmatprep.subr.mxu0 0.0
    %9825 = vmatpush1.msra.mxu0 0.0
    %9826 = vmatprep.subr.mxu0 0.0
    %9827 = vmatpush1.msra.mxu0 0.0
    %9828 = vmatprep.subr.mxu0 0.0
    %9829 = vmatpush1.msra.mxu0 0.0
    %9830 = vmatprep.subr.mxu0 0.0
    %9831 = vmatpush1.msra.mxu0 0.0
    %9832 = vmatprep.subr.mxu0 0.0
    %9833 = vmatpush1.msra.mxu0 0.0
    %9834 = vmatprep.subr.mxu0 0.0
    %9835 = vmatpush1.msra.mxu0 0.0
    %9836 = vmatprep.subr.mxu0 0.0
    %9837 = vmatpush1.msra.mxu0 0.0
    %9838 = vmatprep.mubr.f32.mxu0 0.0
    %v9839 = vand.u32 %v9504, 4294901760
    %9840 = vmatmul.mubr.f32.gmra.mrb[0].mxu0 %v9839
    %v9841 = vpop.f32.mrb[0].mxu0
    %v9842 = vadd.f32 %v9621, %v9841
    %v9843 = vpop.f32.mrb[0].mxu0
    %9844 = vmatprep.mubr.f32.mxu0 0.0
    %v9845 = vand.u32 %v9505, 4294901760
    %9846 = vmatmul.mubr.f32.gmra.mrb[0].mxu0 %v9845
    %v9847 = vpop.f32.mrb[0].mxu0
    %v9848 = vadd.f32 %v9631, %v9847
    %v9849 = vpop.f32.mrb[0].mxu0
    %9850 = vmatprep.mubr.f32.mxu0 0.0
    %v9851 = vand.u32 %v9506, 4294901760
    %9852 = vmatmul.mubr.f32.gmra.mrb[0].mxu0 %v9851
    %v9853 = vpop.f32.mrb[0].mxu0
    %v9854 = vadd.f32 %v9641, %v9853
    %v9855 = vpop.f32.mrb[0].mxu0
    %9856 = vmatprep.mubr.f32.mxu0 0.0
    %v9857 = vand.u32 %v9507, 4294901760
    %9858 = vmatmul.mubr.f32.gmra.mrb[0].mxu0 %v9857
    %v9859 = vpop.f32.mrb[0].mxu0
    %v9860 = vadd.f32 %v9651, %v9859
    %v9861 = vpop.f32.mrb[0].mxu0
    %9862 = vmatprep.mubr.f32.mxu0 0.0
    %v9863 = vand.u32 %v9508, 4294901760
    %9864 = vmatmul.mubr.f32.gmra.mrb[0].mxu0 %v9863
    %v9865 = vpop.f32.mrb[0].mxu0
    %v9866 = vadd.f32 %v9661, %v9865
    %v9867 = vpop.f32.mrb[0].mxu0
    %9868 = vmatprep.mubr.f32.mxu0 0.0
    %v9869 = vand.u32 %v9509, 4294901760
    %9870 = vmatmul.mubr.f32.gmra.mrb[0].mxu0 %v9869
    %v9871 = vpop.f32.mrb[0].mxu0
    %v9872 = vadd.f32 %v9671, %v9871
    %v9873 = vpop.f32.mrb[0].mxu0
    %9874 = vmatprep.mubr.f32.mxu0 0.0
    %v9875 = vand.u32 %v9510, 4294901760
    %9876 = vmatmul.mubr.f32.gmra.mrb[0].mxu0 %v9875
    %v9877 = vpop.f32.mrb[0].mxu0
    %v9878 = vadd.f32 %v9681, %v9877
    %v9879 = vpop.f32.mrb[0].mxu0
    %9880 = vmatprep.mubr.f32.mxu0 0.0
    %v9881 = vand.u32 %v9511, 4294901760
    %9882 = vmatmul.mubr.f32.gmra.mrb[0].mxu0 %v9881
    %v9883 = vpop.f32.mrb[0].mxu0
    %v9884 = vadd.f32 %v9691, %v9883
    %v9885 = vpop.f32.mrb[0].mxu0
    %9886 = vdwg.mxu0
    %9887 = vmatprep.subr.mxu0 0.0
    %v9888 = vand.u32 %v9513, 4294901760
    %v9889 = vsub.f32 %v9513, %v9888
    %9890 = vmatpush1.msra.mxu0 %v9889
    %9891 = vmatprep.subr.mxu0 0.0
    %v9892 = vand.u32 %v9514, 4294901760
    %v9893 = vsub.f32 %v9514, %v9892
    %9894 = vmatpush1.msra.mxu0 %v9893
    %9895 = vmatprep.subr.mxu0 0.0
    %v9896 = vand.u32 %v9515, 4294901760
    %v9897 = vsub.f32 %v9515, %v9896
    %9898 = vmatpush1.msra.mxu0 %v9897
    %9899 = vmatprep.subr.mxu0 0.0
    %v9900 = vand.u32 %v9516, 4294901760
    %v9901 = vsub.f32 %v9516, %v9900
    %9902 = vmatpush1.msra.mxu0 %v9901
    %9903 = vmatprep.subr.mxu0 0.0
    %v9904 = vand.u32 %v9517, 4294901760
    %v9905 = vsub.f32 %v9517, %v9904
    %9906 = vmatpush1.msra.mxu0 %v9905
    %9907 = vmatprep.subr.mxu0 0.0
    %v9908 = vand.u32 %v9518, 4294901760
    %v9909 = vsub.f32 %v9518, %v9908
    %9910 = vmatpush1.msra.mxu0 %v9909
    %9911 = vmatprep.subr.mxu0 0.0
    %v9912 = vand.u32 %v9519, 4294901760
    %v9913 = vsub.f32 %v9519, %v9912
    %9914 = vmatpush1.msra.mxu0 %v9913
    %9915 = vmatprep.subr.mxu0 0.0
    %v9916 = vand.u32 %v9520, 4294901760
    %v9917 = vsub.f32 %v9520, %v9916
    %9918 = vmatpush1.msra.mxu0 %v9917
    %9919 = vmatprep.subr.mxu0 0.0
    %v9920 = vand.u32 %v9521, 4294901760
    %v9921 = vsub.f32 %v9521, %v9920
    %9922 = vmatpush1.msra.mxu0 %v9921
    %9923 = vmatprep.subr.mxu0 0.0
    %v9924 = vand.u32 %v9522, 4294901760
    %v9925 = vsub.f32 %v9522, %v9924
    %9926 = vmatpush1.msra.mxu0 %v9925
    %9927 = vmatprep.subr.mxu0 0.0
    %v9928 = vand.u32 %v9523, 4294901760
    %v9929 = vsub.f32 %v9523, %v9928
    %9930 = vmatpush1.msra.mxu0 %v9929
    %9931 = vmatprep.subr.mxu0 0.0
    %v9932 = vand.u32 %v9524, 4294901760
    %v9933 = vsub.f32 %v9524, %v9932
    %9934 = vmatpush1.msra.mxu0 %v9933
    %9935 = vmatprep.subr.mxu0 0.0
    %v9936 = vand.u32 %v9525, 4294901760
    %v9937 = vsub.f32 %v9525, %v9936
    %9938 = vmatpush1.msra.mxu0 %v9937
    %9939 = vmatprep.subr.mxu0 0.0
    %v9940 = vand.u32 %v9526, 4294901760
    %v9941 = vsub.f32 %v9526, %v9940
    %9942 = vmatpush1.msra.mxu0 %v9941
    %9943 = vmatprep.subr.mxu0 0.0
    %v9944 = vand.u32 %v9527, 4294901760
    %v9945 = vsub.f32 %v9527, %v9944
    %9946 = vmatpush1.msra.mxu0 %v9945
    %9947 = vmatprep.subr.mxu0 0.0
    %v9948 = vand.u32 %v9528, 4294901760
    %v9949 = vsub.f32 %v9528, %v9948
    %9950 = vmatpush1.msra.mxu0 %v9949
    %9951 = vmatprep.subr.mxu0 0.0
    %9952 = vmatpush1.msra.mxu0 0.0
    %9953 = vmatprep.subr.mxu0 0.0
    %9954 = vmatpush1.msra.mxu0 0.0
    %9955 = vmatprep.subr.mxu0 0.0
    %9956 = vmatpush1.msra.mxu0 0.0
    %9957 = vmatprep.subr.mxu0 0.0
    %9958 = vmatpush1.msra.mxu0 0.0
    %9959 = vmatprep.subr.mxu0 0.0
    %9960 = vmatpush1.msra.mxu0 0.0
    %9961 = vmatprep.subr.mxu0 0.0
    %9962 = vmatpush1.msra.mxu0 0.0
    %9963 = vmatprep.subr.mxu0 0.0
    %9964 = vmatpush1.msra.mxu0 0.0
    %9965 = vmatprep.subr.mxu0 0.0
    %9966 = vmatpush1.msra.mxu0 0.0
    %9967 = vmatprep.subr.mxu0 0.0
    %9968 = vmatpush1.msra.mxu0 0.0
    %9969 = vmatprep.subr.mxu0 0.0
    %9970 = vmatpush1.msra.mxu0 0.0
    %9971 = vmatprep.subr.mxu0 0.0
    %9972 = vmatpush1.msra.mxu0 0.0
    %9973 = vmatprep.subr.mxu0 0.0
    %9974 = vmatpush1.msra.mxu0 0.0
    %9975 = vmatprep.subr.mxu0 0.0
    %9976 = vmatpush1.msra.mxu0 0.0
    %9977 = vmatprep.subr.mxu0 0.0
    %9978 = vmatpush1.msra.mxu0 0.0
    %9979 = vmatprep.subr.mxu0 0.0
    %9980 = vmatpush1.msra.mxu0 0.0
    %9981 = vmatprep.subr.mxu0 0.0
    %9982 = vmatpush1.msra.mxu0 0.0
    %9983 = vmatprep.mubr.f32.mxu0 0.0
    %v9984 = vand.u32 %v9504, 4294901760
    %v9985 = vsub.f32 %v9504, %v9984
    %9986 = vmatmul.mubr.f32.gmra.mrb[0].mxu0 %v9985
    %v9987 = vpop.f32.mrb[0].mxu0
    %v9988 = vadd.f32 %v9842, %v9987
    %v9989 = vpop.f32.mrb[0].mxu0
    %9990 = vmatprep.mubr.f32.mxu0 0.0
    %v9991 = vand.u32 %v9505, 4294901760
    %v9992 = vsub.f32 %v9505, %v9991
    %9993 = vmatmul.mubr.f32.gmra.mrb[0].mxu0 %v9992
    %v9994 = vpop.f32.mrb[0].mxu0
    %v9995 = vadd.f32 %v9848, %v9994
    %v9996 = vpop.f32.mrb[0].mxu0
    %9997 = vmatprep.mubr.f32.mxu0 0.0
    %v9998 = vand.u32 %v9506, 4294901760
    %v9999 = vsub.f32 %v9506, %v9998
    %10000 = vmatmul.mubr.f32.gmra.mrb[0].mxu0 %v9999
    %v10001 = vpop.f32.mrb[0].mxu0
    %v10002 = vadd.f32 %v9854, %v10001
    %v10003 = vpop.f32.mrb[0].mxu0
    %10004 = vmatprep.mubr.f32.mxu0 0.0
    %v10005 = vand.u32 %v9507, 4294901760
    %v10006 = vsub.f32 %v9507, %v10005
    %10007 = vmatmul.mubr.f32.gmra.mrb[0].mxu0 %v10006
    %v10008 = vpop.f32.mrb[0].mxu0
    %v10009 = vadd.f32 %v9860, %v10008
    %v10010 = vpop.f32.mrb[0].mxu0
    %10011 = vmatprep.mubr.f32.mxu0 0.0
    %v10012 = vand.u32 %v9508, 4294901760
    %v10013 = vsub.f32 %v9508, %v10012
    %10014 = vmatmul.mubr.f32.gmra.mrb[0].mxu0 %v10013
    %v10015 = vpop.f32.mrb[0].mxu0
    %v10016 = vadd.f32 %v9866, %v10015
    %v10017 = vpop.f32.mrb[0].mxu0
    %10018 = vmatprep.mubr.f32.mxu0 0.0
    %v10019 = vand.u32 %v9509, 4294901760
    %v10020 = vsub.f32 %v9509, %v10019
    %10021 = vmatmul.mubr.f32.gmra.mrb[0].mxu0 %v10020
    %v10022 = vpop.f32.mrb[0].mxu0
    %v10023 = vadd.f32 %v9872, %v10022
    %v10024 = vpop.f32.mrb[0].mxu0
    %10025 = vmatprep.mubr.f32.mxu0 0.0
    %v10026 = vand.u32 %v9510, 4294901760
    %v10027 = vsub.f32 %v9510, %v10026
    %10028 = vmatmul.mubr.f32.gmra.mrb[0].mxu0 %v10027
    %v10029 = vpop.f32.mrb[0].mxu0
    %v10030 = vadd.f32 %v9878, %v10029
    %v10031 = vpop.f32.mrb[0].mxu0
    %10032 = vmatprep.mubr.f32.mxu0 0.0
    %v10033 = vand.u32 %v9511, 4294901760
    %v10034 = vsub.f32 %v9511, %v10033
    %10035 = vmatmul.mubr.f32.gmra.mrb[0].mxu0 %v10034
    %v10036 = vpop.f32.mrb[0].mxu0
    %v10037 = vadd.f32 %v9884, %v10036
    %v10038 = vpop.f32.mrb[0].mxu0
    %10039 = vdwg.mxu0
    %10040 = vmatprep.subr.mxu0 0.0
    %v10041 = vand.u32 %v9513, 4294901760
    %10042 = vmatpush1.msra.mxu0 %v10041
    %10043 = vmatprep.subr.mxu0 0.0
    %v10044 = vand.u32 %v9514, 4294901760
    %10045 = vmatpush1.msra.mxu0 %v10044
    %10046 = vmatprep.subr.mxu0 0.0
    %v10047 = vand.u32 %v9515, 4294901760
    %10048 = vmatpush1.msra.mxu0 %v10047
    %10049 = vmatprep.subr.mxu0 0.0
    %v10050 = vand.u32 %v9516, 4294901760
    %10051 = vmatpush1.msra.mxu0 %v10050
    %10052 = vmatprep.subr.mxu0 0.0
    %v10053 = vand.u32 %v9517, 4294901760
    %10054 = vmatpush1.msra.mxu0 %v10053
    %10055 = vmatprep.subr.mxu0 0.0
    %v10056 = vand.u32 %v9518, 4294901760
    %10057 = vmatpush1.msra.mxu0 %v10056
    %10058 = vmatprep.subr.mxu0 0.0
    %v10059 = vand.u32 %v9519, 4294901760
    %10060 = vmatpush1.msra.mxu0 %v10059
    %10061 = vmatprep.subr.mxu0 0.0
    %v10062 = vand.u32 %v9520, 4294901760
    %10063 = vmatpush1.msra.mxu0 %v10062
    %10064 = vmatprep.subr.mxu0 0.0
    %v10065 = vand.u32 %v9521, 4294901760
    %10066 = vmatpush1.msra.mxu0 %v10065
    %10067 = vmatprep.subr.mxu0 0.0
    %v10068 = vand.u32 %v9522, 4294901760
    %10069 = vmatpush1.msra.mxu0 %v10068
    %10070 = vmatprep.subr.mxu0 0.0
    %v10071 = vand.u32 %v9523, 4294901760
    %10072 = vmatpush1.msra.mxu0 %v10071
    %10073 = vmatprep.subr.mxu0 0.0
    %v10074 = vand.u32 %v9524, 4294901760
    %10075 = vmatpush1.msra.mxu0 %v10074
    %10076 = vmatprep.subr.mxu0 0.0
    %v10077 = vand.u32 %v9525, 4294901760
    %10078 = vmatpush1.msra.mxu0 %v10077
    %10079 = vmatprep.subr.mxu0 0.0
    %v10080 = vand.u32 %v9526, 4294901760
    %10081 = vmatpush1.msra.mxu0 %v10080
    %10082 = vmatprep.subr.mxu0 0.0
    %v10083 = vand.u32 %v9527, 4294901760
    %10084 = vmatpush1.msra.mxu0 %v10083
    %10085 = vmatprep.subr.mxu0 0.0
    %v10086 = vand.u32 %v9528, 4294901760
    %10087 = vmatpush1.msra.mxu0 %v10086
    %10088 = vmatprep.subr.mxu0 0.0
    %10089 = vmatpush1.msra.mxu0 0.0
    %10090 = vmatprep.subr.mxu0 0.0
    %10091 = vmatpush1.msra.mxu0 0.0
    %10092 = vmatprep.subr.mxu0 0.0
    %10093 = vmatpush1.msra.mxu0 0.0
    %10094 = vmatprep.subr.mxu0 0.0
    %10095 = vmatpush1.msra.mxu0 0.0
    %10096 = vmatprep.subr.mxu0 0.0
    %10097 = vmatpush1.msra.mxu0 0.0
    %10098 = vmatprep.subr.mxu0 0.0
    %10099 = vmatpush1.msra.mxu0 0.0
    %10100 = vmatprep.subr.mxu0 0.0
    %10101 = vmatpush1.msra.mxu0 0.0
    %10102 = vmatprep.subr.mxu0 0.0
    %10103 = vmatpush1.msra.mxu0 0.0
    %10104 = vmatprep.subr.mxu0 0.0
    %10105 = vmatpush1.msra.mxu0 0.0
    %10106 = vmatprep.subr.mxu0 0.0
    %10107 = vmatpush1.msra.mxu0 0.0
    %10108 = vmatprep.subr.mxu0 0.0
    %10109 = vmatpush1.msra.mxu0 0.0
    %10110 = vmatprep.subr.mxu0 0.0
    %10111 = vmatpush1.msra.mxu0 0.0
    %10112 = vmatprep.subr.mxu0 0.0
    %10113 = vmatpush1.msra.mxu0 0.0
    %10114 = vmatprep.subr.mxu0 0.0
    %10115 = vmatpush1.msra.mxu0 0.0
    %10116 = vmatprep.subr.mxu0 0.0
    %10117 = vmatpush1.msra.mxu0 0.0
    %10118 = vmatprep.subr.mxu0 0.0
    %10119 = vmatpush1.msra.mxu0 0.0
    %10120 = vmatprep.mubr.f32.mxu0 0.0
    %v10121 = vand.u32 %v9504, 4294901760
    %v10122 = vsub.f32 %v9504, %v10121
    %v10123 = vand.u32 %v10122, 4294901760
    %10124 = vmatmul.mubr.f32.gmra.mrb[0].mxu0 %v10123
    %v10125 = vpop.f32.mrb[0].mxu0
    %v10126 = vadd.f32 %v9988, %v10125
    %v10127 = vpop.f32.mrb[0].mxu0
    %10128 = vmatprep.mubr.f32.mxu0 0.0
    %v10129 = vand.u32 %v9505, 4294901760
    %v10130 = vsub.f32 %v9505, %v10129
    %v10131 = vand.u32 %v10130, 4294901760
    %10132 = vmatmul.mubr.f32.gmra.mrb[0].mxu0 %v10131
    %v10133 = vpop.f32.mrb[0].mxu0
    %v10134 = vadd.f32 %v9995, %v10133
    %v10135 = vpop.f32.mrb[0].mxu0
    %10136 = vmatprep.mubr.f32.mxu0 0.0
    %v10137 = vand.u32 %v9506, 4294901760
    %v10138 = vsub.f32 %v9506, %v10137
    %v10139 = vand.u32 %v10138, 4294901760
    %10140 = vmatmul.mubr.f32.gmra.mrb[0].mxu0 %v10139
    %v10141 = vpop.f32.mrb[0].mxu0
    %v10142 = vadd.f32 %v10002, %v10141
    %v10143 = vpop.f32.mrb[0].mxu0
    %10144 = vmatprep.mubr.f32.mxu0 0.0
    %v10145 = vand.u32 %v9507, 4294901760
    %v10146 = vsub.f32 %v9507, %v10145
    %v10147 = vand.u32 %v10146, 4294901760
    %10148 = vmatmul.mubr.f32.gmra.mrb[0].mxu0 %v10147
    %v10149 = vpop.f32.mrb[0].mxu0
    %v10150 = vadd.f32 %v10009, %v10149
    %v10151 = vpop.f32.mrb[0].mxu0
    %10152 = vmatprep.mubr.f32.mxu0 0.0
    %v10153 = vand.u32 %v9508, 4294901760
    %v10154 = vsub.f32 %v9508, %v10153
    %v10155 = vand.u32 %v10154, 4294901760
    %10156 = vmatmul.mubr.f32.gmra.mrb[0].mxu0 %v10155
    %v10157 = vpop.f32.mrb[0].mxu0
    %v10158 = vadd.f32 %v10016, %v10157
    %v10159 = vpop.f32.mrb[0].mxu0
    %10160 = vmatprep.mubr.f32.mxu0 0.0
    %v10161 = vand.u32 %v9509, 4294901760
    %v10162 = vsub.f32 %v9509, %v10161
    %v10163 = vand.u32 %v10162, 4294901760
    %10164 = vmatmul.mubr.f32.gmra.mrb[0].mxu0 %v10163
    %v10165 = vpop.f32.mrb[0].mxu0
    %v10166 = vadd.f32 %v10023, %v10165
    %v10167 = vpop.f32.mrb[0].mxu0
    %10168 = vmatprep.mubr.f32.mxu0 0.0
    %v10169 = vand.u32 %v9510, 4294901760
    %v10170 = vsub.f32 %v9510, %v10169
    %v10171 = vand.u32 %v10170, 4294901760
    %10172 = vmatmul.mubr.f32.gmra.mrb[0].mxu0 %v10171
    %v10173 = vpop.f32.mrb[0].mxu0
    %v10174 = vadd.f32 %v10030, %v10173
    %v10175 = vpop.f32.mrb[0].mxu0
    %10176 = vmatprep.mubr.f32.mxu0 0.0
    %v10177 = vand.u32 %v9511, 4294901760
    %v10178 = vsub.f32 %v9511, %v10177
    %v10179 = vand.u32 %v10178, 4294901760
    %10180 = vmatmul.mubr.f32.gmra.mrb[0].mxu0 %v10179
    %v10181 = vpop.f32.mrb[0].mxu0
    %v10182 = vadd.f32 %v10037, %v10181
    %v10183 = vpop.f32.mrb[0].mxu0
    %10184 = vdwg.mxu0
    %10185 = vmatprep.subr.mxu0 0.0
    %v10186 = vand.u32 %v9513, 4294901760
    %v10187 = vsub.f32 %v9513, %v10186
    %v10188 = vand.u32 %v10187, 4294901760
    %10189 = vmatpush1.msra.mxu0 %v10188
    %10190 = vmatprep.subr.mxu0 0.0
    %v10191 = vand.u32 %v9514, 4294901760
    %v10192 = vsub.f32 %v9514, %v10191
    %v10193 = vand.u32 %v10192, 4294901760
    %10194 = vmatpush1.msra.mxu0 %v10193
    %10195 = vmatprep.subr.mxu0 0.0
    %v10196 = vand.u32 %v9515, 4294901760
    %v10197 = vsub.f32 %v9515, %v10196
    %v10198 = vand.u32 %v10197, 4294901760
    %10199 = vmatpush1.msra.mxu0 %v10198
    %10200 = vmatprep.subr.mxu0 0.0
    %v10201 = vand.u32 %v9516, 4294901760
    %v10202 = vsub.f32 %v9516, %v10201
    %v10203 = vand.u32 %v10202, 4294901760
    %10204 = vmatpush1.msra.mxu0 %v10203
    %10205 = vmatprep.subr.mxu0 0.0
    %v10206 = vand.u32 %v9517, 4294901760
    %v10207 = vsub.f32 %v9517, %v10206
    %v10208 = vand.u32 %v10207, 4294901760
    %10209 = vmatpush1.msra.mxu0 %v10208
    %10210 = vmatprep.subr.mxu0 0.0
    %v10211 = vand.u32 %v9518, 4294901760
    %v10212 = vsub.f32 %v9518, %v10211
    %v10213 = vand.u32 %v10212, 4294901760
    %10214 = vmatpush1.msra.mxu0 %v10213
    %10215 = vmatprep.subr.mxu0 0.0
    %v10216 = vand.u32 %v9519, 4294901760
    %v10217 = vsub.f32 %v9519, %v10216
    %v10218 = vand.u32 %v10217, 4294901760
    %10219 = vmatpush1.msra.mxu0 %v10218
    %10220 = vmatprep.subr.mxu0 0.0
    %v10221 = vand.u32 %v9520, 4294901760
    %v10222 = vsub.f32 %v9520, %v10221
    %v10223 = vand.u32 %v10222, 4294901760
    %10224 = vmatpush1.msra.mxu0 %v10223
    %10225 = vmatprep.subr.mxu0 0.0
    %v10226 = vand.u32 %v9521, 4294901760
    %v10227 = vsub.f32 %v9521, %v10226
    %v10228 = vand.u32 %v10227, 4294901760
    %10229 = vmatpush1.msra.mxu0 %v10228
    %10230 = vmatprep.subr.mxu0 0.0
    %v10231 = vand.u32 %v9522, 4294901760
    %v10232 = vsub.f32 %v9522, %v10231
    %v10233 = vand.u32 %v10232, 4294901760
    %10234 = vmatpush1.msra.mxu0 %v10233
    %10235 = vmatprep.subr.mxu0 0.0
    %v10236 = vand.u32 %v9523, 4294901760
    %v10237 = vsub.f32 %v9523, %v10236
    %v10238 = vand.u32 %v10237, 4294901760
    %10239 = vmatpush1.msra.mxu0 %v10238
    %10240 = vmatprep.subr.mxu0 0.0
    %v10241 = vand.u32 %v9524, 4294901760
    %v10242 = vsub.f32 %v9524, %v10241
    %v10243 = vand.u32 %v10242, 4294901760
    %10244 = vmatpush1.msra.mxu0 %v10243
    %10245 = vmatprep.subr.mxu0 0.0
    %v10246 = vand.u32 %v9525, 4294901760
    %v10247 = vsub.f32 %v9525, %v10246
    %v10248 = vand.u32 %v10247, 4294901760
    %10249 = vmatpush1.msra.mxu0 %v10248
    %10250 = vmatprep.subr.mxu0 0.0
    %v10251 = vand.u32 %v9526, 4294901760
    %v10252 = vsub.f32 %v9526, %v10251
    %v10253 = vand.u32 %v10252, 4294901760
    %10254 = vmatpush1.msra.mxu0 %v10253
    %10255 = vmatprep.subr.mxu0 0.0
    %v10256 = vand.u32 %v9527, 4294901760
    %v10257 = vsub.f32 %v9527, %v10256
    %v10258 = vand.u32 %v10257, 4294901760
    %10259 = vmatpush1.msra.mxu0 %v10258
    %10260 = vmatprep.subr.mxu0 0.0
    %v10261 = vand.u32 %v9528, 4294901760
    %v10262 = vsub.f32 %v9528, %v10261
    %v10263 = vand.u32 %v10262, 4294901760
    %10264 = vmatpush1.msra.mxu0 %v10263
    %10265 = vmatprep.subr.mxu0 0.0
    %10266 = vmatpush1.msra.mxu0 0.0
    %10267 = vmatprep.subr.mxu0 0.0
    %10268 = vmatpush1.msra.mxu0 0.0
    %10269 = vmatprep.subr.mxu0 0.0
    %10270 = vmatpush1.msra.mxu0 0.0
    %10271 = vmatprep.subr.mxu0 0.0
    %10272 = vmatpush1.msra.mxu0 0.0
    %10273 = vmatprep.subr.mxu0 0.0
    %10274 = vmatpush1.msra.mxu0 0.0
    %10275 = vmatprep.subr.mxu0 0.0
    %10276 = vmatpush1.msra.mxu0 0.0
    %10277 = vmatprep.subr.mxu0 0.0
    %10278 = vmatpush1.msra.mxu0 0.0
    %10279 = vmatprep.subr.mxu0 0.0
    %10280 = vmatpush1.msra.mxu0 0.0
    %10281 = vmatprep.subr.mxu0 0.0
    %10282 = vmatpush1.msra.mxu0 0.0
    %10283 = vmatprep.subr.mxu0 0.0
    %10284 = vmatpush1.msra.mxu0 0.0
    %10285 = vmatprep.subr.mxu0 0.0
    %10286 = vmatpush1.msra.mxu0 0.0
    %10287 = vmatprep.subr.mxu0 0.0
    %10288 = vmatpush1.msra.mxu0 0.0
    %10289 = vmatprep.subr.mxu0 0.0
    %10290 = vmatpush1.msra.mxu0 0.0
    %10291 = vmatprep.subr.mxu0 0.0
    %10292 = vmatpush1.msra.mxu0 0.0
    %10293 = vmatprep.subr.mxu0 0.0
    %10294 = vmatpush1.msra.mxu0 0.0
    %10295 = vmatprep.subr.mxu0 0.0
    %10296 = vmatpush1.msra.mxu0 0.0
    %10297 = vmatprep.mubr.f32.mxu0 0.0
    %v10298 = vand.u32 %v9504, 4294901760
    %10299 = vmatmul.mubr.f32.gmra.mrb[0].mxu0 %v10298
    %v10300 = vpop.f32.mrb[0].mxu0
    %v10301 = vadd.f32 %v10126, %v10300
    %v10302 = vpop.f32.mrb[0].mxu0
    %10303 = vmatprep.mubr.f32.mxu0 0.0
    %v10304 = vand.u32 %v9505, 4294901760
    %10305 = vmatmul.mubr.f32.gmra.mrb[0].mxu0 %v10304
    %v10306 = vpop.f32.mrb[0].mxu0
    %v10307 = vadd.f32 %v10134, %v10306
    %v10308 = vpop.f32.mrb[0].mxu0
    %10309 = vmatprep.mubr.f32.mxu0 0.0
    %v10310 = vand.u32 %v9506, 4294901760
    %10311 = vmatmul.mubr.f32.gmra.mrb[0].mxu0 %v10310
    %v10312 = vpop.f32.mrb[0].mxu0
    %v10313 = vadd.f32 %v10142, %v10312
    %v10314 = vpop.f32.mrb[0].mxu0
    %10315 = vmatprep.mubr.f32.mxu0 0.0
    %v10316 = vand.u32 %v9507, 4294901760
    %10317 = vmatmul.mubr.f32.gmra.mrb[0].mxu0 %v10316
    %v10318 = vpop.f32.mrb[0].mxu0
    %v10319 = vadd.f32 %v10150, %v10318
    %v10320 = vpop.f32.mrb[0].mxu0
    %10321 = vmatprep.mubr.f32.mxu0 0.0
    %v10322 = vand.u32 %v9508, 4294901760
    %10323 = vmatmul.mubr.f32.gmra.mrb[0].mxu0 %v10322
    %v10324 = vpop.f32.mrb[0].mxu0
    %v10325 = vadd.f32 %v10158, %v10324
    %v10326 = vpop.f32.mrb[0].mxu0
    %10327 = vmatprep.mubr.f32.mxu0 0.0
    %v10328 = vand.u32 %v9509, 4294901760
    %10329 = vmatmul.mubr.f32.gmra.mrb[0].mxu0 %v10328
    %v10330 = vpop.f32.mrb[0].mxu0
    %v10331 = vadd.f32 %v10166, %v10330
    %v10332 = vpop.f32.mrb[0].mxu0
    %10333 = vmatprep.mubr.f32.mxu0 0.0
    %v10334 = vand.u32 %v9510, 4294901760
    %10335 = vmatmul.mubr.f32.gmra.mrb[0].mxu0 %v10334
    %v10336 = vpop.f32.mrb[0].mxu0
    %v10337 = vadd.f32 %v10174, %v10336
    %v10338 = vpop.f32.mrb[0].mxu0
    %10339 = vmatprep.mubr.f32.mxu0 0.0
    %v10340 = vand.u32 %v9511, 4294901760
    %10341 = vmatmul.mubr.f32.gmra.mrb[0].mxu0 %v10340
    %v10342 = vpop.f32.mrb[0].mxu0
    %v10343 = vadd.f32 %v10182, %v10342
    %v10344 = vpop.f32.mrb[0].mxu0
    %10345 = vdwg.mxu0
    %10346 = vmatprep.subr.mxu0 0.0
    %v10347 = vand.u32 %v9513, 4294901760
    %10348 = vmatpush1.msra.mxu0 %v10347
    %10349 = vmatprep.subr.mxu0 0.0
    %v10350 = vand.u32 %v9514, 4294901760
    %10351 = vmatpush1.msra.mxu0 %v10350
    %10352 = vmatprep.subr.mxu0 0.0
    %v10353 = vand.u32 %v9515, 4294901760
    %10354 = vmatpush1.msra.mxu0 %v10353
    %10355 = vmatprep.subr.mxu0 0.0
    %v10356 = vand.u32 %v9516, 4294901760
    %10357 = vmatpush1.msra.mxu0 %v10356
    %10358 = vmatprep.subr.mxu0 0.0
    %v10359 = vand.u32 %v9517, 4294901760
    %10360 = vmatpush1.msra.mxu0 %v10359
    %10361 = vmatprep.subr.mxu0 0.0
    %v10362 = vand.u32 %v9518, 4294901760
    %10363 = vmatpush1.msra.mxu0 %v10362
    %10364 = vmatprep.subr.mxu0 0.0
    %v10365 = vand.u32 %v9519, 4294901760
    %10366 = vmatpush1.msra.mxu0 %v10365
    %10367 = vmatprep.subr.mxu0 0.0
    %v10368 = vand.u32 %v9520, 4294901760
    %10369 = vmatpush1.msra.mxu0 %v10368
    %10370 = vmatprep.subr.mxu0 0.0
    %v10371 = vand.u32 %v9521, 4294901760
    %10372 = vmatpush1.msra.mxu0 %v10371
    %10373 = vmatprep.subr.mxu0 0.0
    %v10374 = vand.u32 %v9522, 4294901760
    %10375 = vmatpush1.msra.mxu0 %v10374
    %10376 = vmatprep.subr.mxu0 0.0
    %v10377 = vand.u32 %v9523, 4294901760
    %10378 = vmatpush1.msra.mxu0 %v10377
    %10379 = vmatprep.subr.mxu0 0.0
    %v10380 = vand.u32 %v9524, 4294901760
    %10381 = vmatpush1.msra.mxu0 %v10380
    %10382 = vmatprep.subr.mxu0 0.0
    %v10383 = vand.u32 %v9525, 4294901760
    %10384 = vmatpush1.msra.mxu0 %v10383
    %10385 = vmatprep.subr.mxu0 0.0
    %v10386 = vand.u32 %v9526, 4294901760
    %10387 = vmatpush1.msra.mxu0 %v10386
    %10388 = vmatprep.subr.mxu0 0.0
    %v10389 = vand.u32 %v9527, 4294901760
    %10390 = vmatpush1.msra.mxu0 %v10389
    %10391 = vmatprep.subr.mxu0 0.0
    %v10392 = vand.u32 %v9528, 4294901760
    %10393 = vmatpush1.msra.mxu0 %v10392
    %10394 = vmatprep.subr.mxu0 0.0
    %10395 = vmatpush1.msra.mxu0 0.0
    %10396 = vmatprep.subr.mxu0 0.0
    %10397 = vmatpush1.msra.mxu0 0.0
    %10398 = vmatprep.subr.mxu0 0.0
    %10399 = vmatpush1.msra.mxu0 0.0
    %10400 = vmatprep.subr.mxu0 0.0
    %10401 = vmatpush1.msra.mxu0 0.0
    %10402 = vmatprep.subr.mxu0 0.0
    %10403 = vmatpush1.msra.mxu0 0.0
    %10404 = vmatprep.subr.mxu0 0.0
    %10405 = vmatpush1.msra.mxu0 0.0
    %10406 = vmatprep.subr.mxu0 0.0
    %10407 = vmatpush1.msra.mxu0 0.0
    %10408 = vmatprep.subr.mxu0 0.0
    %10409 = vmatpush1.msra.mxu0 0.0
    %10410 = vmatprep.subr.mxu0 0.0
    %10411 = vmatpush1.msra.mxu0 0.0
    %10412 = vmatprep.subr.mxu0 0.0
    %10413 = vmatpush1.msra.mxu0 0.0
    %10414 = vmatprep.subr.mxu0 0.0
    %10415 = vmatpush1.msra.mxu0 0.0
    %10416 = vmatprep.subr.mxu0 0.0
    %10417 = vmatpush1.msra.mxu0 0.0
    %10418 = vmatprep.subr.mxu0 0.0
    %10419 = vmatpush1.msra.mxu0 0.0
    %10420 = vmatprep.subr.mxu0 0.0
    %10421 = vmatpush1.msra.mxu0 0.0
    %10422 = vmatprep.subr.mxu0 0.0
    %10423 = vmatpush1.msra.mxu0 0.0
    %10424 = vmatprep.subr.mxu0 0.0
    %10425 = vmatpush1.msra.mxu0 0.0
    %10426 = vmatprep.mubr.f32.mxu0 0.0
    %v10427 = vand.u32 %v9504, 4294901760
    %10428 = vmatmul.mubr.f32.gmra.mrb[0].mxu0 %v10427
    %v10429 = vpop.f32.mrb[0].mxu0
    %v10430 = vadd.f32 %v10301, %v10429
    %v10431 = vpop.f32.mrb[0].mxu0
    %10432 = vmatprep.mubr.f32.mxu0 0.0
    %v10433 = vand.u32 %v9505, 4294901760
    %10434 = vmatmul.mubr.f32.gmra.mrb[0].mxu0 %v10433
    %v10435 = vpop.f32.mrb[0].mxu0
    %v10436 = vadd.f32 %v10307, %v10435
    %v10437 = vpop.f32.mrb[0].mxu0
    %10438 = vmatprep.mubr.f32.mxu0 0.0
    %v10439 = vand.u32 %v9506, 4294901760
    %10440 = vmatmul.mubr.f32.gmra.mrb[0].mxu0 %v10439
    %v10441 = vpop.f32.mrb[0].mxu0
    %v10442 = vadd.f32 %v10313, %v10441
    %v10443 = vpop.f32.mrb[0].mxu0
    %10444 = vmatprep.mubr.f32.mxu0 0.0
    %v10445 = vand.u32 %v9507, 4294901760
    %10446 = vmatmul.mubr.f32.gmra.mrb[0].mxu0 %v10445
    %v10447 = vpop.f32.mrb[0].mxu0
    %v10448 = vadd.f32 %v10319, %v10447
    %v10449 = vpop.f32.mrb[0].mxu0
    %10450 = vmatprep.mubr.f32.mxu0 0.0
    %v10451 = vand.u32 %v9508, 4294901760
    %10452 = vmatmul.mubr.f32.gmra.mrb[0].mxu0 %v10451
    %v10453 = vpop.f32.mrb[0].mxu0
    %v10454 = vadd.f32 %v10325, %v10453
    %v10455 = vpop.f32.mrb[0].mxu0
    %10456 = vmatprep.mubr.f32.mxu0 0.0
    %v10457 = vand.u32 %v9509, 4294901760
    %10458 = vmatmul.mubr.f32.gmra.mrb[0].mxu0 %v10457
    %v10459 = vpop.f32.mrb[0].mxu0
    %v10460 = vadd.f32 %v10331, %v10459
    %v10461 = vpop.f32.mrb[0].mxu0
    %10462 = vmatprep.mubr.f32.mxu0 0.0
    %v10463 = vand.u32 %v9510, 4294901760
    %10464 = vmatmul.mubr.f32.gmra.mrb[0].mxu0 %v10463
    %v10465 = vpop.f32.mrb[0].mxu0
    %v10466 = vadd.f32 %v10337, %v10465
    %v10467 = vpop.f32.mrb[0].mxu0
    %10468 = vmatprep.mubr.f32.mxu0 0.0
    %v10469 = vand.u32 %v9511, 4294901760
    %10470 = vmatmul.mubr.f32.gmra.mrb[0].mxu0 %v10469
    %v10471 = vpop.f32.mrb[0].mxu0
    %v10472 = vadd.f32 %v10343, %v10471
    %v10473 = vpop.f32.mrb[0].mxu0
    %10474 = vdwg.mxu0
    %v10475 = vsel %vm8349, %v10430, 0.0
    %v10476 = vsel %vm8350, %v10436, 0.0
    %v10477 = vsel %vm8351, %v10442, 0.0
    %v10478 = vsel %vm8352, %v10448, 0.0
    %v10479 = vsel %vm8353, %v10454, 0.0
    %v10480 = vsel %vm8354, %v10460, 0.0
    %v10481 = vsel %vm8355, %v10466, 0.0
    %v10482 = vsel %vm8356, %v10472, 0.0
    %v10483 = vadd.f32 %v10475, %v10476
    %v10484 = vadd.f32 %v10483, %v10477
    %v10485 = vadd.f32 %v10484, %v10478
    %v10486 = vadd.f32 %v10485, %v10479
    %v10487 = vadd.f32 %v10486, %v10480
    %v10488 = vadd.f32 %v10487, %v10481
    %v10489 = vadd.f32 %v10488, %v10482
    %v10490 = vrot.slane %v10489, 4
    %v10491 = vadd.f32 %v10489, %v10490
    %v10492 = vrot.slane %v10491, 2
    %v10493 = vadd.f32 %v10491, %v10492
    %v10494 = vrot.slane %v10493, 1
    %v10495 = vadd.f32 %v10493, %v10494
    %v10496 = vmul.f32 %v10495, 0.03125
    %v10497 = vsub.f32 %v10430, %v10496
    %v10498 = vsub.f32 %v10436, %v10496
    %v10499 = vsub.f32 %v10442, %v10496
    %v10500 = vsub.f32 %v10448, %v10496
    %v10501 = vsub.f32 %v10454, %v10496
    %v10502 = vsub.f32 %v10460, %v10496
    %v10503 = vsub.f32 %v10466, %v10496
    %v10504 = vsub.f32 %v10472, %v10496
    %v10505 = vsel %vm8349, %v10497, 0.0
    %v10506 = vsel %vm8350, %v10498, 0.0
    %v10507 = vsel %vm8351, %v10499, 0.0
    %v10508 = vsel %vm8352, %v10500, 0.0
    %v10509 = vsel %vm8353, %v10501, 0.0
    %v10510 = vsel %vm8354, %v10502, 0.0
    %v10511 = vsel %vm8355, %v10503, 0.0
    %v10512 = vsel %vm8356, %v10504, 0.0
    %v10513 = vmul.f32 %v10505, %v10505
    %v10514 = vmul.f32 %v10506, %v10506
    %v10515 = vmul.f32 %v10507, %v10507
    %v10516 = vmul.f32 %v10508, %v10508
    %v10517 = vmul.f32 %v10509, %v10509
    %v10518 = vmul.f32 %v10510, %v10510
    %v10519 = vmul.f32 %v10511, %v10511
    %v10520 = vmul.f32 %v10512, %v10512
    %v10521 = vadd.f32 %v10513, %v10514
    %v10522 = vadd.f32 %v10521, %v10515
    %v10523 = vadd.f32 %v10522, %v10516
    %v10524 = vadd.f32 %v10523, %v10517
    %v10525 = vadd.f32 %v10524, %v10518
    %v10526 = vadd.f32 %v10525, %v10519
    %v10527 = vadd.f32 %v10526, %v10520
    %v10528 = vrot.slane %v10527, 4
    %v10529 = vadd.f32 %v10527, %v10528
    %v10530 = vrot.slane %v10529, 2
    %v10531 = vadd.f32 %v10529, %v10530
    %v10532 = vrot.slane %v10531, 1
    %v10533 = vadd.f32 %v10531, %v10532
    %v10534 = vmul.f32 %v10533, 0.03125
    %v10535 = vadd.f32 %v10534, 1e-05
    %v10536 = vrsqrt.pop %v10535
    %v10537 = vmul.f32 %v10536, %v79
    %v10538 = vmul.f32 %v10496, %v10537
    %v10540 = vrot.slane %v10538, 7
    %v10542 = vsub.f32 %v79, %v10540
    %v10543 = vlaneseq
    %v10544 = vshrl.u32 %v10543, 7
    %v10545 = vsub.s32 5, %v10544
    %v10546 = vrot.slane %v10537, %v10545
    %v10547 = vmul.f32 %v10442, %v10546
    %v10548 = vmul.f32 %v10448, %v10546
    %v10549 = vmul.f32 %v10466, %v10546
    %v10550 = vmul.f32 %v10472, %v10546
    %v10551 = vlaneseq
    %v10552 = vshrl.u32 %v10551, 7
    %v10553 = vsub.s32 6, %v10552
    %v10554 = vrot.slane %v10542, %v10553
    %v10555 = vadd.f32 %v10547, %v10554
    %v10556 = vadd.f32 %v10548, %v10554
    %v10557 = vadd.f32 %v10549, %v10554
    %v10558 = vadd.f32 %v10550, %v10554
    %v10559 = vadd.f32 %v10555, %v8247
    %v10560 = vadd.f32 %v10556, %v8248
    %v10561 = vadd.f32 %v10557, %v8251
    %v10562 = vadd.f32 %v10558, %v8252
    %v10563 = vmax.f32 %v10559, 0.0
    %v10564 = vmax.f32 %v10560, 0.0
    %v10565 = vmax.f32 %v10561, 0.0
    %v10566 = vmax.f32 %v10562, 0.0
    %v10567 = vadd.f32 %v5917, %v10563
    %v10568 = vadd.f32 %v5918, %v10564
    %v10569 = vadd.f32 %v5921, %v10565
    %v10570 = vadd.f32 %v5922, %v10566
    %10571 = vst [vmem:[#allocation11] sm:$0xff] %v10567
    %10572 = vst [vmem:[#allocation11 + $0x8] sm:$0xff] %v10568
    %s10573 = scalar_lea.vmem [#allocation11], 16
    %10574 = vst [vmem:[%s10573] sm:$0xff] %v10569
    %10575 = vst [vmem:[%s10573 + $0x8] sm:$0xff] %v10570
    // Predicated region
    $region34: #{tpu_custom_call.1} parent=1 // pred_check
      _
    $region35: #{tpu_custom_call.1} parent=1 // pred_check_branch
      %10577 = sbr.rel (0) target = $region37
    $region36: #{tpu_custom_call.1} parent=1 // pred_region
      %s10579 = ssub.s32 512, 512
      %10580 = vsyncadd [#allocation5], %s10579
      %s10581 = sshll.u32 [#allocation11], 4
      %s10582 = int_to_ptr.vmem [resolvable:$true] %s10581
      %10587 = dma.vmem_to_hbm [thread:$0]  %s10582, 512, %s4, [#allocation5], 128, 128, 8
    $region37: #{tpu_custom_call.1} parent=1 // pred_fallthru
      _
    // Predicated region
    $region38: #{tpu_custom_call.1} parent=1 // pred_check
      _
    $region39: #{tpu_custom_call.1} parent=1 // pred_check_branch
      %10589 = sbr.rel (0) target = $region41
    $region40: #{tpu_custom_call.1} parent=1 // pred_region
      %10590 = dma.done [#allocation5], 512
    $region41: #{tpu_custom_call.1} parent=1 // pred_fallthru
      _
    %10591 = vsyncpa [#allocation4], 1
    %10592 = vsyncpa [#allocation7], 1
    %10593 = vsyncpa [#allocation10], 1
    %10594 = vsyncpa [#allocation5], 1

</llo_original>
